<compile_context>
chip_gen: v5e
topology: v5e:2x2
jax: 0.10.0
libtpu: 0.0.40
codegen_flags: <defaults>
</compile_context>

<pallas_src>
import functools

import jax
import jax.numpy as jnp
from jax.experimental import pallas as pl
from jax.experimental.pallas import tpu as pltpu

LANE = 128


def _round_up(x, m):
    return (x + m - 1) // m * m


# ---------------------------------------------------------------------------
# Kernel 1: fused frame encoder  (conv1 + conv2 + adaptive avg pool)
#
# Input is space-to-depth'ed by 4 in the wrapper:  X4[n, I, J, (q, s, c)] =
# x[n, 4I+q, 4J+s, c], padded by one zero block on top/left.  Then:
#   conv1 (3x3/stride2/pad1): one dot of the 4-tap concatenated window
#     (K = 4*16C) against a weight that emits all 4 conv1 output phases packed
#     along lanes (N = 4*k1)  ->  conv1 activation directly in s2d layout.
#   conv2 (3x3/stride2/pad1): 4 shifted dots against the (zero-haloed) scratch,
#     each with K = 4*k1.
#   AdaptiveAvgPool2d(pool): window adds on the stride-2 conv2 grid, bins
#     packed along lanes -> one lane-dense store.
# ---------------------------------------------------------------------------
def _frame_encoder_kernel(x_ref, w1_ref, b1_ref, w2_ref, b2_ref, o_ref, h1_ref,
                          *, pool):
    tile_n, hp, _, cin16 = x_ref.shape         # hp = ho2 + 1 (top/left pad)
    ho2 = hp - 1                               # conv2 output spatial size
    k1x4 = w1_ref.shape[-1]                    # 4 phases * k1 (lane packed)
    k2 = w2_ref.shape[-1]
    rows = tile_n * ho2 * ho2

    # Re-zero only the 1-wide halo of the scratch every step (cheap, O(border))
    # -- megacore-safe, unlike a program_id==0 one-time init on a 'parallel'
    # grid axis; the interior is fully overwritten below.
    h1_ref[:, 0:1, :, :] = jnp.zeros((tile_n, 1, hp, k1x4), h1_ref.dtype)
    h1_ref[:, :, 0:1, :] = jnp.zeros((tile_n, hp, 1, k1x4), h1_ref.dtype)

    x = x_ref[...]                             # bf16 (tile_n, ho2+1, ho2+1, 16C)

    # conv1: single MXU dot.  4 shifted windows concatenated along lanes
    # (K = 4*16C), output = all 4 conv1 phases packed along lanes (N = 4*k1).
    patch1 = jnp.concatenate(
        [x[:, a:a + ho2, b:b + ho2, :] for a in range(2) for b in range(2)],
        axis=-1).reshape(rows, 4 * cin16)
    h1 = jnp.dot(patch1, w1_ref[...], preferred_element_type=jnp.float32)
    h1 = jnp.maximum(h1 + b1_ref[...], 0.0)

    # bf16 scratch (half the VMEM / vld traffic of f32); conv2 consumes bf16.
    h1_ref[:, 1:, 1:, :] = h1.reshape(tile_n, ho2, ho2, k1x4).astype(
        h1_ref.dtype)
    h1p = h1_ref[...]                          # bf16 (tile_n, ho2+1, ho2+1, 4*k1)

    # conv2: 4 shifted dots with K = 4*k1; first tap writes the accumulator
    # directly (no zero-fill), the rest accumulate in f32.
    acc2 = None
    for a in range(2):
        for b in range(2):
            patch = h1p[:, a:a + ho2, b:b + ho2, :].reshape(rows, k1x4)
            d = jnp.dot(patch, w2_ref[a * 2 + b],
                        preferred_element_type=jnp.float32)
            acc2 = d if acc2 is None else acc2 + d
    acc2 = jnp.maximum(acc2 + b2_ref[...], 0.0)          # (rows, k2) f32

    # AdaptiveAvgPool2d(pool) directly on the stride-2 conv2 grid (no even-
    # position subsampling needed): rows pooled via a reshape + window adds,
    # columns via indexed adds, bins packed along lanes for one dense store.
    # TODO(synk): assumes square inputs with evenly divisible pooling bins; the
    # general unequal-bin AdaptiveAvgPool2d is not implemented.
    bh = ho2 // pool
    inv = 1.0 / float(bh * bh)
    s5 = acc2.reshape(tile_n, pool, bh, ho2, k2)
    srow = s5[:, :, 0]
    for r in range(1, bh):
        srow = srow + s5[:, :, r]                        # (tile_n, pool, ho2, k2)
    bins = []
    for p in range(pool):
        for q in range(pool):
            acc = srow[:, p, q * bh, :]
            for j in range(1, bh):
                acc = acc + srow[:, p, q * bh + j, :]
            bins.append(acc * inv)
    o_ref[0] = jnp.concatenate(bins, axis=-1).astype(o_ref.dtype)


def frame_encoder(frames_nhwc, w1, b1, w2, b2, *, pool, tile_n=8):
    n, h, w, c = frames_nhwc.shape
    assert h == w and h % 4 == 0 and (h // 4) % pool == 0, "stand-in geometry"
    ho2 = h // 4                               # spatial size after both convs
    k1x4 = w1.shape[1]
    k2p = w2.shape[-1]
    p2k = pool * pool * k2p

    # Double space-to-depth (factor 4, zero data expansion) + one zero block on
    # top/left so both stride-2 convs become plain shifted contiguous windows.
    x4 = frames_nhwc.reshape(n, ho2, 4, ho2, 4, c).transpose(0, 1, 3, 2, 4, 5)
    x4 = x4.reshape(n, ho2, ho2, 16 * c)
    x4 = jnp.pad(x4, ((0, 0), (1, 0), (1, 0), (0, 0))).astype(jnp.bfloat16)

    # Keep the grid length >= 2 so v7x's two TensorCores both get work; on
    # single-TC chips the per-step overhead (~0.35us) is negligible here.
    tile_n = max(1, min(tile_n, n // 2)) if n >= 2 else 1
    n_pad = _round_up(n, tile_n)
    if n_pad != n:
        x4 = jnp.pad(x4, ((0, n_pad - n), (0, 0), (0, 0), (0, 0)))
    num_tiles = n_pad // tile_n

    out = pl.pallas_call(
        functools.partial(_frame_encoder_kernel, pool=pool),
        out_shape=jax.ShapeDtypeStruct((num_tiles, tile_n, p2k), jnp.bfloat16),
        grid=(num_tiles,),
        in_specs=[
            pl.BlockSpec((tile_n, ho2 + 1, ho2 + 1, 16 * c),
                         lambda i: (i, 0, 0, 0)),
            pl.BlockSpec(w1.shape, lambda i: (0, 0)),
            pl.BlockSpec(b1.shape, lambda i: (0, 0)),
            pl.BlockSpec(w2.shape, lambda i: (0, 0, 0)),
            pl.BlockSpec(b2.shape, lambda i: (0, 0)),
        ],
        out_specs=pl.BlockSpec((1, tile_n, p2k), lambda i: (i, 0, 0)),
        scratch_shapes=[
            pltpu.VMEM((tile_n, ho2 + 1, ho2 + 1, k1x4), jnp.bfloat16)],
        compiler_params=pltpu.CompilerParams(
            dimension_semantics=("parallel",),
            vmem_limit_bytes=32 * 1024 * 1024),
    )(x4, w1, b1, w2, b2)
    return out.reshape(n_pad, pool * pool, k2p)[:n]


# ---------------------------------------------------------------------------
# Kernel 2: question encoder (single-layer LSTM, packed-sequence masking)
#   * gates packed into 4*H lanes (here 4*32 = 128), not 4 lane-padded blocks
#   * (L, B, .) layout -> contiguous per-step gate reads
#   * per-step outputs buffered, one full-width bf16 store at the end
# ---------------------------------------------------------------------------
def _lstm_kernel(x_ref, mask_ref, wih_ref, whh_ref, b_ref, y_ref, *, hidden):
    L, B, E = x_ref.shape
    H = hidden
    Hp = y_ref.shape[-1]

    x = x_ref[...]                             # bf16 (L, B, E)
    mask = mask_ref[...]                       # f32  (L, B, 1)
    whh = whh_ref[...]                         # bf16 (H, 4H)

    # Input projection for ALL timesteps in one GEMM (one big MXU pass).
    gates_x = jnp.dot(x.reshape(L * B, E), wih_ref[...],
                      preferred_element_type=jnp.float32)
    gates_x = (gates_x + b_ref[...]).reshape(L, B, 4 * H)

    h = jnp.zeros((B, H), jnp.float32)
    c = jnp.zeros((B, H), jnp.float32)
    ys = []
    for t in range(L):                         # static unroll (short fixed L)
        g = gates_x[t] + jnp.dot(h.astype(whh.dtype), whh,
                                 preferred_element_type=jnp.float32)
        i_g = jax.nn.sigmoid(g[:, 0 * H:1 * H])
        f_g = jax.nn.sigmoid(g[:, 1 * H:2 * H])
        g_g = jnp.tanh(g[:, 2 * H:3 * H])
        o_g = jax.nn.sigmoid(g[:, 3 * H:4 * H])
        c_new = f_g * c + i_g * g_g
        h_new = o_g * jnp.tanh(c_new)
        m = mask[t]                            # (B, 1)
        h = m * h_new + (1.0 - m) * h          # freeze state past seq length
        c = m * c_new + (1.0 - m) * c
        # pad_packed_sequence semantics: padded steps emit exactly zero.
        ys.append((m * h_new).astype(y_ref.dtype))

    y = jnp.stack(ys, axis=0)                  # (L, B, H) bf16
    zpad = jnp.zeros((L, B, Hp - H), y_ref.dtype)
    y_ref[...] = jnp.concatenate([y, zpad], axis=-1)   # single full-width store


def lstm_forward(emb, mask, wih, whh, b, *, hidden):
    B, L, Ep = emb.shape
    emb_t = jnp.transpose(emb, (1, 0, 2))                 # (L, B, Ep)
    mask_t = jnp.transpose(mask, (1, 0))[:, :, None]      # (L, B, 1)
    y = pl.pallas_call(
        functools.partial(_lstm_kernel, hidden=hidden),
        out_shape=jax.ShapeDtypeStruct((L, B, Ep), jnp.bfloat16),
    )(emb_t, mask_t, wih, whh, b)
    return jnp.transpose(y, (1, 0, 2))                    # (B, L, Ep) bf16


# ---------------------------------------------------------------------------
# Kernel 3: STAGE head, one grid step per batch element ('parallel').
#   v      = ReLU(vid @ Wv + bv)
#   p      = masked softmax(v . qas)  over text tokens
#   att    = p @ qas
#   fused  = ReLU([v | att | v*att] @ Wf + bf)     (single K=3E GEMM)
#   logits = mean_{T*HW}(fused) @ Wc + bc
# ---------------------------------------------------------------------------
def _stage_kernel(vid_ref, qas_ref, qmask_ref, wv_ref, bv_ref, wf_ref, bf_ref,
                  wc_ref, bc_ref, o_ref):
    _, M, _ = vid_ref.shape
    vid = vid_ref[0]                                     # bf16 (M, K)
    qas = qas_ref[0]                                     # bf16 (L, E)
    qm = qmask_ref[0]                                    # f32  (1, L)

    v = jnp.dot(vid, wv_ref[...], preferred_element_type=jnp.float32)
    v = jnp.maximum(v + bv_ref[...], 0.0)                # (M, E) f32

    # Cross attention; padded qas rows are exactly zero (LSTM emits m*h), so a
    # fully masked row degrades to att == 0 rather than garbage.
    scores = jnp.einsum('me,le->ml', v.astype(jnp.bfloat16), qas,
                        preferred_element_type=jnp.float32)     # (M, L)
    scores = jnp.where(qm > 0.0, scores, -1e30)
    scores = scores - jnp.max(scores, axis=-1, keepdims=True)
    p = jnp.exp(scores)
    # After max subtraction the denominator is >= 1, so the approximate EUP
    # reciprocal is safe.
    p = p * pl.reciprocal(jnp.sum(p, axis=-1, keepdims=True), approx=True)
    att = jnp.dot(p.astype(jnp.bfloat16), qas,
                  preferred_element_type=jnp.float32)            # (M, E) f32

    # Fused projection: one K = 3E GEMM instead of three K = E GEMMs.
    feat = jnp.concatenate([v, att, v * att], axis=-1).astype(jnp.bfloat16)
    fused = jnp.dot(feat, wf_ref[...], preferred_element_type=jnp.float32)
    fused = jnp.maximum(fused + bf_ref[...], 0.0)        # (M, E)

    pooled = jnp.sum(fused, axis=0, keepdims=True) * (1.0 / M)   # (1, E)
    logits = jnp.dot(pooled.astype(jnp.bfloat16), wc_ref[...],
                     preferred_element_type=jnp.float32) + bc_ref[...]
    o_ref[0] = logits                                    # (1, out_pad)


def stage_forward(vid, qas, qmask, kp):
    # TODO(synk): at realistic TVQA sizes (M, K in the thousands) additionally
    # tile M with a grid axis + accumulator; here only the batch axis is tiled.
    B, M, K = vid.shape
    L = qas.shape[1]
    E = kp['wv'].shape[1]
    outp = kp['wc'].shape[1]
    out = pl.pallas_call(
        _stage_kernel,
        out_shape=jax.ShapeDtypeStruct((B, 1, outp), jnp.float32),
        grid=(B,),
        in_specs=[
            pl.BlockSpec((1, M, K), lambda b: (b, 0, 0)),
            pl.BlockSpec((1, L, E), lambda b: (b, 0, 0)),
            pl.BlockSpec((1, 1, L), lambda b: (b, 0, 0)),
            pl.BlockSpec(kp['wv'].shape, lambda b: (0, 0)),
            pl.BlockSpec(kp['bv'].shape, lambda b: (0, 0)),
            pl.BlockSpec(kp['wf'].shape, lambda b: (0, 0)),
            pl.BlockSpec(kp['bf'].shape, lambda b: (0, 0)),
            pl.BlockSpec(kp['wc'].shape, lambda b: (0, 0)),
            pl.BlockSpec(kp['bc'].shape, lambda b: (0, 0)),
        ],
        out_specs=pl.BlockSpec((1, 1, outp), lambda b: (b, 0, 0)),
        compiler_params=pltpu.CompilerParams(
            dimension_semantics=("parallel",),
            vmem_limit_bytes=32 * 1024 * 1024),
    )(vid, qas, qmask, kp['wv'], kp['bv'], kp['wf'], kp['bf'], kp['wc'],
      kp['bc'])
    return out.reshape(B, outp)


# ---------------------------------------------------------------------------
# Full TVQAPlus.forward
# ---------------------------------------------------------------------------
def tvqa_plus_forward(kp, simulations, questions, lengths, *, pool_size=2,
                      output_size=4):
    # ----- process_simulation -----
    B, C, T, H, W = simulations.shape
    frames = jnp.transpose(simulations, (0, 2, 3, 4, 1)).reshape(B * T, H, W, C)
    visual = frame_encoder(frames, kp['w1f'], kp['b1f'], kp['w2f'], kp['b2'],
                           pool=pool_size)               # (B*T, HW, 128) bf16
    HW = pool_size * pool_size
    vid = visual.reshape(B, T * HW, visual.shape[-1])

    # ----- process_question -----
    L = questions.shape[1]
    # TODO(synk): embedding gather stays in plain JAX (no clean small Pallas
    # equivalent for the vocab-table gather).
    emb = jnp.take(kp['emb'], questions, axis=0)         # (B, L, 128) bf16
    tmask = (jnp.arange(L)[None, :] < lengths[:, None]).astype(jnp.float32)
    qas = lstm_forward(emb, tmask, kp['wih'], kp['whh'], kp['lstm_b'],
                       hidden=kp['whh'].shape[0])        # (B, L, 128) bf16

    # ----- STAGE -----
    logits = stage_forward(vid, qas, tmask.reshape(B, 1, L), kp)
    return logits[:, :output_size]                       # slice lane padding


# ---------------------------------------------------------------------------
# Deterministic synthetic parameters (logical sizes) + kernel weight layouts.
# Zero padding is exact: padded channels / hidden units / logits are provably
# zero through every stage, so the math matches the unpadded model up to bf16
# rounding.
# ---------------------------------------------------------------------------
def init_params(key, *, C=3, vocab=50, E=32, K1=8, K2=16, out=4, ksize=3):
    ks = jax.random.split(key, 14)

    def n(k, shape, scale=0.1):
        return (scale * jax.random.normal(k, shape)).astype(jnp.float32)

    H = E
    return {
        'emb': n(ks[0], (vocab, E)),
        'lstm_wih': n(ks[1], (E, 4 * H)),
        'lstm_whh': n(ks[2], (H, 4 * H)),
        # TODO(synk): PyTorch nn.LSTM has separate b_ih/b_hh; folded into one.
        'lstm_b': n(ks[3], (1, 4 * H)),
        'conv1_w': n(ks[4], (ksize * ksize * C, K1)),
        'conv1_b': n(ks[5], (1, K1)),
        'conv2_w': n(ks[6], (ksize * ksize * K1, K2)),
        'conv2_b': n(ks[7], (1, K2)),
        'wv': n(ks[8], (K2, E)),
        'bv': n(ks[9], (1, E)),
        'wfv': n(ks[10], (E, E)),
        'wfa': n(ks[11], (E, E)),
        'wfm': n(ks[12], (E, E)),
        'bf': jnp.zeros((1, E), jnp.float32),
        'wc': n(ks[13], (E, out)),
        'bc': jnp.zeros((1, out), jnp.float32),
    }


def _pad2(w, rows, cols, dtype=jnp.float32):
    return jnp.pad(w, ((0, rows - w.shape[0]),
                       (0, cols - w.shape[1]))).astype(dtype)


def prepare_kernel_params(p, *, C, E, K1, K2, out, lane=LANE):
    assert max(E, K1, K2, out, 4 * E) <= 4 * lane and max(K1, K2, out) <= lane
    K1p = K2p = Ep = outp = lane

    # conv1: 3x3/stride-2/pad-1 expressed on the wrapper's double space-to-
    # depth input as ONE dot: rows = 4 taps x (4x4 window x C), cols = 4 output
    # phases x K1p (lane packed).  For output phase (pi,pj), tap (A,B), kernel
    # position (kh,kw) maps to window position (q,s) = (3-4A+2pi+kh, 3-4B+2pj+kw).
    w1 = p['conv1_w'].reshape(3, 3, C, K1)
    w1f = jnp.zeros((4 * 16 * C, 4 * K1p), jnp.float32)
    for A in range(2):
        for Bt in range(2):
            for pi in range(2):
                for pj in range(2):
                    for kh in range(3):
                        q = 3 - 4 * A + 2 * pi + kh
                        if not 0 <= q < 4:
                            continue
                        for kw in range(3):
                            s = 3 - 4 * Bt + 2 * pj + kw
                            if not 0 <= s < 4:
                                continue
                            r0 = (A * 2 + Bt) * 16 * C + (q * 4 + s) * C
                            c0 = (pi * 2 + pj) * K1p
                            w1f = w1f.at[r0:r0 + C, c0:c0 + K1].set(w1[kh, kw])
    w1f = w1f.astype(jnp.bfloat16)
    b1f = jnp.tile(_pad2(p['conv1_b'], 1, K1p), (1, 4))   # (1, 4*K1p) f32

    # conv2: 3x3/stride-2/pad-1 on the s2d conv1 activation -> 4 taps, each a
    # (4*K1p, K2p) matrix: kernel row kh = 2a+rp-1, col kw = 2b+sp-1.
    w2 = p['conv2_w'].reshape(3, 3, K1, K2)
    w2f = jnp.zeros((4, 4 * K1p, K2p), jnp.float32)
    for a in range(2):
        for b in range(2):
            for rp in range(2):
                kh = 2 * a + rp - 1
                if not 0 <= kh < 3:
                    continue
                for sp in range(2):
                    kw = 2 * b + sp - 1
                    if not 0 <= kw < 3:
                        continue
                    r0 = (rp * 2 + sp) * K1p
                    w2f = w2f.at[a * 2 + b, r0:r0 + K1, :K2].set(w2[kh, kw])
    w2f = w2f.astype(jnp.bfloat16)
    b2 = _pad2(p['conv2_b'], 1, K2p)

    # LSTM: gates kept packed at 4*E lanes (here exactly one vreg width); only
    # the embedding input rows are lane-padded.
    wih = _pad2(p['lstm_wih'], Ep, 4 * E, jnp.bfloat16)   # (Ep, 4E)
    whh = p['lstm_whh'].astype(jnp.bfloat16)              # (E, 4E)
    lstm_b = p['lstm_b']                                  # (1, 4E) f32
    emb = _pad2(p['emb'], p['emb'].shape[0], Ep, jnp.bfloat16)

    # STAGE (fused projection weight stacked to match [v | att | v*att]).
    wv = _pad2(p['wv'], K2p, Ep, jnp.bfloat16)
    bv = _pad2(p['bv'], 1, Ep)
    wf = jnp.concatenate([_pad2(p['wfv'], Ep, Ep),
                          _pad2(p['wfa'], Ep, Ep),
                          _pad2(p['wfm'], Ep, Ep)], axis=0).astype(jnp.bfloat16)
    bf = _pad2(p['bf'], 1, Ep)
    wc = _pad2(p['wc'], Ep, outp, jnp.bfloat16)
    bc = _pad2(p['bc'], 1, outp)

    return dict(w1f=w1f, b1f=b1f, w2f=w2f, b2=b2, emb=emb, wih=wih, whh=whh,
                lstm_b=lstm_b, wv=wv, bv=bv, wf=wf, bf=bf, wc=wc, bc=bc)


if __name__ == "__main__":
    B, C, T, X = 2, 3, 4, 16        # simulations: (B, C, T, X, X)
    L, vocab = 8, 50                # questions padded to length L
    E, K1, K2 = 32, 8, 16           # logical hidden / conv widths
    output_size = 4
    pool_size = 2

    key = jax.random.PRNGKey(0)
    kparam, ksim, kq = jax.random.split(key, 3)
    params = init_params(kparam, C=C, vocab=vocab, E=E, K1=K1, K2=K2,
                         out=output_size)
    kp = prepare_kernel_params(params, C=C, E=E, K1=K1, K2=K2, out=output_size)

    simulations = jax.random.normal(ksim, (B, C, T, X, X), dtype=jnp.float32)
    questions = jax.random.randint(kq, (B, L), 0, vocab, dtype=jnp.int32)
    lengths = jnp.array([L, 5], dtype=jnp.int32)

    fwd = jax.jit(functools.partial(tvqa_plus_forward, pool_size=pool_size,
                                    output_size=output_size))
    logits = fwd(kp, simulations, questions, lengths)
    logits = jax.block_until_ready(logits)

    assert logits.shape == (B, output_size)
    assert bool(jnp.all(jnp.isfinite(logits)))
    print("KERNEL_OK")
</pallas_src>

<mosaic_0001>
module attributes {stable_mosaic.version = 11 : i64} {
  func.func @_frame_encoder_kernel(%arg0: i32, %arg1: memref<4x5x5x48xbf16, #tpu.memory_space<vmem>>, %arg2: memref<192x512xbf16, #tpu.memory_space<vmem>>, %arg3: memref<1x512xf32, #tpu.memory_space<vmem>>, %arg4: memref<4x512x128xbf16, #tpu.memory_space<vmem>>, %arg5: memref<1x128xf32, #tpu.memory_space<vmem>>, %arg6: memref<1x4x512xbf16, #tpu.memory_space<vmem>>, %arg7: memref<4x5x5x512xbf16, #tpu.memory_space<vmem>>) attributes {dimension_semantics = [#tpu.dimension_semantics<parallel>], iteration_bounds = array<i64: 2>, scalar_prefetch = 0 : i64, scratch_operands = 1 : i64, tpu.core_type = #tpu.core_type<tc>, window_params = [{transform_indices = @transform_0, window_bounds = array<i64: 4, 5, 5, 48>}, {pipeline_mode = #tpu.pipeline_mode<synchronous>, transform_indices = @transform_1, window_bounds = array<i64: 192, 512>}, {pipeline_mode = #tpu.pipeline_mode<synchronous>, transform_indices = @transform_2, window_bounds = array<i64: 1, 512>}, {pipeline_mode = #tpu.pipeline_mode<synchronous>, transform_indices = @transform_3, window_bounds = array<i64: 4, 512, 128>}, {pipeline_mode = #tpu.pipeline_mode<synchronous>, transform_indices = @transform_4, window_bounds = array<i64: 1, 128>}, {transform_indices = @transform_5, window_bounds = array<i64: 1, 4, 512>}]} {
    %cst = arith.constant 0.000000e+00 : bf16
    %0 = vector.broadcast %cst : bf16 to vector<4x1x5x512xbf16>
    %c0 = arith.constant 0 : index
    %c0_0 = arith.constant 0 : index
    %c0_1 = arith.constant 0 : index
    %c0_2 = arith.constant 0 : index
    %1 = vector.load %arg7[%c0, %c0_0, %c0_1, %c0_2] : memref<4x5x5x512xbf16, #tpu.memory_space<vmem>>, vector<4x1x5x512xbf16>
    tpu.vector_store %arg7[%c0, %c0_0, %c0_1, %c0_2], %0 {strides = array<i32>} : memref<4x5x5x512xbf16, #tpu.memory_space<vmem>>, vector<4x1x5x512xbf16>,
    %cst_3 = arith.constant 0.000000e+00 : bf16
    %2 = vector.broadcast %cst_3 : bf16 to vector<4x5x1x512xbf16>
    %c0_4 = arith.constant 0 : index
    %c0_5 = arith.constant 0 : index
    %c0_6 = arith.constant 0 : index
    %c0_7 = arith.constant 0 : index
    %3 = vector.load %arg7[%c0_4, %c0_5, %c0_6, %c0_7] : memref<4x5x5x512xbf16, #tpu.memory_space<vmem>>, vector<4x5x1x512xbf16>
    tpu.vector_store %arg7[%c0_4, %c0_5, %c0_6, %c0_7], %2 {strides = array<i32>} : memref<4x5x5x512xbf16, #tpu.memory_space<vmem>>, vector<4x5x1x512xbf16>,
    %c0_8 = arith.constant 0 : index
    %c0_9 = arith.constant 0 : index
    %c0_10 = arith.constant 0 : index
    %c0_11 = arith.constant 0 : index
    %4 = vector.load %arg1[%c0_8, %c0_9, %c0_10, %c0_11] : memref<4x5x5x48xbf16, #tpu.memory_space<vmem>>, vector<4x5x5x48xbf16>
    %5 = vector.extract_strided_slice %4 {offsets = [0, 0, 0, 0], sizes = [4, 4, 4, 48], strides = [1, 1, 1, 1]} : vector<4x5x5x48xbf16> to vector<4x4x4x48xbf16>
    %6 = vector.extract_strided_slice %4 {offsets = [0, 0, 1, 0], sizes = [4, 4, 4, 48], strides = [1, 1, 1, 1]} : vector<4x5x5x48xbf16> to vector<4x4x4x48xbf16>
    %7 = vector.extract_strided_slice %4 {offsets = [0, 1, 0, 0], sizes = [4, 4, 4, 48], strides = [1, 1, 1, 1]} : vector<4x5x5x48xbf16> to vector<4x4x4x48xbf16>
    %8 = vector.extract_strided_slice %4 {offsets = [0, 1, 1, 0], sizes = [4, 4, 4, 48], strides = [1, 1, 1, 1]} : vector<4x5x5x48xbf16> to vector<4x4x4x48xbf16>
    %9 = tpu.concatenate %5, %6, %7, %8 in 3 : vector<4x4x4x48xbf16>, vector<4x4x4x48xbf16>, vector<4x4x4x48xbf16>, vector<4x4x4x48xbf16> -> vector<4x4x4x192xbf16>
    %10 = vector.shape_cast %9 : vector<4x4x4x192xbf16> to vector<64x192xbf16>
    %c0_12 = arith.constant 0 : index
    %c0_13 = arith.constant 0 : index
    %11 = vector.load %arg2[%c0_12, %c0_13] : memref<192x512xbf16, #tpu.memory_space<vmem>>, vector<192x512xbf16>
    %cst_14 = arith.constant dense<0.000000e+00> : vector<64x512xf32>
    %12 = tpu.matmul %10, %11, %cst_14 {dimension_numbers = #tpu.dot_dimension_numbers<[1], [0], [0], [1], [0, 0, 1, 1], [], []>} : vector<64x192xbf16>, vector<192x512xbf16>, vector<64x512xf32> -> vector<64x512xf32>
    %c0_15 = arith.constant 0 : index
    %c0_16 = arith.constant 0 : index
    %13 = vector.load %arg3[%c0_15, %c0_16] : memref<1x512xf32, #tpu.memory_space<vmem>>, vector<1x512xf32>
    %14 = vector.broadcast %13 : vector<1x512xf32> to vector<64x512xf32>
    %15 = arith.addf %12, %14 : vector<64x512xf32>
    %cst_17 = arith.constant 0.000000e+00 : f32
    %16 = vector.broadcast %cst_17 : f32 to vector<64x512xf32>
    %17 = arith.maximumf %15, %16 : vector<64x512xf32>
    %18 = vector.shape_cast %17 : vector<64x512xf32> to vector<4x4x4x512xf32>
    %19 = arith.truncf %18 : vector<4x4x4x512xf32> to vector<4x4x4x512xbf16>
    %c0_18 = arith.constant 0 : index
    %c1 = arith.constant 1 : index
    %c1_19 = arith.constant 1 : index
    %c0_20 = arith.constant 0 : index
    %20 = vector.load %arg7[%c0_18, %c1, %c1_19, %c0_20] : memref<4x5x5x512xbf16, #tpu.memory_space<vmem>>, vector<4x4x4x512xbf16>
    tpu.vector_store %arg7[%c0_18, %c1, %c1_19, %c0_20], %19 {strides = array<i32>} : memref<4x5x5x512xbf16, #tpu.memory_space<vmem>>, vector<4x4x4x512xbf16>,
    %c0_21 = arith.constant 0 : index
    %c0_22 = arith.constant 0 : index
    %c0_23 = arith.constant 0 : index
    %c0_24 = arith.constant 0 : index
    %21 = vector.load %arg7[%c0_21, %c0_22, %c0_23, %c0_24] : memref<4x5x5x512xbf16, #tpu.memory_space<vmem>>, vector<4x5x5x512xbf16>
    %22 = vector.extract_strided_slice %21 {offsets = [0, 0, 0, 0], sizes = [4, 4, 4, 512], strides = [1, 1, 1, 1]} : vector<4x5x5x512xbf16> to vector<4x4x4x512xbf16>
    %23 = vector.shape_cast %22 : vector<4x4x4x512xbf16> to vector<64x512xbf16>
    %c0_25 = arith.constant 0 : index
    %c0_26 = arith.constant 0 : index
    %c0_27 = arith.constant 0 : index
    %24 = vector.load %arg4[%c0_25, %c0_26, %c0_27] : memref<4x512x128xbf16, #tpu.memory_space<vmem>>, vector<1x512x128xbf16>
    %25 = vector.shape_cast %24 : vector<1x512x128xbf16> to vector<512x128xbf16>
    %cst_28 = arith.constant dense<0.000000e+00> : vector<64x128xf32>
    %26 = tpu.matmul %23, %25, %cst_28 {dimension_numbers = #tpu.dot_dimension_numbers<[1], [0], [0], [1], [0, 0, 1, 1], [], []>} : vector<64x512xbf16>, vector<512x128xbf16>, vector<64x128xf32> -> vector<64x128xf32>
    %27 = vector.extract_strided_slice %21 {offsets = [0, 0, 1, 0], sizes = [4, 4, 4, 512], strides = [1, 1, 1, 1]} : vector<4x5x5x512xbf16> to vector<4x4x4x512xbf16>
    %28 = vector.shape_cast %27 : vector<4x4x4x512xbf16> to vector<64x512xbf16>
    %c1_29 = arith.constant 1 : index
    %c0_30 = arith.constant 0 : index
    %c0_31 = arith.constant 0 : index
    %29 = vector.load %arg4[%c1_29, %c0_30, %c0_31] : memref<4x512x128xbf16, #tpu.memory_space<vmem>>, vector<1x512x128xbf16>
    %30 = vector.shape_cast %29 : vector<1x512x128xbf16> to vector<512x128xbf16>
    %cst_32 = arith.constant dense<0.000000e+00> : vector<64x128xf32>
    %31 = tpu.matmul %28, %30, %cst_32 {dimension_numbers = #tpu.dot_dimension_numbers<[1], [0], [0], [1], [0, 0, 1, 1], [], []>} : vector<64x512xbf16>, vector<512x128xbf16>, vector<64x128xf32> -> vector<64x128xf32>
    %32 = arith.addf %26, %31 : vector<64x128xf32>
    %33 = vector.extract_strided_slice %21 {offsets = [0, 1, 0, 0], sizes = [4, 4, 4, 512], strides = [1, 1, 1, 1]} : vector<4x5x5x512xbf16> to vector<4x4x4x512xbf16>
    %34 = vector.shape_cast %33 : vector<4x4x4x512xbf16> to vector<64x512xbf16>
    %c2 = arith.constant 2 : index
    %c0_33 = arith.constant 0 : index
    %c0_34 = arith.constant 0 : index
    %35 = vector.load %arg4[%c2, %c0_33, %c0_34] : memref<4x512x128xbf16, #tpu.memory_space<vmem>>, vector<1x512x128xbf16>
    %36 = vector.shape_cast %35 : vector<1x512x128xbf16> to vector<512x128xbf16>
    %cst_35 = arith.constant dense<0.000000e+00> : vector<64x128xf32>
    %37 = tpu.matmul %34, %36, %cst_35 {dimension_numbers = #tpu.dot_dimension_numbers<[1], [0], [0], [1], [0, 0, 1, 1], [], []>} : vector<64x512xbf16>, vector<512x128xbf16>, vector<64x128xf32> -> vector<64x128xf32>
    %38 = arith.addf %32, %37 : vector<64x128xf32>
    %39 = vector.extract_strided_slice %21 {offsets = [0, 1, 1, 0], sizes = [4, 4, 4, 512], strides = [1, 1, 1, 1]} : vector<4x5x5x512xbf16> to vector<4x4x4x512xbf16>
    %40 = vector.shape_cast %39 : vector<4x4x4x512xbf16> to vector<64x512xbf16>
    %c3 = arith.constant 3 : index
    %c0_36 = arith.constant 0 : index
    %c0_37 = arith.constant 0 : index
    %41 = vector.load %arg4[%c3, %c0_36, %c0_37] : memref<4x512x128xbf16, #tpu.memory_space<vmem>>, vector<1x512x128xbf16>
    %42 = vector.shape_cast %41 : vector<1x512x128xbf16> to vector<512x128xbf16>
    %cst_38 = arith.constant dense<0.000000e+00> : vector<64x128xf32>
    %43 = tpu.matmul %40, %42, %cst_38 {dimension_numbers = #tpu.dot_dimension_numbers<[1], [0], [0], [1], [0, 0, 1, 1], [], []>} : vector<64x512xbf16>, vector<512x128xbf16>, vector<64x128xf32> -> vector<64x128xf32>
    %44 = arith.addf %38, %43 : vector<64x128xf32>
    %c0_39 = arith.constant 0 : index
    %c0_40 = arith.constant 0 : index
    %45 = vector.load %arg5[%c0_39, %c0_40] : memref<1x128xf32, #tpu.memory_space<vmem>>, vector<1x128xf32>
    %46 = vector.broadcast %45 : vector<1x128xf32> to vector<64x128xf32>
    %47 = arith.addf %44, %46 : vector<64x128xf32>
    %cst_41 = arith.constant 0.000000e+00 : f32
    %48 = vector.broadcast %cst_41 : f32 to vector<64x128xf32>
    %49 = arith.maximumf %47, %48 : vector<64x128xf32>
    %50 = vector.shape_cast %49 : vector<64x128xf32> to vector<4x2x2x4x128xf32>
    %51 = vector.extract_strided_slice %50 {offsets = [0, 0, 0, 0, 0], sizes = [4, 2, 1, 4, 128], strides = [1, 1, 1, 1, 1]} : vector<4x2x2x4x128xf32> to vector<4x2x1x4x128xf32>
    %52 = vector.shape_cast %51 : vector<4x2x1x4x128xf32> to vector<4x2x4x128xf32>
    %53 = vector.extract_strided_slice %50 {offsets = [0, 0, 1, 0, 0], sizes = [4, 2, 1, 4, 128], strides = [1, 1, 1, 1, 1]} : vector<4x2x2x4x128xf32> to vector<4x2x1x4x128xf32>
    %54 = vector.shape_cast %53 : vector<4x2x1x4x128xf32> to vector<4x2x4x128xf32>
    %55 = arith.addf %52, %54 : vector<4x2x4x128xf32>
    %56 = vector.extract_strided_slice %55 {offsets = [0, 0, 0, 0], sizes = [4, 1, 1, 128], strides = [1, 1, 1, 1]} : vector<4x2x4x128xf32> to vector<4x1x1x128xf32>
    %57 = vector.shape_cast %56 : vector<4x1x1x128xf32> to vector<4x128xf32>
    %58 = vector.extract_strided_slice %55 {offsets = [0, 0, 1, 0], sizes = [4, 1, 1, 128], strides = [1, 1, 1, 1]} : vector<4x2x4x128xf32> to vector<4x1x1x128xf32>
    %59 = vector.shape_cast %58 : vector<4x1x1x128xf32> to vector<4x128xf32>
    %60 = arith.addf %57, %59 : vector<4x128xf32>
    %cst_42 = arith.constant 2.500000e-01 : f32
    %61 = vector.broadcast %cst_42 : f32 to vector<4x128xf32>
    %62 = arith.mulf %60, %61 : vector<4x128xf32>
    %63 = vector.extract_strided_slice %55 {offsets = [0, 0, 2, 0], sizes = [4, 1, 1, 128], strides = [1, 1, 1, 1]} : vector<4x2x4x128xf32> to vector<4x1x1x128xf32>
    %64 = vector.shape_cast %63 : vector<4x1x1x128xf32> to vector<4x128xf32>
    %65 = vector.extract_strided_slice %55 {offsets = [0, 0, 3, 0], sizes = [4, 1, 1, 128], strides = [1, 1, 1, 1]} : vector<4x2x4x128xf32> to vector<4x1x1x128xf32>
    %66 = vector.shape_cast %65 : vector<4x1x1x128xf32> to vector<4x128xf32>
    %67 = arith.addf %64, %66 : vector<4x128xf32>
    %cst_43 = arith.constant 2.500000e-01 : f32
    %68 = vector.broadcast %cst_43 : f32 to vector<4x128xf32>
    %69 = arith.mulf %67, %68 : vector<4x128xf32>
    %70 = vector.extract_strided_slice %55 {offsets = [0, 1, 0, 0], sizes = [4, 1, 1, 128], strides = [1, 1, 1, 1]} : vector<4x2x4x128xf32> to vector<4x1x1x128xf32>
    %71 = vector.shape_cast %70 : vector<4x1x1x128xf32> to vector<4x128xf32>
    %72 = vector.extract_strided_slice %55 {offsets = [0, 1, 1, 0], sizes = [4, 1, 1, 128], strides = [1, 1, 1, 1]} : vector<4x2x4x128xf32> to vector<4x1x1x128xf32>
    %73 = vector.shape_cast %72 : vector<4x1x1x128xf32> to vector<4x128xf32>
    %74 = arith.addf %71, %73 : vector<4x128xf32>
    %cst_44 = arith.constant 2.500000e-01 : f32
    %75 = vector.broadcast %cst_44 : f32 to vector<4x128xf32>
    %76 = arith.mulf %74, %75 : vector<4x128xf32>
    %77 = vector.extract_strided_slice %55 {offsets = [0, 1, 2, 0], sizes = [4, 1, 1, 128], strides = [1, 1, 1, 1]} : vector<4x2x4x128xf32> to vector<4x1x1x128xf32>
    %78 = vector.shape_cast %77 : vector<4x1x1x128xf32> to vector<4x128xf32>
    %79 = vector.extract_strided_slice %55 {offsets = [0, 1, 3, 0], sizes = [4, 1, 1, 128], strides = [1, 1, 1, 1]} : vector<4x2x4x128xf32> to vector<4x1x1x128xf32>
    %80 = vector.shape_cast %79 : vector<4x1x1x128xf32> to vector<4x128xf32>
    %81 = arith.addf %78, %80 : vector<4x128xf32>
    %cst_45 = arith.constant 2.500000e-01 : f32
    %82 = vector.broadcast %cst_45 : f32 to vector<4x128xf32>
    %83 = arith.mulf %81, %82 : vector<4x128xf32>
    %84 = tpu.concatenate %62, %69, %76, %83 in 1 : vector<4x128xf32>, vector<4x128xf32>, vector<4x128xf32>, vector<4x128xf32> -> vector<4x512xf32>
    %85 = arith.truncf %84 : vector<4x512xf32> to vector<4x512xbf16>
    %c0_46 = arith.constant 0 : index
    %c0_47 = arith.constant 0 : index
    %c0_48 = arith.constant 0 : index
    %86 = vector.load %arg6[%c0_46, %c0_47, %c0_48] : memref<1x4x512xbf16, #tpu.memory_space<vmem>>, vector<1x4x512xbf16>
    %87 = vector.shape_cast %86 : vector<1x4x512xbf16> to vector<4x512xbf16>
    %88 = vector.shape_cast %85 : vector<4x512xbf16> to vector<1x4x512xbf16>
    tpu.vector_store %arg6[%c0_46, %c0_47, %c0_48], %88 {strides = array<i32>} : memref<1x4x512xbf16, #tpu.memory_space<vmem>>, vector<1x4x512xbf16>,
    return
  }
  func.func @transform_0(%arg0: i32) -> (i32, i32, i32, i32) {
    %c0_i32 = arith.constant 0 : i32
    %c0_i32_0 = arith.constant 0 : i32
    %c0_i32_1 = arith.constant 0 : i32
    %c0_i32_2 = arith.constant 0 : i32
    return %arg0, %c0_i32, %c0_i32_0, %c0_i32_1 : i32, i32, i32, i32
  }
  func.func @transform_1(%arg0: i32) -> (i32, i32) {
    %c0_i32 = arith.constant 0 : i32
    %c0_i32_0 = arith.constant 0 : i32
    %c0_i32_1 = arith.constant 0 : i32
    return %c0_i32, %c0_i32_0 : i32, i32
  }
  func.func @transform_2(%arg0: i32) -> (i32, i32) {
    %c0_i32 = arith.constant 0 : i32
    %c0_i32_0 = arith.constant 0 : i32
    %c0_i32_1 = arith.constant 0 : i32
    return %c0_i32, %c0_i32_0 : i32, i32
  }
  func.func @transform_3(%arg0: i32) -> (i32, i32, i32) {
    %c0_i32 = arith.constant 0 : i32
    %c0_i32_0 = arith.constant 0 : i32
    %c0_i32_1 = arith.constant 0 : i32
    %c0_i32_2 = arith.constant 0 : i32
    return %c0_i32, %c0_i32_0, %c0_i32_1 : i32, i32, i32
  }
  func.func @transform_4(%arg0: i32) -> (i32, i32) {
    %c0_i32 = arith.constant 0 : i32
    %c0_i32_0 = arith.constant 0 : i32
    %c0_i32_1 = arith.constant 0 : i32
    return %c0_i32, %c0_i32_0 : i32, i32
  }
  func.func @transform_5(%arg0: i32) -> (i32, i32, i32) {
    %c0_i32 = arith.constant 0 : i32
    %c0_i32_0 = arith.constant 0 : i32
    %c0_i32_1 = arith.constant 0 : i32
    return %arg0, %c0_i32, %c0_i32_0 : i32, i32, i32
  }
}

module attributes {stable_mosaic.version = 11 : i64} {
  func.func @_stage_kernel(%arg0: i32, %arg1: memref<1x16x128xbf16, #tpu.memory_space<vmem>>, %arg2: memref<1x8x128xbf16, #tpu.memory_space<vmem>>, %arg3: memref<1x1x8xf32, #tpu.memory_space<vmem>>, %arg4: memref<128x128xbf16, #tpu.memory_space<vmem>>, %arg5: memref<1x128xf32, #tpu.memory_space<vmem>>, %arg6: memref<384x128xbf16, #tpu.memory_space<vmem>>, %arg7: memref<1x128xf32, #tpu.memory_space<vmem>>, %arg8: memref<128x128xbf16, #tpu.memory_space<vmem>>, %arg9: memref<1x128xf32, #tpu.memory_space<vmem>>, %arg10: memref<1x1x128xf32, #tpu.memory_space<vmem>>) attributes {dimension_semantics = [#tpu.dimension_semantics<parallel>], iteration_bounds = array<i64: 2>, scalar_prefetch = 0 : i64, scratch_operands = 0 : i64, tpu.core_type = #tpu.core_type<tc>, window_params = [{transform_indices = @transform_0, window_bounds = array<i64: 1, 16, 128>}, {transform_indices = @transform_1, window_bounds = array<i64: 1, 8, 128>}, {transform_indices = @transform_2, window_bounds = array<i64: 1, 1, 8>}, {pipeline_mode = #tpu.pipeline_mode<synchronous>, transform_indices = @transform_3, window_bounds = array<i64: 128, 128>}, {pipeline_mode = #tpu.pipeline_mode<synchronous>, transform_indices = @transform_4, window_bounds = array<i64: 1, 128>}, {pipeline_mode = #tpu.pipeline_mode<synchronous>, transform_indices = @transform_5, window_bounds = array<i64: 384, 128>}, {pipeline_mode = #tpu.pipeline_mode<synchronous>, transform_indices = @transform_6, window_bounds = array<i64: 1, 128>}, {pipeline_mode = #tpu.pipeline_mode<synchronous>, transform_indices = @transform_7, window_bounds = array<i64: 128, 128>}, {pipeline_mode = #tpu.pipeline_mode<synchronous>, transform_indices = @transform_8, window_bounds = array<i64: 1, 128>}, {transform_indices = @transform_9, window_bounds = array<i64: 1, 1, 128>}]} {
    %c0 = arith.constant 0 : index
    %c0_0 = arith.constant 0 : index
    %c0_1 = arith.constant 0 : index
    %0 = vector.load %arg1[%c0, %c0_0, %c0_1] : memref<1x16x128xbf16, #tpu.memory_space<vmem>>, vector<1x16x128xbf16>
    %1 = vector.shape_cast %0 : vector<1x16x128xbf16> to vector<16x128xbf16>
    %c0_2 = arith.constant 0 : index
    %c0_3 = arith.constant 0 : index
    %c0_4 = arith.constant 0 : index
    %2 = vector.load %arg2[%c0_2, %c0_3, %c0_4] : memref<1x8x128xbf16, #tpu.memory_space<vmem>>, vector<1x8x128xbf16>
    %3 = vector.shape_cast %2 : vector<1x8x128xbf16> to vector<8x128xbf16>
    %c0_5 = arith.constant 0 : index
    %c0_6 = arith.constant 0 : index
    %c0_7 = arith.constant 0 : index
    %4 = vector.load %arg3[%c0_5, %c0_6, %c0_7] : memref<1x1x8xf32, #tpu.memory_space<vmem>>, vector<1x1x8xf32>
    %5 = vector.shape_cast %4 : vector<1x1x8xf32> to vector<1x8xf32>
    %c0_8 = arith.constant 0 : index
    %c0_9 = arith.constant 0 : index
    %6 = vector.load %arg4[%c0_8, %c0_9] : memref<128x128xbf16, #tpu.memory_space<vmem>>, vector<128x128xbf16>
    %cst = arith.constant dense<0.000000e+00> : vector<16x128xf32>
    %7 = tpu.matmul %1, %6, %cst {dimension_numbers = #tpu.dot_dimension_numbers<[1], [0], [0], [1], [0, 0, 1, 1], [], []>} : vector<16x128xbf16>, vector<128x128xbf16>, vector<16x128xf32> -> vector<16x128xf32>
    %c0_10 = arith.constant 0 : index
    %c0_11 = arith.constant 0 : index
    %8 = vector.load %arg5[%c0_10, %c0_11] : memref<1x128xf32, #tpu.memory_space<vmem>>, vector<1x128xf32>
    %9 = vector.broadcast %8 : vector<1x128xf32> to vector<16x128xf32>
    %10 = arith.addf %7, %9 : vector<16x128xf32>
    %cst_12 = arith.constant 0.000000e+00 : f32
    %11 = vector.broadcast %cst_12 : f32 to vector<16x128xf32>
    %12 = arith.maximumf %10, %11 : vector<16x128xf32>
    %13 = arith.truncf %12 : vector<16x128xf32> to vector<16x128xbf16>
    "tpu.trace_start"() <{level = 10 : i32, message = "me,le->ml"}> : () -> ()
    %cst_13 = arith.constant dense<0.000000e+00> : vector<16x8xf32>
    %14 = tpu.matmul %13, %3, %cst_13 {dimension_numbers = #tpu.dot_dimension_numbers<[1], [1], [0], [0], [0, 0, 1, 0], [], []>} : vector<16x128xbf16>, vector<8x128xbf16>, vector<16x8xf32> -> vector<16x8xf32>
    %cst_14 = arith.constant 0.000000e+00 : f32
    "tpu.trace_stop"() : () -> ()
    %15 = vector.broadcast %cst_14 : f32 to vector<1x8xf32>
    %16 = arith.cmpf ogt, %5, %15 : vector<1x8xf32>
    %cst_15 = arith.constant -1.000000e+30 : f32
    %17 = vector.shape_cast %16 : vector<1x8xi1> to vector<1x8xi1>
    %18 = vector.broadcast %17 : vector<1x8xi1> to vector<16x8xi1>
    %19 = vector.broadcast %cst_15 : f32 to vector<16x8xf32>
    %20 = arith.select %18, %14, %19 : vector<16x8xi1>, vector<16x8xf32>
    %cst_16 = arith.constant dense<0xFF800000> : vector<16xf32>
    %21 = vector.multi_reduction <maximumf>, %20, %cst_16 [1] : vector<16x8xf32> to vector<16xf32>
    %22 = vector.shape_cast %21 : vector<16xf32> to vector<16x1xf32>
    %23 = vector.broadcast %22 : vector<16x1xf32> to vector<16x8xf32>
    %24 = arith.subf %20, %23 : vector<16x8xf32>
    %25 = math.exp %24 : vector<16x8xf32>
    %cst_17 = arith.constant dense<0.000000e+00> : vector<16xf32>
    %26 = vector.multi_reduction <add>, %25, %cst_17 [1] : vector<16x8xf32> to vector<16xf32>
    %27 = vector.shape_cast %26 : vector<16xf32> to vector<16x1xf32>
    %28 = tpu.reciprocal %27 {approx = true} : vector<16x1xf32> -> vector<16x1xf32>
    %29 = vector.broadcast %28 : vector<16x1xf32> to vector<16x8xf32>
    %30 = arith.mulf %25, %29 : vector<16x8xf32>
    %31 = arith.truncf %30 : vector<16x8xf32> to vector<16x8xbf16>
    %cst_18 = arith.constant dense<0.000000e+00> : vector<16x128xf32>
    %32 = tpu.matmul %31, %3, %cst_18 {dimension_numbers = #tpu.dot_dimension_numbers<[1], [0], [0], [1], [0, 0, 1, 1], [], []>} : vector<16x8xbf16>, vector<8x128xbf16>, vector<16x128xf32> -> vector<16x128xf32>
    %33 = arith.mulf %12, %32 : vector<16x128xf32>
    %34 = tpu.concatenate %12, %32, %33 in 1 : vector<16x128xf32>, vector<16x128xf32>, vector<16x128xf32> -> vector<16x384xf32>
    %35 = arith.truncf %34 : vector<16x384xf32> to vector<16x384xbf16>
    %c0_19 = arith.constant 0 : index
    %c0_20 = arith.constant 0 : index
    %36 = vector.load %arg6[%c0_19, %c0_20] : memref<384x128xbf16, #tpu.memory_space<vmem>>, vector<384x128xbf16>
    %cst_21 = arith.constant dense<0.000000e+00> : vector<16x128xf32>
    %37 = tpu.matmul %35, %36, %cst_21 {dimension_numbers = #tpu.dot_dimension_numbers<[1], [0], [0], [1], [0, 0, 1, 1], [], []>} : vector<16x384xbf16>, vector<384x128xbf16>, vector<16x128xf32> -> vector<16x128xf32>
    %c0_22 = arith.constant 0 : index
    %c0_23 = arith.constant 0 : index
    %38 = vector.load %arg7[%c0_22, %c0_23] : memref<1x128xf32, #tpu.memory_space<vmem>>, vector<1x128xf32>
    %39 = vector.broadcast %38 : vector<1x128xf32> to vector<16x128xf32>
    %40 = arith.addf %37, %39 : vector<16x128xf32>
    %cst_24 = arith.constant 0.000000e+00 : f32
    %41 = vector.broadcast %cst_24 : f32 to vector<16x128xf32>
    %42 = arith.maximumf %40, %41 : vector<16x128xf32>
    %cst_25 = arith.constant dense<0.000000e+00> : vector<128xf32>
    %43 = vector.multi_reduction <add>, %42, %cst_25 [0] : vector<16x128xf32> to vector<128xf32>
    %44 = vector.shape_cast %43 : vector<128xf32> to vector<1x128xf32>
    %cst_26 = arith.constant 6.250000e-02 : f32
    %45 = vector.broadcast %cst_26 : f32 to vector<1x128xf32>
    %46 = arith.mulf %44, %45 : vector<1x128xf32>
    %47 = arith.truncf %46 : vector<1x128xf32> to vector<1x128xbf16>
    %c0_27 = arith.constant 0 : index
    %c0_28 = arith.constant 0 : index
    %48 = vector.load %arg8[%c0_27, %c0_28] : memref<128x128xbf16, #tpu.memory_space<vmem>>, vector<128x128xbf16>
    %cst_29 = arith.constant dense<0.000000e+00> : vector<1x128xf32>
    %49 = tpu.matmul %47, %48, %cst_29 {dimension_numbers = #tpu.dot_dimension_numbers<[1], [0], [0], [1], [0, 0, 1, 1], [], []>} : vector<1x128xbf16>, vector<128x128xbf16>, vector<1x128xf32> -> vector<1x128xf32>
    %c0_30 = arith.constant 0 : index
    %c0_31 = arith.constant 0 : index
    %50 = vector.load %arg9[%c0_30, %c0_31] : memref<1x128xf32, #tpu.memory_space<vmem>>, vector<1x128xf32>
    %51 = arith.addf %49, %50 : vector<1x128xf32>
    %c0_32 = arith.constant 0 : index
    %c0_33 = arith.constant 0 : index
    %c0_34 = arith.constant 0 : index
    %52 = vector.load %arg10[%c0_32, %c0_33, %c0_34] : memref<1x1x128xf32, #tpu.memory_space<vmem>>, vector<1x1x128xf32>
    %53 = vector.shape_cast %52 : vector<1x1x128xf32> to vector<1x128xf32>
    %54 = vector.shape_cast %51 : vector<1x128xf32> to vector<1x1x128xf32>
    tpu.vector_store %arg10[%c0_32, %c0_33, %c0_34], %54 {strides = array<i32>} : memref<1x1x128xf32, #tpu.memory_space<vmem>>, vector<1x1x128xf32>,
    return
  }
  func.func @transform_0(%arg0: i32) -> (i32, i32, i32) {
    %c0_i32 = arith.constant 0 : i32
    %c0_i32_0 = arith.constant 0 : i32
    %c0_i32_1 = arith.constant 0 : i32
    return %arg0, %c0_i32, %c0_i32_0 : i32, i32, i32
  }
  func.func @transform_1(%arg0: i32) -> (i32, i32, i32) {
    %c0_i32 = arith.constant 0 : i32
    %c0_i32_0 = arith.constant 0 : i32
    %c0_i32_1 = arith.constant 0 : i32
    return %arg0, %c0_i32, %c0_i32_0 : i32, i32, i32
  }
  func.func @transform_2(%arg0: i32) -> (i32, i32, i32) {
    %c0_i32 = arith.constant 0 : i32
    %c0_i32_0 = arith.constant 0 : i32
    %c0_i32_1 = arith.constant 0 : i32
    return %arg0, %c0_i32, %c0_i32_0 : i32, i32, i32
  }
  func.func @transform_3(%arg0: i32) -> (i32, i32) {
    %c0_i32 = arith.constant 0 : i32
    %c0_i32_0 = arith.constant 0 : i32
    %c0_i32_1 = arith.constant 0 : i32
    return %c0_i32, %c0_i32_0 : i32, i32
  }
  func.func @transform_4(%arg0: i32) -> (i32, i32) {
    %c0_i32 = arith.constant 0 : i32
    %c0_i32_0 = arith.constant 0 : i32
    %c0_i32_1 = arith.constant 0 : i32
    return %c0_i32, %c0_i32_0 : i32, i32
  }
  func.func @transform_5(%arg0: i32) -> (i32, i32) {
    %c0_i32 = arith.constant 0 : i32
    %c0_i32_0 = arith.constant 0 : i32
    %c0_i32_1 = arith.constant 0 : i32
    return %c0_i32, %c0_i32_0 : i32, i32
  }
  func.func @transform_6(%arg0: i32) -> (i32, i32) {
    %c0_i32 = arith.constant 0 : i32
    %c0_i32_0 = arith.constant 0 : i32
    %c0_i32_1 = arith.constant 0 : i32
    return %c0_i32, %c0_i32_0 : i32, i32
  }
  func.func @transform_7(%arg0: i32) -> (i32, i32) {
    %c0_i32 = arith.constant 0 : i32
    %c0_i32_0 = arith.constant 0 : i32
    %c0_i32_1 = arith.constant 0 : i32
    return %c0_i32, %c0_i32_0 : i32, i32
  }
  func.func @transform_8(%arg0: i32) -> (i32, i32) {
    %c0_i32 = arith.constant 0 : i32
    %c0_i32_0 = arith.constant 0 : i32
    %c0_i32_1 = arith.constant 0 : i32
    return %c0_i32, %c0_i32_0 : i32, i32
  }
  func.func @transform_9(%arg0: i32) -> (i32, i32, i32) {
    %c0_i32 = arith.constant 0 : i32
    %c0_i32_0 = arith.constant 0 : i32
    %c0_i32_1 = arith.constant 0 : i32
    return %arg0, %c0_i32, %c0_i32_0 : i32, i32, i32
  }
}

module attributes {stable_mosaic.version = 11 : i64} {
  func.func @_lstm_kernel(%arg0: memref<8x2x128xbf16, #tpu.memory_space<vmem>>, %arg1: memref<8x2x1xf32, #tpu.memory_space<vmem>>, %arg2: memref<128x128xbf16, #tpu.memory_space<vmem>>, %arg3: memref<32x128xbf16, #tpu.memory_space<vmem>>, %arg4: memref<1x128xf32, #tpu.memory_space<vmem>>, %arg5: memref<8x2x128xbf16, #tpu.memory_space<vmem>>) attributes {dimension_semantics = [], scalar_prefetch = 0 : i64, scratch_operands = 0 : i64, tpu.core_type = #tpu.core_type<tc>} {
    %c0 = arith.constant 0 : index
    %c0_0 = arith.constant 0 : index
    %c0_1 = arith.constant 0 : index
    %0 = vector.load %arg0[%c0, %c0_0, %c0_1] : memref<8x2x128xbf16, #tpu.memory_space<vmem>>, vector<8x2x128xbf16>
    %c0_2 = arith.constant 0 : index
    %c0_3 = arith.constant 0 : index
    %c0_4 = arith.constant 0 : index
    %1 = vector.load %arg1[%c0_2, %c0_3, %c0_4] : memref<8x2x1xf32, #tpu.memory_space<vmem>>, vector<8x2x1xf32>
    %c0_5 = arith.constant 0 : index
    %c0_6 = arith.constant 0 : index
    %2 = vector.load %arg3[%c0_5, %c0_6] : memref<32x128xbf16, #tpu.memory_space<vmem>>, vector<32x128xbf16>
    %3 = vector.shape_cast %0 : vector<8x2x128xbf16> to vector<16x128xbf16>
    %c0_7 = arith.constant 0 : index
    %c0_8 = arith.constant 0 : index
    %4 = vector.load %arg2[%c0_7, %c0_8] : memref<128x128xbf16, #tpu.memory_space<vmem>>, vector<128x128xbf16>
    %cst = arith.constant dense<0.000000e+00> : vector<16x128xf32>
    %5 = tpu.matmul %3, %4, %cst {dimension_numbers = #tpu.dot_dimension_numbers<[1], [0], [0], [1], [0, 0, 1, 1], [], []>} : vector<16x128xbf16>, vector<128x128xbf16>, vector<16x128xf32> -> vector<16x128xf32>
    %c0_9 = arith.constant 0 : index
    %c0_10 = arith.constant 0 : index
    %6 = vector.load %arg4[%c0_9, %c0_10] : memref<1x128xf32, #tpu.memory_space<vmem>>, vector<1x128xf32>
    %7 = vector.broadcast %6 : vector<1x128xf32> to vector<16x128xf32>
    %8 = arith.addf %5, %7 : vector<16x128xf32>
    %9 = vector.shape_cast %8 : vector<16x128xf32> to vector<8x2x128xf32>
    %cst_11 = arith.constant 0.000000e+00 : f32
    %10 = vector.broadcast %cst_11 : f32 to vector<2x32xf32>
    %cst_12 = arith.constant 0.000000e+00 : f32
    %11 = vector.broadcast %cst_12 : f32 to vector<2x32xf32>
    %12 = vector.extract_strided_slice %9 {offsets = [0, 0, 0], sizes = [1, 2, 128], strides = [1, 1, 1]} : vector<8x2x128xf32> to vector<1x2x128xf32>
    %13 = vector.shape_cast %12 : vector<1x2x128xf32> to vector<2x128xf32>
    %14 = arith.truncf %10 : vector<2x32xf32> to vector<2x32xbf16>
    %cst_13 = arith.constant dense<0.000000e+00> : vector<2x128xf32>
    %15 = tpu.matmul %14, %2, %cst_13 {dimension_numbers = #tpu.dot_dimension_numbers<[1], [0], [0], [1], [0, 0, 1, 1], [], []>} : vector<2x32xbf16>, vector<32x128xbf16>, vector<2x128xf32> -> vector<2x128xf32>
    %16 = arith.addf %13, %15 : vector<2x128xf32>
    %17 = vector.extract_strided_slice %16 {offsets = [0, 0], sizes = [2, 32], strides = [1, 1]} : vector<2x128xf32> to vector<2x32xf32>
    %18 = arith.negf %17 : vector<2x32xf32>
    %19 = math.exp %18 : vector<2x32xf32>
    %cst_14 = arith.constant 1.000000e+00 : f32
    %20 = vector.broadcast %cst_14 : f32 to vector<2x32xf32>
    %21 = arith.addf %20, %19 : vector<2x32xf32>
    %22 = arith.divf %20, %21 : vector<2x32xf32>
    %23 = vector.extract_strided_slice %16 {offsets = [0, 32], sizes = [2, 32], strides = [1, 1]} : vector<2x128xf32> to vector<2x32xf32>
    %24 = arith.negf %23 : vector<2x32xf32>
    %25 = math.exp %24 : vector<2x32xf32>
    %cst_15 = arith.constant 1.000000e+00 : f32
    %26 = vector.broadcast %cst_15 : f32 to vector<2x32xf32>
    %27 = arith.addf %26, %25 : vector<2x32xf32>
    %28 = arith.divf %26, %27 : vector<2x32xf32>
    %29 = vector.extract_strided_slice %16 {offsets = [0, 64], sizes = [2, 32], strides = [1, 1]} : vector<2x128xf32> to vector<2x32xf32>
    %30 = math.tanh %29 : vector<2x32xf32>
    %31 = vector.extract_strided_slice %16 {offsets = [0, 96], sizes = [2, 32], strides = [1, 1]} : vector<2x128xf32> to vector<2x32xf32>
    %32 = arith.negf %31 : vector<2x32xf32>
    %33 = math.exp %32 : vector<2x32xf32>
    %cst_16 = arith.constant 1.000000e+00 : f32
    %34 = vector.broadcast %cst_16 : f32 to vector<2x32xf32>
    %35 = arith.addf %34, %33 : vector<2x32xf32>
    %36 = arith.divf %34, %35 : vector<2x32xf32>
    %37 = arith.mulf %28, %11 : vector<2x32xf32>
    %38 = arith.mulf %22, %30 : vector<2x32xf32>
    %39 = arith.addf %37, %38 : vector<2x32xf32>
    %40 = math.tanh %39 : vector<2x32xf32>
    %41 = arith.mulf %36, %40 : vector<2x32xf32>
    %42 = vector.extract_strided_slice %1 {offsets = [0, 0, 0], sizes = [1, 2, 1], strides = [1, 1, 1]} : vector<8x2x1xf32> to vector<1x2x1xf32>
    %43 = vector.shape_cast %42 : vector<1x2x1xf32> to vector<2x1xf32>
    %44 = vector.broadcast %43 : vector<2x1xf32> to vector<2x32xf32>
    %45 = arith.mulf %44, %41 : vector<2x32xf32>
    %cst_17 = arith.constant 1.000000e+00 : f32
    %46 = vector.broadcast %cst_17 : f32 to vector<2x1xf32>
    %47 = arith.subf %46, %43 : vector<2x1xf32>
    %48 = vector.broadcast %47 : vector<2x1xf32> to vector<2x32xf32>
    %49 = arith.mulf %48, %10 : vector<2x32xf32>
    %50 = arith.addf %45, %49 : vector<2x32xf32>
    %51 = vector.broadcast %43 : vector<2x1xf32> to vector<2x32xf32>
    %52 = arith.mulf %51, %39 : vector<2x32xf32>
    %cst_18 = arith.constant 1.000000e+00 : f32
    %53 = vector.broadcast %cst_18 : f32 to vector<2x1xf32>
    %54 = arith.subf %53, %43 : vector<2x1xf32>
    %55 = vector.broadcast %54 : vector<2x1xf32> to vector<2x32xf32>
    %56 = arith.mulf %55, %11 : vector<2x32xf32>
    %57 = arith.addf %52, %56 : vector<2x32xf32>
    %58 = vector.broadcast %43 : vector<2x1xf32> to vector<2x32xf32>
    %59 = arith.mulf %58, %41 : vector<2x32xf32>
    %60 = arith.truncf %59 : vector<2x32xf32> to vector<2x32xbf16>
    %61 = vector.extract_strided_slice %9 {offsets = [1, 0, 0], sizes = [1, 2, 128], strides = [1, 1, 1]} : vector<8x2x128xf32> to vector<1x2x128xf32>
    %62 = vector.shape_cast %61 : vector<1x2x128xf32> to vector<2x128xf32>
    %63 = arith.truncf %50 : vector<2x32xf32> to vector<2x32xbf16>
    %cst_19 = arith.constant dense<0.000000e+00> : vector<2x128xf32>
    %64 = tpu.matmul %63, %2, %cst_19 {dimension_numbers = #tpu.dot_dimension_numbers<[1], [0], [0], [1], [0, 0, 1, 1], [], []>} : vector<2x32xbf16>, vector<32x128xbf16>, vector<2x128xf32> -> vector<2x128xf32>
    %65 = arith.addf %62, %64 : vector<2x128xf32>
    %66 = vector.extract_strided_slice %65 {offsets = [0, 0], sizes = [2, 32], strides = [1, 1]} : vector<2x128xf32> to vector<2x32xf32>
    %67 = arith.negf %66 : vector<2x32xf32>
    %68 = math.exp %67 : vector<2x32xf32>
    %cst_20 = arith.constant 1.000000e+00 : f32
    %69 = vector.broadcast %cst_20 : f32 to vector<2x32xf32>
    %70 = arith.addf %69, %68 : vector<2x32xf32>
    %71 = arith.divf %69, %70 : vector<2x32xf32>
    %72 = vector.extract_strided_slice %65 {offsets = [0, 32], sizes = [2, 32], strides = [1, 1]} : vector<2x128xf32> to vector<2x32xf32>
    %73 = arith.negf %72 : vector<2x32xf32>
    %74 = math.exp %73 : vector<2x32xf32>
    %cst_21 = arith.constant 1.000000e+00 : f32
    %75 = vector.broadcast %cst_21 : f32 to vector<2x32xf32>
    %76 = arith.addf %75, %74 : vector<2x32xf32>
    %77 = arith.divf %75, %76 : vector<2x32xf32>
    %78 = vector.extract_strided_slice %65 {offsets = [0, 64], sizes = [2, 32], strides = [1, 1]} : vector<2x128xf32> to vector<2x32xf32>
    %79 = math.tanh %78 : vector<2x32xf32>
    %80 = vector.extract_strided_slice %65 {offsets = [0, 96], sizes = [2, 32], strides = [1, 1]} : vector<2x128xf32> to vector<2x32xf32>
    %81 = arith.negf %80 : vector<2x32xf32>
    %82 = math.exp %81 : vector<2x32xf32>
    %cst_22 = arith.constant 1.000000e+00 : f32
    %83 = vector.broadcast %cst_22 : f32 to vector<2x32xf32>
    %84 = arith.addf %83, %82 : vector<2x32xf32>
    %85 = arith.divf %83, %84 : vector<2x32xf32>
    %86 = arith.mulf %77, %57 : vector<2x32xf32>
    %87 = arith.mulf %71, %79 : vector<2x32xf32>
    %88 = arith.addf %86, %87 : vector<2x32xf32>
    %89 = math.tanh %88 : vector<2x32xf32>
    %90 = arith.mulf %85, %89 : vector<2x32xf32>
    %91 = vector.extract_strided_slice %1 {offsets = [1, 0, 0], sizes = [1, 2, 1], strides = [1, 1, 1]} : vector<8x2x1xf32> to vector<1x2x1xf32>
    %92 = vector.shape_cast %91 : vector<1x2x1xf32> to vector<2x1xf32>
    %93 = vector.broadcast %92 : vector<2x1xf32> to vector<2x32xf32>
    %94 = arith.mulf %93, %90 : vector<2x32xf32>
    %cst_23 = arith.constant 1.000000e+00 : f32
    %95 = vector.broadcast %cst_23 : f32 to vector<2x1xf32>
    %96 = arith.subf %95, %92 : vector<2x1xf32>
    %97 = vector.broadcast %96 : vector<2x1xf32> to vector<2x32xf32>
    %98 = arith.mulf %97, %50 : vector<2x32xf32>
    %99 = arith.addf %94, %98 : vector<2x32xf32>
    %100 = vector.broadcast %92 : vector<2x1xf32> to vector<2x32xf32>
    %101 = arith.mulf %100, %88 : vector<2x32xf32>
    %cst_24 = arith.constant 1.000000e+00 : f32
    %102 = vector.broadcast %cst_24 : f32 to vector<2x1xf32>
    %103 = arith.subf %102, %92 : vector<2x1xf32>
    %104 = vector.broadcast %103 : vector<2x1xf32> to vector<2x32xf32>
    %105 = arith.mulf %104, %57 : vector<2x32xf32>
    %106 = arith.addf %101, %105 : vector<2x32xf32>
    %107 = vector.broadcast %92 : vector<2x1xf32> to vector<2x32xf32>
    %108 = arith.mulf %107, %90 : vector<2x32xf32>
    %109 = arith.truncf %108 : vector<2x32xf32> to vector<2x32xbf16>
    %110 = vector.extract_strided_slice %9 {offsets = [2, 0, 0], sizes = [1, 2, 128], strides = [1, 1, 1]} : vector<8x2x128xf32> to vector<1x2x128xf32>
    %111 = vector.shape_cast %110 : vector<1x2x128xf32> to vector<2x128xf32>
    %112 = arith.truncf %99 : vector<2x32xf32> to vector<2x32xbf16>
    %cst_25 = arith.constant dense<0.000000e+00> : vector<2x128xf32>
    %113 = tpu.matmul %112, %2, %cst_25 {dimension_numbers = #tpu.dot_dimension_numbers<[1], [0], [0], [1], [0, 0, 1, 1], [], []>} : vector<2x32xbf16>, vector<32x128xbf16>, vector<2x128xf32> -> vector<2x128xf32>
    %114 = arith.addf %111, %113 : vector<2x128xf32>
    %115 = vector.extract_strided_slice %114 {offsets = [0, 0], sizes = [2, 32], strides = [1, 1]} : vector<2x128xf32> to vector<2x32xf32>
    %116 = arith.negf %115 : vector<2x32xf32>
    %117 = math.exp %116 : vector<2x32xf32>
    %cst_26 = arith.constant 1.000000e+00 : f32
    %118 = vector.broadcast %cst_26 : f32 to vector<2x32xf32>
    %119 = arith.addf %118, %117 : vector<2x32xf32>
    %120 = arith.divf %118, %119 : vector<2x32xf32>
    %121 = vector.extract_strided_slice %114 {offsets = [0, 32], sizes = [2, 32], strides = [1, 1]} : vector<2x128xf32> to vector<2x32xf32>
    %122 = arith.negf %121 : vector<2x32xf32>
    %123 = math.exp %122 : vector<2x32xf32>
    %cst_27 = arith.constant 1.000000e+00 : f32
    %124 = vector.broadcast %cst_27 : f32 to vector<2x32xf32>
    %125 = arith.addf %124, %123 : vector<2x32xf32>
    %126 = arith.divf %124, %125 : vector<2x32xf32>
    %127 = vector.extract_strided_slice %114 {offsets = [0, 64], sizes = [2, 32], strides = [1, 1]} : vector<2x128xf32> to vector<2x32xf32>
    %128 = math.tanh %127 : vector<2x32xf32>
    %129 = vector.extract_strided_slice %114 {offsets = [0, 96], sizes = [2, 32], strides = [1, 1]} : vector<2x128xf32> to vector<2x32xf32>
    %130 = arith.negf %129 : vector<2x32xf32>
    %131 = math.exp %130 : vector<2x32xf32>
    %cst_28 = arith.constant 1.000000e+00 : f32
    %132 = vector.broadcast %cst_28 : f32 to vector<2x32xf32>
    %133 = arith.addf %132, %131 : vector<2x32xf32>
    %134 = arith.divf %132, %133 : vector<2x32xf32>
    %135 = arith.mulf %126, %106 : vector<2x32xf32>
    %136 = arith.mulf %120, %128 : vector<2x32xf32>
    %137 = arith.addf %135, %136 : vector<2x32xf32>
    %138 = math.tanh %137 : vector<2x32xf32>
    %139 = arith.mulf %134, %138 : vector<2x32xf32>
    %140 = vector.extract_strided_slice %1 {offsets = [2, 0, 0], sizes = [1, 2, 1], strides = [1, 1, 1]} : vector<8x2x1xf32> to vector<1x2x1xf32>
    %141 = vector.shape_cast %140 : vector<1x2x1xf32> to vector<2x1xf32>
    %142 = vector.broadcast %141 : vector<2x1xf32> to vector<2x32xf32>
    %143 = arith.mulf %142, %139 : vector<2x32xf32>
    %cst_29 = arith.constant 1.000000e+00 : f32
    %144 = vector.broadcast %cst_29 : f32 to vector<2x1xf32>
    %145 = arith.subf %144, %141 : vector<2x1xf32>
    %146 = vector.broadcast %145 : vector<2x1xf32> to vector<2x32xf32>
    %147 = arith.mulf %146, %99 : vector<2x32xf32>
    %148 = arith.addf %143, %147 : vector<2x32xf32>
    %149 = vector.broadcast %141 : vector<2x1xf32> to vector<2x32xf32>
    %150 = arith.mulf %149, %137 : vector<2x32xf32>
    %cst_30 = arith.constant 1.000000e+00 : f32
    %151 = vector.broadcast %cst_30 : f32 to vector<2x1xf32>
    %152 = arith.subf %151, %141 : vector<2x1xf32>
    %153 = vector.broadcast %152 : vector<2x1xf32> to vector<2x32xf32>
    %154 = arith.mulf %153, %106 : vector<2x32xf32>
    %155 = arith.addf %150, %154 : vector<2x32xf32>
    %156 = vector.broadcast %141 : vector<2x1xf32> to vector<2x32xf32>
    %157 = arith.mulf %156, %139 : vector<2x32xf32>
    %158 = arith.truncf %157 : vector<2x32xf32> to vector<2x32xbf16>
    %159 = vector.extract_strided_slice %9 {offsets = [3, 0, 0], sizes = [1, 2, 128], strides = [1, 1, 1]} : vector<8x2x128xf32> to vector<1x2x128xf32>
    %160 = vector.shape_cast %159 : vector<1x2x128xf32> to vector<2x128xf32>
    %161 = arith.truncf %148 : vector<2x32xf32> to vector<2x32xbf16>
    %cst_31 = arith.constant dense<0.000000e+00> : vector<2x128xf32>
    %162 = tpu.matmul %161, %2, %cst_31 {dimension_numbers = #tpu.dot_dimension_numbers<[1], [0], [0], [1], [0, 0, 1, 1], [], []>} : vector<2x32xbf16>, vector<32x128xbf16>, vector<2x128xf32> -> vector<2x128xf32>
    %163 = arith.addf %160, %162 : vector<2x128xf32>
    %164 = vector.extract_strided_slice %163 {offsets = [0, 0], sizes = [2, 32], strides = [1, 1]} : vector<2x128xf32> to vector<2x32xf32>
    %165 = arith.negf %164 : vector<2x32xf32>
    %166 = math.exp %165 : vector<2x32xf32>
    %cst_32 = arith.constant 1.000000e+00 : f32
    %167 = vector.broadcast %cst_32 : f32 to vector<2x32xf32>
    %168 = arith.addf %167, %166 : vector<2x32xf32>
    %169 = arith.divf %167, %168 : vector<2x32xf32>
    %170 = vector.extract_strided_slice %163 {offsets = [0, 32], sizes = [2, 32], strides = [1, 1]} : vector<2x128xf32> to vector<2x32xf32>
    %171 = arith.negf %170 : vector<2x32xf32>
    %172 = math.exp %171 : vector<2x32xf32>
    %cst_33 = arith.constant 1.000000e+00 : f32
    %173 = vector.broadcast %cst_33 : f32 to vector<2x32xf32>
    %174 = arith.addf %173, %172 : vector<2x32xf32>
    %175 = arith.divf %173, %174 : vector<2x32xf32>
    %176 = vector.extract_strided_slice %163 {offsets = [0, 64], sizes = [2, 32], strides = [1, 1]} : vector<2x128xf32> to vector<2x32xf32>
    %177 = math.tanh %176 : vector<2x32xf32>
    %178 = vector.extract_strided_slice %163 {offsets = [0, 96], sizes = [2, 32], strides = [1, 1]} : vector<2x128xf32> to vector<2x32xf32>
    %179 = arith.negf %178 : vector<2x32xf32>
    %180 = math.exp %179 : vector<2x32xf32>
    %cst_34 = arith.constant 1.000000e+00 : f32
    %181 = vector.broadcast %cst_34 : f32 to vector<2x32xf32>
    %182 = arith.addf %181, %180 : vector<2x32xf32>
    %183 = arith.divf %181, %182 : vector<2x32xf32>
    %184 = arith.mulf %175, %155 : vector<2x32xf32>
    %185 = arith.mulf %169, %177 : vector<2x32xf32>
    %186 = arith.addf %184, %185 : vector<2x32xf32>
    %187 = math.tanh %186 : vector<2x32xf32>
    %188 = arith.mulf %183, %187 : vector<2x32xf32>
    %189 = vector.extract_strided_slice %1 {offsets = [3, 0, 0], sizes = [1, 2, 1], strides = [1, 1, 1]} : vector<8x2x1xf32> to vector<1x2x1xf32>
    %190 = vector.shape_cast %189 : vector<1x2x1xf32> to vector<2x1xf32>
    %191 = vector.broadcast %190 : vector<2x1xf32> to vector<2x32xf32>
    %192 = arith.mulf %191, %188 : vector<2x32xf32>
    %cst_35 = arith.constant 1.000000e+00 : f32
    %193 = vector.broadcast %cst_35 : f32 to vector<2x1xf32>
    %194 = arith.subf %193, %190 : vector<2x1xf32>
    %195 = vector.broadcast %194 : vector<2x1xf32> to vector<2x32xf32>
    %196 = arith.mulf %195, %148 : vector<2x32xf32>
    %197 = arith.addf %192, %196 : vector<2x32xf32>
    %198 = vector.broadcast %190 : vector<2x1xf32> to vector<2x32xf32>
    %199 = arith.mulf %198, %186 : vector<2x32xf32>
    %cst_36 = arith.constant 1.000000e+00 : f32
    %200 = vector.broadcast %cst_36 : f32 to vector<2x1xf32>
    %201 = arith.subf %200, %190 : vector<2x1xf32>
    %202 = vector.broadcast %201 : vector<2x1xf32> to vector<2x32xf32>
    %203 = arith.mulf %202, %155 : vector<2x32xf32>
    %204 = arith.addf %199, %203 : vector<2x32xf32>
    %205 = vector.broadcast %190 : vector<2x1xf32> to vector<2x32xf32>
    %206 = arith.mulf %205, %188 : vector<2x32xf32>
    %207 = arith.truncf %206 : vector<2x32xf32> to vector<2x32xbf16>
    %208 = vector.extract_strided_slice %9 {offsets = [4, 0, 0], sizes = [1, 2, 128], strides = [1, 1, 1]} : vector<8x2x128xf32> to vector<1x2x128xf32>
    %209 = vector.shape_cast %208 : vector<1x2x128xf32> to vector<2x128xf32>
    %210 = arith.truncf %197 : vector<2x32xf32> to vector<2x32xbf16>
    %cst_37 = arith.constant dense<0.000000e+00> : vector<2x128xf32>
    %211 = tpu.matmul %210, %2, %cst_37 {dimension_numbers = #tpu.dot_dimension_numbers<[1], [0], [0], [1], [0, 0, 1, 1], [], []>} : vector<2x32xbf16>, vector<32x128xbf16>, vector<2x128xf32> -> vector<2x128xf32>
    %212 = arith.addf %209, %211 : vector<2x128xf32>
    %213 = vector.extract_strided_slice %212 {offsets = [0, 0], sizes = [2, 32], strides = [1, 1]} : vector<2x128xf32> to vector<2x32xf32>
    %214 = arith.negf %213 : vector<2x32xf32>
    %215 = math.exp %214 : vector<2x32xf32>
    %cst_38 = arith.constant 1.000000e+00 : f32
    %216 = vector.broadcast %cst_38 : f32 to vector<2x32xf32>
    %217 = arith.addf %216, %215 : vector<2x32xf32>
    %218 = arith.divf %216, %217 : vector<2x32xf32>
    %219 = vector.extract_strided_slice %212 {offsets = [0, 32], sizes = [2, 32], strides = [1, 1]} : vector<2x128xf32> to vector<2x32xf32>
    %220 = arith.negf %219 : vector<2x32xf32>
    %221 = math.exp %220 : vector<2x32xf32>
    %cst_39 = arith.constant 1.000000e+00 : f32
    %222 = vector.broadcast %cst_39 : f32 to vector<2x32xf32>
    %223 = arith.addf %222, %221 : vector<2x32xf32>
    %224 = arith.divf %222, %223 : vector<2x32xf32>
    %225 = vector.extract_strided_slice %212 {offsets = [0, 64], sizes = [2, 32], strides = [1, 1]} : vector<2x128xf32> to vector<2x32xf32>
    %226 = math.tanh %225 : vector<2x32xf32>
    %227 = vector.extract_strided_slice %212 {offsets = [0, 96], sizes = [2, 32], strides = [1, 1]} : vector<2x128xf32> to vector<2x32xf32>
    %228 = arith.negf %227 : vector<2x32xf32>
    %229 = math.exp %228 : vector<2x32xf32>
    %cst_40 = arith.constant 1.000000e+00 : f32
    %230 = vector.broadcast %cst_40 : f32 to vector<2x32xf32>
    %231 = arith.addf %230, %229 : vector<2x32xf32>
    %232 = arith.divf %230, %231 : vector<2x32xf32>
    %233 = arith.mulf %224, %204 : vector<2x32xf32>
    %234 = arith.mulf %218, %226 : vector<2x32xf32>
    %235 = arith.addf %233, %234 : vector<2x32xf32>
    %236 = math.tanh %235 : vector<2x32xf32>
    %237 = arith.mulf %232, %236 : vector<2x32xf32>
    %238 = vector.extract_strided_slice %1 {offsets = [4, 0, 0], sizes = [1, 2, 1], strides = [1, 1, 1]} : vector<8x2x1xf32> to vector<1x2x1xf32>
    %239 = vector.shape_cast %238 : vector<1x2x1xf32> to vector<2x1xf32>
    %240 = vector.broadcast %239 : vector<2x1xf32> to vector<2x32xf32>
    %241 = arith.mulf %240, %237 : vector<2x32xf32>
    %cst_41 = arith.constant 1.000000e+00 : f32
    %242 = vector.broadcast %cst_41 : f32 to vector<2x1xf32>
    %243 = arith.subf %242, %239 : vector<2x1xf32>
    %244 = vector.broadcast %243 : vector<2x1xf32> to vector<2x32xf32>
    %245 = arith.mulf %244, %197 : vector<2x32xf32>
    %246 = arith.addf %241, %245 : vector<2x32xf32>
    %247 = vector.broadcast %239 : vector<2x1xf32> to vector<2x32xf32>
    %248 = arith.mulf %247, %235 : vector<2x32xf32>
    %cst_42 = arith.constant 1.000000e+00 : f32
    %249 = vector.broadcast %cst_42 : f32 to vector<2x1xf32>
    %250 = arith.subf %249, %239 : vector<2x1xf32>
    %251 = vector.broadcast %250 : vector<2x1xf32> to vector<2x32xf32>
    %252 = arith.mulf %251, %204 : vector<2x32xf32>
    %253 = arith.addf %248, %252 : vector<2x32xf32>
    %254 = vector.broadcast %239 : vector<2x1xf32> to vector<2x32xf32>
    %255 = arith.mulf %254, %237 : vector<2x32xf32>
    %256 = arith.truncf %255 : vector<2x32xf32> to vector<2x32xbf16>
    %257 = vector.extract_strided_slice %9 {offsets = [5, 0, 0], sizes = [1, 2, 128], strides = [1, 1, 1]} : vector<8x2x128xf32> to vector<1x2x128xf32>
    %258 = vector.shape_cast %257 : vector<1x2x128xf32> to vector<2x128xf32>
    %259 = arith.truncf %246 : vector<2x32xf32> to vector<2x32xbf16>
    %cst_43 = arith.constant dense<0.000000e+00> : vector<2x128xf32>
    %260 = tpu.matmul %259, %2, %cst_43 {dimension_numbers = #tpu.dot_dimension_numbers<[1], [0], [0], [1], [0, 0, 1, 1], [], []>} : vector<2x32xbf16>, vector<32x128xbf16>, vector<2x128xf32> -> vector<2x128xf32>
    %261 = arith.addf %258, %260 : vector<2x128xf32>
    %262 = vector.extract_strided_slice %261 {offsets = [0, 0], sizes = [2, 32], strides = [1, 1]} : vector<2x128xf32> to vector<2x32xf32>
    %263 = arith.negf %262 : vector<2x32xf32>
    %264 = math.exp %263 : vector<2x32xf32>
    %cst_44 = arith.constant 1.000000e+00 : f32
    %265 = vector.broadcast %cst_44 : f32 to vector<2x32xf32>
    %266 = arith.addf %265, %264 : vector<2x32xf32>
    %267 = arith.divf %265, %266 : vector<2x32xf32>
    %268 = vector.extract_strided_slice %261 {offsets = [0, 32], sizes = [2, 32], strides = [1, 1]} : vector<2x128xf32> to vector<2x32xf32>
    %269 = arith.negf %268 : vector<2x32xf32>
    %270 = math.exp %269 : vector<2x32xf32>
    %cst_45 = arith.constant 1.000000e+00 : f32
    %271 = vector.broadcast %cst_45 : f32 to vector<2x32xf32>
    %272 = arith.addf %271, %270 : vector<2x32xf32>
    %273 = arith.divf %271, %272 : vector<2x32xf32>
    %274 = vector.extract_strided_slice %261 {offsets = [0, 64], sizes = [2, 32], strides = [1, 1]} : vector<2x128xf32> to vector<2x32xf32>
    %275 = math.tanh %274 : vector<2x32xf32>
    %276 = vector.extract_strided_slice %261 {offsets = [0, 96], sizes = [2, 32], strides = [1, 1]} : vector<2x128xf32> to vector<2x32xf32>
    %277 = arith.negf %276 : vector<2x32xf32>
    %278 = math.exp %277 : vector<2x32xf32>
    %cst_46 = arith.constant 1.000000e+00 : f32
    %279 = vector.broadcast %cst_46 : f32 to vector<2x32xf32>
    %280 = arith.addf %279, %278 : vector<2x32xf32>
    %281 = arith.divf %279, %280 : vector<2x32xf32>
    %282 = arith.mulf %273, %253 : vector<2x32xf32>
    %283 = arith.mulf %267, %275 : vector<2x32xf32>
    %284 = arith.addf %282, %283 : vector<2x32xf32>
    %285 = math.tanh %284 : vector<2x32xf32>
    %286 = arith.mulf %281, %285 : vector<2x32xf32>
    %287 = vector.extract_strided_slice %1 {offsets = [5, 0, 0], sizes = [1, 2, 1], strides = [1, 1, 1]} : vector<8x2x1xf32> to vector<1x2x1xf32>
    %288 = vector.shape_cast %287 : vector<1x2x1xf32> to vector<2x1xf32>
    %289 = vector.broadcast %288 : vector<2x1xf32> to vector<2x32xf32>
    %290 = arith.mulf %289, %286 : vector<2x32xf32>
    %cst_47 = arith.constant 1.000000e+00 : f32
    %291 = vector.broadcast %cst_47 : f32 to vector<2x1xf32>
    %292 = arith.subf %291, %288 : vector<2x1xf32>
    %293 = vector.broadcast %292 : vector<2x1xf32> to vector<2x32xf32>
    %294 = arith.mulf %293, %246 : vector<2x32xf32>
    %295 = arith.addf %290, %294 : vector<2x32xf32>
    %296 = vector.broadcast %288 : vector<2x1xf32> to vector<2x32xf32>
    %297 = arith.mulf %296, %284 : vector<2x32xf32>
    %cst_48 = arith.constant 1.000000e+00 : f32
    %298 = vector.broadcast %cst_48 : f32 to vector<2x1xf32>
    %299 = arith.subf %298, %288 : vector<2x1xf32>
    %300 = vector.broadcast %299 : vector<2x1xf32> to vector<2x32xf32>
    %301 = arith.mulf %300, %253 : vector<2x32xf32>
    %302 = arith.addf %297, %301 : vector<2x32xf32>
    %303 = vector.broadcast %288 : vector<2x1xf32> to vector<2x32xf32>
    %304 = arith.mulf %303, %286 : vector<2x32xf32>
    %305 = arith.truncf %304 : vector<2x32xf32> to vector<2x32xbf16>
    %306 = vector.extract_strided_slice %9 {offsets = [6, 0, 0], sizes = [1, 2, 128], strides = [1, 1, 1]} : vector<8x2x128xf32> to vector<1x2x128xf32>
    %307 = vector.shape_cast %306 : vector<1x2x128xf32> to vector<2x128xf32>
    %308 = arith.truncf %295 : vector<2x32xf32> to vector<2x32xbf16>
    %cst_49 = arith.constant dense<0.000000e+00> : vector<2x128xf32>
    %309 = tpu.matmul %308, %2, %cst_49 {dimension_numbers = #tpu.dot_dimension_numbers<[1], [0], [0], [1], [0, 0, 1, 1], [], []>} : vector<2x32xbf16>, vector<32x128xbf16>, vector<2x128xf32> -> vector<2x128xf32>
    %310 = arith.addf %307, %309 : vector<2x128xf32>
    %311 = vector.extract_strided_slice %310 {offsets = [0, 0], sizes = [2, 32], strides = [1, 1]} : vector<2x128xf32> to vector<2x32xf32>
    %312 = arith.negf %311 : vector<2x32xf32>
    %313 = math.exp %312 : vector<2x32xf32>
    %cst_50 = arith.constant 1.000000e+00 : f32
    %314 = vector.broadcast %cst_50 : f32 to vector<2x32xf32>
    %315 = arith.addf %314, %313 : vector<2x32xf32>
    %316 = arith.divf %314, %315 : vector<2x32xf32>
    %317 = vector.extract_strided_slice %310 {offsets = [0, 32], sizes = [2, 32], strides = [1, 1]} : vector<2x128xf32> to vector<2x32xf32>
    %318 = arith.negf %317 : vector<2x32xf32>
    %319 = math.exp %318 : vector<2x32xf32>
    %cst_51 = arith.constant 1.000000e+00 : f32
    %320 = vector.broadcast %cst_51 : f32 to vector<2x32xf32>
    %321 = arith.addf %320, %319 : vector<2x32xf32>
    %322 = arith.divf %320, %321 : vector<2x32xf32>
    %323 = vector.extract_strided_slice %310 {offsets = [0, 64], sizes = [2, 32], strides = [1, 1]} : vector<2x128xf32> to vector<2x32xf32>
    %324 = math.tanh %323 : vector<2x32xf32>
    %325 = vector.extract_strided_slice %310 {offsets = [0, 96], sizes = [2, 32], strides = [1, 1]} : vector<2x128xf32> to vector<2x32xf32>
    %326 = arith.negf %325 : vector<2x32xf32>
    %327 = math.exp %326 : vector<2x32xf32>
    %cst_52 = arith.constant 1.000000e+00 : f32
    %328 = vector.broadcast %cst_52 : f32 to vector<2x32xf32>
    %329 = arith.addf %328, %327 : vector<2x32xf32>
    %330 = arith.divf %328, %329 : vector<2x32xf32>
    %331 = arith.mulf %322, %302 : vector<2x32xf32>
    %332 = arith.mulf %316, %324 : vector<2x32xf32>
    %333 = arith.addf %331, %332 : vector<2x32xf32>
    %334 = math.tanh %333 : vector<2x32xf32>
    %335 = arith.mulf %330, %334 : vector<2x32xf32>
    %336 = vector.extract_strided_slice %1 {offsets = [6, 0, 0], sizes = [1, 2, 1], strides = [1, 1, 1]} : vector<8x2x1xf32> to vector<1x2x1xf32>
    %337 = vector.shape_cast %336 : vector<1x2x1xf32> to vector<2x1xf32>
    %338 = vector.broadcast %337 : vector<2x1xf32> to vector<2x32xf32>
    %339 = arith.mulf %338, %335 : vector<2x32xf32>
    %cst_53 = arith.constant 1.000000e+00 : f32
    %340 = vector.broadcast %cst_53 : f32 to vector<2x1xf32>
    %341 = arith.subf %340, %337 : vector<2x1xf32>
    %342 = vector.broadcast %341 : vector<2x1xf32> to vector<2x32xf32>
    %343 = arith.mulf %342, %295 : vector<2x32xf32>
    %344 = arith.addf %339, %343 : vector<2x32xf32>
    %345 = vector.broadcast %337 : vector<2x1xf32> to vector<2x32xf32>
    %346 = arith.mulf %345, %333 : vector<2x32xf32>
    %cst_54 = arith.constant 1.000000e+00 : f32
    %347 = vector.broadcast %cst_54 : f32 to vector<2x1xf32>
    %348 = arith.subf %347, %337 : vector<2x1xf32>
    %349 = vector.broadcast %348 : vector<2x1xf32> to vector<2x32xf32>
    %350 = arith.mulf %349, %302 : vector<2x32xf32>
    %351 = arith.addf %346, %350 : vector<2x32xf32>
    %352 = vector.broadcast %337 : vector<2x1xf32> to vector<2x32xf32>
    %353 = arith.mulf %352, %335 : vector<2x32xf32>
    %354 = arith.truncf %353 : vector<2x32xf32> to vector<2x32xbf16>
    %355 = vector.extract_strided_slice %9 {offsets = [7, 0, 0], sizes = [1, 2, 128], strides = [1, 1, 1]} : vector<8x2x128xf32> to vector<1x2x128xf32>
    %356 = vector.shape_cast %355 : vector<1x2x128xf32> to vector<2x128xf32>
    %357 = arith.truncf %344 : vector<2x32xf32> to vector<2x32xbf16>
    %cst_55 = arith.constant dense<0.000000e+00> : vector<2x128xf32>
    %358 = tpu.matmul %357, %2, %cst_55 {dimension_numbers = #tpu.dot_dimension_numbers<[1], [0], [0], [1], [0, 0, 1, 1], [], []>} : vector<2x32xbf16>, vector<32x128xbf16>, vector<2x128xf32> -> vector<2x128xf32>
    %359 = arith.addf %356, %358 : vector<2x128xf32>
    %360 = vector.extract_strided_slice %359 {offsets = [0, 0], sizes = [2, 32], strides = [1, 1]} : vector<2x128xf32> to vector<2x32xf32>
    %361 = arith.negf %360 : vector<2x32xf32>
    %362 = math.exp %361 : vector<2x32xf32>
    %cst_56 = arith.constant 1.000000e+00 : f32
    %363 = vector.broadcast %cst_56 : f32 to vector<2x32xf32>
    %364 = arith.addf %363, %362 : vector<2x32xf32>
    %365 = arith.divf %363, %364 : vector<2x32xf32>
    %366 = vector.extract_strided_slice %359 {offsets = [0, 32], sizes = [2, 32], strides = [1, 1]} : vector<2x128xf32> to vector<2x32xf32>
    %367 = arith.negf %366 : vector<2x32xf32>
    %368 = math.exp %367 : vector<2x32xf32>
    %cst_57 = arith.constant 1.000000e+00 : f32
    %369 = vector.broadcast %cst_57 : f32 to vector<2x32xf32>
    %370 = arith.addf %369, %368 : vector<2x32xf32>
    %371 = arith.divf %369, %370 : vector<2x32xf32>
    %372 = vector.extract_strided_slice %359 {offsets = [0, 64], sizes = [2, 32], strides = [1, 1]} : vector<2x128xf32> to vector<2x32xf32>
    %373 = math.tanh %372 : vector<2x32xf32>
    %374 = vector.extract_strided_slice %359 {offsets = [0, 96], sizes = [2, 32], strides = [1, 1]} : vector<2x128xf32> to vector<2x32xf32>
    %375 = arith.negf %374 : vector<2x32xf32>
    %376 = math.exp %375 : vector<2x32xf32>
    %cst_58 = arith.constant 1.000000e+00 : f32
    %377 = vector.broadcast %cst_58 : f32 to vector<2x32xf32>
    %378 = arith.addf %377, %376 : vector<2x32xf32>
    %379 = arith.divf %377, %378 : vector<2x32xf32>
    %380 = arith.mulf %371, %351 : vector<2x32xf32>
    %381 = arith.mulf %365, %373 : vector<2x32xf32>
    %382 = arith.addf %380, %381 : vector<2x32xf32>
    %383 = math.tanh %382 : vector<2x32xf32>
    %384 = arith.mulf %379, %383 : vector<2x32xf32>
    %385 = vector.extract_strided_slice %1 {offsets = [7, 0, 0], sizes = [1, 2, 1], strides = [1, 1, 1]} : vector<8x2x1xf32> to vector<1x2x1xf32>
    %386 = vector.shape_cast %385 : vector<1x2x1xf32> to vector<2x1xf32>
    %387 = vector.broadcast %386 : vector<2x1xf32> to vector<2x32xf32>
    %388 = arith.mulf %387, %384 : vector<2x32xf32>
    %389 = arith.truncf %388 : vector<2x32xf32> to vector<2x32xbf16>
    %390 = vector.shape_cast %60 : vector<2x32xbf16> to vector<1x2x32xbf16>
    %391 = vector.shape_cast %109 : vector<2x32xbf16> to vector<1x2x32xbf16>
    %392 = vector.shape_cast %158 : vector<2x32xbf16> to vector<1x2x32xbf16>
    %393 = vector.shape_cast %207 : vector<2x32xbf16> to vector<1x2x32xbf16>
    %394 = vector.shape_cast %256 : vector<2x32xbf16> to vector<1x2x32xbf16>
    %395 = vector.shape_cast %305 : vector<2x32xbf16> to vector<1x2x32xbf16>
    %396 = vector.shape_cast %354 : vector<2x32xbf16> to vector<1x2x32xbf16>
    %397 = vector.shape_cast %389 : vector<2x32xbf16> to vector<1x2x32xbf16>
    %398 = tpu.concatenate %390, %391, %392, %393, %394, %395, %396, %397 in 0 : vector<1x2x32xbf16>, vector<1x2x32xbf16>, vector<1x2x32xbf16>, vector<1x2x32xbf16>, vector<1x2x32xbf16>, vector<1x2x32xbf16>, vector<1x2x32xbf16>, vector<1x2x32xbf16> -> vector<8x2x32xbf16>
    %cst_59 = arith.constant 0.000000e+00 : bf16
    %399 = vector.broadcast %cst_59 : bf16 to vector<8x2x96xbf16>
    %400 = tpu.concatenate %398, %399 in 2 : vector<8x2x32xbf16>, vector<8x2x96xbf16> -> vector<8x2x128xbf16>
    %c0_60 = arith.constant 0 : index
    %c0_61 = arith.constant 0 : index
    %c0_62 = arith.constant 0 : index
    %401 = vector.load %arg5[%c0_60, %c0_61, %c0_62] : memref<8x2x128xbf16, #tpu.memory_space<vmem>>, vector<8x2x128xbf16>
    tpu.vector_store %arg5[%c0_60, %c0_61, %c0_62], %400 {strides = array<i32>} : memref<8x2x128xbf16, #tpu.memory_space<vmem>>, vector<8x2x128xbf16>,
    return
  }
}

</mosaic_0001>

<llo_original>
// kernel: tvqa_plus_forward.5
$region0: #{tvqa_plus_forward.5}
  #allocation0 [shape = 'u32[]', space=smem, size = 0x4, offset = 0x4, fixed_abs, tag = 'smem constant byte address 0x4 - core index']
  #allocation1 [shape = 'u32[72,128]{1,0:T(1,128)}', space=vmem, size = 0x9000, scoped, tag = 'internal scratch']
  %s0 = inlined_call_operand.vmem [shape: bf16[2,16,128], index: 0, kind: input, shape index: {}]
  %s1 = inlined_call_operand.vmem [shape: bf16[2,8,128], index: 1, kind: input, shape index: {}]
  %s2 = inlined_call_operand.vmem [shape: f32[2,1,8], index: 2, kind: input, shape index: {}]
  %s3 = inlined_call_operand.vmem [shape: bf16[128,128], index: 3, kind: input, shape index: {}]
  %s4 = inlined_call_operand.vmem [shape: f32[1,128], index: 4, kind: input, shape index: {}]
  %s5 = inlined_call_operand.vmem [shape: bf16[384,128], index: 5, kind: input, shape index: {}]
  %s6 = inlined_call_operand.vmem [shape: f32[1,128], index: 6, kind: input, shape index: {}]
  %s7 = inlined_call_operand.vmem [shape: bf16[128,128], index: 7, kind: input, shape index: {}]
  %s8 = inlined_call_operand.vmem [shape: f32[1,128], index: 8, kind: input, shape index: {}]
  %s9 = inlined_call_operand.hbm [shape: f32[2,1,128], index: 9, kind: output, shape index: {}]
  %s10 = sld [smem:[#allocation0]]
  $region69: #{tvqa_plus_forward.5} parent=0
    _
  %s12 = ssub.s32 1, %s10
  %s13 = scalar_select 0, %s12, %s10
  $region1: #{tvqa_plus_forward.5} parent=0
    #allocation2 [shape = 'u8[1024]{0}', space=vmem, size = 0x400, scoped, tag = 'output window, operand 0']
    #allocation3 [shape = 's32[2]{0}', space=sflag, size = 0x8, scoped, tag = 'scoped memory for tvqa_plus_forward.5']
    %14 = vsyncpa [#allocation3], 0
    %s15 = scalar_lea.sflag [#allocation3], 1
    %16 = vsyncpa %s15, 0
    loop: start=0, step=1, limit=4
    $region2: #{tvqa_plus_forward.5} parent=1 // loop_pre_header
      _
    $region3: #{tvqa_plus_forward.5} parent=1 // loop_header
      %s18 = sphi 0, %s22
      %p19 = scmp.ge.s32.totalorder %s18, 4
      %s28 = sphi 0, %s30
      %s31 = sphi 0, %s28
      %s32 = sphi 0, %s31
      %s48 = sphi 0, %s32
      %s54 = sphi 0, %s56
      %s57 = sphi 0, %s54
      %s58 = sphi 0, %s57
      %s74 = sphi 0, %s58
      %s80 = sphi 0, %s82
      %s83 = sphi 0, %s80
      %s84 = sphi 0, %s83
      %s100 = sphi 0, %s84
      %s104 = sphi 0, %s104
      %s106 = sphi 0, %s104
      %s107 = sphi 0, %s106
      %s121 = sphi 0, %s107
      %s125 = sphi 0, %s125
      %s127 = sphi 0, %s125
      %s128 = sphi 0, %s127
      %s142 = sphi 0, %s128
      %s146 = sphi 0, %s146
      %s148 = sphi 0, %s146
      %s149 = sphi 0, %s148
      %s163 = sphi 0, %s149
      %s167 = sphi 0, %s167
      %s169 = sphi 0, %s167
      %s170 = sphi 0, %s169
      %s184 = sphi 0, %s170
      %s188 = sphi 0, %s188
      %s190 = sphi 0, %s188
      %s191 = sphi 0, %s190
      %s205 = sphi 0, %s191
      %s209 = sphi 0, %s209
      %s211 = sphi 0, %s209
      %s212 = sphi 0, %s211
      %s226 = sphi 0, %s212
      %s232 = sphi 0, %s234
      %s235 = sphi 0, %s232
      %s236 = sphi 0, %s235
      %s252 = sphi 0, %s236
    $region4: #{tvqa_plus_forward.5} parent=1 // loop_header_branch
      %21 = sbr.rel (%p19) target = $region8
    $region5: #{tvqa_plus_forward.5} parent=1 // loop_body
      %s23 = ssub.s32 %s18, 1
      %s24 = ssub.s32 %s18, 2
      %s25 = sadd.s32 %s18, 1
      %s26 = ssub.s32 %s18, %s25
      %p27 = scmp.eq.s32.totalorder %s26, 0
      %s29 = sadd.s32 %s28, 1
      %s30 = scalar_select %p27, %s28, %s29
      %p33 = pneg %p27
      %p34 = scmp.eq.s32.totalorder %s18, 1
      %p35 = por %p33, %p34
      %p36 = scmp.ne.s32.totalorder %s28, %s31
      %p37 = scmp.eq.s32.totalorder %s18, 0
      %p38 = por %p36, %p37
      %p39 = scmp.ne.s32.totalorder %s28, %s31
      %p40 = scmp.eq.s32.totalorder %s23, 1
      %p41 = por %p39, %p40
      %p42 = scmp.ne.s32.totalorder %s31, %s32
      %p43 = scmp.eq.s32.totalorder %s23, 0
      %p44 = por %p42, %p43
      %p45 = scmp.ne.s32.totalorder %s31, %s32
      %p46 = scmp.eq.s32.totalorder %s24, 1
      %p47 = por %p45, %p46
      %p49 = scmp.ne.s32.totalorder %s32, %s48
      %p50 = scmp.eq.s32.totalorder %s24, 0
      %p51 = por %p49, %p50
      %s52 = ssub.s32 %s18, %s25
      %p53 = scmp.eq.s32.totalorder %s52, 0
      %s55 = sadd.s32 %s54, 1
      %s56 = scalar_select %p53, %s54, %s55
      %p59 = pneg %p53
      %p60 = scmp.eq.s32.totalorder %s18, 1
      %p61 = por %p59, %p60
      %p62 = scmp.ne.s32.totalorder %s54, %s57
      %p63 = scmp.eq.s32.totalorder %s18, 0
      %p64 = por %p62, %p63
      %p65 = scmp.ne.s32.totalorder %s54, %s57
      %p66 = scmp.eq.s32.totalorder %s23, 1
      %p67 = por %p65, %p66
      %p68 = scmp.ne.s32.totalorder %s57, %s58
      %p69 = scmp.eq.s32.totalorder %s23, 0
      %p70 = por %p68, %p69
      %p71 = scmp.ne.s32.totalorder %s57, %s58
      %p72 = scmp.eq.s32.totalorder %s24, 1
      %p73 = por %p71, %p72
      %p75 = scmp.ne.s32.totalorder %s58, %s74
      %p76 = scmp.eq.s32.totalorder %s24, 0
      %p77 = por %p75, %p76
      %s78 = ssub.s32 %s18, %s25
      %p79 = scmp.eq.s32.totalorder %s78, 0
      %s81 = sadd.s32 %s80, 1
      %s82 = scalar_select %p79, %s80, %s81
      %p85 = pneg %p79
      %p86 = scmp.eq.s32.totalorder %s18, 1
      %p87 = por %p85, %p86
      %p88 = scmp.ne.s32.totalorder %s80, %s83
      %p89 = scmp.eq.s32.totalorder %s18, 0
      %p90 = por %p88, %p89
      %p91 = scmp.ne.s32.totalorder %s80, %s83
      %p92 = scmp.eq.s32.totalorder %s23, 1
      %p93 = por %p91, %p92
      %p94 = scmp.ne.s32.totalorder %s83, %s84
      %p95 = scmp.eq.s32.totalorder %s23, 0
      %p96 = por %p94, %p95
      %p97 = scmp.ne.s32.totalorder %s83, %s84
      %p98 = scmp.eq.s32.totalorder %s24, 1
      %p99 = por %p97, %p98
      %p101 = scmp.ne.s32.totalorder %s84, %s100
      %p102 = scmp.eq.s32.totalorder %s24, 0
      %p103 = por %p101, %p102
      %s105 = sadd.s32 %s104, 1
      %p108 = scmp.eq.s32.totalorder %s18, 1
      %p109 = scmp.ne.s32.totalorder %s104, %s106
      %p110 = scmp.eq.s32.totalorder %s18, 0
      %p111 = por %p109, %p110
      %p112 = scmp.ne.s32.totalorder %s104, %s106
      %p113 = scmp.eq.s32.totalorder %s23, 1
      %p114 = por %p112, %p113
      %p115 = scmp.ne.s32.totalorder %s106, %s107
      %p116 = scmp.eq.s32.totalorder %s23, 0
      %p117 = por %p115, %p116
      %p118 = scmp.ne.s32.totalorder %s106, %s107
      %p119 = scmp.eq.s32.totalorder %s24, 1
      %p120 = por %p118, %p119
      %p122 = scmp.ne.s32.totalorder %s107, %s121
      %p123 = scmp.eq.s32.totalorder %s24, 0
      %p124 = por %p122, %p123
      %s126 = sadd.s32 %s125, 1
      %p129 = scmp.eq.s32.totalorder %s18, 1
      %p130 = scmp.ne.s32.totalorder %s125, %s127
      %p131 = scmp.eq.s32.totalorder %s18, 0
      %p132 = por %p130, %p131
      %p133 = scmp.ne.s32.totalorder %s125, %s127
      %p134 = scmp.eq.s32.totalorder %s23, 1
      %p135 = por %p133, %p134
      %p136 = scmp.ne.s32.totalorder %s127, %s128
      %p137 = scmp.eq.s32.totalorder %s23, 0
      %p138 = por %p136, %p137
      %p139 = scmp.ne.s32.totalorder %s127, %s128
      %p140 = scmp.eq.s32.totalorder %s24, 1
      %p141 = por %p139, %p140
      %p143 = scmp.ne.s32.totalorder %s128, %s142
      %p144 = scmp.eq.s32.totalorder %s24, 0
      %p145 = por %p143, %p144
      %s147 = sadd.s32 %s146, 1
      %p150 = scmp.eq.s32.totalorder %s18, 1
      %p151 = scmp.ne.s32.totalorder %s146, %s148
      %p152 = scmp.eq.s32.totalorder %s18, 0
      %p153 = por %p151, %p152
      %p154 = scmp.ne.s32.totalorder %s146, %s148
      %p155 = scmp.eq.s32.totalorder %s23, 1
      %p156 = por %p154, %p155
      %p157 = scmp.ne.s32.totalorder %s148, %s149
      %p158 = scmp.eq.s32.totalorder %s23, 0
      %p159 = por %p157, %p158
      %p160 = scmp.ne.s32.totalorder %s148, %s149
      %p161 = scmp.eq.s32.totalorder %s24, 1
      %p162 = por %p160, %p161
      %p164 = scmp.ne.s32.totalorder %s149, %s163
      %p165 = scmp.eq.s32.totalorder %s24, 0
      %p166 = por %p164, %p165
      %s168 = sadd.s32 %s167, 1
      %p171 = scmp.eq.s32.totalorder %s18, 1
      %p172 = scmp.ne.s32.totalorder %s167, %s169
      %p173 = scmp.eq.s32.totalorder %s18, 0
      %p174 = por %p172, %p173
      %p175 = scmp.ne.s32.totalorder %s167, %s169
      %p176 = scmp.eq.s32.totalorder %s23, 1
      %p177 = por %p175, %p176
      %p178 = scmp.ne.s32.totalorder %s169, %s170
      %p179 = scmp.eq.s32.totalorder %s23, 0
      %p180 = por %p178, %p179
      %p181 = scmp.ne.s32.totalorder %s169, %s170
      %p182 = scmp.eq.s32.totalorder %s24, 1
      %p183 = por %p181, %p182
      %p185 = scmp.ne.s32.totalorder %s170, %s184
      %p186 = scmp.eq.s32.totalorder %s24, 0
      %p187 = por %p185, %p186
      %s189 = sadd.s32 %s188, 1
      %p192 = scmp.eq.s32.totalorder %s18, 1
      %p193 = scmp.ne.s32.totalorder %s188, %s190
      %p194 = scmp.eq.s32.totalorder %s18, 0
      %p195 = por %p193, %p194
      %p196 = scmp.ne.s32.totalorder %s188, %s190
      %p197 = scmp.eq.s32.totalorder %s23, 1
      %p198 = por %p196, %p197
      %p199 = scmp.ne.s32.totalorder %s190, %s191
      %p200 = scmp.eq.s32.totalorder %s23, 0
      %p201 = por %p199, %p200
      %p202 = scmp.ne.s32.totalorder %s190, %s191
      %p203 = scmp.eq.s32.totalorder %s24, 1
      %p204 = por %p202, %p203
      %p206 = scmp.ne.s32.totalorder %s191, %s205
      %p207 = scmp.eq.s32.totalorder %s24, 0
      %p208 = por %p206, %p207
      %s210 = sadd.s32 %s209, 1
      %p213 = scmp.eq.s32.totalorder %s18, 1
      %p214 = scmp.ne.s32.totalorder %s209, %s211
      %p215 = scmp.eq.s32.totalorder %s18, 0
      %p216 = por %p214, %p215
      %p217 = scmp.ne.s32.totalorder %s209, %s211
      %p218 = scmp.eq.s32.totalorder %s23, 1
      %p219 = por %p217, %p218
      %p220 = scmp.ne.s32.totalorder %s211, %s212
      %p221 = scmp.eq.s32.totalorder %s23, 0
      %p222 = por %p220, %p221
      %p223 = scmp.ne.s32.totalorder %s211, %s212
      %p224 = scmp.eq.s32.totalorder %s24, 1
      %p225 = por %p223, %p224
      %p227 = scmp.ne.s32.totalorder %s212, %s226
      %p228 = scmp.eq.s32.totalorder %s24, 0
      %p229 = por %p227, %p228
      %s230 = ssub.s32 %s18, %s25
      %p231 = scmp.eq.s32.totalorder %s230, 0
      %s233 = sadd.s32 %s232, 1
      %s234 = scalar_select %p231, %s232, %s233
      %p237 = pneg %p231
      %p238 = scmp.eq.s32.totalorder %s18, 1
      %p239 = por %p237, %p238
      %p240 = scmp.ne.s32.totalorder %s232, %s235
      %p241 = scmp.eq.s32.totalorder %s18, 0
      %p242 = por %p240, %p241
      %p243 = scmp.ne.s32.totalorder %s232, %s235
      %p244 = scmp.eq.s32.totalorder %s23, 1
      %p245 = por %p243, %p244
      %p246 = scmp.ne.s32.totalorder %s235, %s236
      %p247 = scmp.eq.s32.totalorder %s23, 0
      %p248 = por %p246, %p247
      %p249 = scmp.ne.s32.totalorder %s235, %s236
      %p250 = scmp.eq.s32.totalorder %s24, 1
      %p251 = por %p249, %p250
      %p253 = scmp.ne.s32.totalorder %s236, %s252
      %p254 = scmp.eq.s32.totalorder %s24, 0
      %p255 = por %p253, %p254
      %p256 = scmp.le.s32.totalorder 1, %s18
      %p257 = scmp.lt.s32.totalorder %s18, 3
      %p258 = pnand %p256, %p257
      %p259 = pneg %p258
      // Predicated region
      $region9: #{tvqa_plus_forward.5} parent=5 // pred_check
        _
      $region10: #{tvqa_plus_forward.5} parent=5 // pred_check_branch
        %261 = sbr.rel (%p258) target = $region12
      $region11: #{tvqa_plus_forward.5} parent=5 // pred_region
        %s262 = ssub.s32 %s18, 1
        // Predicated region
        $region13: #{tvqa_plus_forward.5} parent=11 // pred_check
          %p263 = pneg %p117
        $region14: #{tvqa_plus_forward.5} parent=11 // pred_check_branch
          %265 = sbr.rel (%p263) target = $region16
        $region15: #{tvqa_plus_forward.5} parent=11 // pred_region
          _
        $region16: #{tvqa_plus_forward.5} parent=11 // pred_fallthru
          _
        // Predicated region
        $region17: #{tvqa_plus_forward.5} parent=11 // pred_check
          %p266 = pneg %p138
        $region18: #{tvqa_plus_forward.5} parent=11 // pred_check_branch
          %268 = sbr.rel (%p266) target = $region20
        $region19: #{tvqa_plus_forward.5} parent=11 // pred_region
          _
        $region20: #{tvqa_plus_forward.5} parent=11 // pred_fallthru
          _
        // Predicated region
        $region21: #{tvqa_plus_forward.5} parent=11 // pred_check
          %p269 = pneg %p159
        $region22: #{tvqa_plus_forward.5} parent=11 // pred_check_branch
          %271 = sbr.rel (%p269) target = $region24
        $region23: #{tvqa_plus_forward.5} parent=11 // pred_region
          _
        $region24: #{tvqa_plus_forward.5} parent=11 // pred_fallthru
          _
        // Predicated region
        $region25: #{tvqa_plus_forward.5} parent=11 // pred_check
          %p272 = pneg %p180
        $region26: #{tvqa_plus_forward.5} parent=11 // pred_check_branch
          %274 = sbr.rel (%p272) target = $region28
        $region27: #{tvqa_plus_forward.5} parent=11 // pred_region
          _
        $region28: #{tvqa_plus_forward.5} parent=11 // pred_fallthru
          _
        // Predicated region
        $region29: #{tvqa_plus_forward.5} parent=11 // pred_check
          %p275 = pneg %p201
        $region30: #{tvqa_plus_forward.5} parent=11 // pred_check_branch
          %277 = sbr.rel (%p275) target = $region32
        $region31: #{tvqa_plus_forward.5} parent=11 // pred_region
          _
        $region32: #{tvqa_plus_forward.5} parent=11 // pred_fallthru
          _
        // Predicated region
        $region33: #{tvqa_plus_forward.5} parent=11 // pred_check
          %p278 = pneg %p222
        $region34: #{tvqa_plus_forward.5} parent=11 // pred_check_branch
          %280 = sbr.rel (%p278) target = $region36
        $region35: #{tvqa_plus_forward.5} parent=11 // pred_region
          _
        $region36: #{tvqa_plus_forward.5} parent=11 // pred_fallthru
          _
      $region12: #{tvqa_plus_forward.5} parent=5 // pred_fallthru
        _
      %p281 = scmp.lt.s32.totalorder %s18, 2
      // Predicated region
      $region37: #{tvqa_plus_forward.5} parent=5 // pred_check
        %p282 = pneg %p281
      $region38: #{tvqa_plus_forward.5} parent=5 // pred_check_branch
        %284 = sbr.rel (%p282) target = $region40
      $region39: #{tvqa_plus_forward.5} parent=5 // pred_region
        // Predicated region
        $region41: #{tvqa_plus_forward.5} parent=39 // pred_check
          %p285 = pneg %p38
        $region42: #{tvqa_plus_forward.5} parent=39 // pred_check_branch
          %287 = sbr.rel (%p285) target = $region44
        $region43: #{tvqa_plus_forward.5} parent=39 // pred_region
          %p288 = scmp.lt.s32.totalorder %s18, 1
          %s289 = scalar_select %p288, %s18, 1
          %s290 = smul.addr %s289, 2
          %s291 = smul.addr %s290, 4
          %s292 = scalar_lea.vmem %s0, %s291
        $region44: #{tvqa_plus_forward.5} parent=39 // pred_fallthru
          _
        // Predicated region
        $region45: #{tvqa_plus_forward.5} parent=39 // pred_check
          %p293 = pneg %p64
        $region46: #{tvqa_plus_forward.5} parent=39 // pred_check_branch
          %295 = sbr.rel (%p293) target = $region48
        $region47: #{tvqa_plus_forward.5} parent=39 // pred_region
          %p296 = scmp.lt.s32.totalorder %s18, 1
          %s297 = scalar_select %p296, %s18, 1
          %s298 = smul.addr %s297, 4
          %s299 = scalar_lea.vmem %s1, %s298
        $region48: #{tvqa_plus_forward.5} parent=39 // pred_fallthru
          _
        // Predicated region
        $region49: #{tvqa_plus_forward.5} parent=39 // pred_check
          %p300 = pneg %p90
        $region50: #{tvqa_plus_forward.5} parent=39 // pred_check_branch
          %302 = sbr.rel (%p300) target = $region52
        $region51: #{tvqa_plus_forward.5} parent=39 // pred_region
          %p303 = scmp.lt.s32.totalorder %s18, 1
          %s304 = scalar_select %p303, %s18, 1
          %s305 = scalar_lea.vmem %s2, %s304
        $region52: #{tvqa_plus_forward.5} parent=39 // pred_fallthru
          _
      $region40: #{tvqa_plus_forward.5} parent=5 // pred_fallthru
        _
      %p306 = scmp.le.s32.totalorder 1, %s18
      %p307 = scmp.lt.s32.totalorder %s18, 3
      %p308 = pnand %p306, %p307
      %p309 = pneg %p308
      // Predicated region
      $region53: #{tvqa_plus_forward.5} parent=5 // pred_check
        _
      $region54: #{tvqa_plus_forward.5} parent=5 // pred_check_branch
        %311 = sbr.rel (%p308) target = $region56
      $region55: #{tvqa_plus_forward.5} parent=5 // pred_region
        %s312 = ssub.s32 %s18, 1
        %p313 = scmp.lt.s32.totalorder %s23, 1
        %s314 = scalar_select %p313, %s23, 1
        %s315 = smul.addr %s314, 2
        %s316 = smul.addr %s315, 4
        %s317 = scalar_lea.vmem %s0, %s316
        %p318 = pneg %p44
        %p319 = pneg %p41
        %p320 = scmp.lt.s32.totalorder %s23, 1
        %s321 = scalar_select %p320, %s23, 1
        %s322 = smul.addr %s321, 4
        %s323 = scalar_lea.vmem %s1, %s322
        %p324 = pneg %p70
        %p325 = pneg %p67
        %p326 = scmp.lt.s32.totalorder %s23, 1
        %s327 = scalar_select %p326, %s23, 1
        %s328 = scalar_lea.vmem %s2, %s327
        %p329 = pneg %p96
        %p330 = pneg %p93
        %p331 = pneg %p117
        %p332 = pneg %p114
        %p333 = pneg %p138
        %p334 = pneg %p135
        %p335 = pneg %p159
        %p336 = pneg %p156
        %p337 = pneg %p180
        %p338 = pneg %p177
        %p339 = pneg %p201
        %p340 = pneg %p198
        %p341 = pneg %p222
        %p342 = pneg %p219
        %p343 = pneg %p248
        %p344 = pneg %p245
        %s345 = sand.u32 %s235, 1
        %s346 = scalar_lea.sflag [#allocation3], %s345
        %s347 = sand.u32 %s235, 1
        %s348 = scalar_lea.vmem [#allocation2], %s347
        %p349 = scmp.lt.s32.totalorder %s23, 1
        %s350 = scalar_select %p349, %s23, 1
        %s351 = smul.addr %s350, 2
        %s352 = smul.addr %s351, 4
        %s353 = scalar_lea.vmem %s0, %s352
        %p354 = scmp.lt.s32.totalorder %s23, 1
        %s355 = scalar_select %p354, %s23, 1
        %s356 = smul.addr %s355, 4
        %s357 = scalar_lea.vmem %s1, %s356
        %p358 = scmp.lt.s32.totalorder %s23, 1
        %s359 = scalar_select %p358, %s23, 1
        %s360 = scalar_lea.vmem %s2, %s359
        %v362 = vld [vmem:[%s353] sm:$0xf]
        %v363 = vld [vmem:[%s353 + $0x4] sm:$0xf]
        %v364 = vld [vmem:[%s357] sm:$0xf]
        %v365 = vld [vmem:[%s360] sm:$0x1]
        %v366 = vld [vmem:[%s3] sm:$0xf]
        %v367 = vld [vmem:[%s3 + $0x4] sm:$0xf]
        %v368 = vld [vmem:[%s3 + $0x8] sm:$0xf]
        %v369 = vld [vmem:[%s3 + $0xc] sm:$0xf]
        %v370 = vld [vmem:[%s3 + $0x10] sm:$0xf]
        %v371 = vld [vmem:[%s3 + $0x14] sm:$0xf]
        %v372 = vld [vmem:[%s3 + $0x18] sm:$0xf]
        %v373 = vld [vmem:[%s3 + $0x1c] sm:$0xf]
        %v374 = vld [vmem:[%s3 + $0x20] sm:$0xf]
        %v375 = vld [vmem:[%s3 + $0x24] sm:$0xf]
        %v376 = vld [vmem:[%s3 + $0x28] sm:$0xf]
        %v377 = vld [vmem:[%s3 + $0x2c] sm:$0xf]
        %v378 = vld [vmem:[%s3 + $0x30] sm:$0xf]
        %v379 = vld [vmem:[%s3 + $0x34] sm:$0xf]
        %v380 = vld [vmem:[%s3 + $0x38] sm:$0xf]
        %v381 = vld [vmem:[%s3 + $0x3c] sm:$0xf]
        %v382 = vld [vmem:[%s4] sm:$0x1]
        %v384 = vperm.slane %v382, 0
        %v388 = vunpack.c.l.b16 %v362
        %v389 = vunpack.c.l.b16 %v363
        %v390 = vpack.c.b16 %v389, %v388
        %v408 = vunpack.c.l.b16 %v366
        %v409 = vunpack.c.l.b16 %v367
        %v410 = vunpack.c.l.b16 %v368
        %v411 = vunpack.c.l.b16 %v369
        %v412 = vunpack.c.l.b16 %v370
        %v413 = vunpack.c.l.b16 %v371
        %v414 = vunpack.c.l.b16 %v372
        %v415 = vunpack.c.l.b16 %v373
        %v416 = vunpack.c.l.b16 %v374
        %v417 = vunpack.c.l.b16 %v375
        %v418 = vunpack.c.l.b16 %v376
        %v419 = vunpack.c.l.b16 %v377
        %v420 = vunpack.c.l.b16 %v378
        %v421 = vunpack.c.l.b16 %v379
        %v422 = vunpack.c.l.b16 %v380
        %v423 = vunpack.c.l.b16 %v381
        %v424 = vpack.c.b16 %v409, %v408
        %v425 = vpack.c.b16 %v411, %v410
        %v426 = vpack.c.b16 %v413, %v412
        %v427 = vpack.c.b16 %v415, %v414
        %v428 = vpack.c.b16 %v417, %v416
        %v429 = vpack.c.b16 %v419, %v418
        %v430 = vpack.c.b16 %v421, %v420
        %v431 = vpack.c.b16 %v423, %v422
        %440 = vmatpush.bf16.msra.mxu0 %v431
        %441 = vmatpush.bf16.msra.mxu0 %v430
        %442 = vmatpush.bf16.msra.mxu0 %v429
        %443 = vmatpush.bf16.msra.mxu0 %v428
        %444 = vmatpush.bf16.msra.mxu0 %v427
        %445 = vmatpush.bf16.msra.mxu0 %v426
        %446 = vmatpush.bf16.msra.mxu0 %v425
        %447 = vmatpush.bf16.msra.mxu0 %v424
        %448 = vmatmul.bf16.gmra.mxu0 %v390
        %v449 = vpop.f32.mrf.mxu0
        %v450 = vadd.f32 %v384, %v449
        %v451 = vpop.f32.mrf.mxu0
        %v452 = vadd.f32 %v384, %v451
        %453 = vdwg.mxu0
        %v454 = vmax.f32 %v450, 0.0
        %v455 = vmax.f32 %v452, 0.0
        %v456 = vpack.c.bf16 %v455, %v454
        %457 = vmatpush.bf16.xpose.msra.mxu0 0
        %458 = vmatpush.bf16.xpose.msra.mxu0 0
        %459 = vmatpush.bf16.xpose.msra.mxu0 0
        %460 = vmatpush.bf16.xpose.msra.mxu0 0
        %461 = vmatpush.bf16.xpose.msra.mxu0 0
        %462 = vmatpush.bf16.xpose.msra.mxu0 0
        %463 = vmatpush.bf16.xpose.msra.mxu0 0
        %464 = vmatpush.bf16.xpose.msra.mxu0 %v364
        %465 = vmatmul.bf16.gmra.mxu0 %v456
        %v466 = vpop.f32.mrf.mxu0
        %v467 = vadd.f32 0.0, %v466
        %v468 = vpop.f32.mrf.mxu0
        %v469 = vadd.f32 0.0, %v468
        %470 = vdwg.mxu0
        %vm471 = vcmp.gt.f32.partialorder %v365, 0.0
        %v472 = vsel %vm471, 1, 0
        %v473 = vperm.slane %v472, 0
        %vm474 = vcmp.eq.s32.totalorder %v473, 1
        %v475 = vsel %vm474, %v467, -1e+30
        %v476 = vsel %vm474, %v469, -1e+30
        %vm477 = vcmask 64512
        %v478 = vsel %vm477, %v475, -inf
        %479 = vmax.xlane.f32.xlu0 %v478
        %v480 = vpop.xlane.xlu0 %479
        %v481 = vsel %vm477, %v476, -inf
        %482 = vmax.xlane.f32.xlu0 %v481
        %v483 = vpop.xlane.xlu0 %482
        %v484 = vsub.f32 %v475, %v480
        %v485 = vsub.f32 %v476, %v483
        %v486 = vmul.f32 %v484, 1.442695
        %v487 = vpow.pop %v486
        %v488 = vmul.f32 %v485, 1.442695
        %v489 = vpow.pop %v488
        %v490 = vsel %vm477, %v487, 0.0
        %491 = vadd.xlane.f32.xlu0 %v490
        %v492 = vpop.xlane.xlu0 %491
        %v493 = vsel %vm477, %v489, 0.0
        %494 = vadd.xlane.f32.xlu0 %v493
        %v495 = vpop.xlane.xlu0 %494
        %v496 = vrcp.pop %v492
        %v497 = vrcp.pop %v495
        %v498 = vmul.f32 %v487, %v496
        %v499 = vmul.f32 %v489, %v497
        %v500 = vpack.c.bf16 %v499, %v498
        %v502 = vsel %vm477, %v500, 0
        %vm504 = vcmask 1043456
        %v506 = vsel %vm504, %v364, 0
        %508 = vmatpush.bf16.msra.mxu0 0
        %509 = vmatpush.bf16.msra.mxu0 0
        %510 = vmatpush.bf16.msra.mxu0 0
        %511 = vmatpush.bf16.msra.mxu0 0
        %512 = vmatpush.bf16.msra.mxu0 0
        %513 = vmatpush.bf16.msra.mxu0 0
        %514 = vmatpush.bf16.msra.mxu0 0
        %515 = vmatpush.bf16.msra.mxu0 %v506
        %516 = vmatmul.bf16.gmra.mxu0 %v502
        %v517 = vpop.f32.mrf.mxu0
        %v518 = vadd.f32 0.0, %v517
        %v519 = vpop.f32.mrf.mxu0
        %v520 = vadd.f32 0.0, %v519
        %521 = vdwg.mxu0
        %v522 = vmul.f32 %v454, %v518
        %v523 = vmul.f32 %v455, %v520
        %v524 = vpack.c.bf16 %v520, %v518
        %v525 = vpack.c.bf16 %v523, %v522
        %v526 = vld [vmem:[%s5] sm:$0xf]
        %v527 = vld [vmem:[%s5 + $0x4] sm:$0xf]
        %v528 = vld [vmem:[%s5 + $0x8] sm:$0xf]
        %v529 = vld [vmem:[%s5 + $0xc] sm:$0xf]
        %v530 = vld [vmem:[%s5 + $0x10] sm:$0xf]
        %v531 = vld [vmem:[%s5 + $0x14] sm:$0xf]
        %v532 = vld [vmem:[%s5 + $0x18] sm:$0xf]
        %v533 = vld [vmem:[%s5 + $0x1c] sm:$0xf]
        %v534 = vld [vmem:[%s5 + $0x20] sm:$0xf]
        %v535 = vld [vmem:[%s5 + $0x24] sm:$0xf]
        %v536 = vld [vmem:[%s5 + $0x28] sm:$0xf]
        %v537 = vld [vmem:[%s5 + $0x2c] sm:$0xf]
        %v538 = vld [vmem:[%s5 + $0x30] sm:$0xf]
        %v539 = vld [vmem:[%s5 + $0x34] sm:$0xf]
        %v540 = vld [vmem:[%s5 + $0x38] sm:$0xf]
        %v541 = vld [vmem:[%s5 + $0x3c] sm:$0xf]
        %v542 = vld [vmem:[%s5 + $0x40] sm:$0xf]
        %v543 = vld [vmem:[%s5 + $0x44] sm:$0xf]
        %v544 = vld [vmem:[%s5 + $0x48] sm:$0xf]
        %v545 = vld [vmem:[%s5 + $0x4c] sm:$0xf]
        %v546 = vld [vmem:[%s5 + $0x50] sm:$0xf]
        %v547 = vld [vmem:[%s5 + $0x54] sm:$0xf]
        %v548 = vld [vmem:[%s5 + $0x58] sm:$0xf]
        %v549 = vld [vmem:[%s5 + $0x5c] sm:$0xf]
        %v550 = vld [vmem:[%s5 + $0x60] sm:$0xf]
        %v551 = vld [vmem:[%s5 + $0x64] sm:$0xf]
        %v552 = vld [vmem:[%s5 + $0x68] sm:$0xf]
        %v553 = vld [vmem:[%s5 + $0x6c] sm:$0xf]
        %v554 = vld [vmem:[%s5 + $0x70] sm:$0xf]
        %v555 = vld [vmem:[%s5 + $0x74] sm:$0xf]
        %v556 = vld [vmem:[%s5 + $0x78] sm:$0xf]
        %v557 = vld [vmem:[%s5 + $0x7c] sm:$0xf]
        %v558 = vld [vmem:[%s5 + $0x80] sm:$0xf]
        %v559 = vld [vmem:[%s5 + $0x84] sm:$0xf]
        %v560 = vld [vmem:[%s5 + $0x88] sm:$0xf]
        %v561 = vld [vmem:[%s5 + $0x8c] sm:$0xf]
        %v562 = vld [vmem:[%s5 + $0x90] sm:$0xf]
        %v563 = vld [vmem:[%s5 + $0x94] sm:$0xf]
        %v564 = vld [vmem:[%s5 + $0x98] sm:$0xf]
        %v565 = vld [vmem:[%s5 + $0x9c] sm:$0xf]
        %v566 = vld [vmem:[%s5 + $0xa0] sm:$0xf]
        %v567 = vld [vmem:[%s5 + $0xa4] sm:$0xf]
        %v568 = vld [vmem:[%s5 + $0xa8] sm:$0xf]
        %v569 = vld [vmem:[%s5 + $0xac] sm:$0xf]
        %v570 = vld [vmem:[%s5 + $0xb0] sm:$0xf]
        %v571 = vld [vmem:[%s5 + $0xb4] sm:$0xf]
        %v572 = vld [vmem:[%s5 + $0xb8] sm:$0xf]
        %v573 = vld [vmem:[%s5 + $0xbc] sm:$0xf]
        %v574 = vld [vmem:[%s6] sm:$0x1]
        %v576 = vperm.slane %v574, 0
        %v626 = vunpack.c.l.b16 %v526
        %v627 = vunpack.c.l.b16 %v527
        %v628 = vunpack.c.l.b16 %v528
        %v629 = vunpack.c.l.b16 %v529
        %v630 = vunpack.c.l.b16 %v530
        %v631 = vunpack.c.l.b16 %v531
        %v632 = vunpack.c.l.b16 %v532
        %v633 = vunpack.c.l.b16 %v533
        %v634 = vunpack.c.l.b16 %v534
        %v635 = vunpack.c.l.b16 %v535
        %v636 = vunpack.c.l.b16 %v536
        %v637 = vunpack.c.l.b16 %v537
        %v638 = vunpack.c.l.b16 %v538
        %v639 = vunpack.c.l.b16 %v539
        %v640 = vunpack.c.l.b16 %v540
        %v641 = vunpack.c.l.b16 %v541
        %v642 = vunpack.c.l.b16 %v542
        %v643 = vunpack.c.l.b16 %v543
        %v644 = vunpack.c.l.b16 %v544
        %v645 = vunpack.c.l.b16 %v545
        %v646 = vunpack.c.l.b16 %v546
        %v647 = vunpack.c.l.b16 %v547
        %v648 = vunpack.c.l.b16 %v548
        %v649 = vunpack.c.l.b16 %v549
        %v650 = vunpack.c.l.b16 %v550
        %v651 = vunpack.c.l.b16 %v551
        %v652 = vunpack.c.l.b16 %v552
        %v653 = vunpack.c.l.b16 %v553
        %v654 = vunpack.c.l.b16 %v554
        %v655 = vunpack.c.l.b16 %v555
        %v656 = vunpack.c.l.b16 %v556
        %v657 = vunpack.c.l.b16 %v557
        %v658 = vunpack.c.l.b16 %v558
        %v659 = vunpack.c.l.b16 %v559
        %v660 = vunpack.c.l.b16 %v560
        %v661 = vunpack.c.l.b16 %v561
        %v662 = vunpack.c.l.b16 %v562
        %v663 = vunpack.c.l.b16 %v563
        %v664 = vunpack.c.l.b16 %v564
        %v665 = vunpack.c.l.b16 %v565
        %v666 = vunpack.c.l.b16 %v566
        %v667 = vunpack.c.l.b16 %v567
        %v668 = vunpack.c.l.b16 %v568
        %v669 = vunpack.c.l.b16 %v569
        %v670 = vunpack.c.l.b16 %v570
        %v671 = vunpack.c.l.b16 %v571
        %v672 = vunpack.c.l.b16 %v572
        %v673 = vunpack.c.l.b16 %v573
        %v674 = vpack.c.b16 %v627, %v626
        %v675 = vpack.c.b16 %v629, %v628
        %v676 = vpack.c.b16 %v631, %v630
        %v677 = vpack.c.b16 %v633, %v632
        %v678 = vpack.c.b16 %v635, %v634
        %v679 = vpack.c.b16 %v637, %v636
        %v680 = vpack.c.b16 %v639, %v638
        %v681 = vpack.c.b16 %v641, %v640
        %v682 = vpack.c.b16 %v643, %v642
        %v683 = vpack.c.b16 %v645, %v644
        %v684 = vpack.c.b16 %v647, %v646
        %v685 = vpack.c.b16 %v649, %v648
        %v686 = vpack.c.b16 %v651, %v650
        %v687 = vpack.c.b16 %v653, %v652
        %v688 = vpack.c.b16 %v655, %v654
        %v689 = vpack.c.b16 %v657, %v656
        %v690 = vpack.c.b16 %v659, %v658
        %v691 = vpack.c.b16 %v661, %v660
        %v692 = vpack.c.b16 %v663, %v662
        %v693 = vpack.c.b16 %v665, %v664
        %v694 = vpack.c.b16 %v667, %v666
        %v695 = vpack.c.b16 %v669, %v668
        %v696 = vpack.c.b16 %v671, %v670
        %v697 = vpack.c.b16 %v673, %v672
        %722 = vmatpush.bf16.msra.mxu0 %v681
        %723 = vmatpush.bf16.msra.mxu0 %v680
        %724 = vmatpush.bf16.msra.mxu0 %v679
        %725 = vmatpush.bf16.msra.mxu0 %v678
        %726 = vmatpush.bf16.msra.mxu0 %v677
        %727 = vmatpush.bf16.msra.mxu0 %v676
        %728 = vmatpush.bf16.msra.mxu0 %v675
        %729 = vmatpush.bf16.msra.mxu0 %v674
        %730 = vmatmul.bf16.gmra.mxu0 %v456
        %v731 = vpop.f32.mrf.mxu0
        %v732 = vadd.f32 %v576, %v731
        %v733 = vpop.f32.mrf.mxu0
        %v734 = vadd.f32 %v576, %v733
        %735 = vdwg.mxu0
        %736 = vmatpush.bf16.msra.mxu0 %v689
        %737 = vmatpush.bf16.msra.mxu0 %v688
        %738 = vmatpush.bf16.msra.mxu0 %v687
        %739 = vmatpush.bf16.msra.mxu0 %v686
        %740 = vmatpush.bf16.msra.mxu0 %v685
        %741 = vmatpush.bf16.msra.mxu0 %v684
        %742 = vmatpush.bf16.msra.mxu0 %v683
        %743 = vmatpush.bf16.msra.mxu0 %v682
        %744 = vmatmul.bf16.gmra.mxu0 %v524
        %v745 = vpop.f32.mrf.mxu0
        %v746 = vadd.f32 %v732, %v745
        %v747 = vpop.f32.mrf.mxu0
        %v748 = vadd.f32 %v734, %v747
        %749 = vdwg.mxu0
        %750 = vmatpush.bf16.msra.mxu0 %v697
        %751 = vmatpush.bf16.msra.mxu0 %v696
        %752 = vmatpush.bf16.msra.mxu0 %v695
        %753 = vmatpush.bf16.msra.mxu0 %v694
        %754 = vmatpush.bf16.msra.mxu0 %v693
        %755 = vmatpush.bf16.msra.mxu0 %v692
        %756 = vmatpush.bf16.msra.mxu0 %v691
        %757 = vmatpush.bf16.msra.mxu0 %v690
        %758 = vmatmul.bf16.gmra.mxu0 %v525
        %v759 = vpop.f32.mrf.mxu0
        %v760 = vadd.f32 %v746, %v759
        %v761 = vpop.f32.mrf.mxu0
        %v762 = vadd.f32 %v748, %v761
        %763 = vdwg.mxu0
        %v764 = vmax.f32 %v760, 0.0
        %v765 = vmax.f32 %v762, 0.0
        %v766 = vadd.f32 %v764, %v765
        %v767 = vrot.slane %v766, 4
        %v768 = vadd.f32 %v766, %v767
        %v769 = vrot.slane %v768, 2
        %v770 = vadd.f32 %v768, %v769
        %v771 = vrot.slane %v770, 1
        %v772 = vadd.f32 %v770, %v771
        %v773 = vmul.f32 %v772, 0.0625
        %v774 = vpack.c.bf16 %v773, %v773
        %v775 = vld [vmem:[%s7] sm:$0xf]
        %v776 = vld [vmem:[%s7 + $0x4] sm:$0xf]
        %v777 = vld [vmem:[%s7 + $0x8] sm:$0xf]
        %v778 = vld [vmem:[%s7 + $0xc] sm:$0xf]
        %v779 = vld [vmem:[%s7 + $0x10] sm:$0xf]
        %v780 = vld [vmem:[%s7 + $0x14] sm:$0xf]
        %v781 = vld [vmem:[%s7 + $0x18] sm:$0xf]
        %v782 = vld [vmem:[%s7 + $0x1c] sm:$0xf]
        %v783 = vld [vmem:[%s7 + $0x20] sm:$0xf]
        %v784 = vld [vmem:[%s7 + $0x24] sm:$0xf]
        %v785 = vld [vmem:[%s7 + $0x28] sm:$0xf]
        %v786 = vld [vmem:[%s7 + $0x2c] sm:$0xf]
        %v787 = vld [vmem:[%s7 + $0x30] sm:$0xf]
        %v788 = vld [vmem:[%s7 + $0x34] sm:$0xf]
        %v789 = vld [vmem:[%s7 + $0x38] sm:$0xf]
        %v790 = vld [vmem:[%s7 + $0x3c] sm:$0xf]
        %v791 = vld [vmem:[%s8] sm:$0x1]
        %v808 = vunpack.c.l.b16 %v775
        %v809 = vunpack.c.l.b16 %v776
        %v810 = vunpack.c.l.b16 %v777
        %v811 = vunpack.c.l.b16 %v778
        %v812 = vunpack.c.l.b16 %v779
        %v813 = vunpack.c.l.b16 %v780
        %v814 = vunpack.c.l.b16 %v781
        %v815 = vunpack.c.l.b16 %v782
        %v816 = vunpack.c.l.b16 %v783
        %v817 = vunpack.c.l.b16 %v784
        %v818 = vunpack.c.l.b16 %v785
        %v819 = vunpack.c.l.b16 %v786
        %v820 = vunpack.c.l.b16 %v787
        %v821 = vunpack.c.l.b16 %v788
        %v822 = vunpack.c.l.b16 %v789
        %v823 = vunpack.c.l.b16 %v790
        %v824 = vpack.c.b16 %v809, %v808
        %v825 = vpack.c.b16 %v811, %v810
        %v826 = vpack.c.b16 %v813, %v812
        %v827 = vpack.c.b16 %v815, %v814
        %v828 = vpack.c.b16 %v817, %v816
        %v829 = vpack.c.b16 %v819, %v818
        %v830 = vpack.c.b16 %v821, %v820
        %v831 = vpack.c.b16 %v823, %v822
        %840 = vmatpush.bf16.msra.mxu0 %v831
        %841 = vmatpush.bf16.msra.mxu0 %v830
        %842 = vmatpush.bf16.msra.mxu0 %v829
        %843 = vmatpush.bf16.msra.mxu0 %v828
        %844 = vmatpush.bf16.msra.mxu0 %v827
        %845 = vmatpush.bf16.msra.mxu0 %v826
        %846 = vmatpush.bf16.msra.mxu0 %v825
        %847 = vmatpush.bf16.msra.mxu0 %v824
        %848 = vmatmul.bf16.gmra.mxu0 %v774
        %v849 = vpop.f32.mrf.mxu0
        %v850 = vadd.f32 %v791, %v849
        %v851 = vpop.f32.mrf.mxu0
        %852 = vdwg.mxu0
        %853 = vst [vmem:[%s348] sm:$0x1] %v850
        %s854 = sand.u32 %s235, 1
        %s855 = scalar_lea.sflag [#allocation3], %s854
        %s856 = sand.u32 %s235, 1
        %s857 = scalar_lea.vmem [#allocation2], %s856
        // Predicated region
        $region57: #{tvqa_plus_forward.5} parent=55 // pred_check
          %p858 = pneg %p245
        $region58: #{tvqa_plus_forward.5} parent=55 // pred_check_branch
          %860 = sbr.rel (%p858) target = $region60
        $region59: #{tvqa_plus_forward.5} parent=55 // pred_region
          %862 = vsyncadd %s855, 0
          %s863 = scalar_lea.hbm %s9, %s23
          %s865 = sshll.u32 %s857, 4
          %s866 = int_to_ptr.vmem [resolvable:$true] %s865
          %s867 = sshll.u32 %s863, 4
          %s868 = int_to_ptr.hbm [resolvable:$true] %s867
          %870 = dma.vmem_to_hbm [thread:$0]  %s866, 16, %s868, %s855
        $region60: #{tvqa_plus_forward.5} parent=55 // pred_fallthru
          _
      $region56: #{tvqa_plus_forward.5} parent=5 // pred_fallthru
        _
      %p871 = scmp.le.s32.totalorder 2, %s18
      // Predicated region
      $region61: #{tvqa_plus_forward.5} parent=5 // pred_check
        %p872 = pneg %p871
      $region62: #{tvqa_plus_forward.5} parent=5 // pred_check_branch
        %874 = sbr.rel (%p872) target = $region64
      $region63: #{tvqa_plus_forward.5} parent=5 // pred_region
        %s875 = ssub.s32 %s18, 2
        // Predicated region
        $region65: #{tvqa_plus_forward.5} parent=63 // pred_check
          %p876 = pneg %p251
        $region66: #{tvqa_plus_forward.5} parent=63 // pred_check_branch
          %878 = sbr.rel (%p876) target = $region68
        $region67: #{tvqa_plus_forward.5} parent=63 // pred_region
          %s879 = sand.u32 %s236, 1
          %s880 = scalar_lea.sflag [#allocation3], %s879
          %s881 = sand.u32 %s236, 1
          %s882 = scalar_lea.vmem [#allocation2], %s881
          %884 = dma.done %s880, 16
        $region68: #{tvqa_plus_forward.5} parent=63 // pred_fallthru
          _
      $region64: #{tvqa_plus_forward.5} parent=5 // pred_fallthru
        _
    $region6: #{tvqa_plus_forward.5} parent=1 // loop_footer
      %s22 = sadd.s32 1, %s18
    $region7: #{tvqa_plus_forward.5} parent=1 // loop_footer_branch
      %17 = sbr.rel target = $region3
    $region8: #{tvqa_plus_forward.5} parent=1 // loop_exit
      _
    %885 = vsyncpa [#allocation3], 1
    %s886 = scalar_lea.sflag [#allocation3], 1
    %887 = vsyncpa %s886, 1

// kernel: tvqa_plus_forward.4
$region0: #{tvqa_plus_forward.4}
  #allocation0 [shape = 'u32[]', space=smem, size = 0x4, offset = 0x4, fixed_abs, tag = 'smem constant byte address 0x4 - core index']
  #allocation1 [shape = 'u32[72,128]{1,0:T(1,128)}', space=vmem, size = 0x9000, scoped, tag = 'internal scratch']
  %s0 = inlined_call_operand.vmem [shape: bf16[8,2,128], index: 0, kind: input, shape index: {}]
  %s1 = inlined_call_operand.vmem [shape: f32[8,2,1], index: 1, kind: input, shape index: {}]
  %s2 = inlined_call_operand.vmem [shape: bf16[128,128], index: 2, kind: input, shape index: {}]
  %s3 = inlined_call_operand.vmem [shape: bf16[32,128], index: 3, kind: input, shape index: {}]
  %s4 = inlined_call_operand.vmem [shape: f32[1,128], index: 4, kind: input, shape index: {}]
  %s5 = inlined_call_operand.vmem [shape: bf16[8,2,128], index: 5, kind: output, shape index: {}]
  %s6 = sld [smem:[#allocation0]]
  $region30: #{tvqa_plus_forward.4} parent=0
    _
  %s8 = ssub.s32 1, %s6
  %s9 = scalar_select 0, %s8, %s6
  // Predicated region
  $region2: #{tvqa_plus_forward.4} parent=0 // pred_check
    _
  $region3: #{tvqa_plus_forward.4} parent=0 // pred_check_branch
    %11 = sbr.rel (0) target = $region5
  $region4: #{tvqa_plus_forward.4} parent=0 // pred_region
    _
  $region5: #{tvqa_plus_forward.4} parent=0 // pred_fallthru
    _
  // Predicated region
  $region6: #{tvqa_plus_forward.4} parent=0 // pred_check
    _
  $region7: #{tvqa_plus_forward.4} parent=0 // pred_check_branch
    %13 = sbr.rel (0) target = $region9
  $region8: #{tvqa_plus_forward.4} parent=0 // pred_region
    _
  $region9: #{tvqa_plus_forward.4} parent=0 // pred_fallthru
    _
  // Predicated region
  $region10: #{tvqa_plus_forward.4} parent=0 // pred_check
    _
  $region11: #{tvqa_plus_forward.4} parent=0 // pred_check_branch
    %15 = sbr.rel (0) target = $region13
  $region12: #{tvqa_plus_forward.4} parent=0 // pred_region
    _
  $region13: #{tvqa_plus_forward.4} parent=0 // pred_fallthru
    _
  // Predicated region
  $region14: #{tvqa_plus_forward.4} parent=0 // pred_check
    _
  $region15: #{tvqa_plus_forward.4} parent=0 // pred_check_branch
    %17 = sbr.rel (0) target = $region17
  $region16: #{tvqa_plus_forward.4} parent=0 // pred_region
    _
  $region17: #{tvqa_plus_forward.4} parent=0 // pred_fallthru
    _
  // Predicated region
  $region18: #{tvqa_plus_forward.4} parent=0 // pred_check
    _
  $region19: #{tvqa_plus_forward.4} parent=0 // pred_check_branch
    %19 = sbr.rel (0) target = $region21
  $region20: #{tvqa_plus_forward.4} parent=0 // pred_region
    _
  $region21: #{tvqa_plus_forward.4} parent=0 // pred_fallthru
    _
  %v21 = vld [vmem:[%s0] sm:$0x1]
  %v22 = vld [vmem:[%s0 + $0x1] sm:$0x1]
  %v23 = vld [vmem:[%s0 + $0x2] sm:$0x1]
  %v24 = vld [vmem:[%s0 + $0x3] sm:$0x1]
  %v25 = vld [vmem:[%s0 + $0x4] sm:$0x1]
  %v26 = vld [vmem:[%s0 + $0x5] sm:$0x1]
  %v27 = vld [vmem:[%s0 + $0x6] sm:$0x1]
  %v28 = vld [vmem:[%s0 + $0x7] sm:$0x1]
  %v29 = vld [vmem:[%s1] sm:$0x3]
  %v30 = vld [vmem:[%s1 + $0x2] sm:$0x3]
  %v31 = vld [vmem:[%s1 + $0x4] sm:$0x3]
  %v32 = vld [vmem:[%s1 + $0x6] sm:$0x3]
  %v33 = vld [vmem:[%s1 + $0x8] sm:$0x3]
  %v34 = vld [vmem:[%s1 + $0xa] sm:$0x3]
  %v35 = vld [vmem:[%s1 + $0xc] sm:$0x3]
  %v36 = vld [vmem:[%s1 + $0xe] sm:$0x3]
  %v37 = vld [vmem:[%s3] sm:$0xf]
  %v38 = vld [vmem:[%s3 + $0x4] sm:$0xf]
  %v39 = vld [vmem:[%s3 + $0x8] sm:$0xf]
  %v40 = vld [vmem:[%s3 + $0xc] sm:$0xf]
  %v41 = vld [vmem:[%s2] sm:$0xf]
  %v42 = vld [vmem:[%s2 + $0x4] sm:$0xf]
  %v43 = vld [vmem:[%s2 + $0x8] sm:$0xf]
  %v44 = vld [vmem:[%s2 + $0xc] sm:$0xf]
  %v45 = vld [vmem:[%s2 + $0x10] sm:$0xf]
  %v46 = vld [vmem:[%s2 + $0x14] sm:$0xf]
  %v47 = vld [vmem:[%s2 + $0x18] sm:$0xf]
  %v48 = vld [vmem:[%s2 + $0x1c] sm:$0xf]
  %v49 = vld [vmem:[%s2 + $0x20] sm:$0xf]
  %v50 = vld [vmem:[%s2 + $0x24] sm:$0xf]
  %v51 = vld [vmem:[%s2 + $0x28] sm:$0xf]
  %v52 = vld [vmem:[%s2 + $0x2c] sm:$0xf]
  %v53 = vld [vmem:[%s2 + $0x30] sm:$0xf]
  %v54 = vld [vmem:[%s2 + $0x34] sm:$0xf]
  %v55 = vld [vmem:[%s2 + $0x38] sm:$0xf]
  %v56 = vld [vmem:[%s2 + $0x3c] sm:$0xf]
  %v57 = vld [vmem:[%s4] sm:$0x1]
  %v59 = vperm.slane %v57, 0
  %62 = vst [vmem:[#allocation1] ss:$9 sm:$0xff] %v21
  %s64 = scalar_lea.vmem [#allocation1], 1
  %65 = vst [vmem:[%s64] ss:$9 sm:$0xff] %v22
  %s67 = scalar_lea.vmem [#allocation1], 2
  %68 = vst [vmem:[%s67] ss:$9 sm:$0xff] %v23
  %s70 = scalar_lea.vmem [#allocation1], 3
  %71 = vst [vmem:[%s70] ss:$9 sm:$0xff] %v24
  %s73 = scalar_lea.vmem [#allocation1], 4
  %74 = vst [vmem:[%s73] ss:$9 sm:$0xff] %v25
  %s76 = scalar_lea.vmem [#allocation1], 5
  %77 = vst [vmem:[%s76] ss:$9 sm:$0xff] %v26
  %s79 = scalar_lea.vmem [#allocation1], 6
  %80 = vst [vmem:[%s79] ss:$9 sm:$0xff] %v27
  %s82 = scalar_lea.vmem [#allocation1], 7
  %83 = vst [vmem:[%s82] ss:$9 sm:$0xff] %v28
  %v84 = vld [vmem:[#allocation1] sm:$0xff]
  %v102 = vunpack.c.l.b16 %v41
  %v103 = vunpack.c.l.b16 %v42
  %v104 = vunpack.c.l.b16 %v43
  %v105 = vunpack.c.l.b16 %v44
  %v106 = vunpack.c.l.b16 %v45
  %v107 = vunpack.c.l.b16 %v46
  %v108 = vunpack.c.l.b16 %v47
  %v109 = vunpack.c.l.b16 %v48
  %v110 = vunpack.c.l.b16 %v49
  %v111 = vunpack.c.l.b16 %v50
  %v112 = vunpack.c.l.b16 %v51
  %v113 = vunpack.c.l.b16 %v52
  %v114 = vunpack.c.l.b16 %v53
  %v115 = vunpack.c.l.b16 %v54
  %v116 = vunpack.c.l.b16 %v55
  %v117 = vunpack.c.l.b16 %v56
  %v118 = vpack.c.b16 %v103, %v102
  %v119 = vpack.c.b16 %v105, %v104
  %v120 = vpack.c.b16 %v107, %v106
  %v121 = vpack.c.b16 %v109, %v108
  %v122 = vpack.c.b16 %v111, %v110
  %v123 = vpack.c.b16 %v113, %v112
  %v124 = vpack.c.b16 %v115, %v114
  %v125 = vpack.c.b16 %v117, %v116
  %134 = vmatpush.bf16.msra.mxu0 %v125
  %135 = vmatpush.bf16.msra.mxu0 %v124
  %136 = vmatpush.bf16.msra.mxu0 %v123
  %137 = vmatpush.bf16.msra.mxu0 %v122
  %138 = vmatpush.bf16.msra.mxu0 %v121
  %139 = vmatpush.bf16.msra.mxu0 %v120
  %140 = vmatpush.bf16.msra.mxu0 %v119
  %141 = vmatpush.bf16.msra.mxu0 %v118
  %142 = vmatmul.bf16.gmra.mxu0 %v84
  %v143 = vpop.f32.mrf.mxu0
  %v144 = vadd.f32 %v59, %v143
  %v145 = vpop.f32.mrf.mxu0
  %v146 = vadd.f32 %v59, %v145
  %147 = vdwg.mxu0
  %v150 = vrot.slane %v144, 2
  %v151 = vrot.slane %v144, 4
  %v152 = vrot.slane %v144, 6
  %v153 = vrot.slane %v146, 2
  %v154 = vrot.slane %v146, 4
  %v155 = vrot.slane %v146, 6
  %v166 = vunpack.c.l.b16 %v37
  %v167 = vunpack.c.l.b16 %v38
  %v168 = vunpack.c.l.b16 %v39
  %v169 = vunpack.c.l.b16 %v40
  %v170 = vpack.c.b16 %v167, %v166
  %v171 = vpack.c.b16 %v169, %v168
  %vm174 = vcmask 261120
  %v176 = vsel %vm174, 0, 0
  %178 = vmatpush.bf16.msra.mxu0 0
  %179 = vmatpush.bf16.msra.mxu0 0
  %180 = vmatpush.bf16.msra.mxu0 0
  %181 = vmatpush.bf16.msra.mxu0 0
  %182 = vmatpush.bf16.msra.mxu0 0
  %183 = vmatpush.bf16.msra.mxu0 0
  %184 = vmatpush.bf16.msra.mxu0 %v171
  %185 = vmatpush.bf16.msra.mxu0 %v170
  %186 = vmatmul.bf16.gmra.mxu0 %v176
  %v187 = vpop.f32.mrf.mxu0
  %v188 = vadd.f32 0.0, %v187
  %v189 = vpop.f32.mrf.mxu0
  %190 = vdwg.mxu0
  %v191 = vadd.f32 %v144, %v188
  %v192 = vxor.u32 %v191, 2147483648
  %v193 = vmul.f32 %v192, 1.442695
  %v194 = vpow.pop %v193
  %v195 = vadd.f32 %v194, 1.0
  %v196 = vrcp.pop %v195
  %v197 = vmul.f32 %v195, %v196
  %v198 = vsub.f32 1.0, %v197
  %v199 = vmul.f32 %v196, %v198
  %v200 = vadd.f32 %v196, %v199
  %vm201 = vweird.f32 %v195
  %vm202 = vweird.f32 %v196
  %vm203 = vmor %vm201, %vm202
  %v204 = vsel %vm203, %v196, %v200
  %v205 = vand.u32 2147483647, %v195
  %vm206 = vcmp.eq.f32.partialorder %v205, 8.507059e+37
  %v207 = vand.u32 %v195, 2147483648
  %v208 = vor.u32 1.1754944e-38, %v207
  %v209 = vsel %vm206, %v208, %v204
  %v210 = vmul.f32 1.0, %v209
  %v211 = vtanh.pop %v191
  %v212 = vmul.f32 %v210, 0.0
  %214 = vrot.lane.b32.xlu0 %v211, 64
  %v215 = vpop.permute.xlu0 %214
  %v217 = vmul.f32 %v210, %v215
  %219 = vrot.lane.b32.xlu0 %v217, 32
  %v220 = vpop.permute.xlu0 %219
  %v222 = vadd.f32 %v212, %v220
  %v223 = vtanh.pop %v222
  %225 = vrot.lane.b32.xlu0 %v223, 64
  %v226 = vpop.permute.xlu0 %225
  %v228 = vmul.f32 %v210, %v226
  %230 = vset.pattern.permute.xlu0 0
  %231 = vperm.xlu0 %230, %v29
  %v232 = vpop.permute.xlu0 %231
  %235 = vst [vmem:[#allocation1] ss:$4 sm:$0xff] %v228
  %v236 = vld.sshfl [vmem:[#allocation1] sm:$0xff pattern:$0x73625140]
  %237 = vrot.lane.b32.xlu0 %v236, 32
  %v238 = vpop.permute.xlu0 %237
  %v240 = vmul.f32 %v232, %v238
  %v241 = vsub.f32 1.0, %v29
  %243 = vset.pattern.permute.xlu0 0
  %244 = vperm.xlu0 %243, %v241
  %v245 = vpop.permute.xlu0 %244
  %v247 = vmul.f32 %v245, 0.0
  %v248 = vadd.f32 %v240, %v247
  %250 = vst [vmem:[#allocation1] ss:$4 sm:$0xff] %v222
  %v251 = vld.sshfl [vmem:[#allocation1] sm:$0xff pattern:$0x73625140]
  %252 = vrot.lane.b32.xlu0 %v251, 96
  %v253 = vpop.permute.xlu0 %252
  %v255 = vmul.f32 %v232, %v253
  %v256 = vadd.f32 %v255, %v247
  %v257 = vpack.c.bf16 %v240, %v240
  %v258 = vpack.c.bf16 %v248, %v248
  %v260 = vsel %vm174, %v258, 0
  %262 = vmatpush.bf16.msra.mxu0 0
  %263 = vmatpush.bf16.msra.mxu0 0
  %264 = vmatpush.bf16.msra.mxu0 0
  %265 = vmatpush.bf16.msra.mxu0 0
  %266 = vmatpush.bf16.msra.mxu0 0
  %267 = vmatpush.bf16.msra.mxu0 0
  %268 = vmatpush.bf16.msra.mxu0 %v171
  %269 = vmatpush.bf16.msra.mxu0 %v170
  %270 = vmatmul.bf16.gmra.mxu0 %v260
  %v271 = vpop.f32.mrf.mxu0
  %v272 = vadd.f32 0.0, %v271
  %v273 = vpop.f32.mrf.mxu0
  %274 = vdwg.mxu0
  %v275 = vadd.f32 %v150, %v272
  %v276 = vxor.u32 %v275, 2147483648
  %v277 = vmul.f32 %v276, 1.442695
  %v278 = vpow.pop %v277
  %v279 = vadd.f32 %v278, 1.0
  %v280 = vrcp.pop %v279
  %v281 = vmul.f32 %v279, %v280
  %v282 = vsub.f32 1.0, %v281
  %v283 = vmul.f32 %v280, %v282
  %v284 = vadd.f32 %v280, %v283
  %vm285 = vweird.f32 %v279
  %vm286 = vweird.f32 %v280
  %vm287 = vmor %vm285, %vm286
  %v288 = vsel %vm287, %v280, %v284
  %v289 = vand.u32 2147483647, %v279
  %vm290 = vcmp.eq.f32.partialorder %v289, 8.507059e+37
  %v291 = vand.u32 %v279, 2147483648
  %v292 = vor.u32 1.1754944e-38, %v291
  %v293 = vsel %vm290, %v292, %v288
  %v294 = vmul.f32 1.0, %v293
  %v295 = vtanh.pop %v275
  %297 = vrot.lane.b32.xlu0 %v256, 32
  %v298 = vpop.permute.xlu0 %297
  %v300 = vmul.f32 %v294, %v298
  %302 = vrot.lane.b32.xlu0 %v295, 64
  %v303 = vpop.permute.xlu0 %302
  %v305 = vmul.f32 %v294, %v303
  %307 = vrot.lane.b32.xlu0 %v305, 32
  %v308 = vpop.permute.xlu0 %307
  %v310 = vadd.f32 %v300, %v308
  %v311 = vtanh.pop %v310
  %313 = vrot.lane.b32.xlu0 %v311, 64
  %v314 = vpop.permute.xlu0 %313
  %v316 = vmul.f32 %v294, %v314
  %318 = vset.pattern.permute.xlu0 0
  %319 = vperm.xlu0 %318, %v30
  %v320 = vpop.permute.xlu0 %319
  %323 = vst [vmem:[#allocation1] ss:$4 sm:$0xff] %v316
  %v324 = vld.sshfl [vmem:[#allocation1] sm:$0xff pattern:$0x73625140]
  %325 = vrot.lane.b32.xlu0 %v324, 32
  %v326 = vpop.permute.xlu0 %325
  %v328 = vmul.f32 %v320, %v326
  %v329 = vsub.f32 1.0, %v30
  %331 = vset.pattern.permute.xlu0 0
  %332 = vperm.xlu0 %331, %v329
  %v333 = vpop.permute.xlu0 %332
  %v335 = vmul.f32 %v333, %v248
  %v336 = vadd.f32 %v328, %v335
  %338 = vst [vmem:[#allocation1] ss:$4 sm:$0xff] %v310
  %v339 = vld.sshfl [vmem:[#allocation1] sm:$0xff pattern:$0x73625140]
  %340 = vrot.lane.b32.xlu0 %v339, 96
  %v341 = vpop.permute.xlu0 %340
  %v343 = vmul.f32 %v320, %v341
  %v344 = vmul.f32 %v333, %v256
  %v345 = vadd.f32 %v343, %v344
  %v346 = vpack.c.bf16 %v328, %v328
  %v347 = vpack.c.bf16 %v336, %v336
  %v349 = vsel %vm174, %v347, 0
  %351 = vmatpush.bf16.msra.mxu0 0
  %352 = vmatpush.bf16.msra.mxu0 0
  %353 = vmatpush.bf16.msra.mxu0 0
  %354 = vmatpush.bf16.msra.mxu0 0
  %355 = vmatpush.bf16.msra.mxu0 0
  %356 = vmatpush.bf16.msra.mxu0 0
  %357 = vmatpush.bf16.msra.mxu0 %v171
  %358 = vmatpush.bf16.msra.mxu0 %v170
  %359 = vmatmul.bf16.gmra.mxu0 %v349
  %v360 = vpop.f32.mrf.mxu0
  %v361 = vadd.f32 0.0, %v360
  %v362 = vpop.f32.mrf.mxu0
  %363 = vdwg.mxu0
  %v364 = vadd.f32 %v151, %v361
  %v365 = vxor.u32 %v364, 2147483648
  %v366 = vmul.f32 %v365, 1.442695
  %v367 = vpow.pop %v366
  %v368 = vadd.f32 %v367, 1.0
  %v369 = vrcp.pop %v368
  %v370 = vmul.f32 %v368, %v369
  %v371 = vsub.f32 1.0, %v370
  %v372 = vmul.f32 %v369, %v371
  %v373 = vadd.f32 %v369, %v372
  %vm374 = vweird.f32 %v368
  %vm375 = vweird.f32 %v369
  %vm376 = vmor %vm374, %vm375
  %v377 = vsel %vm376, %v369, %v373
  %v378 = vand.u32 2147483647, %v368
  %vm379 = vcmp.eq.f32.partialorder %v378, 8.507059e+37
  %v380 = vand.u32 %v368, 2147483648
  %v381 = vor.u32 1.1754944e-38, %v380
  %v382 = vsel %vm379, %v381, %v377
  %v383 = vmul.f32 1.0, %v382
  %v384 = vtanh.pop %v364
  %386 = vrot.lane.b32.xlu0 %v345, 32
  %v387 = vpop.permute.xlu0 %386
  %v389 = vmul.f32 %v383, %v387
  %391 = vrot.lane.b32.xlu0 %v384, 64
  %v392 = vpop.permute.xlu0 %391
  %v394 = vmul.f32 %v383, %v392
  %396 = vrot.lane.b32.xlu0 %v394, 32
  %v397 = vpop.permute.xlu0 %396
  %v399 = vadd.f32 %v389, %v397
  %v400 = vtanh.pop %v399
  %402 = vrot.lane.b32.xlu0 %v400, 64
  %v403 = vpop.permute.xlu0 %402
  %v405 = vmul.f32 %v383, %v403
  %407 = vset.pattern.permute.xlu0 0
  %408 = vperm.xlu0 %407, %v31
  %v409 = vpop.permute.xlu0 %408
  %412 = vst [vmem:[#allocation1] ss:$4 sm:$0xff] %v405
  %v413 = vld.sshfl [vmem:[#allocation1] sm:$0xff pattern:$0x73625140]
  %414 = vrot.lane.b32.xlu0 %v413, 32
  %v415 = vpop.permute.xlu0 %414
  %v417 = vmul.f32 %v409, %v415
  %v418 = vsub.f32 1.0, %v31
  %420 = vset.pattern.permute.xlu0 0
  %421 = vperm.xlu0 %420, %v418
  %v422 = vpop.permute.xlu0 %421
  %v424 = vmul.f32 %v422, %v336
  %v425 = vadd.f32 %v417, %v424
  %427 = vst [vmem:[#allocation1] ss:$4 sm:$0xff] %v399
  %v428 = vld.sshfl [vmem:[#allocation1] sm:$0xff pattern:$0x73625140]
  %429 = vrot.lane.b32.xlu0 %v428, 96
  %v430 = vpop.permute.xlu0 %429
  %v432 = vmul.f32 %v409, %v430
  %v433 = vmul.f32 %v422, %v345
  %v434 = vadd.f32 %v432, %v433
  %v435 = vpack.c.bf16 %v417, %v417
  %v436 = vpack.c.bf16 %v425, %v425
  %v438 = vsel %vm174, %v436, 0
  %440 = vmatpush.bf16.msra.mxu0 0
  %441 = vmatpush.bf16.msra.mxu0 0
  %442 = vmatpush.bf16.msra.mxu0 0
  %443 = vmatpush.bf16.msra.mxu0 0
  %444 = vmatpush.bf16.msra.mxu0 0
  %445 = vmatpush.bf16.msra.mxu0 0
  %446 = vmatpush.bf16.msra.mxu0 %v171
  %447 = vmatpush.bf16.msra.mxu0 %v170
  %448 = vmatmul.bf16.gmra.mxu0 %v438
  %v449 = vpop.f32.mrf.mxu0
  %v450 = vadd.f32 0.0, %v449
  %v451 = vpop.f32.mrf.mxu0
  %452 = vdwg.mxu0
  %v453 = vadd.f32 %v152, %v450
  %v454 = vxor.u32 %v453, 2147483648
  %v455 = vmul.f32 %v454, 1.442695
  %v456 = vpow.pop %v455
  %v457 = vadd.f32 %v456, 1.0
  %v458 = vrcp.pop %v457
  %v459 = vmul.f32 %v457, %v458
  %v460 = vsub.f32 1.0, %v459
  %v461 = vmul.f32 %v458, %v460
  %v462 = vadd.f32 %v458, %v461
  %vm463 = vweird.f32 %v457
  %vm464 = vweird.f32 %v458
  %vm465 = vmor %vm463, %vm464
  %v466 = vsel %vm465, %v458, %v462
  %v467 = vand.u32 2147483647, %v457
  %vm468 = vcmp.eq.f32.partialorder %v467, 8.507059e+37
  %v469 = vand.u32 %v457, 2147483648
  %v470 = vor.u32 1.1754944e-38, %v469
  %v471 = vsel %vm468, %v470, %v466
  %v472 = vmul.f32 1.0, %v471
  %v473 = vtanh.pop %v453
  %475 = vrot.lane.b32.xlu0 %v434, 32
  %v476 = vpop.permute.xlu0 %475
  %v478 = vmul.f32 %v472, %v476
  %480 = vrot.lane.b32.xlu0 %v473, 64
  %v481 = vpop.permute.xlu0 %480
  %v483 = vmul.f32 %v472, %v481
  %485 = vrot.lane.b32.xlu0 %v483, 32
  %v486 = vpop.permute.xlu0 %485
  %v488 = vadd.f32 %v478, %v486
  %v489 = vtanh.pop %v488
  %491 = vrot.lane.b32.xlu0 %v489, 64
  %v492 = vpop.permute.xlu0 %491
  %v494 = vmul.f32 %v472, %v492
  %496 = vset.pattern.permute.xlu0 0
  %497 = vperm.xlu0 %496, %v32
  %v498 = vpop.permute.xlu0 %497
  %501 = vst [vmem:[#allocation1] ss:$4 sm:$0xff] %v494
  %v502 = vld.sshfl [vmem:[#allocation1] sm:$0xff pattern:$0x73625140]
  %503 = vrot.lane.b32.xlu0 %v502, 32
  %v504 = vpop.permute.xlu0 %503
  %v506 = vmul.f32 %v498, %v504
  %v507 = vsub.f32 1.0, %v32
  %509 = vset.pattern.permute.xlu0 0
  %510 = vperm.xlu0 %509, %v507
  %v511 = vpop.permute.xlu0 %510
  %v513 = vmul.f32 %v511, %v425
  %v514 = vadd.f32 %v506, %v513
  %516 = vst [vmem:[#allocation1] ss:$4 sm:$0xff] %v488
  %v517 = vld.sshfl [vmem:[#allocation1] sm:$0xff pattern:$0x73625140]
  %518 = vrot.lane.b32.xlu0 %v517, 96
  %v519 = vpop.permute.xlu0 %518
  %v521 = vmul.f32 %v498, %v519
  %v522 = vmul.f32 %v511, %v434
  %v523 = vadd.f32 %v521, %v522
  %v524 = vpack.c.bf16 %v506, %v506
  %v525 = vpack.c.bf16 %v514, %v514
  %v527 = vsel %vm174, %v525, 0
  %529 = vmatpush.bf16.msra.mxu0 0
  %530 = vmatpush.bf16.msra.mxu0 0
  %531 = vmatpush.bf16.msra.mxu0 0
  %532 = vmatpush.bf16.msra.mxu0 0
  %533 = vmatpush.bf16.msra.mxu0 0
  %534 = vmatpush.bf16.msra.mxu0 0
  %535 = vmatpush.bf16.msra.mxu0 %v171
  %536 = vmatpush.bf16.msra.mxu0 %v170
  %537 = vmatmul.bf16.gmra.mxu0 %v527
  %v538 = vpop.f32.mrf.mxu0
  %v539 = vadd.f32 0.0, %v538
  %v540 = vpop.f32.mrf.mxu0
  %541 = vdwg.mxu0
  %v542 = vadd.f32 %v146, %v539
  %v543 = vxor.u32 %v542, 2147483648
  %v544 = vmul.f32 %v543, 1.442695
  %v545 = vpow.pop %v544
  %v546 = vadd.f32 %v545, 1.0
  %v547 = vrcp.pop %v546
  %v548 = vmul.f32 %v546, %v547
  %v549 = vsub.f32 1.0, %v548
  %v550 = vmul.f32 %v547, %v549
  %v551 = vadd.f32 %v547, %v550
  %vm552 = vweird.f32 %v546
  %vm553 = vweird.f32 %v547
  %vm554 = vmor %vm552, %vm553
  %v555 = vsel %vm554, %v547, %v551
  %v556 = vand.u32 2147483647, %v546
  %vm557 = vcmp.eq.f32.partialorder %v556, 8.507059e+37
  %v558 = vand.u32 %v546, 2147483648
  %v559 = vor.u32 1.1754944e-38, %v558
  %v560 = vsel %vm557, %v559, %v555
  %v561 = vmul.f32 1.0, %v560
  %v562 = vtanh.pop %v542
  %564 = vrot.lane.b32.xlu0 %v523, 32
  %v565 = vpop.permute.xlu0 %564
  %v567 = vmul.f32 %v561, %v565
  %569 = vrot.lane.b32.xlu0 %v562, 64
  %v570 = vpop.permute.xlu0 %569
  %v572 = vmul.f32 %v561, %v570
  %574 = vrot.lane.b32.xlu0 %v572, 32
  %v575 = vpop.permute.xlu0 %574
  %v577 = vadd.f32 %v567, %v575
  %v578 = vtanh.pop %v577
  %580 = vrot.lane.b32.xlu0 %v578, 64
  %v581 = vpop.permute.xlu0 %580
  %v583 = vmul.f32 %v561, %v581
  %585 = vset.pattern.permute.xlu0 0
  %586 = vperm.xlu0 %585, %v33
  %v587 = vpop.permute.xlu0 %586
  %590 = vst [vmem:[#allocation1] ss:$4 sm:$0xff] %v583
  %v591 = vld.sshfl [vmem:[#allocation1] sm:$0xff pattern:$0x73625140]
  %592 = vrot.lane.b32.xlu0 %v591, 32
  %v593 = vpop.permute.xlu0 %592
  %v595 = vmul.f32 %v587, %v593
  %v596 = vsub.f32 1.0, %v33
  %598 = vset.pattern.permute.xlu0 0
  %599 = vperm.xlu0 %598, %v596
  %v600 = vpop.permute.xlu0 %599
  %v602 = vmul.f32 %v600, %v514
  %v603 = vadd.f32 %v595, %v602
  %605 = vst [vmem:[#allocation1] ss:$4 sm:$0xff] %v577
  %v606 = vld.sshfl [vmem:[#allocation1] sm:$0xff pattern:$0x73625140]
  %607 = vrot.lane.b32.xlu0 %v606, 96
  %v608 = vpop.permute.xlu0 %607
  %v610 = vmul.f32 %v587, %v608
  %v611 = vmul.f32 %v600, %v523
  %v612 = vadd.f32 %v610, %v611
  %v613 = vpack.c.bf16 %v595, %v595
  %v614 = vpack.c.bf16 %v603, %v603
  %v616 = vsel %vm174, %v614, 0
  %618 = vmatpush.bf16.msra.mxu0 0
  %619 = vmatpush.bf16.msra.mxu0 0
  %620 = vmatpush.bf16.msra.mxu0 0
  %621 = vmatpush.bf16.msra.mxu0 0
  %622 = vmatpush.bf16.msra.mxu0 0
  %623 = vmatpush.bf16.msra.mxu0 0
  %624 = vmatpush.bf16.msra.mxu0 %v171
  %625 = vmatpush.bf16.msra.mxu0 %v170
  %626 = vmatmul.bf16.gmra.mxu0 %v616
  %v627 = vpop.f32.mrf.mxu0
  %v628 = vadd.f32 0.0, %v627
  %v629 = vpop.f32.mrf.mxu0
  %630 = vdwg.mxu0
  %v631 = vadd.f32 %v153, %v628
  %v632 = vxor.u32 %v631, 2147483648
  %v633 = vmul.f32 %v632, 1.442695
  %v634 = vpow.pop %v633
  %v635 = vadd.f32 %v634, 1.0
  %v636 = vrcp.pop %v635
  %v637 = vmul.f32 %v635, %v636
  %v638 = vsub.f32 1.0, %v637
  %v639 = vmul.f32 %v636, %v638
  %v640 = vadd.f32 %v636, %v639
  %vm641 = vweird.f32 %v635
  %vm642 = vweird.f32 %v636
  %vm643 = vmor %vm641, %vm642
  %v644 = vsel %vm643, %v636, %v640
  %v645 = vand.u32 2147483647, %v635
  %vm646 = vcmp.eq.f32.partialorder %v645, 8.507059e+37
  %v647 = vand.u32 %v635, 2147483648
  %v648 = vor.u32 1.1754944e-38, %v647
  %v649 = vsel %vm646, %v648, %v644
  %v650 = vmul.f32 1.0, %v649
  %v651 = vtanh.pop %v631
  %653 = vrot.lane.b32.xlu0 %v612, 32
  %v654 = vpop.permute.xlu0 %653
  %v656 = vmul.f32 %v650, %v654
  %658 = vrot.lane.b32.xlu0 %v651, 64
  %v659 = vpop.permute.xlu0 %658
  %v661 = vmul.f32 %v650, %v659
  %663 = vrot.lane.b32.xlu0 %v661, 32
  %v664 = vpop.permute.xlu0 %663
  %v666 = vadd.f32 %v656, %v664
  %v667 = vtanh.pop %v666
  %669 = vrot.lane.b32.xlu0 %v667, 64
  %v670 = vpop.permute.xlu0 %669
  %v672 = vmul.f32 %v650, %v670
  %674 = vset.pattern.permute.xlu0 0
  %675 = vperm.xlu0 %674, %v34
  %v676 = vpop.permute.xlu0 %675
  %679 = vst [vmem:[#allocation1] ss:$4 sm:$0xff] %v672
  %v680 = vld.sshfl [vmem:[#allocation1] sm:$0xff pattern:$0x73625140]
  %681 = vrot.lane.b32.xlu0 %v680, 32
  %v682 = vpop.permute.xlu0 %681
  %v684 = vmul.f32 %v676, %v682
  %v685 = vsub.f32 1.0, %v34
  %687 = vset.pattern.permute.xlu0 0
  %688 = vperm.xlu0 %687, %v685
  %v689 = vpop.permute.xlu0 %688
  %v691 = vmul.f32 %v689, %v603
  %v692 = vadd.f32 %v684, %v691
  %694 = vst [vmem:[#allocation1] ss:$4 sm:$0xff] %v666
  %v695 = vld.sshfl [vmem:[#allocation1] sm:$0xff pattern:$0x73625140]
  %696 = vrot.lane.b32.xlu0 %v695, 96
  %v697 = vpop.permute.xlu0 %696
  %v699 = vmul.f32 %v676, %v697
  %v700 = vmul.f32 %v689, %v612
  %v701 = vadd.f32 %v699, %v700
  %v702 = vpack.c.bf16 %v684, %v684
  %v703 = vpack.c.bf16 %v692, %v692
  %v705 = vsel %vm174, %v703, 0
  %707 = vmatpush.bf16.msra.mxu0 0
  %708 = vmatpush.bf16.msra.mxu0 0
  %709 = vmatpush.bf16.msra.mxu0 0
  %710 = vmatpush.bf16.msra.mxu0 0
  %711 = vmatpush.bf16.msra.mxu0 0
  %712 = vmatpush.bf16.msra.mxu0 0
  %713 = vmatpush.bf16.msra.mxu0 %v171
  %714 = vmatpush.bf16.msra.mxu0 %v170
  %715 = vmatmul.bf16.gmra.mxu0 %v705
  %v716 = vpop.f32.mrf.mxu0
  %v717 = vadd.f32 0.0, %v716
  %v718 = vpop.f32.mrf.mxu0
  %719 = vdwg.mxu0
  %v720 = vadd.f32 %v154, %v717
  %v721 = vxor.u32 %v720, 2147483648
  %v722 = vmul.f32 %v721, 1.442695
  %v723 = vpow.pop %v722
  %v724 = vadd.f32 %v723, 1.0
  %v725 = vrcp.pop %v724
  %v726 = vmul.f32 %v724, %v725
  %v727 = vsub.f32 1.0, %v726
  %v728 = vmul.f32 %v725, %v727
  %v729 = vadd.f32 %v725, %v728
  %vm730 = vweird.f32 %v724
  %vm731 = vweird.f32 %v725
  %vm732 = vmor %vm730, %vm731
  %v733 = vsel %vm732, %v725, %v729
  %v734 = vand.u32 2147483647, %v724
  %vm735 = vcmp.eq.f32.partialorder %v734, 8.507059e+37
  %v736 = vand.u32 %v724, 2147483648
  %v737 = vor.u32 1.1754944e-38, %v736
  %v738 = vsel %vm735, %v737, %v733
  %v739 = vmul.f32 1.0, %v738
  %v740 = vtanh.pop %v720
  %742 = vrot.lane.b32.xlu0 %v701, 32
  %v743 = vpop.permute.xlu0 %742
  %v745 = vmul.f32 %v739, %v743
  %747 = vrot.lane.b32.xlu0 %v740, 64
  %v748 = vpop.permute.xlu0 %747
  %v750 = vmul.f32 %v739, %v748
  %752 = vrot.lane.b32.xlu0 %v750, 32
  %v753 = vpop.permute.xlu0 %752
  %v755 = vadd.f32 %v745, %v753
  %v756 = vtanh.pop %v755
  %758 = vrot.lane.b32.xlu0 %v756, 64
  %v759 = vpop.permute.xlu0 %758
  %v761 = vmul.f32 %v739, %v759
  %763 = vset.pattern.permute.xlu0 0
  %764 = vperm.xlu0 %763, %v35
  %v765 = vpop.permute.xlu0 %764
  %768 = vst [vmem:[#allocation1] ss:$4 sm:$0xff] %v761
  %v769 = vld.sshfl [vmem:[#allocation1] sm:$0xff pattern:$0x73625140]
  %770 = vrot.lane.b32.xlu0 %v769, 32
  %v771 = vpop.permute.xlu0 %770
  %v773 = vmul.f32 %v765, %v771
  %v774 = vsub.f32 1.0, %v35
  %776 = vset.pattern.permute.xlu0 0
  %777 = vperm.xlu0 %776, %v774
  %v778 = vpop.permute.xlu0 %777
  %v780 = vmul.f32 %v778, %v692
  %v781 = vadd.f32 %v773, %v780
  %783 = vst [vmem:[#allocation1] ss:$4 sm:$0xff] %v755
  %v784 = vld.sshfl [vmem:[#allocation1] sm:$0xff pattern:$0x73625140]
  %785 = vrot.lane.b32.xlu0 %v784, 96
  %v786 = vpop.permute.xlu0 %785
  %v788 = vmul.f32 %v765, %v786
  %v789 = vmul.f32 %v778, %v701
  %v790 = vadd.f32 %v788, %v789
  %v791 = vpack.c.bf16 %v773, %v773
  %v792 = vpack.c.bf16 %v781, %v781
  %v794 = vsel %vm174, %v792, 0
  %796 = vmatpush.bf16.msra.mxu0 0
  %797 = vmatpush.bf16.msra.mxu0 0
  %798 = vmatpush.bf16.msra.mxu0 0
  %799 = vmatpush.bf16.msra.mxu0 0
  %800 = vmatpush.bf16.msra.mxu0 0
  %801 = vmatpush.bf16.msra.mxu0 0
  %802 = vmatpush.bf16.msra.mxu0 %v171
  %803 = vmatpush.bf16.msra.mxu0 %v170
  %804 = vmatmul.bf16.gmra.mxu0 %v794
  %v805 = vpop.f32.mrf.mxu0
  %v806 = vadd.f32 0.0, %v805
  %v807 = vpop.f32.mrf.mxu0
  %808 = vdwg.mxu0
  %v809 = vadd.f32 %v155, %v806
  %v810 = vxor.u32 %v809, 2147483648
  %v811 = vmul.f32 %v810, 1.442695
  %v812 = vpow.pop %v811
  %v813 = vadd.f32 %v812, 1.0
  %v814 = vrcp.pop %v813
  %v815 = vmul.f32 %v813, %v814
  %v816 = vsub.f32 1.0, %v815
  %v817 = vmul.f32 %v814, %v816
  %v818 = vadd.f32 %v814, %v817
  %vm819 = vweird.f32 %v813
  %vm820 = vweird.f32 %v814
  %vm821 = vmor %vm819, %vm820
  %v822 = vsel %vm821, %v814, %v818
  %v823 = vand.u32 2147483647, %v813
  %vm824 = vcmp.eq.f32.partialorder %v823, 8.507059e+37
  %v825 = vand.u32 %v813, 2147483648
  %v826 = vor.u32 1.1754944e-38, %v825
  %v827 = vsel %vm824, %v826, %v822
  %v828 = vmul.f32 1.0, %v827
  %v829 = vtanh.pop %v809
  %831 = vrot.lane.b32.xlu0 %v790, 32
  %v832 = vpop.permute.xlu0 %831
  %v834 = vmul.f32 %v828, %v832
  %836 = vrot.lane.b32.xlu0 %v829, 64
  %v837 = vpop.permute.xlu0 %836
  %v839 = vmul.f32 %v828, %v837
  %841 = vrot.lane.b32.xlu0 %v839, 32
  %v842 = vpop.permute.xlu0 %841
  %v844 = vadd.f32 %v834, %v842
  %v845 = vtanh.pop %v844
  %847 = vrot.lane.b32.xlu0 %v845, 64
  %v848 = vpop.permute.xlu0 %847
  %v850 = vmul.f32 %v828, %v848
  %852 = vset.pattern.permute.xlu0 0
  %853 = vperm.xlu0 %852, %v36
  %v854 = vpop.permute.xlu0 %853
  %857 = vst [vmem:[#allocation1] ss:$4 sm:$0xff] %v850
  %v858 = vld.sshfl [vmem:[#allocation1] sm:$0xff pattern:$0x73625140]
  %859 = vrot.lane.b32.xlu0 %v858, 32
  %v860 = vpop.permute.xlu0 %859
  %v862 = vmul.f32 %v854, %v860
  %v863 = vpack.c.bf16 %v862, %v862
  %v865 = vsel %vm174, %v257, 0
  %v868 = vsel %vm174, %v346, 0
  %v871 = vsel %vm174, %v435, 0
  %v874 = vsel %vm174, %v524, 0
  %v877 = vsel %vm174, %v613, 0
  %v880 = vsel %vm174, %v702, 0
  %v883 = vsel %vm174, %v791, 0
  %v886 = vsel %vm174, %v863, 0
  %888 = vst [vmem:[%s5] sm:$0x1] %v865
  %889 = vst [vmem:[%s5 + $0x1] sm:$0x1] %v868
  %890 = vst [vmem:[%s5 + $0x2] sm:$0x1] %v871
  %891 = vst [vmem:[%s5 + $0x3] sm:$0x1] %v874
  %892 = vst [vmem:[%s5 + $0x4] sm:$0x1] %v877
  %893 = vst [vmem:[%s5 + $0x5] sm:$0x1] %v880
  %894 = vst [vmem:[%s5 + $0x6] sm:$0x1] %v883
  %895 = vst [vmem:[%s5 + $0x7] sm:$0x1] %v886
  // Predicated region
  $region22: #{tvqa_plus_forward.4} parent=0 // pred_check
    _
  $region23: #{tvqa_plus_forward.4} parent=0 // pred_check_branch
    %897 = sbr.rel (0) target = $region25
  $region24: #{tvqa_plus_forward.4} parent=0 // pred_region
    _
  $region25: #{tvqa_plus_forward.4} parent=0 // pred_fallthru
    _
  // Predicated region
  $region26: #{tvqa_plus_forward.4} parent=0 // pred_check
    _
  $region27: #{tvqa_plus_forward.4} parent=0 // pred_check_branch
    %899 = sbr.rel (0) target = $region29
  $region28: #{tvqa_plus_forward.4} parent=0 // pred_region
    _
  $region29: #{tvqa_plus_forward.4} parent=0 // pred_fallthru
    _

// kernel: tvqa_plus_forward.3
$region0: #{tvqa_plus_forward.3}
  #allocation0 [shape = 'u32[]', space=smem, size = 0x4, offset = 0x4, fixed_abs, tag = 'smem constant byte address 0x4 - core index']
  #allocation1 [shape = 'u32[72,128]{1,0:T(1,128)}', space=vmem, size = 0x9000, scoped, tag = 'internal scratch']
  #allocation2 [shape = 'bf16[4,5,5,512]{3,2,1,0:T(8,128)(2,1)}', space=vmem, size = 0x28000, scoped, tag = 'scratch operand']
  %s0 = inlined_call_operand.vmem [shape: bf16[8,5,5,48], index: 0, kind: input, shape index: {}]
  %s1 = inlined_call_operand.vmem [shape: bf16[192,512], index: 1, kind: input, shape index: {}]
  %s2 = inlined_call_operand.vmem [shape: f32[1,512], index: 2, kind: input, shape index: {}]
  %s3 = inlined_call_operand.vmem [shape: bf16[4,512,128], index: 3, kind: input, shape index: {}]
  %s4 = inlined_call_operand.vmem [shape: f32[1,128], index: 4, kind: input, shape index: {}]
  %s5 = inlined_call_operand.vmem [shape: bf16[2,4,512], index: 5, kind: output, shape index: {}]
  %s6 = sld [smem:[#allocation0]]
  $region53: #{tvqa_plus_forward.3} parent=0
    _
  %s8 = ssub.s32 1, %s6
  %s9 = scalar_select 0, %s8, %s6
  loop: start=0, step=1, limit=4
  $region2: #{tvqa_plus_forward.3} parent=0 // loop_pre_header
    _
  $region3: #{tvqa_plus_forward.3} parent=0 // loop_header
    %s11 = sphi 0, %s15
    %p12 = scmp.ge.s32.totalorder %s11, 4
    %s21 = sphi 0, %s23
    %s24 = sphi 0, %s21
    %s25 = sphi 0, %s24
    %s41 = sphi 0, %s25
    %s45 = sphi 0, %s45
    %s47 = sphi 0, %s45
    %s48 = sphi 0, %s47
    %s62 = sphi 0, %s48
    %s66 = sphi 0, %s66
    %s68 = sphi 0, %s66
    %s69 = sphi 0, %s68
    %s83 = sphi 0, %s69
    %s87 = sphi 0, %s87
    %s89 = sphi 0, %s87
    %s90 = sphi 0, %s89
    %s104 = sphi 0, %s90
    %s108 = sphi 0, %s108
    %s110 = sphi 0, %s108
    %s111 = sphi 0, %s110
    %s125 = sphi 0, %s111
    %s131 = sphi 0, %s133
    %s134 = sphi 0, %s131
    %s135 = sphi 0, %s134
    %s151 = sphi 0, %s135
  $region4: #{tvqa_plus_forward.3} parent=0 // loop_header_branch
    %14 = sbr.rel (%p12) target = $region8
  $region5: #{tvqa_plus_forward.3} parent=0 // loop_body
    %s16 = ssub.s32 %s11, 1
    %s17 = ssub.s32 %s11, 2
    %s18 = sadd.s32 %s11, 1
    %s19 = ssub.s32 %s11, %s18
    %p20 = scmp.eq.s32.totalorder %s19, 0
    %s22 = sadd.s32 %s21, 1
    %s23 = scalar_select %p20, %s21, %s22
    %p26 = pneg %p20
    %p27 = scmp.eq.s32.totalorder %s11, 1
    %p28 = por %p26, %p27
    %p29 = scmp.ne.s32.totalorder %s21, %s24
    %p30 = scmp.eq.s32.totalorder %s11, 0
    %p31 = por %p29, %p30
    %p32 = scmp.ne.s32.totalorder %s21, %s24
    %p33 = scmp.eq.s32.totalorder %s16, 1
    %p34 = por %p32, %p33
    %p35 = scmp.ne.s32.totalorder %s24, %s25
    %p36 = scmp.eq.s32.totalorder %s16, 0
    %p37 = por %p35, %p36
    %p38 = scmp.ne.s32.totalorder %s24, %s25
    %p39 = scmp.eq.s32.totalorder %s17, 1
    %p40 = por %p38, %p39
    %p42 = scmp.ne.s32.totalorder %s25, %s41
    %p43 = scmp.eq.s32.totalorder %s17, 0
    %p44 = por %p42, %p43
    %s46 = sadd.s32 %s45, 1
    %p49 = scmp.eq.s32.totalorder %s11, 1
    %p50 = scmp.ne.s32.totalorder %s45, %s47
    %p51 = scmp.eq.s32.totalorder %s11, 0
    %p52 = por %p50, %p51
    %p53 = scmp.ne.s32.totalorder %s45, %s47
    %p54 = scmp.eq.s32.totalorder %s16, 1
    %p55 = por %p53, %p54
    %p56 = scmp.ne.s32.totalorder %s47, %s48
    %p57 = scmp.eq.s32.totalorder %s16, 0
    %p58 = por %p56, %p57
    %p59 = scmp.ne.s32.totalorder %s47, %s48
    %p60 = scmp.eq.s32.totalorder %s17, 1
    %p61 = por %p59, %p60
    %p63 = scmp.ne.s32.totalorder %s48, %s62
    %p64 = scmp.eq.s32.totalorder %s17, 0
    %p65 = por %p63, %p64
    %s67 = sadd.s32 %s66, 1
    %p70 = scmp.eq.s32.totalorder %s11, 1
    %p71 = scmp.ne.s32.totalorder %s66, %s68
    %p72 = scmp.eq.s32.totalorder %s11, 0
    %p73 = por %p71, %p72
    %p74 = scmp.ne.s32.totalorder %s66, %s68
    %p75 = scmp.eq.s32.totalorder %s16, 1
    %p76 = por %p74, %p75
    %p77 = scmp.ne.s32.totalorder %s68, %s69
    %p78 = scmp.eq.s32.totalorder %s16, 0
    %p79 = por %p77, %p78
    %p80 = scmp.ne.s32.totalorder %s68, %s69
    %p81 = scmp.eq.s32.totalorder %s17, 1
    %p82 = por %p80, %p81
    %p84 = scmp.ne.s32.totalorder %s69, %s83
    %p85 = scmp.eq.s32.totalorder %s17, 0
    %p86 = por %p84, %p85
    %s88 = sadd.s32 %s87, 1
    %p91 = scmp.eq.s32.totalorder %s11, 1
    %p92 = scmp.ne.s32.totalorder %s87, %s89
    %p93 = scmp.eq.s32.totalorder %s11, 0
    %p94 = por %p92, %p93
    %p95 = scmp.ne.s32.totalorder %s87, %s89
    %p96 = scmp.eq.s32.totalorder %s16, 1
    %p97 = por %p95, %p96
    %p98 = scmp.ne.s32.totalorder %s89, %s90
    %p99 = scmp.eq.s32.totalorder %s16, 0
    %p100 = por %p98, %p99
    %p101 = scmp.ne.s32.totalorder %s89, %s90
    %p102 = scmp.eq.s32.totalorder %s17, 1
    %p103 = por %p101, %p102
    %p105 = scmp.ne.s32.totalorder %s90, %s104
    %p106 = scmp.eq.s32.totalorder %s17, 0
    %p107 = por %p105, %p106
    %s109 = sadd.s32 %s108, 1
    %p112 = scmp.eq.s32.totalorder %s11, 1
    %p113 = scmp.ne.s32.totalorder %s108, %s110
    %p114 = scmp.eq.s32.totalorder %s11, 0
    %p115 = por %p113, %p114
    %p116 = scmp.ne.s32.totalorder %s108, %s110
    %p117 = scmp.eq.s32.totalorder %s16, 1
    %p118 = por %p116, %p117
    %p119 = scmp.ne.s32.totalorder %s110, %s111
    %p120 = scmp.eq.s32.totalorder %s16, 0
    %p121 = por %p119, %p120
    %p122 = scmp.ne.s32.totalorder %s110, %s111
    %p123 = scmp.eq.s32.totalorder %s17, 1
    %p124 = por %p122, %p123
    %p126 = scmp.ne.s32.totalorder %s111, %s125
    %p127 = scmp.eq.s32.totalorder %s17, 0
    %p128 = por %p126, %p127
    %s129 = ssub.s32 %s11, %s18
    %p130 = scmp.eq.s32.totalorder %s129, 0
    %s132 = sadd.s32 %s131, 1
    %s133 = scalar_select %p130, %s131, %s132
    %p136 = pneg %p130
    %p137 = scmp.eq.s32.totalorder %s11, 1
    %p138 = por %p136, %p137
    %p139 = scmp.ne.s32.totalorder %s131, %s134
    %p140 = scmp.eq.s32.totalorder %s11, 0
    %p141 = por %p139, %p140
    %p142 = scmp.ne.s32.totalorder %s131, %s134
    %p143 = scmp.eq.s32.totalorder %s16, 1
    %p144 = por %p142, %p143
    %p145 = scmp.ne.s32.totalorder %s134, %s135
    %p146 = scmp.eq.s32.totalorder %s16, 0
    %p147 = por %p145, %p146
    %p148 = scmp.ne.s32.totalorder %s134, %s135
    %p149 = scmp.eq.s32.totalorder %s17, 1
    %p150 = por %p148, %p149
    %p152 = scmp.ne.s32.totalorder %s135, %s151
    %p153 = scmp.eq.s32.totalorder %s17, 0
    %p154 = por %p152, %p153
    %p155 = scmp.le.s32.totalorder 1, %s11
    %p156 = scmp.lt.s32.totalorder %s11, 3
    %p157 = pnand %p155, %p156
    %p158 = pneg %p157
    // Predicated region
    $region9: #{tvqa_plus_forward.3} parent=5 // pred_check
      _
    $region10: #{tvqa_plus_forward.3} parent=5 // pred_check_branch
      %160 = sbr.rel (%p157) target = $region12
    $region11: #{tvqa_plus_forward.3} parent=5 // pred_region
      %s161 = ssub.s32 %s11, 1
      // Predicated region
      $region13: #{tvqa_plus_forward.3} parent=11 // pred_check
        %p162 = pneg %p58
      $region14: #{tvqa_plus_forward.3} parent=11 // pred_check_branch
        %164 = sbr.rel (%p162) target = $region16
      $region15: #{tvqa_plus_forward.3} parent=11 // pred_region
        _
      $region16: #{tvqa_plus_forward.3} parent=11 // pred_fallthru
        _
      // Predicated region
      $region17: #{tvqa_plus_forward.3} parent=11 // pred_check
        %p165 = pneg %p79
      $region18: #{tvqa_plus_forward.3} parent=11 // pred_check_branch
        %167 = sbr.rel (%p165) target = $region20
      $region19: #{tvqa_plus_forward.3} parent=11 // pred_region
        _
      $region20: #{tvqa_plus_forward.3} parent=11 // pred_fallthru
        _
      // Predicated region
      $region21: #{tvqa_plus_forward.3} parent=11 // pred_check
        %p168 = pneg %p100
      $region22: #{tvqa_plus_forward.3} parent=11 // pred_check_branch
        %170 = sbr.rel (%p168) target = $region24
      $region23: #{tvqa_plus_forward.3} parent=11 // pred_region
        _
      $region24: #{tvqa_plus_forward.3} parent=11 // pred_fallthru
        _
      // Predicated region
      $region25: #{tvqa_plus_forward.3} parent=11 // pred_check
        %p171 = pneg %p121
      $region26: #{tvqa_plus_forward.3} parent=11 // pred_check_branch
        %173 = sbr.rel (%p171) target = $region28
      $region27: #{tvqa_plus_forward.3} parent=11 // pred_region
        _
      $region28: #{tvqa_plus_forward.3} parent=11 // pred_fallthru
        _
    $region12: #{tvqa_plus_forward.3} parent=5 // pred_fallthru
      _
    %p174 = scmp.lt.s32.totalorder %s11, 2
    // Predicated region
    $region29: #{tvqa_plus_forward.3} parent=5 // pred_check
      %p175 = pneg %p174
    $region30: #{tvqa_plus_forward.3} parent=5 // pred_check_branch
      %177 = sbr.rel (%p175) target = $region32
    $region31: #{tvqa_plus_forward.3} parent=5 // pred_region
      // Predicated region
      $region33: #{tvqa_plus_forward.3} parent=31 // pred_check
        %p178 = pneg %p31
      $region34: #{tvqa_plus_forward.3} parent=31 // pred_check_branch
        %180 = sbr.rel (%p178) target = $region36
      $region35: #{tvqa_plus_forward.3} parent=31 // pred_region
        %s181 = smul.u32 4, %s11
        %p182 = scmp.lt.s32.totalorder %s181, 7
        %s183 = scalar_select %p182, %s181, 7
        %s184 = smul.addr %s183, 5
        %s185 = smul.addr %s184, 4
        %s186 = scalar_lea.vmem %s0, %s185
        %s187 = smul.u32 4, %s11
      $region36: #{tvqa_plus_forward.3} parent=31 // pred_fallthru
        _
    $region32: #{tvqa_plus_forward.3} parent=5 // pred_fallthru
      _
    %p188 = scmp.le.s32.totalorder 1, %s11
    %p189 = scmp.lt.s32.totalorder %s11, 3
    %p190 = pnand %p188, %p189
    %p191 = pneg %p190
    // Predicated region
    $region37: #{tvqa_plus_forward.3} parent=5 // pred_check
      _
    $region38: #{tvqa_plus_forward.3} parent=5 // pred_check_branch
      %193 = sbr.rel (%p190) target = $region40
    $region39: #{tvqa_plus_forward.3} parent=5 // pred_region
      %s194 = ssub.s32 %s11, 1
      %s195 = smul.u32 4, %s16
      %p196 = scmp.lt.s32.totalorder %s195, 7
      %s197 = scalar_select %p196, %s195, 7
      %s198 = smul.addr %s197, 5
      %s199 = smul.addr %s198, 4
      %s200 = scalar_lea.vmem %s0, %s199
      %p201 = pneg %p37
      %p202 = pneg %p34
      %p203 = pneg %p58
      %p204 = pneg %p55
      %p205 = pneg %p79
      %p206 = pneg %p76
      %p207 = pneg %p100
      %p208 = pneg %p97
      %p209 = pneg %p121
      %p210 = pneg %p118
      %p211 = pneg %p147
      %p212 = pneg %p144
      %p213 = scmp.lt.s32.totalorder %s16, 1
      %s214 = scalar_select %p213, %s16, 1
      %s215 = smul.addr %s214, 4
      %s216 = smul.addr %s215, 2
      %s217 = scalar_lea.vmem %s5, %s216
      %s218 = smul.u32 4, %s16
      %p219 = scmp.lt.s32.totalorder %s218, 7
      %s220 = scalar_select %p219, %s218, 7
      %s221 = smul.addr %s220, 5
      %s222 = smul.addr %s221, 4
      %s223 = scalar_lea.vmem %s0, %s222
      %s224 = smul.u32 4, %s16
      %p225 = scmp.lt.s32.totalorder %s16, 1
      %s226 = scalar_select %p225, %s16, 1
      %s227 = smul.addr %s226, 4
      %s228 = smul.addr %s227, 2
      %s229 = scalar_lea.vmem %s5, %s228
      %vm231 = vcmask 1042432
      %vm232 = vsmask.f32 2304
      %vm233 = vmand %vm231, %vm232
      %vm234 = vcmask 1046532
      %vm235 = vsmask.f32 6400
      %vm236 = vmand %vm234, %vm235
      %vm237 = vmor %vm236, %vm233
      %v238 = vld [vmem:[#allocation2] sm:$0x77]
      %v239 = vsel %vm237, 0, %v238
      %240 = vst [vmem:[#allocation2] sm:$0x77] %v239
      %v241 = vld [vmem:[#allocation2 + $0x8] sm:$0x77]
      %v242 = vsel %vm237, 0, %v241
      %243 = vst [vmem:[#allocation2 + $0x8] sm:$0x77] %v242
      %v244 = vld [vmem:[#allocation2 + $0x50] sm:$0x77]
      %v245 = vsel %vm237, 0, %v244
      %246 = vst [vmem:[#allocation2 + $0x50] sm:$0x77] %v245
      %v247 = vld [vmem:[#allocation2 + $0x58] sm:$0x77]
      %v248 = vsel %vm237, 0, %v247
      %249 = vst [vmem:[#allocation2 + $0x58] sm:$0x77] %v248
      %v250 = vld [vmem:[#allocation2 + $0xa0] sm:$0x77]
      %v251 = vsel %vm237, 0, %v250
      %252 = vst [vmem:[#allocation2 + $0xa0] sm:$0x77] %v251
      %v253 = vld [vmem:[#allocation2 + $0xa8] sm:$0x77]
      %v254 = vsel %vm237, 0, %v253
      %255 = vst [vmem:[#allocation2 + $0xa8] sm:$0x77] %v254
      %v256 = vld [vmem:[#allocation2 + $0xf0] sm:$0x77]
      %v257 = vsel %vm237, 0, %v256
      %258 = vst [vmem:[#allocation2 + $0xf0] sm:$0x77] %v257
      %v259 = vld [vmem:[#allocation2 + $0xf8] sm:$0x77]
      %v260 = vsel %vm237, 0, %v259
      %261 = vst [vmem:[#allocation2 + $0xf8] sm:$0x77] %v260
      %vm262 = vcmask 1040384
      %vm263 = vsmask.f32 256
      %vm264 = vmand %vm262, %vm263
      %vm265 = vcmask 1044484
      %vm266 = vsmask.f32 4352
      %vm267 = vmand %vm265, %vm266
      %vm268 = vmor %vm267, %vm264
      %v269 = vld [vmem:[#allocation2] sm:$0x11]
      %v270 = vsel %vm268, 0, %v269
      %271 = vst [vmem:[#allocation2] sm:$0x11] %v270
      %v272 = vld [vmem:[#allocation2 + $0x8] sm:$0x11]
      %v273 = vsel %vm268, 0, %v272
      %274 = vst [vmem:[#allocation2 + $0x8] sm:$0x11] %v273
      %v275 = vld [vmem:[#allocation2 + $0x10] sm:$0x11]
      %v276 = vsel %vm268, 0, %v275
      %277 = vst [vmem:[#allocation2 + $0x10] sm:$0x11] %v276
      %v278 = vld [vmem:[#allocation2 + $0x18] sm:$0x11]
      %v279 = vsel %vm268, 0, %v278
      %280 = vst [vmem:[#allocation2 + $0x18] sm:$0x11] %v279
      %v281 = vld [vmem:[#allocation2 + $0x20] sm:$0x11]
      %v282 = vsel %vm268, 0, %v281
      %283 = vst [vmem:[#allocation2 + $0x20] sm:$0x11] %v282
      %v284 = vld [vmem:[#allocation2 + $0x28] sm:$0x11]
      %v285 = vsel %vm268, 0, %v284
      %286 = vst [vmem:[#allocation2 + $0x28] sm:$0x11] %v285
      %v287 = vld [vmem:[#allocation2 + $0x30] sm:$0x11]
      %v288 = vsel %vm268, 0, %v287
      %289 = vst [vmem:[#allocation2 + $0x30] sm:$0x11] %v288
      %v290 = vld [vmem:[#allocation2 + $0x38] sm:$0x11]
      %v291 = vsel %vm268, 0, %v290
      %292 = vst [vmem:[#allocation2 + $0x38] sm:$0x11] %v291
      %v293 = vld [vmem:[#allocation2 + $0x40] sm:$0x11]
      %v294 = vsel %vm268, 0, %v293
      %295 = vst [vmem:[#allocation2 + $0x40] sm:$0x11] %v294
      %v296 = vld [vmem:[#allocation2 + $0x48] sm:$0x11]
      %v297 = vsel %vm268, 0, %v296
      %298 = vst [vmem:[#allocation2 + $0x48] sm:$0x11] %v297
      %v299 = vld [vmem:[#allocation2 + $0x50] sm:$0x11]
      %v300 = vsel %vm268, 0, %v299
      %301 = vst [vmem:[#allocation2 + $0x50] sm:$0x11] %v300
      %v302 = vld [vmem:[#allocation2 + $0x58] sm:$0x11]
      %v303 = vsel %vm268, 0, %v302
      %304 = vst [vmem:[#allocation2 + $0x58] sm:$0x11] %v303
      %v305 = vld [vmem:[#allocation2 + $0x60] sm:$0x11]
      %v306 = vsel %vm268, 0, %v305
      %307 = vst [vmem:[#allocation2 + $0x60] sm:$0x11] %v306
      %v308 = vld [vmem:[#allocation2 + $0x68] sm:$0x11]
      %v309 = vsel %vm268, 0, %v308
      %310 = vst [vmem:[#allocation2 + $0x68] sm:$0x11] %v309
      %v311 = vld [vmem:[#allocation2 + $0x70] sm:$0x11]
      %v312 = vsel %vm268, 0, %v311
      %313 = vst [vmem:[#allocation2 + $0x70] sm:$0x11] %v312
      %v314 = vld [vmem:[#allocation2 + $0x78] sm:$0x11]
      %v315 = vsel %vm268, 0, %v314
      %316 = vst [vmem:[#allocation2 + $0x78] sm:$0x11] %v315
      %v317 = vld [vmem:[#allocation2 + $0x80] sm:$0x11]
      %v318 = vsel %vm268, 0, %v317
      %319 = vst [vmem:[#allocation2 + $0x80] sm:$0x11] %v318
      %v320 = vld [vmem:[#allocation2 + $0x88] sm:$0x11]
      %v321 = vsel %vm268, 0, %v320
      %322 = vst [vmem:[#allocation2 + $0x88] sm:$0x11] %v321
      %v323 = vld [vmem:[#allocation2 + $0x90] sm:$0x11]
      %v324 = vsel %vm268, 0, %v323
      %325 = vst [vmem:[#allocation2 + $0x90] sm:$0x11] %v324
      %v326 = vld [vmem:[#allocation2 + $0x98] sm:$0x11]
      %v327 = vsel %vm268, 0, %v326
      %328 = vst [vmem:[#allocation2 + $0x98] sm:$0x11] %v327
      %v329 = vld [vmem:[#allocation2 + $0xa0] sm:$0x11]
      %v330 = vsel %vm268, 0, %v329
      %331 = vst [vmem:[#allocation2 + $0xa0] sm:$0x11] %v330
      %v332 = vld [vmem:[#allocation2 + $0xa8] sm:$0x11]
      %v333 = vsel %vm268, 0, %v332
      %334 = vst [vmem:[#allocation2 + $0xa8] sm:$0x11] %v333
      %v335 = vld [vmem:[#allocation2 + $0xb0] sm:$0x11]
      %v336 = vsel %vm268, 0, %v335
      %337 = vst [vmem:[#allocation2 + $0xb0] sm:$0x11] %v336
      %v338 = vld [vmem:[#allocation2 + $0xb8] sm:$0x11]
      %v339 = vsel %vm268, 0, %v338
      %340 = vst [vmem:[#allocation2 + $0xb8] sm:$0x11] %v339
      %v341 = vld [vmem:[#allocation2 + $0xc0] sm:$0x11]
      %v342 = vsel %vm268, 0, %v341
      %343 = vst [vmem:[#allocation2 + $0xc0] sm:$0x11] %v342
      %v344 = vld [vmem:[#allocation2 + $0xc8] sm:$0x11]
      %v345 = vsel %vm268, 0, %v344
      %346 = vst [vmem:[#allocation2 + $0xc8] sm:$0x11] %v345
      %v347 = vld [vmem:[#allocation2 + $0xd0] sm:$0x11]
      %v348 = vsel %vm268, 0, %v347
      %349 = vst [vmem:[#allocation2 + $0xd0] sm:$0x11] %v348
      %v350 = vld [vmem:[#allocation2 + $0xd8] sm:$0x11]
      %v351 = vsel %vm268, 0, %v350
      %352 = vst [vmem:[#allocation2 + $0xd8] sm:$0x11] %v351
      %v353 = vld [vmem:[#allocation2 + $0xe0] sm:$0x11]
      %v354 = vsel %vm268, 0, %v353
      %355 = vst [vmem:[#allocation2 + $0xe0] sm:$0x11] %v354
      %v356 = vld [vmem:[#allocation2 + $0xe8] sm:$0x11]
      %v357 = vsel %vm268, 0, %v356
      %358 = vst [vmem:[#allocation2 + $0xe8] sm:$0x11] %v357
      %v359 = vld [vmem:[#allocation2 + $0xf0] sm:$0x11]
      %v360 = vsel %vm268, 0, %v359
      %361 = vst [vmem:[#allocation2 + $0xf0] sm:$0x11] %v360
      %v362 = vld [vmem:[#allocation2 + $0xf8] sm:$0x11]
      %v363 = vsel %vm268, 0, %v362
      %364 = vst [vmem:[#allocation2 + $0xf8] sm:$0x11] %v363
      %v365 = vld [vmem:[#allocation2 + $0x100] sm:$0x11]
      %v366 = vsel %vm268, 0, %v365
      %367 = vst [vmem:[#allocation2 + $0x100] sm:$0x11] %v366
      %v368 = vld [vmem:[#allocation2 + $0x108] sm:$0x11]
      %v369 = vsel %vm268, 0, %v368
      %370 = vst [vmem:[#allocation2 + $0x108] sm:$0x11] %v369
      %v371 = vld [vmem:[#allocation2 + $0x110] sm:$0x11]
      %v372 = vsel %vm268, 0, %v371
      %373 = vst [vmem:[#allocation2 + $0x110] sm:$0x11] %v372
      %v374 = vld [vmem:[#allocation2 + $0x118] sm:$0x11]
      %v375 = vsel %vm268, 0, %v374
      %376 = vst [vmem:[#allocation2 + $0x118] sm:$0x11] %v375
      %v377 = vld [vmem:[#allocation2 + $0x120] sm:$0x11]
      %v378 = vsel %vm268, 0, %v377
      %379 = vst [vmem:[#allocation2 + $0x120] sm:$0x11] %v378
      %v380 = vld [vmem:[#allocation2 + $0x128] sm:$0x11]
      %v381 = vsel %vm268, 0, %v380
      %382 = vst [vmem:[#allocation2 + $0x128] sm:$0x11] %v381
      %v383 = vld [vmem:[#allocation2 + $0x130] sm:$0x11]
      %v384 = vsel %vm268, 0, %v383
      %385 = vst [vmem:[#allocation2 + $0x130] sm:$0x11] %v384
      %v386 = vld [vmem:[#allocation2 + $0x138] sm:$0x11]
      %v387 = vsel %vm268, 0, %v386
      %388 = vst [vmem:[#allocation2 + $0x138] sm:$0x11] %v387
      %v389 = vld [vmem:[%s223] sm:$0x7]
      %v390 = vld [vmem:[%s223 + $0x4] sm:$0x7]
      %v391 = vld [vmem:[%s223 + $0x8] sm:$0x7]
      %v392 = vld [vmem:[%s223 + $0xc] sm:$0x7]
      %v393 = vld [vmem:[%s223 + $0x10] sm:$0x7]
      %v394 = vld [vmem:[%s223 + $0x14] sm:$0x7]
      %v395 = vld [vmem:[%s223 + $0x18] sm:$0x7]
      %v396 = vld [vmem:[%s223 + $0x1c] sm:$0x7]
      %v397 = vld [vmem:[%s223 + $0x20] sm:$0x7]
      %v398 = vld [vmem:[%s223 + $0x24] sm:$0x7]
      %v399 = vld [vmem:[%s223 + $0x28] sm:$0x7]
      %v400 = vld [vmem:[%s223 + $0x2c] sm:$0x7]
      %v401 = vld [vmem:[%s223 + $0x30] sm:$0x7]
      %v402 = vld [vmem:[%s223 + $0x34] sm:$0x7]
      %v403 = vld [vmem:[%s223 + $0x38] sm:$0x7]
      %v404 = vld [vmem:[%s223 + $0x3c] sm:$0x7]
      %v405 = vld [vmem:[%s223 + $0x40] sm:$0x7]
      %v406 = vld [vmem:[%s223 + $0x44] sm:$0x7]
      %v407 = vld [vmem:[%s223 + $0x48] sm:$0x7]
      %v408 = vld [vmem:[%s223 + $0x4c] sm:$0x7]
      %v425 = vunpack.c.l.b16 %v389
      %v426 = vunpack.c.l.b16 %v390
      %v427 = vunpack.c.l.b16 %v391
      %v428 = vunpack.c.l.b16 %v392
      %v429 = vunpack.c.l.b16 %v394
      %v430 = vunpack.c.l.b16 %v395
      %v431 = vunpack.c.l.b16 %v396
      %v432 = vunpack.c.l.b16 %v397
      %v433 = vunpack.c.l.b16 %v399
      %v434 = vunpack.c.l.b16 %v400
      %v435 = vunpack.c.l.b16 %v401
      %v436 = vunpack.c.l.b16 %v402
      %v437 = vunpack.c.l.b16 %v404
      %v438 = vunpack.c.l.b16 %v405
      %v439 = vunpack.c.l.b16 %v406
      %v440 = vunpack.c.l.b16 %v407
      %v441 = vpack.c.b16 %v425, %v425
      %v442 = vpack.c.b16 %v426, %v426
      %v443 = vpack.c.b16 %v427, %v427
      %v444 = vpack.c.b16 %v428, %v428
      %v445 = vpack.c.b16 %v429, %v429
      %v446 = vpack.c.b16 %v430, %v430
      %v447 = vpack.c.b16 %v431, %v431
      %v448 = vpack.c.b16 %v432, %v432
      %v449 = vpack.c.b16 %v433, %v433
      %v450 = vpack.c.b16 %v434, %v434
      %v451 = vpack.c.b16 %v435, %v435
      %v452 = vpack.c.b16 %v436, %v436
      %v453 = vpack.c.b16 %v437, %v437
      %v454 = vpack.c.b16 %v438, %v438
      %v455 = vpack.c.b16 %v439, %v439
      %v456 = vpack.c.b16 %v440, %v440
      %v458 = vshrl.u32 %v441, 16
      %v460 = vshll.u32 %v441, 16
      %v462 = vrot.slane %v460, 1
      %v463 = vor.u32 %v458, %v462
      %v465 = vshrl.u32 %v442, 16
      %v467 = vshll.u32 %v442, 16
      %v469 = vrot.slane %v467, 1
      %v470 = vor.u32 %v465, %v469
      %v472 = vshrl.u32 %v443, 16
      %v474 = vshll.u32 %v443, 16
      %v476 = vrot.slane %v474, 1
      %v477 = vor.u32 %v472, %v476
      %v479 = vshrl.u32 %v444, 16
      %v481 = vshll.u32 %v444, 16
      %v483 = vrot.slane %v481, 1
      %v484 = vor.u32 %v479, %v483
      %v486 = vshrl.u32 %v445, 16
      %v488 = vshll.u32 %v445, 16
      %v490 = vrot.slane %v488, 1
      %v491 = vor.u32 %v486, %v490
      %v493 = vshrl.u32 %v446, 16
      %v495 = vshll.u32 %v446, 16
      %v497 = vrot.slane %v495, 1
      %v498 = vor.u32 %v493, %v497
      %v500 = vshrl.u32 %v447, 16
      %v502 = vshll.u32 %v447, 16
      %v504 = vrot.slane %v502, 1
      %v505 = vor.u32 %v500, %v504
      %v507 = vshrl.u32 %v448, 16
      %v509 = vshll.u32 %v448, 16
      %v511 = vrot.slane %v509, 1
      %v512 = vor.u32 %v507, %v511
      %v514 = vshrl.u32 %v449, 16
      %v516 = vshll.u32 %v449, 16
      %v518 = vrot.slane %v516, 1
      %v519 = vor.u32 %v514, %v518
      %v521 = vshrl.u32 %v450, 16
      %v523 = vshll.u32 %v450, 16
      %v525 = vrot.slane %v523, 1
      %v526 = vor.u32 %v521, %v525
      %v528 = vshrl.u32 %v451, 16
      %v530 = vshll.u32 %v451, 16
      %v532 = vrot.slane %v530, 1
      %v533 = vor.u32 %v528, %v532
      %v535 = vshrl.u32 %v452, 16
      %v537 = vshll.u32 %v452, 16
      %v539 = vrot.slane %v537, 1
      %v540 = vor.u32 %v535, %v539
      %v542 = vshrl.u32 %v453, 16
      %v544 = vshll.u32 %v453, 16
      %v546 = vrot.slane %v544, 1
      %v547 = vor.u32 %v542, %v546
      %v549 = vshrl.u32 %v454, 16
      %v551 = vshll.u32 %v454, 16
      %v553 = vrot.slane %v551, 1
      %v554 = vor.u32 %v549, %v553
      %v556 = vshrl.u32 %v455, 16
      %v558 = vshll.u32 %v455, 16
      %v560 = vrot.slane %v558, 1
      %v561 = vor.u32 %v556, %v560
      %v563 = vshrl.u32 %v456, 16
      %v565 = vshll.u32 %v456, 16
      %v567 = vrot.slane %v565, 1
      %v568 = vor.u32 %v563, %v567
      %569 = vrot.lane.b32.xlu0 %v463, 48
      %v570 = vpop.permute.xlu0 %569
      %571 = vrot.lane.b32.xlu0 %v470, 48
      %v572 = vpop.permute.xlu0 %571
      %573 = vrot.lane.b32.xlu0 %v477, 48
      %v574 = vpop.permute.xlu0 %573
      %575 = vrot.lane.b32.xlu0 %v484, 48
      %v576 = vpop.permute.xlu0 %575
      %577 = vrot.lane.b32.xlu0 %v491, 48
      %v578 = vpop.permute.xlu0 %577
      %579 = vrot.lane.b32.xlu0 %v498, 48
      %v580 = vpop.permute.xlu0 %579
      %581 = vrot.lane.b32.xlu0 %v505, 48
      %v582 = vpop.permute.xlu0 %581
      %583 = vrot.lane.b32.xlu0 %v512, 48
      %v584 = vpop.permute.xlu0 %583
      %585 = vrot.lane.b32.xlu0 %v519, 48
      %v586 = vpop.permute.xlu0 %585
      %587 = vrot.lane.b32.xlu0 %v526, 48
      %v588 = vpop.permute.xlu0 %587
      %589 = vrot.lane.b32.xlu0 %v533, 48
      %v590 = vpop.permute.xlu0 %589
      %591 = vrot.lane.b32.xlu0 %v540, 48
      %v592 = vpop.permute.xlu0 %591
      %593 = vrot.lane.b32.xlu0 %v547, 48
      %v594 = vpop.permute.xlu0 %593
      %595 = vrot.lane.b32.xlu0 %v554, 48
      %v596 = vpop.permute.xlu0 %595
      %597 = vrot.lane.b32.xlu0 %v561, 48
      %v598 = vpop.permute.xlu0 %597
      %599 = vrot.lane.b32.xlu0 %v568, 48
      %v600 = vpop.permute.xlu0 %599
      %v605 = vunpack.c.l.b16 %v393
      %v606 = vunpack.c.l.b16 %v398
      %v607 = vunpack.c.l.b16 %v403
      %v608 = vunpack.c.l.b16 %v408
      %v609 = vpack.c.b16 %v605, %v605
      %v610 = vpack.c.b16 %v606, %v606
      %v611 = vpack.c.b16 %v607, %v607
      %v612 = vpack.c.b16 %v608, %v608
      %613 = vrot.lane.b32.xlu0 %v442, 96
      %v614 = vpop.permute.xlu0 %613
      %615 = vrot.lane.b32.xlu0 %v443, 96
      %v616 = vpop.permute.xlu0 %615
      %617 = vrot.lane.b32.xlu0 %v444, 96
      %v618 = vpop.permute.xlu0 %617
      %619 = vrot.lane.b32.xlu0 %v609, 96
      %v620 = vpop.permute.xlu0 %619
      %621 = vrot.lane.b32.xlu0 %v446, 96
      %v622 = vpop.permute.xlu0 %621
      %623 = vrot.lane.b32.xlu0 %v447, 96
      %v624 = vpop.permute.xlu0 %623
      %625 = vrot.lane.b32.xlu0 %v448, 96
      %v626 = vpop.permute.xlu0 %625
      %627 = vrot.lane.b32.xlu0 %v610, 96
      %v628 = vpop.permute.xlu0 %627
      %629 = vrot.lane.b32.xlu0 %v450, 96
      %v630 = vpop.permute.xlu0 %629
      %631 = vrot.lane.b32.xlu0 %v451, 96
      %v632 = vpop.permute.xlu0 %631
      %633 = vrot.lane.b32.xlu0 %v452, 96
      %v634 = vpop.permute.xlu0 %633
      %635 = vrot.lane.b32.xlu0 %v611, 96
      %v636 = vpop.permute.xlu0 %635
      %637 = vrot.lane.b32.xlu0 %v454, 96
      %v638 = vpop.permute.xlu0 %637
      %639 = vrot.lane.b32.xlu0 %v455, 96
      %v640 = vpop.permute.xlu0 %639
      %641 = vrot.lane.b32.xlu0 %v456, 96
      %v642 = vpop.permute.xlu0 %641
      %643 = vrot.lane.b32.xlu0 %v612, 96
      %v644 = vpop.permute.xlu0 %643
      %v646 = vshrl.u32 %v609, 16
      %v648 = vshll.u32 %v609, 16
      %v650 = vrot.slane %v648, 1
      %v651 = vor.u32 %v646, %v650
      %v653 = vshrl.u32 %v610, 16
      %v655 = vshll.u32 %v610, 16
      %v657 = vrot.slane %v655, 1
      %v658 = vor.u32 %v653, %v657
      %v660 = vshrl.u32 %v611, 16
      %v662 = vshll.u32 %v611, 16
      %v664 = vrot.slane %v662, 1
      %v665 = vor.u32 %v660, %v664
      %v667 = vshrl.u32 %v612, 16
      %v669 = vshll.u32 %v612, 16
      %v671 = vrot.slane %v669, 1
      %v672 = vor.u32 %v667, %v671
      %673 = vrot.lane.b32.xlu0 %v470, 16
      %v674 = vpop.permute.xlu0 %673
      %675 = vrot.lane.b32.xlu0 %v477, 16
      %v676 = vpop.permute.xlu0 %675
      %677 = vrot.lane.b32.xlu0 %v484, 16
      %v678 = vpop.permute.xlu0 %677
      %679 = vrot.lane.b32.xlu0 %v651, 16
      %v680 = vpop.permute.xlu0 %679
      %681 = vrot.lane.b32.xlu0 %v498, 16
      %v682 = vpop.permute.xlu0 %681
      %683 = vrot.lane.b32.xlu0 %v505, 16
      %v684 = vpop.permute.xlu0 %683
      %685 = vrot.lane.b32.xlu0 %v512, 16
      %v686 = vpop.permute.xlu0 %685
      %687 = vrot.lane.b32.xlu0 %v658, 16
      %v688 = vpop.permute.xlu0 %687
      %689 = vrot.lane.b32.xlu0 %v526, 16
      %v690 = vpop.permute.xlu0 %689
      %691 = vrot.lane.b32.xlu0 %v533, 16
      %v692 = vpop.permute.xlu0 %691
      %693 = vrot.lane.b32.xlu0 %v540, 16
      %v694 = vpop.permute.xlu0 %693
      %695 = vrot.lane.b32.xlu0 %v665, 16
      %v696 = vpop.permute.xlu0 %695
      %697 = vrot.lane.b32.xlu0 %v554, 16
      %v698 = vpop.permute.xlu0 %697
      %699 = vrot.lane.b32.xlu0 %v561, 16
      %v700 = vpop.permute.xlu0 %699
      %701 = vrot.lane.b32.xlu0 %v568, 16
      %v702 = vpop.permute.xlu0 %701
      %703 = vrot.lane.b32.xlu0 %v672, 16
      %v704 = vpop.permute.xlu0 %703
      %vm705 = vcmask 392192
      %v708 = vsel %vm705, %v389, %v570
      %v711 = vsel %vm705, %v390, %v572
      %v714 = vsel %vm705, %v391, %v574
      %v717 = vsel %vm705, %v392, %v576
      %v720 = vsel %vm705, %v394, %v578
      %v723 = vsel %vm705, %v395, %v580
      %v726 = vsel %vm705, %v396, %v582
      %v729 = vsel %vm705, %v397, %v584
      %v732 = vsel %vm705, %v399, %v586
      %v735 = vsel %vm705, %v400, %v588
      %v738 = vsel %vm705, %v401, %v590
      %v741 = vsel %vm705, %v402, %v592
      %v744 = vsel %vm705, %v404, %v594
      %v747 = vsel %vm705, %v405, %v596
      %v750 = vsel %vm705, %v406, %v598
      %v753 = vsel %vm705, %v407, %v600
      %vm754 = vcmask 785408
      %v756 = vsel %vm754, %v708, %v614
      %v758 = vsel %vm754, %v711, %v616
      %v760 = vsel %vm754, %v714, %v618
      %v762 = vsel %vm754, %v717, %v620
      %v764 = vsel %vm754, %v720, %v622
      %v766 = vsel %vm754, %v723, %v624
      %v768 = vsel %vm754, %v726, %v626
      %v770 = vsel %vm754, %v729, %v628
      %v772 = vsel %vm754, %v732, %v630
      %v774 = vsel %vm754, %v735, %v632
      %v776 = vsel %vm754, %v738, %v634
      %v778 = vsel %vm754, %v741, %v636
      %v780 = vsel %vm754, %v744, %v638
      %v782 = vsel %vm754, %v747, %v640
      %v784 = vsel %vm754, %v750, %v642
      %v786 = vsel %vm754, %v753, %v644
      %vm787 = vcmask 130048
      %v789 = vsel %vm787, %v614, %v674
      %v791 = vsel %vm787, %v616, %v676
      %v793 = vsel %vm787, %v618, %v678
      %v795 = vsel %vm787, %v620, %v680
      %v797 = vsel %vm787, %v622, %v682
      %v799 = vsel %vm787, %v624, %v684
      %v801 = vsel %vm787, %v626, %v686
      %v803 = vsel %vm787, %v628, %v688
      %v805 = vsel %vm787, %v630, %v690
      %v807 = vsel %vm787, %v632, %v692
      %v809 = vsel %vm787, %v634, %v694
      %v811 = vsel %vm787, %v636, %v696
      %v813 = vsel %vm787, %v638, %v698
      %v815 = vsel %vm787, %v640, %v700
      %v817 = vsel %vm787, %v642, %v702
      %v819 = vsel %vm787, %v644, %v704
      %v836 = vrot.slane %v789, 6
      %v837 = vrot.slane %v791, 6
      %v838 = vrot.slane %v793, 6
      %v839 = vrot.slane %v795, 6
      %v840 = vrot.slane %v797, 6
      %v841 = vrot.slane %v799, 6
      %v842 = vrot.slane %v801, 6
      %v843 = vrot.slane %v803, 6
      %v844 = vrot.slane %v805, 6
      %v845 = vrot.slane %v807, 6
      %v846 = vrot.slane %v809, 6
      %v847 = vrot.slane %v811, 6
      %v848 = vrot.slane %v813, 6
      %v849 = vrot.slane %v815, 6
      %v850 = vrot.slane %v817, 6
      %v851 = vrot.slane %v819, 6
      %vm852 = vcmask 1041408
      %v854 = vsel %vm852, %v756, %v836
      %v856 = vsel %vm852, %v758, %v837
      %v858 = vsel %vm852, %v760, %v838
      %v860 = vsel %vm852, %v762, %v839
      %v862 = vsel %vm852, %v764, %v840
      %v864 = vsel %vm852, %v766, %v841
      %v866 = vsel %vm852, %v768, %v842
      %v868 = vsel %vm852, %v770, %v843
      %v870 = vsel %vm852, %v772, %v844
      %v872 = vsel %vm852, %v774, %v845
      %v874 = vsel %vm852, %v776, %v846
      %v876 = vsel %vm852, %v778, %v847
      %v878 = vsel %vm852, %v780, %v848
      %v880 = vsel %vm852, %v782, %v849
      %v882 = vsel %vm852, %v784, %v850
      %v884 = vsel %vm852, %v786, %v851
      %v885 = vld [vmem:[%s1] sm:$0xff]
      %v886 = vld [vmem:[%s1 + $0x8] sm:$0xff]
      %v887 = vld [vmem:[%s1 + $0x10] sm:$0xff]
      %v888 = vld [vmem:[%s1 + $0x18] sm:$0xff]
      %v889 = vld [vmem:[%s1 + $0x20] sm:$0xff]
      %v890 = vld [vmem:[%s1 + $0x28] sm:$0xff]
      %v891 = vld [vmem:[%s1 + $0x30] sm:$0xff]
      %v892 = vld [vmem:[%s1 + $0x38] sm:$0xff]
      %v893 = vld [vmem:[%s1 + $0x40] sm:$0xff]
      %v894 = vld [vmem:[%s1 + $0x48] sm:$0xff]
      %v895 = vld [vmem:[%s1 + $0x50] sm:$0xff]
      %v896 = vld [vmem:[%s1 + $0x58] sm:$0xff]
      %v897 = vld [vmem:[%s1 + $0x60] sm:$0xff]
      %v898 = vld [vmem:[%s1 + $0x68] sm:$0xff]
      %v899 = vld [vmem:[%s1 + $0x70] sm:$0xff]
      %v900 = vld [vmem:[%s1 + $0x78] sm:$0xff]
      %v901 = vld [vmem:[%s1 + $0x80] sm:$0xff]
      %v902 = vld [vmem:[%s1 + $0x88] sm:$0xff]
      %v903 = vld [vmem:[%s1 + $0x90] sm:$0xff]
      %v904 = vld [vmem:[%s1 + $0x98] sm:$0xff]
      %v905 = vld [vmem:[%s1 + $0xa0] sm:$0xff]
      %v906 = vld [vmem:[%s1 + $0xa8] sm:$0xff]
      %v907 = vld [vmem:[%s1 + $0xb0] sm:$0xff]
      %v908 = vld [vmem:[%s1 + $0xb8] sm:$0xff]
      %v909 = vld [vmem:[%s1 + $0xc0] sm:$0xff]
      %v910 = vld [vmem:[%s1 + $0xc8] sm:$0xff]
      %v911 = vld [vmem:[%s1 + $0xd0] sm:$0xff]
      %v912 = vld [vmem:[%s1 + $0xd8] sm:$0xff]
      %v913 = vld [vmem:[%s1 + $0xe0] sm:$0xff]
      %v914 = vld [vmem:[%s1 + $0xe8] sm:$0xff]
      %v915 = vld [vmem:[%s1 + $0xf0] sm:$0xff]
      %v916 = vld [vmem:[%s1 + $0xf8] sm:$0xff]
      %v917 = vld [vmem:[%s1 + $0x100] sm:$0xff]
      %v918 = vld [vmem:[%s1 + $0x108] sm:$0xff]
      %v919 = vld [vmem:[%s1 + $0x110] sm:$0xff]
      %v920 = vld [vmem:[%s1 + $0x118] sm:$0xff]
      %v921 = vld [vmem:[%s1 + $0x120] sm:$0xff]
      %v922 = vld [vmem:[%s1 + $0x128] sm:$0xff]
      %v923 = vld [vmem:[%s1 + $0x130] sm:$0xff]
      %v924 = vld [vmem:[%s1 + $0x138] sm:$0xff]
      %v925 = vld [vmem:[%s1 + $0x140] sm:$0xff]
      %v926 = vld [vmem:[%s1 + $0x148] sm:$0xff]
      %v927 = vld [vmem:[%s1 + $0x150] sm:$0xff]
      %v928 = vld [vmem:[%s1 + $0x158] sm:$0xff]
      %v929 = vld [vmem:[%s1 + $0x160] sm:$0xff]
      %v930 = vld [vmem:[%s1 + $0x168] sm:$0xff]
      %v931 = vld [vmem:[%s1 + $0x170] sm:$0xff]
      %v932 = vld [vmem:[%s1 + $0x178] sm:$0xff]
      %v933 = vld [vmem:[%s2] sm:$0xf]
      %v935 = vperm.slane %v933, 0
      %v936 = vperm.slane %v933, 1
      %v937 = vperm.slane %v933, 2
      %v938 = vperm.slane %v933, 3
      %943 = vst [vmem:[#allocation1] ss:$4 sm:$0xff] %v854
      %s944 = scalar_lea.vmem [#allocation1], 1
      %945 = vst [vmem:[%s944] ss:$4 sm:$0xff] %v856
      %s946 = scalar_lea.vmem [#allocation1], 2
      %947 = vst [vmem:[%s946] ss:$4 sm:$0xff] %v858
      %s948 = scalar_lea.vmem [#allocation1], 3
      %949 = vst [vmem:[%s948] ss:$4 sm:$0xff] %v860
      %s950 = scalar_lea.vmem [#allocation1], 32
      %951 = vst [vmem:[%s950] ss:$4 sm:$0xff] %v862
      %s952 = scalar_lea.vmem [#allocation1], 33
      %953 = vst [vmem:[%s952] ss:$4 sm:$0xff] %v864
      %s954 = scalar_lea.vmem [#allocation1], 34
      %955 = vst [vmem:[%s954] ss:$4 sm:$0xff] %v866
      %s956 = scalar_lea.vmem [#allocation1], 35
      %957 = vst [vmem:[%s956] ss:$4 sm:$0xff] %v868
      %v958 = vld.sshfl [vmem:[#allocation1] sm:$0xff pattern:$0x73625140]
      %v959 = vld.sshfl [vmem:[#allocation1 + $0x8] sm:$0xff pattern:$0x73625140]
      %v960 = vld.sshfl [vmem:[#allocation1 + $0x20] sm:$0xff pattern:$0x73625140]
      %v961 = vld.sshfl [vmem:[#allocation1 + $0x28] sm:$0xff pattern:$0x73625140]
      %962 = vst [vmem:[#allocation1] ss:$4 sm:$0xff] %v870
      %963 = vst [vmem:[%s944] ss:$4 sm:$0xff] %v872
      %964 = vst [vmem:[%s946] ss:$4 sm:$0xff] %v874
      %965 = vst [vmem:[%s948] ss:$4 sm:$0xff] %v876
      %966 = vst [vmem:[%s950] ss:$4 sm:$0xff] %v878
      %967 = vst [vmem:[%s952] ss:$4 sm:$0xff] %v880
      %968 = vst [vmem:[%s954] ss:$4 sm:$0xff] %v882
      %969 = vst [vmem:[%s956] ss:$4 sm:$0xff] %v884
      %v970 = vld.sshfl [vmem:[#allocation1] sm:$0xff pattern:$0x73625140]
      %v971 = vld.sshfl [vmem:[#allocation1 + $0x8] sm:$0xff pattern:$0x73625140]
      %v972 = vld.sshfl [vmem:[#allocation1 + $0x20] sm:$0xff pattern:$0x73625140]
      %v973 = vld.sshfl [vmem:[#allocation1 + $0x28] sm:$0xff pattern:$0x73625140]
      %v1026 = vunpack.c.l.b16 %v885
      %v1027 = vunpack.c.h.b16 %v885
      %v1028 = vunpack.c.l.b16 %v886
      %v1029 = vunpack.c.h.b16 %v886
      %v1030 = vunpack.c.l.b16 %v887
      %v1031 = vunpack.c.h.b16 %v887
      %v1032 = vunpack.c.l.b16 %v888
      %v1033 = vunpack.c.h.b16 %v888
      %v1034 = vunpack.c.l.b16 %v889
      %v1035 = vunpack.c.h.b16 %v889
      %v1036 = vunpack.c.l.b16 %v890
      %v1037 = vunpack.c.h.b16 %v890
      %v1038 = vunpack.c.l.b16 %v891
      %v1039 = vunpack.c.h.b16 %v891
      %v1040 = vunpack.c.l.b16 %v892
      %v1041 = vunpack.c.h.b16 %v892
      %v1042 = vunpack.c.l.b16 %v893
      %v1043 = vunpack.c.h.b16 %v893
      %v1044 = vunpack.c.l.b16 %v894
      %v1045 = vunpack.c.h.b16 %v894
      %v1046 = vunpack.c.l.b16 %v895
      %v1047 = vunpack.c.h.b16 %v895
      %v1048 = vunpack.c.l.b16 %v896
      %v1049 = vunpack.c.h.b16 %v896
      %v1050 = vunpack.c.l.b16 %v897
      %v1051 = vunpack.c.h.b16 %v897
      %v1052 = vunpack.c.l.b16 %v898
      %v1053 = vunpack.c.h.b16 %v898
      %v1054 = vunpack.c.l.b16 %v899
      %v1055 = vunpack.c.h.b16 %v899
      %v1056 = vunpack.c.l.b16 %v900
      %v1057 = vunpack.c.h.b16 %v900
      %v1058 = vunpack.c.l.b16 %v901
      %v1059 = vunpack.c.h.b16 %v901
      %v1060 = vunpack.c.l.b16 %v902
      %v1061 = vunpack.c.h.b16 %v902
      %v1062 = vunpack.c.l.b16 %v903
      %v1063 = vunpack.c.h.b16 %v903
      %v1064 = vunpack.c.l.b16 %v904
      %v1065 = vunpack.c.h.b16 %v904
      %v1066 = vunpack.c.l.b16 %v905
      %v1067 = vunpack.c.h.b16 %v905
      %v1068 = vunpack.c.l.b16 %v906
      %v1069 = vunpack.c.h.b16 %v906
      %v1070 = vunpack.c.l.b16 %v907
      %v1071 = vunpack.c.h.b16 %v907
      %v1072 = vunpack.c.l.b16 %v908
      %v1073 = vunpack.c.h.b16 %v908
      %v1074 = vunpack.c.l.b16 %v909
      %v1075 = vunpack.c.h.b16 %v909
      %v1076 = vunpack.c.l.b16 %v910
      %v1077 = vunpack.c.h.b16 %v910
      %v1078 = vunpack.c.l.b16 %v911
      %v1079 = vunpack.c.h.b16 %v911
      %v1080 = vunpack.c.l.b16 %v912
      %v1081 = vunpack.c.h.b16 %v912
      %v1082 = vunpack.c.l.b16 %v913
      %v1083 = vunpack.c.h.b16 %v913
      %v1084 = vunpack.c.l.b16 %v914
      %v1085 = vunpack.c.h.b16 %v914
      %v1086 = vunpack.c.l.b16 %v915
      %v1087 = vunpack.c.h.b16 %v915
      %v1088 = vunpack.c.l.b16 %v916
      %v1089 = vunpack.c.h.b16 %v916
      %v1090 = vunpack.c.l.b16 %v917
      %v1091 = vunpack.c.h.b16 %v917
      %v1092 = vunpack.c.l.b16 %v918
      %v1093 = vunpack.c.h.b16 %v918
      %v1094 = vunpack.c.l.b16 %v919
      %v1095 = vunpack.c.h.b16 %v919
      %v1096 = vunpack.c.l.b16 %v920
      %v1097 = vunpack.c.h.b16 %v920
      %v1098 = vunpack.c.l.b16 %v921
      %v1099 = vunpack.c.h.b16 %v921
      %v1100 = vunpack.c.l.b16 %v922
      %v1101 = vunpack.c.h.b16 %v922
      %v1102 = vunpack.c.l.b16 %v923
      %v1103 = vunpack.c.h.b16 %v923
      %v1104 = vunpack.c.l.b16 %v924
      %v1105 = vunpack.c.h.b16 %v924
      %v1106 = vunpack.c.l.b16 %v925
      %v1107 = vunpack.c.h.b16 %v925
      %v1108 = vunpack.c.l.b16 %v926
      %v1109 = vunpack.c.h.b16 %v926
      %v1110 = vunpack.c.l.b16 %v927
      %v1111 = vunpack.c.h.b16 %v927
      %v1112 = vunpack.c.l.b16 %v928
      %v1113 = vunpack.c.h.b16 %v928
      %v1114 = vunpack.c.l.b16 %v929
      %v1115 = vunpack.c.h.b16 %v929
      %v1116 = vunpack.c.l.b16 %v930
      %v1117 = vunpack.c.h.b16 %v930
      %v1118 = vunpack.c.l.b16 %v931
      %v1119 = vunpack.c.h.b16 %v931
      %v1120 = vunpack.c.l.b16 %v932
      %v1121 = vunpack.c.h.b16 %v932
      %v1122 = vpack.c.b16 %v1030, %v1026
      %v1123 = vpack.c.b16 %v1031, %v1027
      %v1124 = vpack.c.b16 %v1032, %v1028
      %v1125 = vpack.c.b16 %v1033, %v1029
      %v1126 = vpack.c.b16 %v1038, %v1034
      %v1127 = vpack.c.b16 %v1039, %v1035
      %v1128 = vpack.c.b16 %v1040, %v1036
      %v1129 = vpack.c.b16 %v1041, %v1037
      %v1130 = vpack.c.b16 %v1046, %v1042
      %v1131 = vpack.c.b16 %v1047, %v1043
      %v1132 = vpack.c.b16 %v1048, %v1044
      %v1133 = vpack.c.b16 %v1049, %v1045
      %v1134 = vpack.c.b16 %v1054, %v1050
      %v1135 = vpack.c.b16 %v1055, %v1051
      %v1136 = vpack.c.b16 %v1056, %v1052
      %v1137 = vpack.c.b16 %v1057, %v1053
      %v1138 = vpack.c.b16 %v1062, %v1058
      %v1139 = vpack.c.b16 %v1063, %v1059
      %v1140 = vpack.c.b16 %v1064, %v1060
      %v1141 = vpack.c.b16 %v1065, %v1061
      %v1142 = vpack.c.b16 %v1070, %v1066
      %v1143 = vpack.c.b16 %v1071, %v1067
      %v1144 = vpack.c.b16 %v1072, %v1068
      %v1145 = vpack.c.b16 %v1073, %v1069
      %v1146 = vpack.c.b16 %v1078, %v1074
      %v1147 = vpack.c.b16 %v1079, %v1075
      %v1148 = vpack.c.b16 %v1080, %v1076
      %v1149 = vpack.c.b16 %v1081, %v1077
      %v1150 = vpack.c.b16 %v1086, %v1082
      %v1151 = vpack.c.b16 %v1087, %v1083
      %v1152 = vpack.c.b16 %v1088, %v1084
      %v1153 = vpack.c.b16 %v1089, %v1085
      %v1154 = vpack.c.b16 %v1094, %v1090
      %v1155 = vpack.c.b16 %v1095, %v1091
      %v1156 = vpack.c.b16 %v1096, %v1092
      %v1157 = vpack.c.b16 %v1097, %v1093
      %v1158 = vpack.c.b16 %v1102, %v1098
      %v1159 = vpack.c.b16 %v1103, %v1099
      %v1160 = vpack.c.b16 %v1104, %v1100
      %v1161 = vpack.c.b16 %v1105, %v1101
      %v1162 = vpack.c.b16 %v1110, %v1106
      %v1163 = vpack.c.b16 %v1111, %v1107
      %v1164 = vpack.c.b16 %v1112, %v1108
      %v1165 = vpack.c.b16 %v1113, %v1109
      %v1166 = vpack.c.b16 %v1118, %v1114
      %v1167 = vpack.c.b16 %v1119, %v1115
      %v1168 = vpack.c.b16 %v1120, %v1116
      %v1169 = vpack.c.b16 %v1121, %v1117
      %vm1218 = vcmask 523264
      %v1219 = vsel %vm1218, %v959, 0
      %v1221 = vsel %vm1218, %v961, 0
      %v1223 = vsel %vm1218, %v971, 0
      %v1225 = vsel %vm1218, %v973, 0
      %1227 = vmatpush.bf16.msra.mxu0 %v1150
      %1228 = vmatpush.bf16.msra.mxu0 %v1146
      %1229 = vmatpush.bf16.msra.mxu0 %v1142
      %1230 = vmatpush.bf16.msra.mxu0 %v1138
      %1231 = vmatpush.bf16.msra.mxu0 %v1134
      %1232 = vmatpush.bf16.msra.mxu0 %v1130
      %1233 = vmatpush.bf16.msra.mxu0 %v1126
      %1234 = vmatpush.bf16.msra.mxu0 %v1122
      %1235 = vmatmul.bf16.gmra.mxu0 %v958
      %v1236 = vpop.f32.mrf.mxu0
      %v1237 = vadd.f32 %v935, %v1236
      %v1238 = vpop.f32.mrf.mxu0
      %v1239 = vadd.f32 %v935, %v1238
      %1240 = vmatmul.bf16.gmra.mxu0 %v960
      %v1241 = vpop.f32.mrf.mxu0
      %v1242 = vadd.f32 %v935, %v1241
      %v1243 = vpop.f32.mrf.mxu0
      %v1244 = vadd.f32 %v935, %v1243
      %1245 = vmatmul.bf16.gmra.mxu0 %v970
      %v1246 = vpop.f32.mrf.mxu0
      %v1247 = vadd.f32 %v935, %v1246
      %v1248 = vpop.f32.mrf.mxu0
      %v1249 = vadd.f32 %v935, %v1248
      %1250 = vmatmul.bf16.gmra.mxu0 %v972
      %v1251 = vpop.f32.mrf.mxu0
      %v1252 = vadd.f32 %v935, %v1251
      %v1253 = vpop.f32.mrf.mxu0
      %v1254 = vadd.f32 %v935, %v1253
      %1255 = vdwg.mxu0
      %1256 = vmatpush.bf16.msra.mxu0 0
      %1257 = vmatpush.bf16.msra.mxu0 0
      %1258 = vmatpush.bf16.msra.mxu0 0
      %1259 = vmatpush.bf16.msra.mxu0 0
      %1260 = vmatpush.bf16.msra.mxu0 %v1166
      %1261 = vmatpush.bf16.msra.mxu0 %v1162
      %1262 = vmatpush.bf16.msra.mxu0 %v1158
      %1263 = vmatpush.bf16.msra.mxu0 %v1154
      %1264 = vmatmul.bf16.gmra.mxu0 %v1219
      %v1265 = vpop.f32.mrf.mxu0
      %v1266 = vadd.f32 %v1237, %v1265
      %v1267 = vpop.f32.mrf.mxu0
      %v1268 = vadd.f32 %v1239, %v1267
      %1269 = vmatmul.bf16.gmra.mxu0 %v1221
      %v1270 = vpop.f32.mrf.mxu0
      %v1271 = vadd.f32 %v1242, %v1270
      %v1272 = vpop.f32.mrf.mxu0
      %v1273 = vadd.f32 %v1244, %v1272
      %1274 = vmatmul.bf16.gmra.mxu0 %v1223
      %v1275 = vpop.f32.mrf.mxu0
      %v1276 = vadd.f32 %v1247, %v1275
      %v1277 = vpop.f32.mrf.mxu0
      %v1278 = vadd.f32 %v1249, %v1277
      %1279 = vmatmul.bf16.gmra.mxu0 %v1225
      %v1280 = vpop.f32.mrf.mxu0
      %v1281 = vadd.f32 %v1252, %v1280
      %v1282 = vpop.f32.mrf.mxu0
      %v1283 = vadd.f32 %v1254, %v1282
      %1284 = vdwg.mxu0
      %1285 = vmatpush.bf16.msra.mxu0 %v1151
      %1286 = vmatpush.bf16.msra.mxu0 %v1147
      %1287 = vmatpush.bf16.msra.mxu0 %v1143
      %1288 = vmatpush.bf16.msra.mxu0 %v1139
      %1289 = vmatpush.bf16.msra.mxu0 %v1135
      %1290 = vmatpush.bf16.msra.mxu0 %v1131
      %1291 = vmatpush.bf16.msra.mxu0 %v1127
      %1292 = vmatpush.bf16.msra.mxu0 %v1123
      %1293 = vmatmul.bf16.gmra.mxu0 %v958
      %v1294 = vpop.f32.mrf.mxu0
      %v1295 = vadd.f32 %v936, %v1294
      %v1296 = vpop.f32.mrf.mxu0
      %v1297 = vadd.f32 %v936, %v1296
      %1298 = vmatmul.bf16.gmra.mxu0 %v960
      %v1299 = vpop.f32.mrf.mxu0
      %v1300 = vadd.f32 %v936, %v1299
      %v1301 = vpop.f32.mrf.mxu0
      %v1302 = vadd.f32 %v936, %v1301
      %1303 = vmatmul.bf16.gmra.mxu0 %v970
      %v1304 = vpop.f32.mrf.mxu0
      %v1305 = vadd.f32 %v936, %v1304
      %v1306 = vpop.f32.mrf.mxu0
      %v1307 = vadd.f32 %v936, %v1306
      %1308 = vmatmul.bf16.gmra.mxu0 %v972
      %v1309 = vpop.f32.mrf.mxu0
      %v1310 = vadd.f32 %v936, %v1309
      %v1311 = vpop.f32.mrf.mxu0
      %v1312 = vadd.f32 %v936, %v1311
      %1313 = vdwg.mxu0
      %1314 = vmatpush.bf16.msra.mxu0 0
      %1315 = vmatpush.bf16.msra.mxu0 0
      %1316 = vmatpush.bf16.msra.mxu0 0
      %1317 = vmatpush.bf16.msra.mxu0 0
      %1318 = vmatpush.bf16.msra.mxu0 %v1167
      %1319 = vmatpush.bf16.msra.mxu0 %v1163
      %1320 = vmatpush.bf16.msra.mxu0 %v1159
      %1321 = vmatpush.bf16.msra.mxu0 %v1155
      %1322 = vmatmul.bf16.gmra.mxu0 %v1219
      %v1323 = vpop.f32.mrf.mxu0
      %v1324 = vadd.f32 %v1295, %v1323
      %v1325 = vpop.f32.mrf.mxu0
      %v1326 = vadd.f32 %v1297, %v1325
      %1327 = vmatmul.bf16.gmra.mxu0 %v1221
      %v1328 = vpop.f32.mrf.mxu0
      %v1329 = vadd.f32 %v1300, %v1328
      %v1330 = vpop.f32.mrf.mxu0
      %v1331 = vadd.f32 %v1302, %v1330
      %1332 = vmatmul.bf16.gmra.mxu0 %v1223
      %v1333 = vpop.f32.mrf.mxu0
      %v1334 = vadd.f32 %v1305, %v1333
      %v1335 = vpop.f32.mrf.mxu0
      %v1336 = vadd.f32 %v1307, %v1335
      %1337 = vmatmul.bf16.gmra.mxu0 %v1225
      %v1338 = vpop.f32.mrf.mxu0
      %v1339 = vadd.f32 %v1310, %v1338
      %v1340 = vpop.f32.mrf.mxu0
      %v1341 = vadd.f32 %v1312, %v1340
      %1342 = vdwg.mxu0
      %1343 = vmatpush.bf16.msra.mxu0 %v1152
      %1344 = vmatpush.bf16.msra.mxu0 %v1148
      %1345 = vmatpush.bf16.msra.mxu0 %v1144
      %1346 = vmatpush.bf16.msra.mxu0 %v1140
      %1347 = vmatpush.bf16.msra.mxu0 %v1136
      %1348 = vmatpush.bf16.msra.mxu0 %v1132
      %1349 = vmatpush.bf16.msra.mxu0 %v1128
      %1350 = vmatpush.bf16.msra.mxu0 %v1124
      %1351 = vmatmul.bf16.gmra.mxu0 %v958
      %v1352 = vpop.f32.mrf.mxu0
      %v1353 = vadd.f32 %v937, %v1352
      %v1354 = vpop.f32.mrf.mxu0
      %v1355 = vadd.f32 %v937, %v1354
      %1356 = vmatmul.bf16.gmra.mxu0 %v960
      %v1357 = vpop.f32.mrf.mxu0
      %v1358 = vadd.f32 %v937, %v1357
      %v1359 = vpop.f32.mrf.mxu0
      %v1360 = vadd.f32 %v937, %v1359
      %1361 = vmatmul.bf16.gmra.mxu0 %v970
      %v1362 = vpop.f32.mrf.mxu0
      %v1363 = vadd.f32 %v937, %v1362
      %v1364 = vpop.f32.mrf.mxu0
      %v1365 = vadd.f32 %v937, %v1364
      %1366 = vmatmul.bf16.gmra.mxu0 %v972
      %v1367 = vpop.f32.mrf.mxu0
      %v1368 = vadd.f32 %v937, %v1367
      %v1369 = vpop.f32.mrf.mxu0
      %v1370 = vadd.f32 %v937, %v1369
      %1371 = vdwg.mxu0
      %1372 = vmatpush.bf16.msra.mxu0 0
      %1373 = vmatpush.bf16.msra.mxu0 0
      %1374 = vmatpush.bf16.msra.mxu0 0
      %1375 = vmatpush.bf16.msra.mxu0 0
      %1376 = vmatpush.bf16.msra.mxu0 %v1168
      %1377 = vmatpush.bf16.msra.mxu0 %v1164
      %1378 = vmatpush.bf16.msra.mxu0 %v1160
      %1379 = vmatpush.bf16.msra.mxu0 %v1156
      %1380 = vmatmul.bf16.gmra.mxu0 %v1219
      %v1381 = vpop.f32.mrf.mxu0
      %v1382 = vadd.f32 %v1353, %v1381
      %v1383 = vpop.f32.mrf.mxu0
      %v1384 = vadd.f32 %v1355, %v1383
      %1385 = vmatmul.bf16.gmra.mxu0 %v1221
      %v1386 = vpop.f32.mrf.mxu0
      %v1387 = vadd.f32 %v1358, %v1386
      %v1388 = vpop.f32.mrf.mxu0
      %v1389 = vadd.f32 %v1360, %v1388
      %1390 = vmatmul.bf16.gmra.mxu0 %v1223
      %v1391 = vpop.f32.mrf.mxu0
      %v1392 = vadd.f32 %v1363, %v1391
      %v1393 = vpop.f32.mrf.mxu0
      %v1394 = vadd.f32 %v1365, %v1393
      %1395 = vmatmul.bf16.gmra.mxu0 %v1225
      %v1396 = vpop.f32.mrf.mxu0
      %v1397 = vadd.f32 %v1368, %v1396
      %v1398 = vpop.f32.mrf.mxu0
      %v1399 = vadd.f32 %v1370, %v1398
      %1400 = vdwg.mxu0
      %1401 = vmatpush.bf16.msra.mxu0 %v1153
      %1402 = vmatpush.bf16.msra.mxu0 %v1149
      %1403 = vmatpush.bf16.msra.mxu0 %v1145
      %1404 = vmatpush.bf16.msra.mxu0 %v1141
      %1405 = vmatpush.bf16.msra.mxu0 %v1137
      %1406 = vmatpush.bf16.msra.mxu0 %v1133
      %1407 = vmatpush.bf16.msra.mxu0 %v1129
      %1408 = vmatpush.bf16.msra.mxu0 %v1125
      %1409 = vmatmul.bf16.gmra.mxu0 %v958
      %v1410 = vpop.f32.mrf.mxu0
      %v1411 = vadd.f32 %v938, %v1410
      %v1412 = vpop.f32.mrf.mxu0
      %v1413 = vadd.f32 %v938, %v1412
      %1414 = vmatmul.bf16.gmra.mxu0 %v960
      %v1415 = vpop.f32.mrf.mxu0
      %v1416 = vadd.f32 %v938, %v1415
      %v1417 = vpop.f32.mrf.mxu0
      %v1418 = vadd.f32 %v938, %v1417
      %1419 = vmatmul.bf16.gmra.mxu0 %v970
      %v1420 = vpop.f32.mrf.mxu0
      %v1421 = vadd.f32 %v938, %v1420
      %v1422 = vpop.f32.mrf.mxu0
      %v1423 = vadd.f32 %v938, %v1422
      %1424 = vmatmul.bf16.gmra.mxu0 %v972
      %v1425 = vpop.f32.mrf.mxu0
      %v1426 = vadd.f32 %v938, %v1425
      %v1427 = vpop.f32.mrf.mxu0
      %v1428 = vadd.f32 %v938, %v1427
      %1429 = vdwg.mxu0
      %1430 = vmatpush.bf16.msra.mxu0 0
      %1431 = vmatpush.bf16.msra.mxu0 0
      %1432 = vmatpush.bf16.msra.mxu0 0
      %1433 = vmatpush.bf16.msra.mxu0 0
      %1434 = vmatpush.bf16.msra.mxu0 %v1169
      %1435 = vmatpush.bf16.msra.mxu0 %v1165
      %1436 = vmatpush.bf16.msra.mxu0 %v1161
      %1437 = vmatpush.bf16.msra.mxu0 %v1157
      %1438 = vmatmul.bf16.gmra.mxu0 %v1219
      %v1439 = vpop.f32.mrf.mxu0
      %v1440 = vadd.f32 %v1411, %v1439
      %v1441 = vpop.f32.mrf.mxu0
      %v1442 = vadd.f32 %v1413, %v1441
      %1443 = vmatmul.bf16.gmra.mxu0 %v1221
      %v1444 = vpop.f32.mrf.mxu0
      %v1445 = vadd.f32 %v1416, %v1444
      %v1446 = vpop.f32.mrf.mxu0
      %v1447 = vadd.f32 %v1418, %v1446
      %1448 = vmatmul.bf16.gmra.mxu0 %v1223
      %v1449 = vpop.f32.mrf.mxu0
      %v1450 = vadd.f32 %v1421, %v1449
      %v1451 = vpop.f32.mrf.mxu0
      %v1452 = vadd.f32 %v1423, %v1451
      %1453 = vmatmul.bf16.gmra.mxu0 %v1225
      %v1454 = vpop.f32.mrf.mxu0
      %v1455 = vadd.f32 %v1426, %v1454
      %v1456 = vpop.f32.mrf.mxu0
      %v1457 = vadd.f32 %v1428, %v1456
      %1458 = vdwg.mxu0
      %v1459 = vmax.f32 %v1266, 0.0
      %v1460 = vmax.f32 %v1324, 0.0
      %v1461 = vmax.f32 %v1382, 0.0
      %v1462 = vmax.f32 %v1440, 0.0
      %v1463 = vmax.f32 %v1268, 0.0
      %v1464 = vmax.f32 %v1326, 0.0
      %v1465 = vmax.f32 %v1384, 0.0
      %v1466 = vmax.f32 %v1442, 0.0
      %v1467 = vmax.f32 %v1271, 0.0
      %v1468 = vmax.f32 %v1329, 0.0
      %v1469 = vmax.f32 %v1387, 0.0
      %v1470 = vmax.f32 %v1445, 0.0
      %v1471 = vmax.f32 %v1273, 0.0
      %v1472 = vmax.f32 %v1331, 0.0
      %v1473 = vmax.f32 %v1389, 0.0
      %v1474 = vmax.f32 %v1447, 0.0
      %v1475 = vmax.f32 %v1276, 0.0
      %v1476 = vmax.f32 %v1334, 0.0
      %v1477 = vmax.f32 %v1392, 0.0
      %v1478 = vmax.f32 %v1450, 0.0
      %v1479 = vmax.f32 %v1278, 0.0
      %v1480 = vmax.f32 %v1336, 0.0
      %v1481 = vmax.f32 %v1394, 0.0
      %v1482 = vmax.f32 %v1452, 0.0
      %v1483 = vmax.f32 %v1281, 0.0
      %v1484 = vmax.f32 %v1339, 0.0
      %v1485 = vmax.f32 %v1397, 0.0
      %v1486 = vmax.f32 %v1455, 0.0
      %v1487 = vmax.f32 %v1283, 0.0
      %v1488 = vmax.f32 %v1341, 0.0
      %v1489 = vmax.f32 %v1399, 0.0
      %v1490 = vmax.f32 %v1457, 0.0
      %v1523 = vrot.slane %v1460, 4
      %v1524 = vrot.slane %v1462, 4
      %v1525 = vrot.slane %v1464, 4
      %v1526 = vrot.slane %v1466, 4
      %v1527 = vrot.slane %v1468, 4
      %v1528 = vrot.slane %v1470, 4
      %v1529 = vrot.slane %v1472, 4
      %v1530 = vrot.slane %v1474, 4
      %v1531 = vrot.slane %v1476, 4
      %v1532 = vrot.slane %v1478, 4
      %v1533 = vrot.slane %v1480, 4
      %v1534 = vrot.slane %v1482, 4
      %v1535 = vrot.slane %v1484, 4
      %v1536 = vrot.slane %v1486, 4
      %v1537 = vrot.slane %v1488, 4
      %v1538 = vrot.slane %v1490, 4
      %vm1539 = vcmask 1043456
      %v1540 = vsel %vm1539, %v1459, %v1523
      %v1541 = vsel %vm1539, %v1461, %v1524
      %v1542 = vsel %vm1539, %v1523, %v1459
      %v1543 = vrot.slane %v1542, 4
      %v1544 = vsel %vm1539, %v1524, %v1461
      %v1545 = vrot.slane %v1544, 4
      %v1546 = vsel %vm1539, %v1463, %v1525
      %v1547 = vsel %vm1539, %v1465, %v1526
      %v1548 = vsel %vm1539, %v1525, %v1463
      %v1549 = vrot.slane %v1548, 4
      %v1550 = vsel %vm1539, %v1526, %v1465
      %v1551 = vrot.slane %v1550, 4
      %v1552 = vsel %vm1539, %v1467, %v1527
      %v1553 = vsel %vm1539, %v1469, %v1528
      %v1554 = vsel %vm1539, %v1527, %v1467
      %v1555 = vrot.slane %v1554, 4
      %v1556 = vsel %vm1539, %v1528, %v1469
      %v1557 = vrot.slane %v1556, 4
      %v1558 = vsel %vm1539, %v1471, %v1529
      %v1559 = vsel %vm1539, %v1473, %v1530
      %v1560 = vsel %vm1539, %v1529, %v1471
      %v1561 = vrot.slane %v1560, 4
      %v1562 = vsel %vm1539, %v1530, %v1473
      %v1563 = vrot.slane %v1562, 4
      %v1564 = vsel %vm1539, %v1475, %v1531
      %v1565 = vsel %vm1539, %v1477, %v1532
      %v1566 = vsel %vm1539, %v1531, %v1475
      %v1567 = vrot.slane %v1566, 4
      %v1568 = vsel %vm1539, %v1532, %v1477
      %v1569 = vrot.slane %v1568, 4
      %v1570 = vsel %vm1539, %v1479, %v1533
      %v1571 = vsel %vm1539, %v1481, %v1534
      %v1572 = vsel %vm1539, %v1533, %v1479
      %v1573 = vrot.slane %v1572, 4
      %v1574 = vsel %vm1539, %v1534, %v1481
      %v1575 = vrot.slane %v1574, 4
      %v1576 = vsel %vm1539, %v1483, %v1535
      %v1577 = vsel %vm1539, %v1485, %v1536
      %v1578 = vsel %vm1539, %v1535, %v1483
      %v1579 = vrot.slane %v1578, 4
      %v1580 = vsel %vm1539, %v1536, %v1485
      %v1581 = vrot.slane %v1580, 4
      %v1582 = vsel %vm1539, %v1487, %v1537
      %v1583 = vsel %vm1539, %v1489, %v1538
      %v1584 = vsel %vm1539, %v1537, %v1487
      %v1585 = vrot.slane %v1584, 4
      %v1586 = vsel %vm1539, %v1538, %v1489
      %v1587 = vrot.slane %v1586, 4
      %1588 = vst [vmem:[#allocation1] ss:$2 sm:$0xff] %v1540
      %s1589 = scalar_lea.vmem [#allocation1], 16
      %1590 = vst [vmem:[%s1589] ss:$2 sm:$0xff] %v1541
      %v1591 = vld.sshfl [vmem:[#allocation1] sm:$0xff pattern:$0x75316420]
      %v1592 = vld.sshfl [vmem:[#allocation1 + $0x8] sm:$0xff pattern:$0x75316420]
      %v1593 = vld.sshfl [vmem:[#allocation1 + $0x10] sm:$0xff pattern:$0x75316420]
      %v1594 = vld.sshfl [vmem:[#allocation1 + $0x18] sm:$0xff pattern:$0x75316420]
      %s1595 = scalar_lea.vmem [#allocation1], 32
      %1596 = vst [vmem:[%s1595] ss:$2 sm:$0xff] %v1543
      %s1597 = scalar_lea.vmem [#allocation1], 48
      %1598 = vst [vmem:[%s1597] ss:$2 sm:$0xff] %v1545
      %v1599 = vld.sshfl [vmem:[#allocation1 + $0x20] sm:$0xff pattern:$0x75316420]
      %v1600 = vld.sshfl [vmem:[#allocation1 + $0x28] sm:$0xff pattern:$0x75316420]
      %v1601 = vld.sshfl [vmem:[#allocation1 + $0x30] sm:$0xff pattern:$0x75316420]
      %v1602 = vld.sshfl [vmem:[#allocation1 + $0x38] sm:$0xff pattern:$0x75316420]
      %1603 = vst [vmem:[#allocation1] ss:$2 sm:$0xff] %v1546
      %1604 = vst [vmem:[%s1589] ss:$2 sm:$0xff] %v1547
      %v1605 = vld.sshfl [vmem:[#allocation1] sm:$0xff pattern:$0x75316420]
      %v1606 = vld.sshfl [vmem:[#allocation1 + $0x8] sm:$0xff pattern:$0x75316420]
      %v1607 = vld.sshfl [vmem:[#allocation1 + $0x10] sm:$0xff pattern:$0x75316420]
      %v1608 = vld.sshfl [vmem:[#allocation1 + $0x18] sm:$0xff pattern:$0x75316420]
      %1609 = vst [vmem:[%s1595] ss:$2 sm:$0xff] %v1549
      %1610 = vst [vmem:[%s1597] ss:$2 sm:$0xff] %v1551
      %v1611 = vld.sshfl [vmem:[#allocation1 + $0x20] sm:$0xff pattern:$0x75316420]
      %v1612 = vld.sshfl [vmem:[#allocation1 + $0x28] sm:$0xff pattern:$0x75316420]
      %v1613 = vld.sshfl [vmem:[#allocation1 + $0x30] sm:$0xff pattern:$0x75316420]
      %v1614 = vld.sshfl [vmem:[#allocation1 + $0x38] sm:$0xff pattern:$0x75316420]
      %1615 = vst [vmem:[#allocation1] ss:$2 sm:$0xff] %v1552
      %1616 = vst [vmem:[%s1589] ss:$2 sm:$0xff] %v1553
      %v1617 = vld.sshfl [vmem:[#allocation1] sm:$0xff pattern:$0x75316420]
      %v1618 = vld.sshfl [vmem:[#allocation1 + $0x8] sm:$0xff pattern:$0x75316420]
      %v1619 = vld.sshfl [vmem:[#allocation1 + $0x10] sm:$0xff pattern:$0x75316420]
      %v1620 = vld.sshfl [vmem:[#allocation1 + $0x18] sm:$0xff pattern:$0x75316420]
      %1621 = vst [vmem:[%s1595] ss:$2 sm:$0xff] %v1555
      %1622 = vst [vmem:[%s1597] ss:$2 sm:$0xff] %v1557
      %v1623 = vld.sshfl [vmem:[#allocation1 + $0x20] sm:$0xff pattern:$0x75316420]
      %v1624 = vld.sshfl [vmem:[#allocation1 + $0x28] sm:$0xff pattern:$0x75316420]
      %v1625 = vld.sshfl [vmem:[#allocation1 + $0x30] sm:$0xff pattern:$0x75316420]
      %v1626 = vld.sshfl [vmem:[#allocation1 + $0x38] sm:$0xff pattern:$0x75316420]
      %1627 = vst [vmem:[#allocation1] ss:$2 sm:$0xff] %v1558
      %1628 = vst [vmem:[%s1589] ss:$2 sm:$0xff] %v1559
      %v1629 = vld.sshfl [vmem:[#allocation1] sm:$0xff pattern:$0x75316420]
      %v1630 = vld.sshfl [vmem:[#allocation1 + $0x8] sm:$0xff pattern:$0x75316420]
      %v1631 = vld.sshfl [vmem:[#allocation1 + $0x10] sm:$0xff pattern:$0x75316420]
      %v1632 = vld.sshfl [vmem:[#allocation1 + $0x18] sm:$0xff pattern:$0x75316420]
      %1633 = vst [vmem:[%s1595] ss:$2 sm:$0xff] %v1561
      %1634 = vst [vmem:[%s1597] ss:$2 sm:$0xff] %v1563
      %v1635 = vld.sshfl [vmem:[#allocation1 + $0x20] sm:$0xff pattern:$0x75316420]
      %v1636 = vld.sshfl [vmem:[#allocation1 + $0x28] sm:$0xff pattern:$0x75316420]
      %v1637 = vld.sshfl [vmem:[#allocation1 + $0x30] sm:$0xff pattern:$0x75316420]
      %v1638 = vld.sshfl [vmem:[#allocation1 + $0x38] sm:$0xff pattern:$0x75316420]
      %1639 = vst [vmem:[#allocation1] ss:$2 sm:$0xff] %v1564
      %1640 = vst [vmem:[%s1589] ss:$2 sm:$0xff] %v1565
      %v1641 = vld.sshfl [vmem:[#allocation1] sm:$0xff pattern:$0x75316420]
      %v1642 = vld.sshfl [vmem:[#allocation1 + $0x8] sm:$0xff pattern:$0x75316420]
      %v1643 = vld.sshfl [vmem:[#allocation1 + $0x10] sm:$0xff pattern:$0x75316420]
      %v1644 = vld.sshfl [vmem:[#allocation1 + $0x18] sm:$0xff pattern:$0x75316420]
      %1645 = vst [vmem:[%s1595] ss:$2 sm:$0xff] %v1567
      %1646 = vst [vmem:[%s1597] ss:$2 sm:$0xff] %v1569
      %v1647 = vld.sshfl [vmem:[#allocation1 + $0x20] sm:$0xff pattern:$0x75316420]
      %v1648 = vld.sshfl [vmem:[#allocation1 + $0x28] sm:$0xff pattern:$0x75316420]
      %v1649 = vld.sshfl [vmem:[#allocation1 + $0x30] sm:$0xff pattern:$0x75316420]
      %v1650 = vld.sshfl [vmem:[#allocation1 + $0x38] sm:$0xff pattern:$0x75316420]
      %1651 = vst [vmem:[#allocation1] ss:$2 sm:$0xff] %v1570
      %1652 = vst [vmem:[%s1589] ss:$2 sm:$0xff] %v1571
      %v1653 = vld.sshfl [vmem:[#allocation1] sm:$0xff pattern:$0x75316420]
      %v1654 = vld.sshfl [vmem:[#allocation1 + $0x8] sm:$0xff pattern:$0x75316420]
      %v1655 = vld.sshfl [vmem:[#allocation1 + $0x10] sm:$0xff pattern:$0x75316420]
      %v1656 = vld.sshfl [vmem:[#allocation1 + $0x18] sm:$0xff pattern:$0x75316420]
      %1657 = vst [vmem:[%s1595] ss:$2 sm:$0xff] %v1573
      %1658 = vst [vmem:[%s1597] ss:$2 sm:$0xff] %v1575
      %v1659 = vld.sshfl [vmem:[#allocation1 + $0x20] sm:$0xff pattern:$0x75316420]
      %v1660 = vld.sshfl [vmem:[#allocation1 + $0x28] sm:$0xff pattern:$0x75316420]
      %v1661 = vld.sshfl [vmem:[#allocation1 + $0x30] sm:$0xff pattern:$0x75316420]
      %v1662 = vld.sshfl [vmem:[#allocation1 + $0x38] sm:$0xff pattern:$0x75316420]
      %1663 = vst [vmem:[#allocation1] ss:$2 sm:$0xff] %v1576
      %1664 = vst [vmem:[%s1589] ss:$2 sm:$0xff] %v1577
      %v1665 = vld.sshfl [vmem:[#allocation1] sm:$0xff pattern:$0x75316420]
      %v1666 = vld.sshfl [vmem:[#allocation1 + $0x8] sm:$0xff pattern:$0x75316420]
      %v1667 = vld.sshfl [vmem:[#allocation1 + $0x10] sm:$0xff pattern:$0x75316420]
      %v1668 = vld.sshfl [vmem:[#allocation1 + $0x18] sm:$0xff pattern:$0x75316420]
      %1669 = vst [vmem:[%s1595] ss:$2 sm:$0xff] %v1579
      %1670 = vst [vmem:[%s1597] ss:$2 sm:$0xff] %v1581
      %v1671 = vld.sshfl [vmem:[#allocation1 + $0x20] sm:$0xff pattern:$0x75316420]
      %v1672 = vld.sshfl [vmem:[#allocation1 + $0x28] sm:$0xff pattern:$0x75316420]
      %v1673 = vld.sshfl [vmem:[#allocation1 + $0x30] sm:$0xff pattern:$0x75316420]
      %v1674 = vld.sshfl [vmem:[#allocation1 + $0x38] sm:$0xff pattern:$0x75316420]
      %1675 = vst [vmem:[#allocation1] ss:$2 sm:$0xff] %v1582
      %1676 = vst [vmem:[%s1589] ss:$2 sm:$0xff] %v1583
      %v1677 = vld.sshfl [vmem:[#allocation1] sm:$0xff pattern:$0x75316420]
      %v1678 = vld.sshfl [vmem:[#allocation1 + $0x8] sm:$0xff pattern:$0x75316420]
      %v1679 = vld.sshfl [vmem:[#allocation1 + $0x10] sm:$0xff pattern:$0x75316420]
      %v1680 = vld.sshfl [vmem:[#allocation1 + $0x18] sm:$0xff pattern:$0x75316420]
      %1681 = vst [vmem:[%s1595] ss:$2 sm:$0xff] %v1585
      %1682 = vst [vmem:[%s1597] ss:$2 sm:$0xff] %v1587
      %v1683 = vld.sshfl [vmem:[#allocation1 + $0x20] sm:$0xff pattern:$0x75316420]
      %v1684 = vld.sshfl [vmem:[#allocation1 + $0x28] sm:$0xff pattern:$0x75316420]
      %v1685 = vld.sshfl [vmem:[#allocation1 + $0x30] sm:$0xff pattern:$0x75316420]
      %v1686 = vld.sshfl [vmem:[#allocation1 + $0x38] sm:$0xff pattern:$0x75316420]
      %v1751 = vpack.c.bf16 %v1592, %v1591
      %v1752 = vpack.c.bf16 %v1594, %v1593
      %v1753 = vpack.c.bf16 %v1600, %v1599
      %v1754 = vpack.c.bf16 %v1602, %v1601
      %v1755 = vpack.c.bf16 %v1606, %v1605
      %v1756 = vpack.c.bf16 %v1608, %v1607
      %v1757 = vpack.c.bf16 %v1612, %v1611
      %v1758 = vpack.c.bf16 %v1614, %v1613
      %v1759 = vpack.c.bf16 %v1618, %v1617
      %v1760 = vpack.c.bf16 %v1620, %v1619
      %v1761 = vpack.c.bf16 %v1624, %v1623
      %v1762 = vpack.c.bf16 %v1626, %v1625
      %v1763 = vpack.c.bf16 %v1630, %v1629
      %v1764 = vpack.c.bf16 %v1632, %v1631
      %v1765 = vpack.c.bf16 %v1636, %v1635
      %v1766 = vpack.c.bf16 %v1638, %v1637
      %v1767 = vpack.c.bf16 %v1642, %v1641
      %v1768 = vpack.c.bf16 %v1644, %v1643
      %v1769 = vpack.c.bf16 %v1648, %v1647
      %v1770 = vpack.c.bf16 %v1650, %v1649
      %v1771 = vpack.c.bf16 %v1654, %v1653
      %v1772 = vpack.c.bf16 %v1656, %v1655
      %v1773 = vpack.c.bf16 %v1660, %v1659
      %v1774 = vpack.c.bf16 %v1662, %v1661
      %v1775 = vpack.c.bf16 %v1666, %v1665
      %v1776 = vpack.c.bf16 %v1668, %v1667
      %v1777 = vpack.c.bf16 %v1672, %v1671
      %v1778 = vpack.c.bf16 %v1674, %v1673
      %v1779 = vpack.c.bf16 %v1678, %v1677
      %v1780 = vpack.c.bf16 %v1680, %v1679
      %v1781 = vpack.c.bf16 %v1684, %v1683
      %v1782 = vpack.c.bf16 %v1686, %v1685
      %v1784 = vshrl.u32 %v1751, 16
      %v1786 = vrot.slane %v1784, 7
      %v1787 = vshll.u32 %v1751, 16
      %v1789 = vor.u32 %v1786, %v1787
      %v1791 = vshrl.u32 %v1752, 16
      %v1793 = vrot.slane %v1791, 7
      %v1794 = vshll.u32 %v1752, 16
      %v1796 = vor.u32 %v1793, %v1794
      %v1798 = vshrl.u32 %v1753, 16
      %v1800 = vrot.slane %v1798, 7
      %v1801 = vshll.u32 %v1753, 16
      %v1803 = vor.u32 %v1800, %v1801
      %v1805 = vshrl.u32 %v1754, 16
      %v1807 = vrot.slane %v1805, 7
      %v1808 = vshll.u32 %v1754, 16
      %v1810 = vor.u32 %v1807, %v1808
      %v1812 = vshrl.u32 %v1755, 16
      %v1814 = vrot.slane %v1812, 7
      %v1815 = vshll.u32 %v1755, 16
      %v1817 = vor.u32 %v1814, %v1815
      %v1819 = vshrl.u32 %v1756, 16
      %v1821 = vrot.slane %v1819, 7
      %v1822 = vshll.u32 %v1756, 16
      %v1824 = vor.u32 %v1821, %v1822
      %v1826 = vshrl.u32 %v1757, 16
      %v1828 = vrot.slane %v1826, 7
      %v1829 = vshll.u32 %v1757, 16
      %v1831 = vor.u32 %v1828, %v1829
      %v1833 = vshrl.u32 %v1758, 16
      %v1835 = vrot.slane %v1833, 7
      %v1836 = vshll.u32 %v1758, 16
      %v1838 = vor.u32 %v1835, %v1836
      %v1840 = vshrl.u32 %v1759, 16
      %v1842 = vrot.slane %v1840, 7
      %v1843 = vshll.u32 %v1759, 16
      %v1845 = vor.u32 %v1842, %v1843
      %v1847 = vshrl.u32 %v1760, 16
      %v1849 = vrot.slane %v1847, 7
      %v1850 = vshll.u32 %v1760, 16
      %v1852 = vor.u32 %v1849, %v1850
      %v1854 = vshrl.u32 %v1761, 16
      %v1856 = vrot.slane %v1854, 7
      %v1857 = vshll.u32 %v1761, 16
      %v1859 = vor.u32 %v1856, %v1857
      %v1861 = vshrl.u32 %v1762, 16
      %v1863 = vrot.slane %v1861, 7
      %v1864 = vshll.u32 %v1762, 16
      %v1866 = vor.u32 %v1863, %v1864
      %v1868 = vshrl.u32 %v1763, 16
      %v1870 = vrot.slane %v1868, 7
      %v1871 = vshll.u32 %v1763, 16
      %v1873 = vor.u32 %v1870, %v1871
      %v1875 = vshrl.u32 %v1764, 16
      %v1877 = vrot.slane %v1875, 7
      %v1878 = vshll.u32 %v1764, 16
      %v1880 = vor.u32 %v1877, %v1878
      %v1882 = vshrl.u32 %v1765, 16
      %v1884 = vrot.slane %v1882, 7
      %v1885 = vshll.u32 %v1765, 16
      %v1887 = vor.u32 %v1884, %v1885
      %v1889 = vshrl.u32 %v1766, 16
      %v1891 = vrot.slane %v1889, 7
      %v1892 = vshll.u32 %v1766, 16
      %v1894 = vor.u32 %v1891, %v1892
      %v1896 = vshrl.u32 %v1767, 16
      %v1898 = vrot.slane %v1896, 7
      %v1899 = vshll.u32 %v1767, 16
      %v1901 = vor.u32 %v1898, %v1899
      %v1903 = vshrl.u32 %v1768, 16
      %v1905 = vrot.slane %v1903, 7
      %v1906 = vshll.u32 %v1768, 16
      %v1908 = vor.u32 %v1905, %v1906
      %v1910 = vshrl.u32 %v1769, 16
      %v1912 = vrot.slane %v1910, 7
      %v1913 = vshll.u32 %v1769, 16
      %v1915 = vor.u32 %v1912, %v1913
      %v1917 = vshrl.u32 %v1770, 16
      %v1919 = vrot.slane %v1917, 7
      %v1920 = vshll.u32 %v1770, 16
      %v1922 = vor.u32 %v1919, %v1920
      %v1924 = vshrl.u32 %v1771, 16
      %v1926 = vrot.slane %v1924, 7
      %v1927 = vshll.u32 %v1771, 16
      %v1929 = vor.u32 %v1926, %v1927
      %v1931 = vshrl.u32 %v1772, 16
      %v1933 = vrot.slane %v1931, 7
      %v1934 = vshll.u32 %v1772, 16
      %v1936 = vor.u32 %v1933, %v1934
      %v1938 = vshrl.u32 %v1773, 16
      %v1940 = vrot.slane %v1938, 7
      %v1941 = vshll.u32 %v1773, 16
      %v1943 = vor.u32 %v1940, %v1941
      %v1945 = vshrl.u32 %v1774, 16
      %v1947 = vrot.slane %v1945, 7
      %v1948 = vshll.u32 %v1774, 16
      %v1950 = vor.u32 %v1947, %v1948
      %v1952 = vshrl.u32 %v1775, 16
      %v1954 = vrot.slane %v1952, 7
      %v1955 = vshll.u32 %v1775, 16
      %v1957 = vor.u32 %v1954, %v1955
      %v1959 = vshrl.u32 %v1776, 16
      %v1961 = vrot.slane %v1959, 7
      %v1962 = vshll.u32 %v1776, 16
      %v1964 = vor.u32 %v1961, %v1962
      %v1966 = vshrl.u32 %v1777, 16
      %v1968 = vrot.slane %v1966, 7
      %v1969 = vshll.u32 %v1777, 16
      %v1971 = vor.u32 %v1968, %v1969
      %v1973 = vshrl.u32 %v1778, 16
      %v1975 = vrot.slane %v1973, 7
      %v1976 = vshll.u32 %v1778, 16
      %v1978 = vor.u32 %v1975, %v1976
      %v1980 = vshrl.u32 %v1779, 16
      %v1982 = vrot.slane %v1980, 7
      %v1983 = vshll.u32 %v1779, 16
      %v1985 = vor.u32 %v1982, %v1983
      %v1987 = vshrl.u32 %v1780, 16
      %v1989 = vrot.slane %v1987, 7
      %v1990 = vshll.u32 %v1780, 16
      %v1992 = vor.u32 %v1989, %v1990
      %v1994 = vshrl.u32 %v1781, 16
      %v1996 = vrot.slane %v1994, 7
      %v1997 = vshll.u32 %v1781, 16
      %v1999 = vor.u32 %v1996, %v1997
      %v2001 = vshrl.u32 %v1782, 16
      %v2003 = vrot.slane %v2001, 7
      %v2004 = vshll.u32 %v1782, 16
      %v2006 = vor.u32 %v2003, %v2004
      %s2039 = scalar_lea.vmem [#allocation2], 16
      %vm2040 = vsmask.f32 2306
      %vm2041 = vmand %vm231, %vm2040
      %vm2042 = vsmask.f32 6418
      %vm2043 = vmand %vm234, %vm2042
      %vm2044 = vmor %vm2043, %vm2041
      %v2045 = vld [vmem:[%s2039] sm:$0x77]
      %v2046 = vsel %vm2044, %v1789, %v2045
      %2047 = vst [vmem:[%s2039] sm:$0x77] %v2046
      %v2048 = vld [vmem:[%s2039 + $0x8] sm:$0x77]
      %v2049 = vsel %vm2044, %v1796, %v2048
      %2050 = vst [vmem:[%s2039 + $0x8] sm:$0x77] %v2049
      %v2051 = vld [vmem:[%s2039 + $0x10] sm:$0x77]
      %v2052 = vsel %vm2044, %v1803, %v2051
      %2053 = vst [vmem:[%s2039 + $0x10] sm:$0x77] %v2052
      %v2054 = vld [vmem:[%s2039 + $0x18] sm:$0x77]
      %v2055 = vsel %vm2044, %v1810, %v2054
      %2056 = vst [vmem:[%s2039 + $0x18] sm:$0x77] %v2055
      %v2057 = vld [vmem:[%s2039 + $0x20] sm:$0x77]
      %v2058 = vsel %vm2044, %v1817, %v2057
      %2059 = vst [vmem:[%s2039 + $0x20] sm:$0x77] %v2058
      %v2060 = vld [vmem:[%s2039 + $0x28] sm:$0x77]
      %v2061 = vsel %vm2044, %v1824, %v2060
      %2062 = vst [vmem:[%s2039 + $0x28] sm:$0x77] %v2061
      %v2063 = vld [vmem:[%s2039 + $0x30] sm:$0x77]
      %v2064 = vsel %vm2044, %v1831, %v2063
      %2065 = vst [vmem:[%s2039 + $0x30] sm:$0x77] %v2064
      %v2066 = vld [vmem:[%s2039 + $0x38] sm:$0x77]
      %v2067 = vsel %vm2044, %v1838, %v2066
      %2068 = vst [vmem:[%s2039 + $0x38] sm:$0x77] %v2067
      %v2069 = vld [vmem:[%s2039 + $0x50] sm:$0x77]
      %v2070 = vsel %vm2044, %v1845, %v2069
      %2071 = vst [vmem:[%s2039 + $0x50] sm:$0x77] %v2070
      %v2072 = vld [vmem:[%s2039 + $0x58] sm:$0x77]
      %v2073 = vsel %vm2044, %v1852, %v2072
      %2074 = vst [vmem:[%s2039 + $0x58] sm:$0x77] %v2073
      %v2075 = vld [vmem:[%s2039 + $0x60] sm:$0x77]
      %v2076 = vsel %vm2044, %v1859, %v2075
      %2077 = vst [vmem:[%s2039 + $0x60] sm:$0x77] %v2076
      %v2078 = vld [vmem:[%s2039 + $0x68] sm:$0x77]
      %v2079 = vsel %vm2044, %v1866, %v2078
      %2080 = vst [vmem:[%s2039 + $0x68] sm:$0x77] %v2079
      %v2081 = vld [vmem:[%s2039 + $0x70] sm:$0x77]
      %v2082 = vsel %vm2044, %v1873, %v2081
      %2083 = vst [vmem:[%s2039 + $0x70] sm:$0x77] %v2082
      %v2084 = vld [vmem:[%s2039 + $0x78] sm:$0x77]
      %v2085 = vsel %vm2044, %v1880, %v2084
      %2086 = vst [vmem:[%s2039 + $0x78] sm:$0x77] %v2085
      %v2087 = vld [vmem:[%s2039 + $0x80] sm:$0x77]
      %v2088 = vsel %vm2044, %v1887, %v2087
      %2089 = vst [vmem:[%s2039 + $0x80] sm:$0x77] %v2088
      %v2090 = vld [vmem:[%s2039 + $0x88] sm:$0x77]
      %v2091 = vsel %vm2044, %v1894, %v2090
      %2092 = vst [vmem:[%s2039 + $0x88] sm:$0x77] %v2091
      %v2093 = vld [vmem:[%s2039 + $0xa0] sm:$0x77]
      %v2094 = vsel %vm2044, %v1901, %v2093
      %2095 = vst [vmem:[%s2039 + $0xa0] sm:$0x77] %v2094
      %v2096 = vld [vmem:[%s2039 + $0xa8] sm:$0x77]
      %v2097 = vsel %vm2044, %v1908, %v2096
      %2098 = vst [vmem:[%s2039 + $0xa8] sm:$0x77] %v2097
      %v2099 = vld [vmem:[%s2039 + $0xb0] sm:$0x77]
      %v2100 = vsel %vm2044, %v1915, %v2099
      %2101 = vst [vmem:[%s2039 + $0xb0] sm:$0x77] %v2100
      %v2102 = vld [vmem:[%s2039 + $0xb8] sm:$0x77]
      %v2103 = vsel %vm2044, %v1922, %v2102
      %2104 = vst [vmem:[%s2039 + $0xb8] sm:$0x77] %v2103
      %v2105 = vld [vmem:[%s2039 + $0xc0] sm:$0x77]
      %v2106 = vsel %vm2044, %v1929, %v2105
      %2107 = vst [vmem:[%s2039 + $0xc0] sm:$0x77] %v2106
      %v2108 = vld [vmem:[%s2039 + $0xc8] sm:$0x77]
      %v2109 = vsel %vm2044, %v1936, %v2108
      %2110 = vst [vmem:[%s2039 + $0xc8] sm:$0x77] %v2109
      %v2111 = vld [vmem:[%s2039 + $0xd0] sm:$0x77]
      %v2112 = vsel %vm2044, %v1943, %v2111
      %2113 = vst [vmem:[%s2039 + $0xd0] sm:$0x77] %v2112
      %v2114 = vld [vmem:[%s2039 + $0xd8] sm:$0x77]
      %v2115 = vsel %vm2044, %v1950, %v2114
      %2116 = vst [vmem:[%s2039 + $0xd8] sm:$0x77] %v2115
      %v2117 = vld [vmem:[%s2039 + $0xf0] sm:$0x77]
      %v2118 = vsel %vm2044, %v1957, %v2117
      %2119 = vst [vmem:[%s2039 + $0xf0] sm:$0x77] %v2118
      %v2120 = vld [vmem:[%s2039 + $0xf8] sm:$0x77]
      %v2121 = vsel %vm2044, %v1964, %v2120
      %2122 = vst [vmem:[%s2039 + $0xf8] sm:$0x77] %v2121
      %v2123 = vld [vmem:[%s2039 + $0x100] sm:$0x77]
      %v2124 = vsel %vm2044, %v1971, %v2123
      %2125 = vst [vmem:[%s2039 + $0x100] sm:$0x77] %v2124
      %v2126 = vld [vmem:[%s2039 + $0x108] sm:$0x77]
      %v2127 = vsel %vm2044, %v1978, %v2126
      %2128 = vst [vmem:[%s2039 + $0x108] sm:$0x77] %v2127
      %v2129 = vld [vmem:[%s2039 + $0x110] sm:$0x77]
      %v2130 = vsel %vm2044, %v1985, %v2129
      %2131 = vst [vmem:[%s2039 + $0x110] sm:$0x77] %v2130
      %v2132 = vld [vmem:[%s2039 + $0x118] sm:$0x77]
      %v2133 = vsel %vm2044, %v1992, %v2132
      %2134 = vst [vmem:[%s2039 + $0x118] sm:$0x77] %v2133
      %v2135 = vld [vmem:[%s2039 + $0x120] sm:$0x77]
      %v2136 = vsel %vm2044, %v1999, %v2135
      %2137 = vst [vmem:[%s2039 + $0x120] sm:$0x77] %v2136
      %v2138 = vld [vmem:[%s2039 + $0x128] sm:$0x77]
      %v2139 = vsel %vm2044, %v2006, %v2138
      %2140 = vst [vmem:[%s2039 + $0x128] sm:$0x77] %v2139
      %v2141 = vld [vmem:[#allocation2] sm:$0x77]
      %v2142 = vld [vmem:[#allocation2 + $0x8] sm:$0x77]
      %v2143 = vld [vmem:[#allocation2 + $0x10] sm:$0x77]
      %v2144 = vld [vmem:[#allocation2 + $0x18] sm:$0x77]
      %v2145 = vld [vmem:[#allocation2 + $0x20] sm:$0x77]
      %v2146 = vld [vmem:[#allocation2 + $0x28] sm:$0x77]
      %v2147 = vld [vmem:[#allocation2 + $0x30] sm:$0x77]
      %v2148 = vld [vmem:[#allocation2 + $0x38] sm:$0x77]
      %v2149 = vld [vmem:[#allocation2 + $0x40] sm:$0x77]
      %v2150 = vld [vmem:[#allocation2 + $0x48] sm:$0x77]
      %v2151 = vld [vmem:[#allocation2 + $0x50] sm:$0x77]
      %v2152 = vld [vmem:[#allocation2 + $0x58] sm:$0x77]
      %v2153 = vld [vmem:[#allocation2 + $0x60] sm:$0x77]
      %v2154 = vld [vmem:[#allocation2 + $0x68] sm:$0x77]
      %v2155 = vld [vmem:[#allocation2 + $0x70] sm:$0x77]
      %v2156 = vld [vmem:[#allocation2 + $0x78] sm:$0x77]
      %v2157 = vld [vmem:[#allocation2 + $0x80] sm:$0x77]
      %v2158 = vld [vmem:[#allocation2 + $0x88] sm:$0x77]
      %v2159 = vld [vmem:[#allocation2 + $0x90] sm:$0x77]
      %v2160 = vld [vmem:[#allocation2 + $0x98] sm:$0x77]
      %v2161 = vld [vmem:[#allocation2 + $0xa0] sm:$0x77]
      %v2162 = vld [vmem:[#allocation2 + $0xa8] sm:$0x77]
      %v2163 = vld [vmem:[#allocation2 + $0xb0] sm:$0x77]
      %v2164 = vld [vmem:[#allocation2 + $0xb8] sm:$0x77]
      %v2165 = vld [vmem:[#allocation2 + $0xc0] sm:$0x77]
      %v2166 = vld [vmem:[#allocation2 + $0xc8] sm:$0x77]
      %v2167 = vld [vmem:[#allocation2 + $0xd0] sm:$0x77]
      %v2168 = vld [vmem:[#allocation2 + $0xd8] sm:$0x77]
      %v2169 = vld [vmem:[#allocation2 + $0xe0] sm:$0x77]
      %v2170 = vld [vmem:[#allocation2 + $0xe8] sm:$0x77]
      %v2171 = vld [vmem:[#allocation2 + $0xf0] sm:$0x77]
      %v2172 = vld [vmem:[#allocation2 + $0xf8] sm:$0x77]
      %v2173 = vld [vmem:[#allocation2 + $0x100] sm:$0x77]
      %v2174 = vld [vmem:[#allocation2 + $0x108] sm:$0x77]
      %v2175 = vld [vmem:[#allocation2 + $0x110] sm:$0x77]
      %v2176 = vld [vmem:[#allocation2 + $0x118] sm:$0x77]
      %v2177 = vld [vmem:[#allocation2 + $0x120] sm:$0x77]
      %v2178 = vld [vmem:[#allocation2 + $0x128] sm:$0x77]
      %v2179 = vld [vmem:[#allocation2 + $0x130] sm:$0x77]
      %v2180 = vld [vmem:[#allocation2 + $0x138] sm:$0x77]
      %v2213 = vrot.slane %v2141, 2
      %v2214 = vrot.slane %v2142, 4
      %v2215 = vrot.slane %v2142, 6
      %v2216 = vrot.slane %v2143, 2
      %v2217 = vrot.slane %v2144, 4
      %v2218 = vrot.slane %v2144, 6
      %v2219 = vrot.slane %v2145, 2
      %v2220 = vrot.slane %v2146, 4
      %v2221 = vrot.slane %v2146, 6
      %v2222 = vrot.slane %v2147, 2
      %v2223 = vrot.slane %v2148, 4
      %v2224 = vrot.slane %v2148, 6
      %v2225 = vrot.slane %v2151, 2
      %v2226 = vrot.slane %v2152, 4
      %v2227 = vrot.slane %v2152, 6
      %v2228 = vrot.slane %v2153, 2
      %v2229 = vrot.slane %v2154, 4
      %v2230 = vrot.slane %v2154, 6
      %v2231 = vrot.slane %v2155, 2
      %v2232 = vrot.slane %v2156, 4
      %v2233 = vrot.slane %v2156, 6
      %v2234 = vrot.slane %v2157, 2
      %v2235 = vrot.slane %v2158, 4
      %v2236 = vrot.slane %v2158, 6
      %v2237 = vrot.slane %v2161, 2
      %v2238 = vrot.slane %v2162, 4
      %v2239 = vrot.slane %v2162, 6
      %v2240 = vrot.slane %v2163, 2
      %v2241 = vrot.slane %v2164, 4
      %v2242 = vrot.slane %v2164, 6
      %v2243 = vrot.slane %v2165, 2
      %v2244 = vrot.slane %v2166, 4
      %v2245 = vrot.slane %v2166, 6
      %v2246 = vrot.slane %v2167, 2
      %v2247 = vrot.slane %v2168, 4
      %v2248 = vrot.slane %v2168, 6
      %v2249 = vrot.slane %v2171, 2
      %v2250 = vrot.slane %v2172, 4
      %v2251 = vrot.slane %v2172, 6
      %v2252 = vrot.slane %v2173, 2
      %v2253 = vrot.slane %v2174, 4
      %v2254 = vrot.slane %v2174, 6
      %v2255 = vrot.slane %v2175, 2
      %v2256 = vrot.slane %v2176, 4
      %v2257 = vrot.slane %v2176, 6
      %v2258 = vrot.slane %v2177, 2
      %v2259 = vrot.slane %v2178, 4
      %v2260 = vrot.slane %v2178, 6
      %v2263 = vsel %vm852, %v2141, %v2213
      %vm2264 = vcmask 1045508
      %v2267 = vsel %vm2264, %v2214, %v2215
      %v2268 = vsel %vm1539, %v2263, %v2267
      %v2271 = vsel %vm852, %v2143, %v2216
      %v2274 = vsel %vm2264, %v2217, %v2218
      %v2275 = vsel %vm1539, %v2271, %v2274
      %v2278 = vsel %vm852, %v2145, %v2219
      %v2281 = vsel %vm2264, %v2220, %v2221
      %v2282 = vsel %vm1539, %v2278, %v2281
      %v2285 = vsel %vm852, %v2147, %v2222
      %v2288 = vsel %vm2264, %v2223, %v2224
      %v2289 = vsel %vm1539, %v2285, %v2288
      %v2292 = vsel %vm852, %v2151, %v2225
      %v2295 = vsel %vm2264, %v2226, %v2227
      %v2296 = vsel %vm1539, %v2292, %v2295
      %v2299 = vsel %vm852, %v2153, %v2228
      %v2302 = vsel %vm2264, %v2229, %v2230
      %v2303 = vsel %vm1539, %v2299, %v2302
      %v2306 = vsel %vm852, %v2155, %v2231
      %v2309 = vsel %vm2264, %v2232, %v2233
      %v2310 = vsel %vm1539, %v2306, %v2309
      %v2313 = vsel %vm852, %v2157, %v2234
      %v2316 = vsel %vm2264, %v2235, %v2236
      %v2317 = vsel %vm1539, %v2313, %v2316
      %v2320 = vsel %vm852, %v2161, %v2237
      %v2323 = vsel %vm2264, %v2238, %v2239
      %v2324 = vsel %vm1539, %v2320, %v2323
      %v2327 = vsel %vm852, %v2163, %v2240
      %v2330 = vsel %vm2264, %v2241, %v2242
      %v2331 = vsel %vm1539, %v2327, %v2330
      %v2334 = vsel %vm852, %v2165, %v2243
      %v2337 = vsel %vm2264, %v2244, %v2245
      %v2338 = vsel %vm1539, %v2334, %v2337
      %v2341 = vsel %vm852, %v2167, %v2246
      %v2344 = vsel %vm2264, %v2247, %v2248
      %v2345 = vsel %vm1539, %v2341, %v2344
      %v2348 = vsel %vm852, %v2171, %v2249
      %v2351 = vsel %vm2264, %v2250, %v2251
      %v2352 = vsel %vm1539, %v2348, %v2351
      %v2355 = vsel %vm852, %v2173, %v2252
      %v2358 = vsel %vm2264, %v2253, %v2254
      %v2359 = vsel %vm1539, %v2355, %v2358
      %v2362 = vsel %vm852, %v2175, %v2255
      %v2365 = vsel %vm2264, %v2256, %v2257
      %v2366 = vsel %vm1539, %v2362, %v2365
      %v2369 = vsel %vm852, %v2177, %v2258
      %v2372 = vsel %vm2264, %v2259, %v2260
      %v2373 = vsel %vm1539, %v2369, %v2372
      %v2374 = vld [vmem:[%s3] sm:$0xf]
      %v2375 = vld [vmem:[%s3 + $0x4] sm:$0xf]
      %v2376 = vld [vmem:[%s3 + $0x8] sm:$0xf]
      %v2377 = vld [vmem:[%s3 + $0xc] sm:$0xf]
      %v2378 = vld [vmem:[%s3 + $0x10] sm:$0xf]
      %v2379 = vld [vmem:[%s3 + $0x14] sm:$0xf]
      %v2380 = vld [vmem:[%s3 + $0x18] sm:$0xf]
      %v2381 = vld [vmem:[%s3 + $0x1c] sm:$0xf]
      %v2382 = vld [vmem:[%s3 + $0x20] sm:$0xf]
      %v2383 = vld [vmem:[%s3 + $0x24] sm:$0xf]
      %v2384 = vld [vmem:[%s3 + $0x28] sm:$0xf]
      %v2385 = vld [vmem:[%s3 + $0x2c] sm:$0xf]
      %v2386 = vld [vmem:[%s3 + $0x30] sm:$0xf]
      %v2387 = vld [vmem:[%s3 + $0x34] sm:$0xf]
      %v2388 = vld [vmem:[%s3 + $0x38] sm:$0xf]
      %v2389 = vld [vmem:[%s3 + $0x3c] sm:$0xf]
      %v2390 = vld [vmem:[%s3 + $0x40] sm:$0xf]
      %v2391 = vld [vmem:[%s3 + $0x44] sm:$0xf]
      %v2392 = vld [vmem:[%s3 + $0x48] sm:$0xf]
      %v2393 = vld [vmem:[%s3 + $0x4c] sm:$0xf]
      %v2394 = vld [vmem:[%s3 + $0x50] sm:$0xf]
      %v2395 = vld [vmem:[%s3 + $0x54] sm:$0xf]
      %v2396 = vld [vmem:[%s3 + $0x58] sm:$0xf]
      %v2397 = vld [vmem:[%s3 + $0x5c] sm:$0xf]
      %v2398 = vld [vmem:[%s3 + $0x60] sm:$0xf]
      %v2399 = vld [vmem:[%s3 + $0x64] sm:$0xf]
      %v2400 = vld [vmem:[%s3 + $0x68] sm:$0xf]
      %v2401 = vld [vmem:[%s3 + $0x6c] sm:$0xf]
      %v2402 = vld [vmem:[%s3 + $0x70] sm:$0xf]
      %v2403 = vld [vmem:[%s3 + $0x74] sm:$0xf]
      %v2404 = vld [vmem:[%s3 + $0x78] sm:$0xf]
      %v2405 = vld [vmem:[%s3 + $0x7c] sm:$0xf]
      %v2406 = vld [vmem:[%s3 + $0x80] sm:$0xf]
      %v2407 = vld [vmem:[%s3 + $0x84] sm:$0xf]
      %v2408 = vld [vmem:[%s3 + $0x88] sm:$0xf]
      %v2409 = vld [vmem:[%s3 + $0x8c] sm:$0xf]
      %v2410 = vld [vmem:[%s3 + $0x90] sm:$0xf]
      %v2411 = vld [vmem:[%s3 + $0x94] sm:$0xf]
      %v2412 = vld [vmem:[%s3 + $0x98] sm:$0xf]
      %v2413 = vld [vmem:[%s3 + $0x9c] sm:$0xf]
      %v2414 = vld [vmem:[%s3 + $0xa0] sm:$0xf]
      %v2415 = vld [vmem:[%s3 + $0xa4] sm:$0xf]
      %v2416 = vld [vmem:[%s3 + $0xa8] sm:$0xf]
      %v2417 = vld [vmem:[%s3 + $0xac] sm:$0xf]
      %v2418 = vld [vmem:[%s3 + $0xb0] sm:$0xf]
      %v2419 = vld [vmem:[%s3 + $0xb4] sm:$0xf]
      %v2420 = vld [vmem:[%s3 + $0xb8] sm:$0xf]
      %v2421 = vld [vmem:[%s3 + $0xbc] sm:$0xf]
      %v2422 = vld [vmem:[%s3 + $0xc0] sm:$0xf]
      %v2423 = vld [vmem:[%s3 + $0xc4] sm:$0xf]
      %v2424 = vld [vmem:[%s3 + $0xc8] sm:$0xf]
      %v2425 = vld [vmem:[%s3 + $0xcc] sm:$0xf]
      %v2426 = vld [vmem:[%s3 + $0xd0] sm:$0xf]
      %v2427 = vld [vmem:[%s3 + $0xd4] sm:$0xf]
      %v2428 = vld [vmem:[%s3 + $0xd8] sm:$0xf]
      %v2429 = vld [vmem:[%s3 + $0xdc] sm:$0xf]
      %v2430 = vld [vmem:[%s3 + $0xe0] sm:$0xf]
      %v2431 = vld [vmem:[%s3 + $0xe4] sm:$0xf]
      %v2432 = vld [vmem:[%s3 + $0xe8] sm:$0xf]
      %v2433 = vld [vmem:[%s3 + $0xec] sm:$0xf]
      %v2434 = vld [vmem:[%s3 + $0xf0] sm:$0xf]
      %v2435 = vld [vmem:[%s3 + $0xf4] sm:$0xf]
      %v2436 = vld [vmem:[%s3 + $0xf8] sm:$0xf]
      %v2437 = vld [vmem:[%s3 + $0xfc] sm:$0xf]
      %vm2438 = vcmask 1043458
      %v2439 = vsel %vm2438, %v2141, %v2213
      %vm2440 = vcmask 1045504
      %v2441 = vsel %vm2440, %v2215, %v2214
      %vm2442 = vcmask 1045506
      %v2443 = vsel %vm2442, %v2439, %v2441
      %v2445 = vrot.slane %v2443, 2
      %v2446 = vsel %vm2438, %v2143, %v2216
      %v2447 = vsel %vm2440, %v2218, %v2217
      %v2448 = vsel %vm2442, %v2446, %v2447
      %v2450 = vrot.slane %v2448, 2
      %v2451 = vsel %vm2438, %v2145, %v2219
      %v2452 = vsel %vm2440, %v2221, %v2220
      %v2453 = vsel %vm2442, %v2451, %v2452
      %v2455 = vrot.slane %v2453, 2
      %v2456 = vsel %vm2438, %v2147, %v2222
      %v2457 = vsel %vm2440, %v2224, %v2223
      %v2458 = vsel %vm2442, %v2456, %v2457
      %v2460 = vrot.slane %v2458, 2
      %v2461 = vsel %vm2438, %v2151, %v2225
      %v2462 = vsel %vm2440, %v2227, %v2226
      %v2463 = vsel %vm2442, %v2461, %v2462
      %v2465 = vrot.slane %v2463, 2
      %v2466 = vsel %vm2438, %v2153, %v2228
      %v2467 = vsel %vm2440, %v2230, %v2229
      %v2468 = vsel %vm2442, %v2466, %v2467
      %v2470 = vrot.slane %v2468, 2
      %v2471 = vsel %vm2438, %v2155, %v2231
      %v2472 = vsel %vm2440, %v2233, %v2232
      %v2473 = vsel %vm2442, %v2471, %v2472
      %v2475 = vrot.slane %v2473, 2
      %v2476 = vsel %vm2438, %v2157, %v2234
      %v2477 = vsel %vm2440, %v2236, %v2235
      %v2478 = vsel %vm2442, %v2476, %v2477
      %v2480 = vrot.slane %v2478, 2
      %v2481 = vsel %vm2438, %v2161, %v2237
      %v2482 = vsel %vm2440, %v2239, %v2238
      %v2483 = vsel %vm2442, %v2481, %v2482
      %v2485 = vrot.slane %v2483, 2
      %v2486 = vsel %vm2438, %v2163, %v2240
      %v2487 = vsel %vm2440, %v2242, %v2241
      %v2488 = vsel %vm2442, %v2486, %v2487
      %v2490 = vrot.slane %v2488, 2
      %v2491 = vsel %vm2438, %v2165, %v2243
      %v2492 = vsel %vm2440, %v2245, %v2244
      %v2493 = vsel %vm2442, %v2491, %v2492
      %v2495 = vrot.slane %v2493, 2
      %v2496 = vsel %vm2438, %v2167, %v2246
      %v2497 = vsel %vm2440, %v2248, %v2247
      %v2498 = vsel %vm2442, %v2496, %v2497
      %v2500 = vrot.slane %v2498, 2
      %v2501 = vsel %vm2438, %v2171, %v2249
      %v2502 = vsel %vm2440, %v2251, %v2250
      %v2503 = vsel %vm2442, %v2501, %v2502
      %v2505 = vrot.slane %v2503, 2
      %v2506 = vsel %vm2438, %v2173, %v2252
      %v2507 = vsel %vm2440, %v2254, %v2253
      %v2508 = vsel %vm2442, %v2506, %v2507
      %v2510 = vrot.slane %v2508, 2
      %v2511 = vsel %vm2438, %v2175, %v2255
      %v2512 = vsel %vm2440, %v2257, %v2256
      %v2513 = vsel %vm2442, %v2511, %v2512
      %v2515 = vrot.slane %v2513, 2
      %v2516 = vsel %vm2438, %v2177, %v2258
      %v2517 = vsel %vm2440, %v2260, %v2259
      %v2518 = vsel %vm2442, %v2516, %v2517
      %v2520 = vrot.slane %v2518, 2
      %vm2521 = vsmask.f32 1280
      %vm2522 = vsmask.f32 3336
      %vm2523 = vmor %vm2521, %vm2522
      %vm2524 = vsmask.f32 5392
      %vm2525 = vmor %vm2523, %vm2524
      %vm2526 = vsmask.f32 7448
      %vm2527 = vmor %vm2525, %vm2526
      %v2528 = vshrl.u32 %v2268, 16
      %v2530 = vrot.slane %v2528, 6
      %v2531 = vshll.u32 %v2268, 16
      %v2533 = vrot.slane %v2531, 7
      %v2534 = vor.u32 %v2530, %v2533
      %v2535 = vrot.slane %v2534, 2
      %v2537 = vshll.u32 %v2445, 16
      %v2539 = vrot.slane %v2537, 7
      %v2540 = vsel %vm2527, %v2535, %v2539
      %v2541 = vshrl.u32 %v2275, 16
      %v2543 = vrot.slane %v2541, 6
      %v2544 = vshll.u32 %v2275, 16
      %v2546 = vrot.slane %v2544, 7
      %v2547 = vor.u32 %v2543, %v2546
      %v2548 = vrot.slane %v2547, 2
      %v2550 = vshll.u32 %v2450, 16
      %v2552 = vrot.slane %v2550, 7
      %v2553 = vsel %vm2527, %v2548, %v2552
      %v2554 = vshrl.u32 %v2282, 16
      %v2556 = vrot.slane %v2554, 6
      %v2557 = vshll.u32 %v2282, 16
      %v2559 = vrot.slane %v2557, 7
      %v2560 = vor.u32 %v2556, %v2559
      %v2561 = vrot.slane %v2560, 2
      %v2563 = vshll.u32 %v2455, 16
      %v2565 = vrot.slane %v2563, 7
      %v2566 = vsel %vm2527, %v2561, %v2565
      %v2567 = vshrl.u32 %v2289, 16
      %v2569 = vrot.slane %v2567, 6
      %v2570 = vshll.u32 %v2289, 16
      %v2572 = vrot.slane %v2570, 7
      %v2573 = vor.u32 %v2569, %v2572
      %v2574 = vrot.slane %v2573, 2
      %v2576 = vshll.u32 %v2460, 16
      %v2578 = vrot.slane %v2576, 7
      %v2579 = vsel %vm2527, %v2574, %v2578
      %v2580 = vshrl.u32 %v2296, 16
      %v2582 = vrot.slane %v2580, 6
      %v2583 = vshll.u32 %v2296, 16
      %v2585 = vrot.slane %v2583, 7
      %v2586 = vor.u32 %v2582, %v2585
      %v2587 = vrot.slane %v2586, 2
      %v2589 = vshll.u32 %v2465, 16
      %v2591 = vrot.slane %v2589, 7
      %v2592 = vsel %vm2527, %v2587, %v2591
      %v2593 = vshrl.u32 %v2303, 16
      %v2595 = vrot.slane %v2593, 6
      %v2596 = vshll.u32 %v2303, 16
      %v2598 = vrot.slane %v2596, 7
      %v2599 = vor.u32 %v2595, %v2598
      %v2600 = vrot.slane %v2599, 2
      %v2602 = vshll.u32 %v2470, 16
      %v2604 = vrot.slane %v2602, 7
      %v2605 = vsel %vm2527, %v2600, %v2604
      %v2606 = vshrl.u32 %v2310, 16
      %v2608 = vrot.slane %v2606, 6
      %v2609 = vshll.u32 %v2310, 16
      %v2611 = vrot.slane %v2609, 7
      %v2612 = vor.u32 %v2608, %v2611
      %v2613 = vrot.slane %v2612, 2
      %v2615 = vshll.u32 %v2475, 16
      %v2617 = vrot.slane %v2615, 7
      %v2618 = vsel %vm2527, %v2613, %v2617
      %v2619 = vshrl.u32 %v2317, 16
      %v2621 = vrot.slane %v2619, 6
      %v2622 = vshll.u32 %v2317, 16
      %v2624 = vrot.slane %v2622, 7
      %v2625 = vor.u32 %v2621, %v2624
      %v2626 = vrot.slane %v2625, 2
      %v2628 = vshll.u32 %v2480, 16
      %v2630 = vrot.slane %v2628, 7
      %v2631 = vsel %vm2527, %v2626, %v2630
      %v2632 = vshrl.u32 %v2324, 16
      %v2634 = vrot.slane %v2632, 6
      %v2635 = vshll.u32 %v2324, 16
      %v2637 = vrot.slane %v2635, 7
      %v2638 = vor.u32 %v2634, %v2637
      %v2639 = vrot.slane %v2638, 2
      %v2641 = vshll.u32 %v2485, 16
      %v2643 = vrot.slane %v2641, 7
      %v2644 = vsel %vm2527, %v2639, %v2643
      %v2645 = vshrl.u32 %v2331, 16
      %v2647 = vrot.slane %v2645, 6
      %v2648 = vshll.u32 %v2331, 16
      %v2650 = vrot.slane %v2648, 7
      %v2651 = vor.u32 %v2647, %v2650
      %v2652 = vrot.slane %v2651, 2
      %v2654 = vshll.u32 %v2490, 16
      %v2656 = vrot.slane %v2654, 7
      %v2657 = vsel %vm2527, %v2652, %v2656
      %v2658 = vshrl.u32 %v2338, 16
      %v2660 = vrot.slane %v2658, 6
      %v2661 = vshll.u32 %v2338, 16
      %v2663 = vrot.slane %v2661, 7
      %v2664 = vor.u32 %v2660, %v2663
      %v2665 = vrot.slane %v2664, 2
      %v2667 = vshll.u32 %v2495, 16
      %v2669 = vrot.slane %v2667, 7
      %v2670 = vsel %vm2527, %v2665, %v2669
      %v2671 = vshrl.u32 %v2345, 16
      %v2673 = vrot.slane %v2671, 6
      %v2674 = vshll.u32 %v2345, 16
      %v2676 = vrot.slane %v2674, 7
      %v2677 = vor.u32 %v2673, %v2676
      %v2678 = vrot.slane %v2677, 2
      %v2680 = vshll.u32 %v2500, 16
      %v2682 = vrot.slane %v2680, 7
      %v2683 = vsel %vm2527, %v2678, %v2682
      %v2684 = vshrl.u32 %v2352, 16
      %v2686 = vrot.slane %v2684, 6
      %v2687 = vshll.u32 %v2352, 16
      %v2689 = vrot.slane %v2687, 7
      %v2690 = vor.u32 %v2686, %v2689
      %v2691 = vrot.slane %v2690, 2
      %v2693 = vshll.u32 %v2505, 16
      %v2695 = vrot.slane %v2693, 7
      %v2696 = vsel %vm2527, %v2691, %v2695
      %v2697 = vshrl.u32 %v2359, 16
      %v2699 = vrot.slane %v2697, 6
      %v2700 = vshll.u32 %v2359, 16
      %v2702 = vrot.slane %v2700, 7
      %v2703 = vor.u32 %v2699, %v2702
      %v2704 = vrot.slane %v2703, 2
      %v2706 = vshll.u32 %v2510, 16
      %v2708 = vrot.slane %v2706, 7
      %v2709 = vsel %vm2527, %v2704, %v2708
      %v2710 = vshrl.u32 %v2366, 16
      %v2712 = vrot.slane %v2710, 6
      %v2713 = vshll.u32 %v2366, 16
      %v2715 = vrot.slane %v2713, 7
      %v2716 = vor.u32 %v2712, %v2715
      %v2717 = vrot.slane %v2716, 2
      %v2719 = vshll.u32 %v2515, 16
      %v2721 = vrot.slane %v2719, 7
      %v2722 = vsel %vm2527, %v2717, %v2721
      %v2723 = vshrl.u32 %v2373, 16
      %v2725 = vrot.slane %v2723, 6
      %v2726 = vshll.u32 %v2373, 16
      %v2728 = vrot.slane %v2726, 7
      %v2729 = vor.u32 %v2725, %v2728
      %v2730 = vrot.slane %v2729, 2
      %v2732 = vshll.u32 %v2520, 16
      %v2734 = vrot.slane %v2732, 7
      %v2735 = vsel %vm2527, %v2730, %v2734
      %s2736 = scalar_lea.vmem %s3, 256
      %v2737 = vld [vmem:[%s2736] sm:$0xf]
      %v2738 = vld [vmem:[%s2736 + $0x4] sm:$0xf]
      %v2739 = vld [vmem:[%s2736 + $0x8] sm:$0xf]
      %v2740 = vld [vmem:[%s2736 + $0xc] sm:$0xf]
      %v2741 = vld [vmem:[%s2736 + $0x10] sm:$0xf]
      %v2742 = vld [vmem:[%s2736 + $0x14] sm:$0xf]
      %v2743 = vld [vmem:[%s2736 + $0x18] sm:$0xf]
      %v2744 = vld [vmem:[%s2736 + $0x1c] sm:$0xf]
      %v2745 = vld [vmem:[%s2736 + $0x20] sm:$0xf]
      %v2746 = vld [vmem:[%s2736 + $0x24] sm:$0xf]
      %v2747 = vld [vmem:[%s2736 + $0x28] sm:$0xf]
      %v2748 = vld [vmem:[%s2736 + $0x2c] sm:$0xf]
      %v2749 = vld [vmem:[%s2736 + $0x30] sm:$0xf]
      %v2750 = vld [vmem:[%s2736 + $0x34] sm:$0xf]
      %v2751 = vld [vmem:[%s2736 + $0x38] sm:$0xf]
      %v2752 = vld [vmem:[%s2736 + $0x3c] sm:$0xf]
      %v2753 = vld [vmem:[%s2736 + $0x40] sm:$0xf]
      %v2754 = vld [vmem:[%s2736 + $0x44] sm:$0xf]
      %v2755 = vld [vmem:[%s2736 + $0x48] sm:$0xf]
      %v2756 = vld [vmem:[%s2736 + $0x4c] sm:$0xf]
      %v2757 = vld [vmem:[%s2736 + $0x50] sm:$0xf]
      %v2758 = vld [vmem:[%s2736 + $0x54] sm:$0xf]
      %v2759 = vld [vmem:[%s2736 + $0x58] sm:$0xf]
      %v2760 = vld [vmem:[%s2736 + $0x5c] sm:$0xf]
      %v2761 = vld [vmem:[%s2736 + $0x60] sm:$0xf]
      %v2762 = vld [vmem:[%s2736 + $0x64] sm:$0xf]
      %v2763 = vld [vmem:[%s2736 + $0x68] sm:$0xf]
      %v2764 = vld [vmem:[%s2736 + $0x6c] sm:$0xf]
      %v2765 = vld [vmem:[%s2736 + $0x70] sm:$0xf]
      %v2766 = vld [vmem:[%s2736 + $0x74] sm:$0xf]
      %v2767 = vld [vmem:[%s2736 + $0x78] sm:$0xf]
      %v2768 = vld [vmem:[%s2736 + $0x7c] sm:$0xf]
      %v2769 = vld [vmem:[%s2736 + $0x80] sm:$0xf]
      %v2770 = vld [vmem:[%s2736 + $0x84] sm:$0xf]
      %v2771 = vld [vmem:[%s2736 + $0x88] sm:$0xf]
      %v2772 = vld [vmem:[%s2736 + $0x8c] sm:$0xf]
      %v2773 = vld [vmem:[%s2736 + $0x90] sm:$0xf]
      %v2774 = vld [vmem:[%s2736 + $0x94] sm:$0xf]
      %v2775 = vld [vmem:[%s2736 + $0x98] sm:$0xf]
      %v2776 = vld [vmem:[%s2736 + $0x9c] sm:$0xf]
      %v2777 = vld [vmem:[%s2736 + $0xa0] sm:$0xf]
      %v2778 = vld [vmem:[%s2736 + $0xa4] sm:$0xf]
      %v2779 = vld [vmem:[%s2736 + $0xa8] sm:$0xf]
      %v2780 = vld [vmem:[%s2736 + $0xac] sm:$0xf]
      %v2781 = vld [vmem:[%s2736 + $0xb0] sm:$0xf]
      %v2782 = vld [vmem:[%s2736 + $0xb4] sm:$0xf]
      %v2783 = vld [vmem:[%s2736 + $0xb8] sm:$0xf]
      %v2784 = vld [vmem:[%s2736 + $0xbc] sm:$0xf]
      %v2785 = vld [vmem:[%s2736 + $0xc0] sm:$0xf]
      %v2786 = vld [vmem:[%s2736 + $0xc4] sm:$0xf]
      %v2787 = vld [vmem:[%s2736 + $0xc8] sm:$0xf]
      %v2788 = vld [vmem:[%s2736 + $0xcc] sm:$0xf]
      %v2789 = vld [vmem:[%s2736 + $0xd0] sm:$0xf]
      %v2790 = vld [vmem:[%s2736 + $0xd4] sm:$0xf]
      %v2791 = vld [vmem:[%s2736 + $0xd8] sm:$0xf]
      %v2792 = vld [vmem:[%s2736 + $0xdc] sm:$0xf]
      %v2793 = vld [vmem:[%s2736 + $0xe0] sm:$0xf]
      %v2794 = vld [vmem:[%s2736 + $0xe4] sm:$0xf]
      %v2795 = vld [vmem:[%s2736 + $0xe8] sm:$0xf]
      %v2796 = vld [vmem:[%s2736 + $0xec] sm:$0xf]
      %v2797 = vld [vmem:[%s2736 + $0xf0] sm:$0xf]
      %v2798 = vld [vmem:[%s2736 + $0xf4] sm:$0xf]
      %v2799 = vld [vmem:[%s2736 + $0xf8] sm:$0xf]
      %v2800 = vld [vmem:[%s2736 + $0xfc] sm:$0xf]
      %2802 = vst [vmem:[#allocation1] ss:$4 sm:$0xff] %v2540
      %s2804 = scalar_lea.vmem [#allocation1], 1
      %2805 = vst [vmem:[%s2804] ss:$4 sm:$0xff] %v2553
      %s2807 = scalar_lea.vmem [#allocation1], 2
      %2808 = vst [vmem:[%s2807] ss:$4 sm:$0xff] %v2566
      %s2810 = scalar_lea.vmem [#allocation1], 3
      %2811 = vst [vmem:[%s2810] ss:$4 sm:$0xff] %v2579
      %s2813 = scalar_lea.vmem [#allocation1], 32
      %2814 = vst [vmem:[%s2813] ss:$4 sm:$0xff] %v2592
      %s2816 = scalar_lea.vmem [#allocation1], 33
      %2817 = vst [vmem:[%s2816] ss:$4 sm:$0xff] %v2605
      %s2819 = scalar_lea.vmem [#allocation1], 34
      %2820 = vst [vmem:[%s2819] ss:$4 sm:$0xff] %v2618
      %s2822 = scalar_lea.vmem [#allocation1], 35
      %2823 = vst [vmem:[%s2822] ss:$4 sm:$0xff] %v2631
      %v2824 = vld.sshfl [vmem:[#allocation1] sm:$0xff pattern:$0x73625140]
      %v2825 = vld.sshfl [vmem:[#allocation1 + $0x8] sm:$0xff pattern:$0x73625140]
      %v2826 = vld.sshfl [vmem:[#allocation1 + $0x10] sm:$0xff pattern:$0x73625140]
      %v2827 = vld.sshfl [vmem:[#allocation1 + $0x18] sm:$0xff pattern:$0x73625140]
      %v2828 = vld.sshfl [vmem:[#allocation1 + $0x20] sm:$0xff pattern:$0x73625140]
      %v2829 = vld.sshfl [vmem:[#allocation1 + $0x28] sm:$0xff pattern:$0x73625140]
      %v2830 = vld.sshfl [vmem:[#allocation1 + $0x30] sm:$0xff pattern:$0x73625140]
      %v2831 = vld.sshfl [vmem:[#allocation1 + $0x38] sm:$0xff pattern:$0x73625140]
      %2833 = vst [vmem:[#allocation1] ss:$4 sm:$0xff] %v2644
      %2835 = vst [vmem:[%s2804] ss:$4 sm:$0xff] %v2657
      %2837 = vst [vmem:[%s2807] ss:$4 sm:$0xff] %v2670
      %2839 = vst [vmem:[%s2810] ss:$4 sm:$0xff] %v2683
      %2841 = vst [vmem:[%s2813] ss:$4 sm:$0xff] %v2696
      %2843 = vst [vmem:[%s2816] ss:$4 sm:$0xff] %v2709
      %2845 = vst [vmem:[%s2819] ss:$4 sm:$0xff] %v2722
      %2847 = vst [vmem:[%s2822] ss:$4 sm:$0xff] %v2735
      %v2848 = vld.sshfl [vmem:[#allocation1] sm:$0xff pattern:$0x73625140]
      %v2849 = vld.sshfl [vmem:[#allocation1 + $0x8] sm:$0xff pattern:$0x73625140]
      %v2850 = vld.sshfl [vmem:[#allocation1 + $0x10] sm:$0xff pattern:$0x73625140]
      %v2851 = vld.sshfl [vmem:[#allocation1 + $0x18] sm:$0xff pattern:$0x73625140]
      %v2852 = vld.sshfl [vmem:[#allocation1 + $0x20] sm:$0xff pattern:$0x73625140]
      %v2853 = vld.sshfl [vmem:[#allocation1 + $0x28] sm:$0xff pattern:$0x73625140]
      %v2854 = vld.sshfl [vmem:[#allocation1 + $0x30] sm:$0xff pattern:$0x73625140]
      %v2855 = vld.sshfl [vmem:[#allocation1 + $0x38] sm:$0xff pattern:$0x73625140]
      %v2936 = vunpack.c.l.b16 %v2737
      %v2937 = vunpack.c.l.b16 %v2738
      %v2938 = vunpack.c.l.b16 %v2739
      %v2939 = vunpack.c.l.b16 %v2740
      %v2940 = vunpack.c.l.b16 %v2741
      %v2941 = vunpack.c.l.b16 %v2742
      %v2942 = vunpack.c.l.b16 %v2743
      %v2943 = vunpack.c.l.b16 %v2744
      %v2944 = vunpack.c.l.b16 %v2745
      %v2945 = vunpack.c.l.b16 %v2746
      %v2946 = vunpack.c.l.b16 %v2747
      %v2947 = vunpack.c.l.b16 %v2748
      %v2948 = vunpack.c.l.b16 %v2749
      %v2949 = vunpack.c.l.b16 %v2750
      %v2950 = vunpack.c.l.b16 %v2751
      %v2951 = vunpack.c.l.b16 %v2752
      %v2952 = vunpack.c.l.b16 %v2753
      %v2953 = vunpack.c.l.b16 %v2754
      %v2954 = vunpack.c.l.b16 %v2755
      %v2955 = vunpack.c.l.b16 %v2756
      %v2956 = vunpack.c.l.b16 %v2757
      %v2957 = vunpack.c.l.b16 %v2758
      %v2958 = vunpack.c.l.b16 %v2759
      %v2959 = vunpack.c.l.b16 %v2760
      %v2960 = vunpack.c.l.b16 %v2761
      %v2961 = vunpack.c.l.b16 %v2762
      %v2962 = vunpack.c.l.b16 %v2763
      %v2963 = vunpack.c.l.b16 %v2764
      %v2964 = vunpack.c.l.b16 %v2765
      %v2965 = vunpack.c.l.b16 %v2766
      %v2966 = vunpack.c.l.b16 %v2767
      %v2967 = vunpack.c.l.b16 %v2768
      %v2968 = vunpack.c.l.b16 %v2769
      %v2969 = vunpack.c.l.b16 %v2770
      %v2970 = vunpack.c.l.b16 %v2771
      %v2971 = vunpack.c.l.b16 %v2772
      %v2972 = vunpack.c.l.b16 %v2773
      %v2973 = vunpack.c.l.b16 %v2774
      %v2974 = vunpack.c.l.b16 %v2775
      %v2975 = vunpack.c.l.b16 %v2776
      %v2976 = vunpack.c.l.b16 %v2777
      %v2977 = vunpack.c.l.b16 %v2778
      %v2978 = vunpack.c.l.b16 %v2779
      %v2979 = vunpack.c.l.b16 %v2780
      %v2980 = vunpack.c.l.b16 %v2781
      %v2981 = vunpack.c.l.b16 %v2782
      %v2982 = vunpack.c.l.b16 %v2783
      %v2983 = vunpack.c.l.b16 %v2784
      %v2984 = vunpack.c.l.b16 %v2785
      %v2985 = vunpack.c.l.b16 %v2786
      %v2986 = vunpack.c.l.b16 %v2787
      %v2987 = vunpack.c.l.b16 %v2788
      %v2988 = vunpack.c.l.b16 %v2789
      %v2989 = vunpack.c.l.b16 %v2790
      %v2990 = vunpack.c.l.b16 %v2791
      %v2991 = vunpack.c.l.b16 %v2792
      %v2992 = vunpack.c.l.b16 %v2793
      %v2993 = vunpack.c.l.b16 %v2794
      %v2994 = vunpack.c.l.b16 %v2795
      %v2995 = vunpack.c.l.b16 %v2796
      %v2996 = vunpack.c.l.b16 %v2797
      %v2997 = vunpack.c.l.b16 %v2798
      %v2998 = vunpack.c.l.b16 %v2799
      %v2999 = vunpack.c.l.b16 %v2800
      %v3000 = vpack.c.b16 %v2937, %v2936
      %v3001 = vpack.c.b16 %v2939, %v2938
      %v3002 = vpack.c.b16 %v2941, %v2940
      %v3003 = vpack.c.b16 %v2943, %v2942
      %v3004 = vpack.c.b16 %v2945, %v2944
      %v3005 = vpack.c.b16 %v2947, %v2946
      %v3006 = vpack.c.b16 %v2949, %v2948
      %v3007 = vpack.c.b16 %v2951, %v2950
      %v3008 = vpack.c.b16 %v2953, %v2952
      %v3009 = vpack.c.b16 %v2955, %v2954
      %v3010 = vpack.c.b16 %v2957, %v2956
      %v3011 = vpack.c.b16 %v2959, %v2958
      %v3012 = vpack.c.b16 %v2961, %v2960
      %v3013 = vpack.c.b16 %v2963, %v2962
      %v3014 = vpack.c.b16 %v2965, %v2964
      %v3015 = vpack.c.b16 %v2967, %v2966
      %v3016 = vpack.c.b16 %v2969, %v2968
      %v3017 = vpack.c.b16 %v2971, %v2970
      %v3018 = vpack.c.b16 %v2973, %v2972
      %v3019 = vpack.c.b16 %v2975, %v2974
      %v3020 = vpack.c.b16 %v2977, %v2976
      %v3021 = vpack.c.b16 %v2979, %v2978
      %v3022 = vpack.c.b16 %v2981, %v2980
      %v3023 = vpack.c.b16 %v2983, %v2982
      %v3024 = vpack.c.b16 %v2985, %v2984
      %v3025 = vpack.c.b16 %v2987, %v2986
      %v3026 = vpack.c.b16 %v2989, %v2988
      %v3027 = vpack.c.b16 %v2991, %v2990
      %v3028 = vpack.c.b16 %v2993, %v2992
      %v3029 = vpack.c.b16 %v2995, %v2994
      %v3030 = vpack.c.b16 %v2997, %v2996
      %v3031 = vpack.c.b16 %v2999, %v2998
      %3064 = vmatpush.bf16.msra.mxu0 %v3007
      %3065 = vmatpush.bf16.msra.mxu0 %v3006
      %3066 = vmatpush.bf16.msra.mxu0 %v3005
      %3067 = vmatpush.bf16.msra.mxu0 %v3004
      %3068 = vmatpush.bf16.msra.mxu0 %v3003
      %3069 = vmatpush.bf16.msra.mxu0 %v3002
      %3070 = vmatpush.bf16.msra.mxu0 %v3001
      %3071 = vmatpush.bf16.msra.mxu0 %v3000
      %3072 = vmatmul.bf16.gmra.mxu0 %v2824
      %v3073 = vpop.f32.mrf.mxu0
      %v3074 = vadd.f32 0.0, %v3073
      %v3075 = vpop.f32.mrf.mxu0
      %v3076 = vadd.f32 0.0, %v3075
      %3077 = vmatmul.bf16.gmra.mxu0 %v2828
      %v3078 = vpop.f32.mrf.mxu0
      %v3079 = vadd.f32 0.0, %v3078
      %v3080 = vpop.f32.mrf.mxu0
      %v3081 = vadd.f32 0.0, %v3080
      %3082 = vmatmul.bf16.gmra.mxu0 %v2848
      %v3083 = vpop.f32.mrf.mxu0
      %v3084 = vadd.f32 0.0, %v3083
      %v3085 = vpop.f32.mrf.mxu0
      %v3086 = vadd.f32 0.0, %v3085
      %3087 = vmatmul.bf16.gmra.mxu0 %v2852
      %v3088 = vpop.f32.mrf.mxu0
      %v3089 = vadd.f32 0.0, %v3088
      %v3090 = vpop.f32.mrf.mxu0
      %v3091 = vadd.f32 0.0, %v3090
      %3092 = vdwg.mxu0
      %3093 = vmatpush.bf16.msra.mxu0 %v3015
      %3094 = vmatpush.bf16.msra.mxu0 %v3014
      %3095 = vmatpush.bf16.msra.mxu0 %v3013
      %3096 = vmatpush.bf16.msra.mxu0 %v3012
      %3097 = vmatpush.bf16.msra.mxu0 %v3011
      %3098 = vmatpush.bf16.msra.mxu0 %v3010
      %3099 = vmatpush.bf16.msra.mxu0 %v3009
      %3100 = vmatpush.bf16.msra.mxu0 %v3008
      %3101 = vmatmul.bf16.gmra.mxu0 %v2825
      %v3102 = vpop.f32.mrf.mxu0
      %v3103 = vadd.f32 %v3074, %v3102
      %v3104 = vpop.f32.mrf.mxu0
      %v3105 = vadd.f32 %v3076, %v3104
      %3106 = vmatmul.bf16.gmra.mxu0 %v2829
      %v3107 = vpop.f32.mrf.mxu0
      %v3108 = vadd.f32 %v3079, %v3107
      %v3109 = vpop.f32.mrf.mxu0
      %v3110 = vadd.f32 %v3081, %v3109
      %3111 = vmatmul.bf16.gmra.mxu0 %v2849
      %v3112 = vpop.f32.mrf.mxu0
      %v3113 = vadd.f32 %v3084, %v3112
      %v3114 = vpop.f32.mrf.mxu0
      %v3115 = vadd.f32 %v3086, %v3114
      %3116 = vmatmul.bf16.gmra.mxu0 %v2853
      %v3117 = vpop.f32.mrf.mxu0
      %v3118 = vadd.f32 %v3089, %v3117
      %v3119 = vpop.f32.mrf.mxu0
      %v3120 = vadd.f32 %v3091, %v3119
      %3121 = vdwg.mxu0
      %3122 = vmatpush.bf16.msra.mxu0 %v3023
      %3123 = vmatpush.bf16.msra.mxu0 %v3022
      %3124 = vmatpush.bf16.msra.mxu0 %v3021
      %3125 = vmatpush.bf16.msra.mxu0 %v3020
      %3126 = vmatpush.bf16.msra.mxu0 %v3019
      %3127 = vmatpush.bf16.msra.mxu0 %v3018
      %3128 = vmatpush.bf16.msra.mxu0 %v3017
      %3129 = vmatpush.bf16.msra.mxu0 %v3016
      %3130 = vmatmul.bf16.gmra.mxu0 %v2826
      %v3131 = vpop.f32.mrf.mxu0
      %v3132 = vadd.f32 %v3103, %v3131
      %v3133 = vpop.f32.mrf.mxu0
      %v3134 = vadd.f32 %v3105, %v3133
      %3135 = vmatmul.bf16.gmra.mxu0 %v2830
      %v3136 = vpop.f32.mrf.mxu0
      %v3137 = vadd.f32 %v3108, %v3136
      %v3138 = vpop.f32.mrf.mxu0
      %v3139 = vadd.f32 %v3110, %v3138
      %3140 = vmatmul.bf16.gmra.mxu0 %v2850
      %v3141 = vpop.f32.mrf.mxu0
      %v3142 = vadd.f32 %v3113, %v3141
      %v3143 = vpop.f32.mrf.mxu0
      %v3144 = vadd.f32 %v3115, %v3143
      %3145 = vmatmul.bf16.gmra.mxu0 %v2854
      %v3146 = vpop.f32.mrf.mxu0
      %v3147 = vadd.f32 %v3118, %v3146
      %v3148 = vpop.f32.mrf.mxu0
      %v3149 = vadd.f32 %v3120, %v3148
      %3150 = vdwg.mxu0
      %3151 = vmatpush.bf16.msra.mxu0 %v3031
      %3152 = vmatpush.bf16.msra.mxu0 %v3030
      %3153 = vmatpush.bf16.msra.mxu0 %v3029
      %3154 = vmatpush.bf16.msra.mxu0 %v3028
      %3155 = vmatpush.bf16.msra.mxu0 %v3027
      %3156 = vmatpush.bf16.msra.mxu0 %v3026
      %3157 = vmatpush.bf16.msra.mxu0 %v3025
      %3158 = vmatpush.bf16.msra.mxu0 %v3024
      %3159 = vmatmul.bf16.gmra.mxu0 %v2827
      %v3160 = vpop.f32.mrf.mxu0
      %v3161 = vadd.f32 %v3132, %v3160
      %v3162 = vpop.f32.mrf.mxu0
      %v3163 = vadd.f32 %v3134, %v3162
      %3164 = vmatmul.bf16.gmra.mxu0 %v2831
      %v3165 = vpop.f32.mrf.mxu0
      %v3166 = vadd.f32 %v3137, %v3165
      %v3167 = vpop.f32.mrf.mxu0
      %v3168 = vadd.f32 %v3139, %v3167
      %3169 = vmatmul.bf16.gmra.mxu0 %v2851
      %v3170 = vpop.f32.mrf.mxu0
      %v3171 = vadd.f32 %v3142, %v3170
      %v3172 = vpop.f32.mrf.mxu0
      %v3173 = vadd.f32 %v3144, %v3172
      %3174 = vmatmul.bf16.gmra.mxu0 %v2855
      %v3175 = vpop.f32.mrf.mxu0
      %v3176 = vadd.f32 %v3147, %v3175
      %v3177 = vpop.f32.mrf.mxu0
      %v3178 = vadd.f32 %v3149, %v3177
      %3179 = vdwg.mxu0
      %3180 = vst [vmem:[#allocation1] ss:$4 sm:$0xff] %v2268
      %s3181 = scalar_lea.vmem [#allocation1], 1
      %3182 = vst [vmem:[%s3181] ss:$4 sm:$0xff] %v2275
      %s3183 = scalar_lea.vmem [#allocation1], 2
      %3184 = vst [vmem:[%s3183] ss:$4 sm:$0xff] %v2282
      %s3185 = scalar_lea.vmem [#allocation1], 3
      %3186 = vst [vmem:[%s3185] ss:$4 sm:$0xff] %v2289
      %s3187 = scalar_lea.vmem [#allocation1], 32
      %3188 = vst [vmem:[%s3187] ss:$4 sm:$0xff] %v2296
      %s3189 = scalar_lea.vmem [#allocation1], 33
      %3190 = vst [vmem:[%s3189] ss:$4 sm:$0xff] %v2303
      %s3191 = scalar_lea.vmem [#allocation1], 34
      %3192 = vst [vmem:[%s3191] ss:$4 sm:$0xff] %v2310
      %s3193 = scalar_lea.vmem [#allocation1], 35
      %3194 = vst [vmem:[%s3193] ss:$4 sm:$0xff] %v2317
      %v3195 = vld.sshfl [vmem:[#allocation1] sm:$0xff pattern:$0x73625140]
      %v3196 = vld.sshfl [vmem:[#allocation1 + $0x8] sm:$0xff pattern:$0x73625140]
      %v3197 = vld.sshfl [vmem:[#allocation1 + $0x10] sm:$0xff pattern:$0x73625140]
      %v3198 = vld.sshfl [vmem:[#allocation1 + $0x18] sm:$0xff pattern:$0x73625140]
      %v3199 = vld.sshfl [vmem:[#allocation1 + $0x20] sm:$0xff pattern:$0x73625140]
      %v3200 = vld.sshfl [vmem:[#allocation1 + $0x28] sm:$0xff pattern:$0x73625140]
      %v3201 = vld.sshfl [vmem:[#allocation1 + $0x30] sm:$0xff pattern:$0x73625140]
      %v3202 = vld.sshfl [vmem:[#allocation1 + $0x38] sm:$0xff pattern:$0x73625140]
      %3203 = vst [vmem:[#allocation1] ss:$4 sm:$0xff] %v2324
      %3204 = vst [vmem:[%s3181] ss:$4 sm:$0xff] %v2331
      %3205 = vst [vmem:[%s3183] ss:$4 sm:$0xff] %v2338
      %3206 = vst [vmem:[%s3185] ss:$4 sm:$0xff] %v2345
      %3207 = vst [vmem:[%s3187] ss:$4 sm:$0xff] %v2352
      %3208 = vst [vmem:[%s3189] ss:$4 sm:$0xff] %v2359
      %3209 = vst [vmem:[%s3191] ss:$4 sm:$0xff] %v2366
      %3210 = vst [vmem:[%s3193] ss:$4 sm:$0xff] %v2373
      %v3211 = vld.sshfl [vmem:[#allocation1] sm:$0xff pattern:$0x73625140]
      %v3212 = vld.sshfl [vmem:[#allocation1 + $0x8] sm:$0xff pattern:$0x73625140]
      %v3213 = vld.sshfl [vmem:[#allocation1 + $0x10] sm:$0xff pattern:$0x73625140]
      %v3214 = vld.sshfl [vmem:[#allocation1 + $0x18] sm:$0xff pattern:$0x73625140]
      %v3215 = vld.sshfl [vmem:[#allocation1 + $0x20] sm:$0xff pattern:$0x73625140]
      %v3216 = vld.sshfl [vmem:[#allocation1 + $0x28] sm:$0xff pattern:$0x73625140]
      %v3217 = vld.sshfl [vmem:[#allocation1 + $0x30] sm:$0xff pattern:$0x73625140]
      %v3218 = vld.sshfl [vmem:[#allocation1 + $0x38] sm:$0xff pattern:$0x73625140]
      %v3299 = vunpack.c.l.b16 %v2374
      %v3300 = vunpack.c.l.b16 %v2375
      %v3301 = vunpack.c.l.b16 %v2376
      %v3302 = vunpack.c.l.b16 %v2377
      %v3303 = vunpack.c.l.b16 %v2378
      %v3304 = vunpack.c.l.b16 %v2379
      %v3305 = vunpack.c.l.b16 %v2380
      %v3306 = vunpack.c.l.b16 %v2381
      %v3307 = vunpack.c.l.b16 %v2382
      %v3308 = vunpack.c.l.b16 %v2383
      %v3309 = vunpack.c.l.b16 %v2384
      %v3310 = vunpack.c.l.b16 %v2385
      %v3311 = vunpack.c.l.b16 %v2386
      %v3312 = vunpack.c.l.b16 %v2387
      %v3313 = vunpack.c.l.b16 %v2388
      %v3314 = vunpack.c.l.b16 %v2389
      %v3315 = vunpack.c.l.b16 %v2390
      %v3316 = vunpack.c.l.b16 %v2391
      %v3317 = vunpack.c.l.b16 %v2392
      %v3318 = vunpack.c.l.b16 %v2393
      %v3319 = vunpack.c.l.b16 %v2394
      %v3320 = vunpack.c.l.b16 %v2395
      %v3321 = vunpack.c.l.b16 %v2396
      %v3322 = vunpack.c.l.b16 %v2397
      %v3323 = vunpack.c.l.b16 %v2398
      %v3324 = vunpack.c.l.b16 %v2399
      %v3325 = vunpack.c.l.b16 %v2400
      %v3326 = vunpack.c.l.b16 %v2401
      %v3327 = vunpack.c.l.b16 %v2402
      %v3328 = vunpack.c.l.b16 %v2403
      %v3329 = vunpack.c.l.b16 %v2404
      %v3330 = vunpack.c.l.b16 %v2405
      %v3331 = vunpack.c.l.b16 %v2406
      %v3332 = vunpack.c.l.b16 %v2407
      %v3333 = vunpack.c.l.b16 %v2408
      %v3334 = vunpack.c.l.b16 %v2409
      %v3335 = vunpack.c.l.b16 %v2410
      %v3336 = vunpack.c.l.b16 %v2411
      %v3337 = vunpack.c.l.b16 %v2412
      %v3338 = vunpack.c.l.b16 %v2413
      %v3339 = vunpack.c.l.b16 %v2414
      %v3340 = vunpack.c.l.b16 %v2415
      %v3341 = vunpack.c.l.b16 %v2416
      %v3342 = vunpack.c.l.b16 %v2417
      %v3343 = vunpack.c.l.b16 %v2418
      %v3344 = vunpack.c.l.b16 %v2419
      %v3345 = vunpack.c.l.b16 %v2420
      %v3346 = vunpack.c.l.b16 %v2421
      %v3347 = vunpack.c.l.b16 %v2422
      %v3348 = vunpack.c.l.b16 %v2423
      %v3349 = vunpack.c.l.b16 %v2424
      %v3350 = vunpack.c.l.b16 %v2425
      %v3351 = vunpack.c.l.b16 %v2426
      %v3352 = vunpack.c.l.b16 %v2427
      %v3353 = vunpack.c.l.b16 %v2428
      %v3354 = vunpack.c.l.b16 %v2429
      %v3355 = vunpack.c.l.b16 %v2430
      %v3356 = vunpack.c.l.b16 %v2431
      %v3357 = vunpack.c.l.b16 %v2432
      %v3358 = vunpack.c.l.b16 %v2433
      %v3359 = vunpack.c.l.b16 %v2434
      %v3360 = vunpack.c.l.b16 %v2435
      %v3361 = vunpack.c.l.b16 %v2436
      %v3362 = vunpack.c.l.b16 %v2437
      %v3363 = vpack.c.b16 %v3300, %v3299
      %v3364 = vpack.c.b16 %v3302, %v3301
      %v3365 = vpack.c.b16 %v3304, %v3303
      %v3366 = vpack.c.b16 %v3306, %v3305
      %v3367 = vpack.c.b16 %v3308, %v3307
      %v3368 = vpack.c.b16 %v3310, %v3309
      %v3369 = vpack.c.b16 %v3312, %v3311
      %v3370 = vpack.c.b16 %v3314, %v3313
      %v3371 = vpack.c.b16 %v3316, %v3315
      %v3372 = vpack.c.b16 %v3318, %v3317
      %v3373 = vpack.c.b16 %v3320, %v3319
      %v3374 = vpack.c.b16 %v3322, %v3321
      %v3375 = vpack.c.b16 %v3324, %v3323
      %v3376 = vpack.c.b16 %v3326, %v3325
      %v3377 = vpack.c.b16 %v3328, %v3327
      %v3378 = vpack.c.b16 %v3330, %v3329
      %v3379 = vpack.c.b16 %v3332, %v3331
      %v3380 = vpack.c.b16 %v3334, %v3333
      %v3381 = vpack.c.b16 %v3336, %v3335
      %v3382 = vpack.c.b16 %v3338, %v3337
      %v3383 = vpack.c.b16 %v3340, %v3339
      %v3384 = vpack.c.b16 %v3342, %v3341
      %v3385 = vpack.c.b16 %v3344, %v3343
      %v3386 = vpack.c.b16 %v3346, %v3345
      %v3387 = vpack.c.b16 %v3348, %v3347
      %v3388 = vpack.c.b16 %v3350, %v3349
      %v3389 = vpack.c.b16 %v3352, %v3351
      %v3390 = vpack.c.b16 %v3354, %v3353
      %v3391 = vpack.c.b16 %v3356, %v3355
      %v3392 = vpack.c.b16 %v3358, %v3357
      %v3393 = vpack.c.b16 %v3360, %v3359
      %v3394 = vpack.c.b16 %v3362, %v3361
      %3427 = vmatpush.bf16.msra.mxu0 %v3370
      %3428 = vmatpush.bf16.msra.mxu0 %v3369
      %3429 = vmatpush.bf16.msra.mxu0 %v3368
      %3430 = vmatpush.bf16.msra.mxu0 %v3367
      %3431 = vmatpush.bf16.msra.mxu0 %v3366
      %3432 = vmatpush.bf16.msra.mxu0 %v3365
      %3433 = vmatpush.bf16.msra.mxu0 %v3364
      %3434 = vmatpush.bf16.msra.mxu0 %v3363
      %3435 = vmatmul.bf16.gmra.mxu0 %v3195
      %v3436 = vpop.f32.mrf.mxu0
      %v3437 = vadd.f32 %v3161, %v3436
      %v3438 = vpop.f32.mrf.mxu0
      %v3439 = vadd.f32 %v3163, %v3438
      %3440 = vmatmul.bf16.gmra.mxu0 %v3199
      %v3441 = vpop.f32.mrf.mxu0
      %v3442 = vadd.f32 %v3166, %v3441
      %v3443 = vpop.f32.mrf.mxu0
      %v3444 = vadd.f32 %v3168, %v3443
      %3445 = vmatmul.bf16.gmra.mxu0 %v3211
      %v3446 = vpop.f32.mrf.mxu0
      %v3447 = vadd.f32 %v3171, %v3446
      %v3448 = vpop.f32.mrf.mxu0
      %v3449 = vadd.f32 %v3173, %v3448
      %3450 = vmatmul.bf16.gmra.mxu0 %v3215
      %v3451 = vpop.f32.mrf.mxu0
      %v3452 = vadd.f32 %v3176, %v3451
      %v3453 = vpop.f32.mrf.mxu0
      %v3454 = vadd.f32 %v3178, %v3453
      %3455 = vdwg.mxu0
      %3456 = vmatpush.bf16.msra.mxu0 %v3378
      %3457 = vmatpush.bf16.msra.mxu0 %v3377
      %3458 = vmatpush.bf16.msra.mxu0 %v3376
      %3459 = vmatpush.bf16.msra.mxu0 %v3375
      %3460 = vmatpush.bf16.msra.mxu0 %v3374
      %3461 = vmatpush.bf16.msra.mxu0 %v3373
      %3462 = vmatpush.bf16.msra.mxu0 %v3372
      %3463 = vmatpush.bf16.msra.mxu0 %v3371
      %3464 = vmatmul.bf16.gmra.mxu0 %v3196
      %v3465 = vpop.f32.mrf.mxu0
      %v3466 = vadd.f32 %v3437, %v3465
      %v3467 = vpop.f32.mrf.mxu0
      %v3468 = vadd.f32 %v3439, %v3467
      %3469 = vmatmul.bf16.gmra.mxu0 %v3200
      %v3470 = vpop.f32.mrf.mxu0
      %v3471 = vadd.f32 %v3442, %v3470
      %v3472 = vpop.f32.mrf.mxu0
      %v3473 = vadd.f32 %v3444, %v3472
      %3474 = vmatmul.bf16.gmra.mxu0 %v3212
      %v3475 = vpop.f32.mrf.mxu0
      %v3476 = vadd.f32 %v3447, %v3475
      %v3477 = vpop.f32.mrf.mxu0
      %v3478 = vadd.f32 %v3449, %v3477
      %3479 = vmatmul.bf16.gmra.mxu0 %v3216
      %v3480 = vpop.f32.mrf.mxu0
      %v3481 = vadd.f32 %v3452, %v3480
      %v3482 = vpop.f32.mrf.mxu0
      %v3483 = vadd.f32 %v3454, %v3482
      %3484 = vdwg.mxu0
      %3485 = vmatpush.bf16.msra.mxu0 %v3386
      %3486 = vmatpush.bf16.msra.mxu0 %v3385
      %3487 = vmatpush.bf16.msra.mxu0 %v3384
      %3488 = vmatpush.bf16.msra.mxu0 %v3383
      %3489 = vmatpush.bf16.msra.mxu0 %v3382
      %3490 = vmatpush.bf16.msra.mxu0 %v3381
      %3491 = vmatpush.bf16.msra.mxu0 %v3380
      %3492 = vmatpush.bf16.msra.mxu0 %v3379
      %3493 = vmatmul.bf16.gmra.mxu0 %v3197
      %v3494 = vpop.f32.mrf.mxu0
      %v3495 = vadd.f32 %v3466, %v3494
      %v3496 = vpop.f32.mrf.mxu0
      %v3497 = vadd.f32 %v3468, %v3496
      %3498 = vmatmul.bf16.gmra.mxu0 %v3201
      %v3499 = vpop.f32.mrf.mxu0
      %v3500 = vadd.f32 %v3471, %v3499
      %v3501 = vpop.f32.mrf.mxu0
      %v3502 = vadd.f32 %v3473, %v3501
      %3503 = vmatmul.bf16.gmra.mxu0 %v3213
      %v3504 = vpop.f32.mrf.mxu0
      %v3505 = vadd.f32 %v3476, %v3504
      %v3506 = vpop.f32.mrf.mxu0
      %v3507 = vadd.f32 %v3478, %v3506
      %3508 = vmatmul.bf16.gmra.mxu0 %v3217
      %v3509 = vpop.f32.mrf.mxu0
      %v3510 = vadd.f32 %v3481, %v3509
      %v3511 = vpop.f32.mrf.mxu0
      %v3512 = vadd.f32 %v3483, %v3511
      %3513 = vdwg.mxu0
      %3514 = vmatpush.bf16.msra.mxu0 %v3394
      %3515 = vmatpush.bf16.msra.mxu0 %v3393
      %3516 = vmatpush.bf16.msra.mxu0 %v3392
      %3517 = vmatpush.bf16.msra.mxu0 %v3391
      %3518 = vmatpush.bf16.msra.mxu0 %v3390
      %3519 = vmatpush.bf16.msra.mxu0 %v3389
      %3520 = vmatpush.bf16.msra.mxu0 %v3388
      %3521 = vmatpush.bf16.msra.mxu0 %v3387
      %3522 = vmatmul.bf16.gmra.mxu0 %v3198
      %v3523 = vpop.f32.mrf.mxu0
      %v3524 = vadd.f32 %v3495, %v3523
      %v3525 = vpop.f32.mrf.mxu0
      %v3526 = vadd.f32 %v3497, %v3525
      %3527 = vmatmul.bf16.gmra.mxu0 %v3202
      %v3528 = vpop.f32.mrf.mxu0
      %v3529 = vadd.f32 %v3500, %v3528
      %v3530 = vpop.f32.mrf.mxu0
      %v3531 = vadd.f32 %v3502, %v3530
      %3532 = vmatmul.bf16.gmra.mxu0 %v3214
      %v3533 = vpop.f32.mrf.mxu0
      %v3534 = vadd.f32 %v3505, %v3533
      %v3535 = vpop.f32.mrf.mxu0
      %v3536 = vadd.f32 %v3507, %v3535
      %3537 = vmatmul.bf16.gmra.mxu0 %v3218
      %v3538 = vpop.f32.mrf.mxu0
      %v3539 = vadd.f32 %v3510, %v3538
      %v3540 = vpop.f32.mrf.mxu0
      %v3541 = vadd.f32 %v3512, %v3540
      %3542 = vdwg.mxu0
      %v3551 = vrot.slane %v2149, 2
      %v3552 = vrot.slane %v2150, 4
      %v3553 = vrot.slane %v2150, 6
      %v3554 = vrot.slane %v2159, 2
      %v3555 = vrot.slane %v2160, 4
      %v3556 = vrot.slane %v2160, 6
      %v3557 = vrot.slane %v2169, 2
      %v3558 = vrot.slane %v2170, 4
      %v3559 = vrot.slane %v2170, 6
      %v3560 = vrot.slane %v2179, 2
      %v3561 = vrot.slane %v2180, 4
      %v3562 = vrot.slane %v2180, 6
      %v3565 = vsel %vm852, %v2149, %v3551
      %v3568 = vsel %vm2264, %v3552, %v3553
      %v3569 = vsel %vm1539, %v3565, %v3568
      %v3572 = vsel %vm852, %v2159, %v3554
      %v3575 = vsel %vm2264, %v3555, %v3556
      %v3576 = vsel %vm1539, %v3572, %v3575
      %v3579 = vsel %vm852, %v2169, %v3557
      %v3582 = vsel %vm2264, %v3558, %v3559
      %v3583 = vsel %vm1539, %v3579, %v3582
      %v3586 = vsel %vm852, %v2179, %v3560
      %v3589 = vsel %vm2264, %v3561, %v3562
      %v3590 = vsel %vm1539, %v3586, %v3589
      %s3591 = scalar_lea.vmem %s3, 512
      %v3592 = vld [vmem:[%s3591] sm:$0xf]
      %v3593 = vld [vmem:[%s3591 + $0x4] sm:$0xf]
      %v3594 = vld [vmem:[%s3591 + $0x8] sm:$0xf]
      %v3595 = vld [vmem:[%s3591 + $0xc] sm:$0xf]
      %v3596 = vld [vmem:[%s3591 + $0x10] sm:$0xf]
      %v3597 = vld [vmem:[%s3591 + $0x14] sm:$0xf]
      %v3598 = vld [vmem:[%s3591 + $0x18] sm:$0xf]
      %v3599 = vld [vmem:[%s3591 + $0x1c] sm:$0xf]
      %v3600 = vld [vmem:[%s3591 + $0x20] sm:$0xf]
      %v3601 = vld [vmem:[%s3591 + $0x24] sm:$0xf]
      %v3602 = vld [vmem:[%s3591 + $0x28] sm:$0xf]
      %v3603 = vld [vmem:[%s3591 + $0x2c] sm:$0xf]
      %v3604 = vld [vmem:[%s3591 + $0x30] sm:$0xf]
      %v3605 = vld [vmem:[%s3591 + $0x34] sm:$0xf]
      %v3606 = vld [vmem:[%s3591 + $0x38] sm:$0xf]
      %v3607 = vld [vmem:[%s3591 + $0x3c] sm:$0xf]
      %v3608 = vld [vmem:[%s3591 + $0x40] sm:$0xf]
      %v3609 = vld [vmem:[%s3591 + $0x44] sm:$0xf]
      %v3610 = vld [vmem:[%s3591 + $0x48] sm:$0xf]
      %v3611 = vld [vmem:[%s3591 + $0x4c] sm:$0xf]
      %v3612 = vld [vmem:[%s3591 + $0x50] sm:$0xf]
      %v3613 = vld [vmem:[%s3591 + $0x54] sm:$0xf]
      %v3614 = vld [vmem:[%s3591 + $0x58] sm:$0xf]
      %v3615 = vld [vmem:[%s3591 + $0x5c] sm:$0xf]
      %v3616 = vld [vmem:[%s3591 + $0x60] sm:$0xf]
      %v3617 = vld [vmem:[%s3591 + $0x64] sm:$0xf]
      %v3618 = vld [vmem:[%s3591 + $0x68] sm:$0xf]
      %v3619 = vld [vmem:[%s3591 + $0x6c] sm:$0xf]
      %v3620 = vld [vmem:[%s3591 + $0x70] sm:$0xf]
      %v3621 = vld [vmem:[%s3591 + $0x74] sm:$0xf]
      %v3622 = vld [vmem:[%s3591 + $0x78] sm:$0xf]
      %v3623 = vld [vmem:[%s3591 + $0x7c] sm:$0xf]
      %v3624 = vld [vmem:[%s3591 + $0x80] sm:$0xf]
      %v3625 = vld [vmem:[%s3591 + $0x84] sm:$0xf]
      %v3626 = vld [vmem:[%s3591 + $0x88] sm:$0xf]
      %v3627 = vld [vmem:[%s3591 + $0x8c] sm:$0xf]
      %v3628 = vld [vmem:[%s3591 + $0x90] sm:$0xf]
      %v3629 = vld [vmem:[%s3591 + $0x94] sm:$0xf]
      %v3630 = vld [vmem:[%s3591 + $0x98] sm:$0xf]
      %v3631 = vld [vmem:[%s3591 + $0x9c] sm:$0xf]
      %v3632 = vld [vmem:[%s3591 + $0xa0] sm:$0xf]
      %v3633 = vld [vmem:[%s3591 + $0xa4] sm:$0xf]
      %v3634 = vld [vmem:[%s3591 + $0xa8] sm:$0xf]
      %v3635 = vld [vmem:[%s3591 + $0xac] sm:$0xf]
      %v3636 = vld [vmem:[%s3591 + $0xb0] sm:$0xf]
      %v3637 = vld [vmem:[%s3591 + $0xb4] sm:$0xf]
      %v3638 = vld [vmem:[%s3591 + $0xb8] sm:$0xf]
      %v3639 = vld [vmem:[%s3591 + $0xbc] sm:$0xf]
      %v3640 = vld [vmem:[%s3591 + $0xc0] sm:$0xf]
      %v3641 = vld [vmem:[%s3591 + $0xc4] sm:$0xf]
      %v3642 = vld [vmem:[%s3591 + $0xc8] sm:$0xf]
      %v3643 = vld [vmem:[%s3591 + $0xcc] sm:$0xf]
      %v3644 = vld [vmem:[%s3591 + $0xd0] sm:$0xf]
      %v3645 = vld [vmem:[%s3591 + $0xd4] sm:$0xf]
      %v3646 = vld [vmem:[%s3591 + $0xd8] sm:$0xf]
      %v3647 = vld [vmem:[%s3591 + $0xdc] sm:$0xf]
      %v3648 = vld [vmem:[%s3591 + $0xe0] sm:$0xf]
      %v3649 = vld [vmem:[%s3591 + $0xe4] sm:$0xf]
      %v3650 = vld [vmem:[%s3591 + $0xe8] sm:$0xf]
      %v3651 = vld [vmem:[%s3591 + $0xec] sm:$0xf]
      %v3652 = vld [vmem:[%s3591 + $0xf0] sm:$0xf]
      %v3653 = vld [vmem:[%s3591 + $0xf4] sm:$0xf]
      %v3654 = vld [vmem:[%s3591 + $0xf8] sm:$0xf]
      %v3655 = vld [vmem:[%s3591 + $0xfc] sm:$0xf]
      %3656 = vst [vmem:[#allocation1] ss:$4 sm:$0xff] %v2275
      %s3657 = scalar_lea.vmem [#allocation1], 1
      %3658 = vst [vmem:[%s3657] ss:$4 sm:$0xff] %v2282
      %s3659 = scalar_lea.vmem [#allocation1], 2
      %3660 = vst [vmem:[%s3659] ss:$4 sm:$0xff] %v2289
      %s3661 = scalar_lea.vmem [#allocation1], 3
      %3662 = vst [vmem:[%s3661] ss:$4 sm:$0xff] %v3569
      %s3663 = scalar_lea.vmem [#allocation1], 32
      %3664 = vst [vmem:[%s3663] ss:$4 sm:$0xff] %v2303
      %s3665 = scalar_lea.vmem [#allocation1], 33
      %3666 = vst [vmem:[%s3665] ss:$4 sm:$0xff] %v2310
      %s3667 = scalar_lea.vmem [#allocation1], 34
      %3668 = vst [vmem:[%s3667] ss:$4 sm:$0xff] %v2317
      %s3669 = scalar_lea.vmem [#allocation1], 35
      %3670 = vst [vmem:[%s3669] ss:$4 sm:$0xff] %v3576
      %v3671 = vld.sshfl [vmem:[#allocation1] sm:$0xff pattern:$0x73625140]
      %v3672 = vld.sshfl [vmem:[#allocation1 + $0x8] sm:$0xff pattern:$0x73625140]
      %v3673 = vld.sshfl [vmem:[#allocation1 + $0x10] sm:$0xff pattern:$0x73625140]
      %v3674 = vld.sshfl [vmem:[#allocation1 + $0x18] sm:$0xff pattern:$0x73625140]
      %v3675 = vld.sshfl [vmem:[#allocation1 + $0x20] sm:$0xff pattern:$0x73625140]
      %v3676 = vld.sshfl [vmem:[#allocation1 + $0x28] sm:$0xff pattern:$0x73625140]
      %v3677 = vld.sshfl [vmem:[#allocation1 + $0x30] sm:$0xff pattern:$0x73625140]
      %v3678 = vld.sshfl [vmem:[#allocation1 + $0x38] sm:$0xff pattern:$0x73625140]
      %3679 = vst [vmem:[#allocation1] ss:$4 sm:$0xff] %v2331
      %3680 = vst [vmem:[%s3657] ss:$4 sm:$0xff] %v2338
      %3681 = vst [vmem:[%s3659] ss:$4 sm:$0xff] %v2345
      %3682 = vst [vmem:[%s3661] ss:$4 sm:$0xff] %v3583
      %3683 = vst [vmem:[%s3663] ss:$4 sm:$0xff] %v2359
      %3684 = vst [vmem:[%s3665] ss:$4 sm:$0xff] %v2366
      %3685 = vst [vmem:[%s3667] ss:$4 sm:$0xff] %v2373
      %3686 = vst [vmem:[%s3669] ss:$4 sm:$0xff] %v3590
      %v3687 = vld.sshfl [vmem:[#allocation1] sm:$0xff pattern:$0x73625140]
      %v3688 = vld.sshfl [vmem:[#allocation1 + $0x8] sm:$0xff pattern:$0x73625140]
      %v3689 = vld.sshfl [vmem:[#allocation1 + $0x10] sm:$0xff pattern:$0x73625140]
      %v3690 = vld.sshfl [vmem:[#allocation1 + $0x18] sm:$0xff pattern:$0x73625140]
      %v3691 = vld.sshfl [vmem:[#allocation1 + $0x20] sm:$0xff pattern:$0x73625140]
      %v3692 = vld.sshfl [vmem:[#allocation1 + $0x28] sm:$0xff pattern:$0x73625140]
      %v3693 = vld.sshfl [vmem:[#allocation1 + $0x30] sm:$0xff pattern:$0x73625140]
      %v3694 = vld.sshfl [vmem:[#allocation1 + $0x38] sm:$0xff pattern:$0x73625140]
      %v3775 = vunpack.c.l.b16 %v3592
      %v3776 = vunpack.c.l.b16 %v3593
      %v3777 = vunpack.c.l.b16 %v3594
      %v3778 = vunpack.c.l.b16 %v3595
      %v3779 = vunpack.c.l.b16 %v3596
      %v3780 = vunpack.c.l.b16 %v3597
      %v3781 = vunpack.c.l.b16 %v3598
      %v3782 = vunpack.c.l.b16 %v3599
      %v3783 = vunpack.c.l.b16 %v3600
      %v3784 = vunpack.c.l.b16 %v3601
      %v3785 = vunpack.c.l.b16 %v3602
      %v3786 = vunpack.c.l.b16 %v3603
      %v3787 = vunpack.c.l.b16 %v3604
      %v3788 = vunpack.c.l.b16 %v3605
      %v3789 = vunpack.c.l.b16 %v3606
      %v3790 = vunpack.c.l.b16 %v3607
      %v3791 = vunpack.c.l.b16 %v3608
      %v3792 = vunpack.c.l.b16 %v3609
      %v3793 = vunpack.c.l.b16 %v3610
      %v3794 = vunpack.c.l.b16 %v3611
      %v3795 = vunpack.c.l.b16 %v3612
      %v3796 = vunpack.c.l.b16 %v3613
      %v3797 = vunpack.c.l.b16 %v3614
      %v3798 = vunpack.c.l.b16 %v3615
      %v3799 = vunpack.c.l.b16 %v3616
      %v3800 = vunpack.c.l.b16 %v3617
      %v3801 = vunpack.c.l.b16 %v3618
      %v3802 = vunpack.c.l.b16 %v3619
      %v3803 = vunpack.c.l.b16 %v3620
      %v3804 = vunpack.c.l.b16 %v3621
      %v3805 = vunpack.c.l.b16 %v3622
      %v3806 = vunpack.c.l.b16 %v3623
      %v3807 = vunpack.c.l.b16 %v3624
      %v3808 = vunpack.c.l.b16 %v3625
      %v3809 = vunpack.c.l.b16 %v3626
      %v3810 = vunpack.c.l.b16 %v3627
      %v3811 = vunpack.c.l.b16 %v3628
      %v3812 = vunpack.c.l.b16 %v3629
      %v3813 = vunpack.c.l.b16 %v3630
      %v3814 = vunpack.c.l.b16 %v3631
      %v3815 = vunpack.c.l.b16 %v3632
      %v3816 = vunpack.c.l.b16 %v3633
      %v3817 = vunpack.c.l.b16 %v3634
      %v3818 = vunpack.c.l.b16 %v3635
      %v3819 = vunpack.c.l.b16 %v3636
      %v3820 = vunpack.c.l.b16 %v3637
      %v3821 = vunpack.c.l.b16 %v3638
      %v3822 = vunpack.c.l.b16 %v3639
      %v3823 = vunpack.c.l.b16 %v3640
      %v3824 = vunpack.c.l.b16 %v3641
      %v3825 = vunpack.c.l.b16 %v3642
      %v3826 = vunpack.c.l.b16 %v3643
      %v3827 = vunpack.c.l.b16 %v3644
      %v3828 = vunpack.c.l.b16 %v3645
      %v3829 = vunpack.c.l.b16 %v3646
      %v3830 = vunpack.c.l.b16 %v3647
      %v3831 = vunpack.c.l.b16 %v3648
      %v3832 = vunpack.c.l.b16 %v3649
      %v3833 = vunpack.c.l.b16 %v3650
      %v3834 = vunpack.c.l.b16 %v3651
      %v3835 = vunpack.c.l.b16 %v3652
      %v3836 = vunpack.c.l.b16 %v3653
      %v3837 = vunpack.c.l.b16 %v3654
      %v3838 = vunpack.c.l.b16 %v3655
      %v3839 = vpack.c.b16 %v3776, %v3775
      %v3840 = vpack.c.b16 %v3778, %v3777
      %v3841 = vpack.c.b16 %v3780, %v3779
      %v3842 = vpack.c.b16 %v3782, %v3781
      %v3843 = vpack.c.b16 %v3784, %v3783
      %v3844 = vpack.c.b16 %v3786, %v3785
      %v3845 = vpack.c.b16 %v3788, %v3787
      %v3846 = vpack.c.b16 %v3790, %v3789
      %v3847 = vpack.c.b16 %v3792, %v3791
      %v3848 = vpack.c.b16 %v3794, %v3793
      %v3849 = vpack.c.b16 %v3796, %v3795
      %v3850 = vpack.c.b16 %v3798, %v3797
      %v3851 = vpack.c.b16 %v3800, %v3799
      %v3852 = vpack.c.b16 %v3802, %v3801
      %v3853 = vpack.c.b16 %v3804, %v3803
      %v3854 = vpack.c.b16 %v3806, %v3805
      %v3855 = vpack.c.b16 %v3808, %v3807
      %v3856 = vpack.c.b16 %v3810, %v3809
      %v3857 = vpack.c.b16 %v3812, %v3811
      %v3858 = vpack.c.b16 %v3814, %v3813
      %v3859 = vpack.c.b16 %v3816, %v3815
      %v3860 = vpack.c.b16 %v3818, %v3817
      %v3861 = vpack.c.b16 %v3820, %v3819
      %v3862 = vpack.c.b16 %v3822, %v3821
      %v3863 = vpack.c.b16 %v3824, %v3823
      %v3864 = vpack.c.b16 %v3826, %v3825
      %v3865 = vpack.c.b16 %v3828, %v3827
      %v3866 = vpack.c.b16 %v3830, %v3829
      %v3867 = vpack.c.b16 %v3832, %v3831
      %v3868 = vpack.c.b16 %v3834, %v3833
      %v3869 = vpack.c.b16 %v3836, %v3835
      %v3870 = vpack.c.b16 %v3838, %v3837
      %3903 = vmatpush.bf16.msra.mxu0 %v3846
      %3904 = vmatpush.bf16.msra.mxu0 %v3845
      %3905 = vmatpush.bf16.msra.mxu0 %v3844
      %3906 = vmatpush.bf16.msra.mxu0 %v3843
      %3907 = vmatpush.bf16.msra.mxu0 %v3842
      %3908 = vmatpush.bf16.msra.mxu0 %v3841
      %3909 = vmatpush.bf16.msra.mxu0 %v3840
      %3910 = vmatpush.bf16.msra.mxu0 %v3839
      %3911 = vmatmul.bf16.gmra.mxu0 %v3671
      %v3912 = vpop.f32.mrf.mxu0
      %v3913 = vadd.f32 0.0, %v3912
      %v3914 = vpop.f32.mrf.mxu0
      %v3915 = vadd.f32 0.0, %v3914
      %3916 = vmatmul.bf16.gmra.mxu0 %v3675
      %v3917 = vpop.f32.mrf.mxu0
      %v3918 = vadd.f32 0.0, %v3917
      %v3919 = vpop.f32.mrf.mxu0
      %v3920 = vadd.f32 0.0, %v3919
      %3921 = vmatmul.bf16.gmra.mxu0 %v3687
      %v3922 = vpop.f32.mrf.mxu0
      %v3923 = vadd.f32 0.0, %v3922
      %v3924 = vpop.f32.mrf.mxu0
      %v3925 = vadd.f32 0.0, %v3924
      %3926 = vmatmul.bf16.gmra.mxu0 %v3691
      %v3927 = vpop.f32.mrf.mxu0
      %v3928 = vadd.f32 0.0, %v3927
      %v3929 = vpop.f32.mrf.mxu0
      %v3930 = vadd.f32 0.0, %v3929
      %3931 = vdwg.mxu0
      %3932 = vmatpush.bf16.msra.mxu0 %v3854
      %3933 = vmatpush.bf16.msra.mxu0 %v3853
      %3934 = vmatpush.bf16.msra.mxu0 %v3852
      %3935 = vmatpush.bf16.msra.mxu0 %v3851
      %3936 = vmatpush.bf16.msra.mxu0 %v3850
      %3937 = vmatpush.bf16.msra.mxu0 %v3849
      %3938 = vmatpush.bf16.msra.mxu0 %v3848
      %3939 = vmatpush.bf16.msra.mxu0 %v3847
      %3940 = vmatmul.bf16.gmra.mxu0 %v3672
      %v3941 = vpop.f32.mrf.mxu0
      %v3942 = vadd.f32 %v3913, %v3941
      %v3943 = vpop.f32.mrf.mxu0
      %v3944 = vadd.f32 %v3915, %v3943
      %3945 = vmatmul.bf16.gmra.mxu0 %v3676
      %v3946 = vpop.f32.mrf.mxu0
      %v3947 = vadd.f32 %v3918, %v3946
      %v3948 = vpop.f32.mrf.mxu0
      %v3949 = vadd.f32 %v3920, %v3948
      %3950 = vmatmul.bf16.gmra.mxu0 %v3688
      %v3951 = vpop.f32.mrf.mxu0
      %v3952 = vadd.f32 %v3923, %v3951
      %v3953 = vpop.f32.mrf.mxu0
      %v3954 = vadd.f32 %v3925, %v3953
      %3955 = vmatmul.bf16.gmra.mxu0 %v3692
      %v3956 = vpop.f32.mrf.mxu0
      %v3957 = vadd.f32 %v3928, %v3956
      %v3958 = vpop.f32.mrf.mxu0
      %v3959 = vadd.f32 %v3930, %v3958
      %3960 = vdwg.mxu0
      %3961 = vmatpush.bf16.msra.mxu0 %v3862
      %3962 = vmatpush.bf16.msra.mxu0 %v3861
      %3963 = vmatpush.bf16.msra.mxu0 %v3860
      %3964 = vmatpush.bf16.msra.mxu0 %v3859
      %3965 = vmatpush.bf16.msra.mxu0 %v3858
      %3966 = vmatpush.bf16.msra.mxu0 %v3857
      %3967 = vmatpush.bf16.msra.mxu0 %v3856
      %3968 = vmatpush.bf16.msra.mxu0 %v3855
      %3969 = vmatmul.bf16.gmra.mxu0 %v3673
      %v3970 = vpop.f32.mrf.mxu0
      %v3971 = vadd.f32 %v3942, %v3970
      %v3972 = vpop.f32.mrf.mxu0
      %v3973 = vadd.f32 %v3944, %v3972
      %3974 = vmatmul.bf16.gmra.mxu0 %v3677
      %v3975 = vpop.f32.mrf.mxu0
      %v3976 = vadd.f32 %v3947, %v3975
      %v3977 = vpop.f32.mrf.mxu0
      %v3978 = vadd.f32 %v3949, %v3977
      %3979 = vmatmul.bf16.gmra.mxu0 %v3689
      %v3980 = vpop.f32.mrf.mxu0
      %v3981 = vadd.f32 %v3952, %v3980
      %v3982 = vpop.f32.mrf.mxu0
      %v3983 = vadd.f32 %v3954, %v3982
      %3984 = vmatmul.bf16.gmra.mxu0 %v3693
      %v3985 = vpop.f32.mrf.mxu0
      %v3986 = vadd.f32 %v3957, %v3985
      %v3987 = vpop.f32.mrf.mxu0
      %v3988 = vadd.f32 %v3959, %v3987
      %3989 = vdwg.mxu0
      %3990 = vmatpush.bf16.msra.mxu0 %v3870
      %3991 = vmatpush.bf16.msra.mxu0 %v3869
      %3992 = vmatpush.bf16.msra.mxu0 %v3868
      %3993 = vmatpush.bf16.msra.mxu0 %v3867
      %3994 = vmatpush.bf16.msra.mxu0 %v3866
      %3995 = vmatpush.bf16.msra.mxu0 %v3865
      %3996 = vmatpush.bf16.msra.mxu0 %v3864
      %3997 = vmatpush.bf16.msra.mxu0 %v3863
      %3998 = vmatmul.bf16.gmra.mxu0 %v3674
      %v3999 = vpop.f32.mrf.mxu0
      %v4000 = vadd.f32 %v3971, %v3999
      %v4001 = vpop.f32.mrf.mxu0
      %v4002 = vadd.f32 %v3973, %v4001
      %4003 = vmatmul.bf16.gmra.mxu0 %v3678
      %v4004 = vpop.f32.mrf.mxu0
      %v4005 = vadd.f32 %v3976, %v4004
      %v4006 = vpop.f32.mrf.mxu0
      %v4007 = vadd.f32 %v3978, %v4006
      %4008 = vmatmul.bf16.gmra.mxu0 %v3690
      %v4009 = vpop.f32.mrf.mxu0
      %v4010 = vadd.f32 %v3981, %v4009
      %v4011 = vpop.f32.mrf.mxu0
      %v4012 = vadd.f32 %v3983, %v4011
      %4013 = vmatmul.bf16.gmra.mxu0 %v3694
      %v4014 = vpop.f32.mrf.mxu0
      %v4015 = vadd.f32 %v3986, %v4014
      %v4016 = vpop.f32.mrf.mxu0
      %v4017 = vadd.f32 %v3988, %v4016
      %4018 = vdwg.mxu0
      %v4019 = vadd.f32 %v3524, %v4000
      %v4020 = vadd.f32 %v3526, %v4002
      %v4021 = vadd.f32 %v3529, %v4005
      %v4022 = vadd.f32 %v3531, %v4007
      %v4023 = vadd.f32 %v3534, %v4010
      %v4024 = vadd.f32 %v3536, %v4012
      %v4025 = vadd.f32 %v3539, %v4015
      %v4026 = vadd.f32 %v3541, %v4017
      %v4027 = vsel %vm2438, %v2149, %v3551
      %v4028 = vsel %vm2440, %v3553, %v3552
      %v4029 = vsel %vm2442, %v4027, %v4028
      %v4031 = vrot.slane %v4029, 2
      %v4032 = vsel %vm2438, %v2159, %v3554
      %v4033 = vsel %vm2440, %v3556, %v3555
      %v4034 = vsel %vm2442, %v4032, %v4033
      %v4036 = vrot.slane %v4034, 2
      %v4037 = vsel %vm2438, %v2169, %v3557
      %v4038 = vsel %vm2440, %v3559, %v3558
      %v4039 = vsel %vm2442, %v4037, %v4038
      %v4041 = vrot.slane %v4039, 2
      %v4042 = vsel %vm2438, %v2179, %v3560
      %v4043 = vsel %vm2440, %v3562, %v3561
      %v4044 = vsel %vm2442, %v4042, %v4043
      %v4046 = vrot.slane %v4044, 2
      %v4047 = vshrl.u32 %v3569, 16
      %v4049 = vrot.slane %v4047, 6
      %v4050 = vshll.u32 %v3569, 16
      %v4052 = vrot.slane %v4050, 7
      %v4053 = vor.u32 %v4049, %v4052
      %v4054 = vrot.slane %v4053, 2
      %v4056 = vshll.u32 %v4031, 16
      %v4058 = vrot.slane %v4056, 7
      %v4059 = vsel %vm2527, %v4054, %v4058
      %v4060 = vshrl.u32 %v3576, 16
      %v4062 = vrot.slane %v4060, 6
      %v4063 = vshll.u32 %v3576, 16
      %v4065 = vrot.slane %v4063, 7
      %v4066 = vor.u32 %v4062, %v4065
      %v4067 = vrot.slane %v4066, 2
      %v4069 = vshll.u32 %v4036, 16
      %v4071 = vrot.slane %v4069, 7
      %v4072 = vsel %vm2527, %v4067, %v4071
      %v4073 = vshrl.u32 %v3583, 16
      %v4075 = vrot.slane %v4073, 6
      %v4076 = vshll.u32 %v3583, 16
      %v4078 = vrot.slane %v4076, 7
      %v4079 = vor.u32 %v4075, %v4078
      %v4080 = vrot.slane %v4079, 2
      %v4082 = vshll.u32 %v4041, 16
      %v4084 = vrot.slane %v4082, 7
      %v4085 = vsel %vm2527, %v4080, %v4084
      %v4086 = vshrl.u32 %v3590, 16
      %v4088 = vrot.slane %v4086, 6
      %v4089 = vshll.u32 %v3590, 16
      %v4091 = vrot.slane %v4089, 7
      %v4092 = vor.u32 %v4088, %v4091
      %v4093 = vrot.slane %v4092, 2
      %v4095 = vshll.u32 %v4046, 16
      %v4097 = vrot.slane %v4095, 7
      %v4098 = vsel %vm2527, %v4093, %v4097
      %s4099 = scalar_lea.vmem %s3, 768
      %v4100 = vld [vmem:[%s4099] sm:$0xf]
      %v4101 = vld [vmem:[%s4099 + $0x4] sm:$0xf]
      %v4102 = vld [vmem:[%s4099 + $0x8] sm:$0xf]
      %v4103 = vld [vmem:[%s4099 + $0xc] sm:$0xf]
      %v4104 = vld [vmem:[%s4099 + $0x10] sm:$0xf]
      %v4105 = vld [vmem:[%s4099 + $0x14] sm:$0xf]
      %v4106 = vld [vmem:[%s4099 + $0x18] sm:$0xf]
      %v4107 = vld [vmem:[%s4099 + $0x1c] sm:$0xf]
      %v4108 = vld [vmem:[%s4099 + $0x20] sm:$0xf]
      %v4109 = vld [vmem:[%s4099 + $0x24] sm:$0xf]
      %v4110 = vld [vmem:[%s4099 + $0x28] sm:$0xf]
      %v4111 = vld [vmem:[%s4099 + $0x2c] sm:$0xf]
      %v4112 = vld [vmem:[%s4099 + $0x30] sm:$0xf]
      %v4113 = vld [vmem:[%s4099 + $0x34] sm:$0xf]
      %v4114 = vld [vmem:[%s4099 + $0x38] sm:$0xf]
      %v4115 = vld [vmem:[%s4099 + $0x3c] sm:$0xf]
      %v4116 = vld [vmem:[%s4099 + $0x40] sm:$0xf]
      %v4117 = vld [vmem:[%s4099 + $0x44] sm:$0xf]
      %v4118 = vld [vmem:[%s4099 + $0x48] sm:$0xf]
      %v4119 = vld [vmem:[%s4099 + $0x4c] sm:$0xf]
      %v4120 = vld [vmem:[%s4099 + $0x50] sm:$0xf]
      %v4121 = vld [vmem:[%s4099 + $0x54] sm:$0xf]
      %v4122 = vld [vmem:[%s4099 + $0x58] sm:$0xf]
      %v4123 = vld [vmem:[%s4099 + $0x5c] sm:$0xf]
      %v4124 = vld [vmem:[%s4099 + $0x60] sm:$0xf]
      %v4125 = vld [vmem:[%s4099 + $0x64] sm:$0xf]
      %v4126 = vld [vmem:[%s4099 + $0x68] sm:$0xf]
      %v4127 = vld [vmem:[%s4099 + $0x6c] sm:$0xf]
      %v4128 = vld [vmem:[%s4099 + $0x70] sm:$0xf]
      %v4129 = vld [vmem:[%s4099 + $0x74] sm:$0xf]
      %v4130 = vld [vmem:[%s4099 + $0x78] sm:$0xf]
      %v4131 = vld [vmem:[%s4099 + $0x7c] sm:$0xf]
      %v4132 = vld [vmem:[%s4099 + $0x80] sm:$0xf]
      %v4133 = vld [vmem:[%s4099 + $0x84] sm:$0xf]
      %v4134 = vld [vmem:[%s4099 + $0x88] sm:$0xf]
      %v4135 = vld [vmem:[%s4099 + $0x8c] sm:$0xf]
      %v4136 = vld [vmem:[%s4099 + $0x90] sm:$0xf]
      %v4137 = vld [vmem:[%s4099 + $0x94] sm:$0xf]
      %v4138 = vld [vmem:[%s4099 + $0x98] sm:$0xf]
      %v4139 = vld [vmem:[%s4099 + $0x9c] sm:$0xf]
      %v4140 = vld [vmem:[%s4099 + $0xa0] sm:$0xf]
      %v4141 = vld [vmem:[%s4099 + $0xa4] sm:$0xf]
      %v4142 = vld [vmem:[%s4099 + $0xa8] sm:$0xf]
      %v4143 = vld [vmem:[%s4099 + $0xac] sm:$0xf]
      %v4144 = vld [vmem:[%s4099 + $0xb0] sm:$0xf]
      %v4145 = vld [vmem:[%s4099 + $0xb4] sm:$0xf]
      %v4146 = vld [vmem:[%s4099 + $0xb8] sm:$0xf]
      %v4147 = vld [vmem:[%s4099 + $0xbc] sm:$0xf]
      %v4148 = vld [vmem:[%s4099 + $0xc0] sm:$0xf]
      %v4149 = vld [vmem:[%s4099 + $0xc4] sm:$0xf]
      %v4150 = vld [vmem:[%s4099 + $0xc8] sm:$0xf]
      %v4151 = vld [vmem:[%s4099 + $0xcc] sm:$0xf]
      %v4152 = vld [vmem:[%s4099 + $0xd0] sm:$0xf]
      %v4153 = vld [vmem:[%s4099 + $0xd4] sm:$0xf]
      %v4154 = vld [vmem:[%s4099 + $0xd8] sm:$0xf]
      %v4155 = vld [vmem:[%s4099 + $0xdc] sm:$0xf]
      %v4156 = vld [vmem:[%s4099 + $0xe0] sm:$0xf]
      %v4157 = vld [vmem:[%s4099 + $0xe4] sm:$0xf]
      %v4158 = vld [vmem:[%s4099 + $0xe8] sm:$0xf]
      %v4159 = vld [vmem:[%s4099 + $0xec] sm:$0xf]
      %v4160 = vld [vmem:[%s4099 + $0xf0] sm:$0xf]
      %v4161 = vld [vmem:[%s4099 + $0xf4] sm:$0xf]
      %v4162 = vld [vmem:[%s4099 + $0xf8] sm:$0xf]
      %v4163 = vld [vmem:[%s4099 + $0xfc] sm:$0xf]
      %4164 = vst [vmem:[#allocation1] ss:$4 sm:$0xff] %v2553
      %s4165 = scalar_lea.vmem [#allocation1], 1
      %4166 = vst [vmem:[%s4165] ss:$4 sm:$0xff] %v2566
      %s4167 = scalar_lea.vmem [#allocation1], 2
      %4168 = vst [vmem:[%s4167] ss:$4 sm:$0xff] %v2579
      %s4170 = scalar_lea.vmem [#allocation1], 3
      %4171 = vst [vmem:[%s4170] ss:$4 sm:$0xff] %v4059
      %s4172 = scalar_lea.vmem [#allocation1], 32
      %4173 = vst [vmem:[%s4172] ss:$4 sm:$0xff] %v2605
      %s4174 = scalar_lea.vmem [#allocation1], 33
      %4175 = vst [vmem:[%s4174] ss:$4 sm:$0xff] %v2618
      %s4176 = scalar_lea.vmem [#allocation1], 34
      %4177 = vst [vmem:[%s4176] ss:$4 sm:$0xff] %v2631
      %s4179 = scalar_lea.vmem [#allocation1], 35
      %4180 = vst [vmem:[%s4179] ss:$4 sm:$0xff] %v4072
      %v4181 = vld.sshfl [vmem:[#allocation1] sm:$0xff pattern:$0x73625140]
      %v4182 = vld.sshfl [vmem:[#allocation1 + $0x8] sm:$0xff pattern:$0x73625140]
      %v4183 = vld.sshfl [vmem:[#allocation1 + $0x10] sm:$0xff pattern:$0x73625140]
      %v4184 = vld.sshfl [vmem:[#allocation1 + $0x18] sm:$0xff pattern:$0x73625140]
      %v4185 = vld.sshfl [vmem:[#allocation1 + $0x20] sm:$0xff pattern:$0x73625140]
      %v4186 = vld.sshfl [vmem:[#allocation1 + $0x28] sm:$0xff pattern:$0x73625140]
      %v4187 = vld.sshfl [vmem:[#allocation1 + $0x30] sm:$0xff pattern:$0x73625140]
      %v4188 = vld.sshfl [vmem:[#allocation1 + $0x38] sm:$0xff pattern:$0x73625140]
      %4189 = vst [vmem:[#allocation1] ss:$4 sm:$0xff] %v2657
      %4190 = vst [vmem:[%s4165] ss:$4 sm:$0xff] %v2670
      %4191 = vst [vmem:[%s4167] ss:$4 sm:$0xff] %v2683
      %4193 = vst [vmem:[%s4170] ss:$4 sm:$0xff] %v4085
      %4194 = vst [vmem:[%s4172] ss:$4 sm:$0xff] %v2709
      %4195 = vst [vmem:[%s4174] ss:$4 sm:$0xff] %v2722
      %4196 = vst [vmem:[%s4176] ss:$4 sm:$0xff] %v2735
      %4198 = vst [vmem:[%s4179] ss:$4 sm:$0xff] %v4098
      %v4199 = vld.sshfl [vmem:[#allocation1] sm:$0xff pattern:$0x73625140]
      %v4200 = vld.sshfl [vmem:[#allocation1 + $0x8] sm:$0xff pattern:$0x73625140]
      %v4201 = vld.sshfl [vmem:[#allocation1 + $0x10] sm:$0xff pattern:$0x73625140]
      %v4202 = vld.sshfl [vmem:[#allocation1 + $0x18] sm:$0xff pattern:$0x73625140]
      %v4203 = vld.sshfl [vmem:[#allocation1 + $0x20] sm:$0xff pattern:$0x73625140]
      %v4204 = vld.sshfl [vmem:[#allocation1 + $0x28] sm:$0xff pattern:$0x73625140]
      %v4205 = vld.sshfl [vmem:[#allocation1 + $0x30] sm:$0xff pattern:$0x73625140]
      %v4206 = vld.sshfl [vmem:[#allocation1 + $0x38] sm:$0xff pattern:$0x73625140]
      %v4287 = vunpack.c.l.b16 %v4100
      %v4288 = vunpack.c.l.b16 %v4101
      %v4289 = vunpack.c.l.b16 %v4102
      %v4290 = vunpack.c.l.b16 %v4103
      %v4291 = vunpack.c.l.b16 %v4104
      %v4292 = vunpack.c.l.b16 %v4105
      %v4293 = vunpack.c.l.b16 %v4106
      %v4294 = vunpack.c.l.b16 %v4107
      %v4295 = vunpack.c.l.b16 %v4108
      %v4296 = vunpack.c.l.b16 %v4109
      %v4297 = vunpack.c.l.b16 %v4110
      %v4298 = vunpack.c.l.b16 %v4111
      %v4299 = vunpack.c.l.b16 %v4112
      %v4300 = vunpack.c.l.b16 %v4113
      %v4301 = vunpack.c.l.b16 %v4114
      %v4302 = vunpack.c.l.b16 %v4115
      %v4303 = vunpack.c.l.b16 %v4116
      %v4304 = vunpack.c.l.b16 %v4117
      %v4305 = vunpack.c.l.b16 %v4118
      %v4306 = vunpack.c.l.b16 %v4119
      %v4307 = vunpack.c.l.b16 %v4120
      %v4308 = vunpack.c.l.b16 %v4121
      %v4309 = vunpack.c.l.b16 %v4122
      %v4310 = vunpack.c.l.b16 %v4123
      %v4311 = vunpack.c.l.b16 %v4124
      %v4312 = vunpack.c.l.b16 %v4125
      %v4313 = vunpack.c.l.b16 %v4126
      %v4314 = vunpack.c.l.b16 %v4127
      %v4315 = vunpack.c.l.b16 %v4128
      %v4316 = vunpack.c.l.b16 %v4129
      %v4317 = vunpack.c.l.b16 %v4130
      %v4318 = vunpack.c.l.b16 %v4131
      %v4319 = vunpack.c.l.b16 %v4132
      %v4320 = vunpack.c.l.b16 %v4133
      %v4321 = vunpack.c.l.b16 %v4134
      %v4322 = vunpack.c.l.b16 %v4135
      %v4323 = vunpack.c.l.b16 %v4136
      %v4324 = vunpack.c.l.b16 %v4137
      %v4325 = vunpack.c.l.b16 %v4138
      %v4326 = vunpack.c.l.b16 %v4139
      %v4327 = vunpack.c.l.b16 %v4140
      %v4328 = vunpack.c.l.b16 %v4141
      %v4329 = vunpack.c.l.b16 %v4142
      %v4330 = vunpack.c.l.b16 %v4143
      %v4331 = vunpack.c.l.b16 %v4144
      %v4332 = vunpack.c.l.b16 %v4145
      %v4333 = vunpack.c.l.b16 %v4146
      %v4334 = vunpack.c.l.b16 %v4147
      %v4335 = vunpack.c.l.b16 %v4148
      %v4336 = vunpack.c.l.b16 %v4149
      %v4337 = vunpack.c.l.b16 %v4150
      %v4338 = vunpack.c.l.b16 %v4151
      %v4339 = vunpack.c.l.b16 %v4152
      %v4340 = vunpack.c.l.b16 %v4153
      %v4341 = vunpack.c.l.b16 %v4154
      %v4342 = vunpack.c.l.b16 %v4155
      %v4343 = vunpack.c.l.b16 %v4156
      %v4344 = vunpack.c.l.b16 %v4157
      %v4345 = vunpack.c.l.b16 %v4158
      %v4346 = vunpack.c.l.b16 %v4159
      %v4347 = vunpack.c.l.b16 %v4160
      %v4348 = vunpack.c.l.b16 %v4161
      %v4349 = vunpack.c.l.b16 %v4162
      %v4350 = vunpack.c.l.b16 %v4163
      %v4351 = vpack.c.b16 %v4288, %v4287
      %v4352 = vpack.c.b16 %v4290, %v4289
      %v4353 = vpack.c.b16 %v4292, %v4291
      %v4354 = vpack.c.b16 %v4294, %v4293
      %v4355 = vpack.c.b16 %v4296, %v4295
      %v4356 = vpack.c.b16 %v4298, %v4297
      %v4357 = vpack.c.b16 %v4300, %v4299
      %v4358 = vpack.c.b16 %v4302, %v4301
      %v4359 = vpack.c.b16 %v4304, %v4303
      %v4360 = vpack.c.b16 %v4306, %v4305
      %v4361 = vpack.c.b16 %v4308, %v4307
      %v4362 = vpack.c.b16 %v4310, %v4309
      %v4363 = vpack.c.b16 %v4312, %v4311
      %v4364 = vpack.c.b16 %v4314, %v4313
      %v4365 = vpack.c.b16 %v4316, %v4315
      %v4366 = vpack.c.b16 %v4318, %v4317
      %v4367 = vpack.c.b16 %v4320, %v4319
      %v4368 = vpack.c.b16 %v4322, %v4321
      %v4369 = vpack.c.b16 %v4324, %v4323
      %v4370 = vpack.c.b16 %v4326, %v4325
      %v4371 = vpack.c.b16 %v4328, %v4327
      %v4372 = vpack.c.b16 %v4330, %v4329
      %v4373 = vpack.c.b16 %v4332, %v4331
      %v4374 = vpack.c.b16 %v4334, %v4333
      %v4375 = vpack.c.b16 %v4336, %v4335
      %v4376 = vpack.c.b16 %v4338, %v4337
      %v4377 = vpack.c.b16 %v4340, %v4339
      %v4378 = vpack.c.b16 %v4342, %v4341
      %v4379 = vpack.c.b16 %v4344, %v4343
      %v4380 = vpack.c.b16 %v4346, %v4345
      %v4381 = vpack.c.b16 %v4348, %v4347
      %v4382 = vpack.c.b16 %v4350, %v4349
      %4415 = vmatpush.bf16.msra.mxu0 %v4358
      %4416 = vmatpush.bf16.msra.mxu0 %v4357
      %4417 = vmatpush.bf16.msra.mxu0 %v4356
      %4418 = vmatpush.bf16.msra.mxu0 %v4355
      %4419 = vmatpush.bf16.msra.mxu0 %v4354
      %4420 = vmatpush.bf16.msra.mxu0 %v4353
      %4421 = vmatpush.bf16.msra.mxu0 %v4352
      %4422 = vmatpush.bf16.msra.mxu0 %v4351
      %4423 = vmatmul.bf16.gmra.mxu0 %v4181
      %v4424 = vpop.f32.mrf.mxu0
      %v4425 = vadd.f32 0.0, %v4424
      %v4426 = vpop.f32.mrf.mxu0
      %v4427 = vadd.f32 0.0, %v4426
      %4428 = vmatmul.bf16.gmra.mxu0 %v4185
      %v4429 = vpop.f32.mrf.mxu0
      %v4430 = vadd.f32 0.0, %v4429
      %v4431 = vpop.f32.mrf.mxu0
      %v4432 = vadd.f32 0.0, %v4431
      %4433 = vmatmul.bf16.gmra.mxu0 %v4199
      %v4434 = vpop.f32.mrf.mxu0
      %v4435 = vadd.f32 0.0, %v4434
      %v4436 = vpop.f32.mrf.mxu0
      %v4437 = vadd.f32 0.0, %v4436
      %4438 = vmatmul.bf16.gmra.mxu0 %v4203
      %v4439 = vpop.f32.mrf.mxu0
      %v4440 = vadd.f32 0.0, %v4439
      %v4441 = vpop.f32.mrf.mxu0
      %v4442 = vadd.f32 0.0, %v4441
      %4443 = vdwg.mxu0
      %4444 = vmatpush.bf16.msra.mxu0 %v4366
      %4445 = vmatpush.bf16.msra.mxu0 %v4365
      %4446 = vmatpush.bf16.msra.mxu0 %v4364
      %4447 = vmatpush.bf16.msra.mxu0 %v4363
      %4448 = vmatpush.bf16.msra.mxu0 %v4362
      %4449 = vmatpush.bf16.msra.mxu0 %v4361
      %4450 = vmatpush.bf16.msra.mxu0 %v4360
      %4451 = vmatpush.bf16.msra.mxu0 %v4359
      %4452 = vmatmul.bf16.gmra.mxu0 %v4182
      %v4453 = vpop.f32.mrf.mxu0
      %v4454 = vadd.f32 %v4425, %v4453
      %v4455 = vpop.f32.mrf.mxu0
      %v4456 = vadd.f32 %v4427, %v4455
      %4457 = vmatmul.bf16.gmra.mxu0 %v4186
      %v4458 = vpop.f32.mrf.mxu0
      %v4459 = vadd.f32 %v4430, %v4458
      %v4460 = vpop.f32.mrf.mxu0
      %v4461 = vadd.f32 %v4432, %v4460
      %4462 = vmatmul.bf16.gmra.mxu0 %v4200
      %v4463 = vpop.f32.mrf.mxu0
      %v4464 = vadd.f32 %v4435, %v4463
      %v4465 = vpop.f32.mrf.mxu0
      %v4466 = vadd.f32 %v4437, %v4465
      %4467 = vmatmul.bf16.gmra.mxu0 %v4204
      %v4468 = vpop.f32.mrf.mxu0
      %v4469 = vadd.f32 %v4440, %v4468
      %v4470 = vpop.f32.mrf.mxu0
      %v4471 = vadd.f32 %v4442, %v4470
      %4472 = vdwg.mxu0
      %4473 = vmatpush.bf16.msra.mxu0 %v4374
      %4474 = vmatpush.bf16.msra.mxu0 %v4373
      %4475 = vmatpush.bf16.msra.mxu0 %v4372
      %4476 = vmatpush.bf16.msra.mxu0 %v4371
      %4477 = vmatpush.bf16.msra.mxu0 %v4370
      %4478 = vmatpush.bf16.msra.mxu0 %v4369
      %4479 = vmatpush.bf16.msra.mxu0 %v4368
      %4480 = vmatpush.bf16.msra.mxu0 %v4367
      %4481 = vmatmul.bf16.gmra.mxu0 %v4183
      %v4482 = vpop.f32.mrf.mxu0
      %v4483 = vadd.f32 %v4454, %v4482
      %v4484 = vpop.f32.mrf.mxu0
      %v4485 = vadd.f32 %v4456, %v4484
      %4486 = vmatmul.bf16.gmra.mxu0 %v4187
      %v4487 = vpop.f32.mrf.mxu0
      %v4488 = vadd.f32 %v4459, %v4487
      %v4489 = vpop.f32.mrf.mxu0
      %v4490 = vadd.f32 %v4461, %v4489
      %4491 = vmatmul.bf16.gmra.mxu0 %v4201
      %v4492 = vpop.f32.mrf.mxu0
      %v4493 = vadd.f32 %v4464, %v4492
      %v4494 = vpop.f32.mrf.mxu0
      %v4495 = vadd.f32 %v4466, %v4494
      %4496 = vmatmul.bf16.gmra.mxu0 %v4205
      %v4497 = vpop.f32.mrf.mxu0
      %v4498 = vadd.f32 %v4469, %v4497
      %v4499 = vpop.f32.mrf.mxu0
      %v4500 = vadd.f32 %v4471, %v4499
      %4501 = vdwg.mxu0
      %4502 = vmatpush.bf16.msra.mxu0 %v4382
      %4503 = vmatpush.bf16.msra.mxu0 %v4381
      %4504 = vmatpush.bf16.msra.mxu0 %v4380
      %4505 = vmatpush.bf16.msra.mxu0 %v4379
      %4506 = vmatpush.bf16.msra.mxu0 %v4378
      %4507 = vmatpush.bf16.msra.mxu0 %v4377
      %4508 = vmatpush.bf16.msra.mxu0 %v4376
      %4509 = vmatpush.bf16.msra.mxu0 %v4375
      %4510 = vmatmul.bf16.gmra.mxu0 %v4184
      %v4511 = vpop.f32.mrf.mxu0
      %v4512 = vadd.f32 %v4483, %v4511
      %v4513 = vpop.f32.mrf.mxu0
      %v4514 = vadd.f32 %v4485, %v4513
      %4515 = vmatmul.bf16.gmra.mxu0 %v4188
      %v4516 = vpop.f32.mrf.mxu0
      %v4517 = vadd.f32 %v4488, %v4516
      %v4518 = vpop.f32.mrf.mxu0
      %v4519 = vadd.f32 %v4490, %v4518
      %4520 = vmatmul.bf16.gmra.mxu0 %v4202
      %v4521 = vpop.f32.mrf.mxu0
      %v4522 = vadd.f32 %v4493, %v4521
      %v4523 = vpop.f32.mrf.mxu0
      %v4524 = vadd.f32 %v4495, %v4523
      %4525 = vmatmul.bf16.gmra.mxu0 %v4206
      %v4526 = vpop.f32.mrf.mxu0
      %v4527 = vadd.f32 %v4498, %v4526
      %v4528 = vpop.f32.mrf.mxu0
      %v4529 = vadd.f32 %v4500, %v4528
      %4530 = vdwg.mxu0
      %v4531 = vadd.f32 %v4019, %v4512
      %v4532 = vadd.f32 %v4020, %v4514
      %v4533 = vadd.f32 %v4021, %v4517
      %v4534 = vadd.f32 %v4022, %v4519
      %v4535 = vadd.f32 %v4023, %v4522
      %v4536 = vadd.f32 %v4024, %v4524
      %v4537 = vadd.f32 %v4025, %v4527
      %v4538 = vadd.f32 %v4026, %v4529
      %v4539 = vld [vmem:[%s4] sm:$0x1]
      %v4541 = vperm.slane %v4539, 0
      %v4543 = vadd.f32 %v4531, %v4541
      %v4544 = vadd.f32 %v4532, %v4541
      %v4545 = vadd.f32 %v4533, %v4541
      %v4546 = vadd.f32 %v4534, %v4541
      %v4547 = vadd.f32 %v4535, %v4541
      %v4548 = vadd.f32 %v4536, %v4541
      %v4549 = vadd.f32 %v4537, %v4541
      %v4550 = vadd.f32 %v4538, %v4541
      %v4551 = vmax.f32 %v4543, 0.0
      %v4552 = vmax.f32 %v4544, 0.0
      %v4553 = vmax.f32 %v4545, 0.0
      %v4554 = vmax.f32 %v4546, 0.0
      %v4555 = vmax.f32 %v4547, 0.0
      %v4556 = vmax.f32 %v4548, 0.0
      %v4557 = vmax.f32 %v4549, 0.0
      %v4558 = vmax.f32 %v4550, 0.0
      %v4567 = vrot.slane %v4551, 4
      %v4568 = vrot.slane %v4552, 4
      %v4569 = vrot.slane %v4553, 4
      %v4570 = vrot.slane %v4554, 4
      %v4571 = vrot.slane %v4555, 4
      %v4572 = vrot.slane %v4556, 4
      %v4573 = vrot.slane %v4557, 4
      %v4574 = vrot.slane %v4558, 4
      %v4583 = vadd.f32 %v4551, %v4567
      %v4584 = vadd.f32 %v4552, %v4568
      %v4585 = vadd.f32 %v4553, %v4569
      %v4586 = vadd.f32 %v4554, %v4570
      %v4587 = vadd.f32 %v4555, %v4571
      %v4588 = vadd.f32 %v4556, %v4572
      %v4589 = vadd.f32 %v4557, %v4573
      %v4590 = vadd.f32 %v4558, %v4574
      %v4595 = vrot.slane %v4583, 5
      %v4596 = vrot.slane %v4595, 4
      %v4597 = vrot.slane %v4585, 5
      %v4598 = vrot.slane %v4597, 4
      %v4599 = vrot.slane %v4587, 5
      %v4600 = vrot.slane %v4599, 4
      %v4601 = vrot.slane %v4589, 5
      %v4602 = vrot.slane %v4601, 4
      %v4607 = vadd.f32 %v4583, %v4596
      %v4608 = vadd.f32 %v4585, %v4598
      %v4609 = vadd.f32 %v4587, %v4600
      %v4610 = vadd.f32 %v4589, %v4602
      %v4611 = vmul.f32 %v4607, 0.25
      %v4612 = vmul.f32 %v4608, 0.25
      %v4613 = vmul.f32 %v4609, 0.25
      %v4614 = vmul.f32 %v4610, 0.25
      %v4619 = vrot.slane %v4584, 5
      %v4620 = vrot.slane %v4619, 4
      %v4621 = vrot.slane %v4586, 5
      %v4622 = vrot.slane %v4621, 4
      %v4623 = vrot.slane %v4588, 5
      %v4624 = vrot.slane %v4623, 4
      %v4625 = vrot.slane %v4590, 5
      %v4626 = vrot.slane %v4625, 4
      %v4631 = vadd.f32 %v4584, %v4620
      %v4632 = vadd.f32 %v4586, %v4622
      %v4633 = vadd.f32 %v4588, %v4624
      %v4634 = vadd.f32 %v4590, %v4626
      %v4635 = vmul.f32 %v4631, 0.25
      %v4636 = vmul.f32 %v4632, 0.25
      %v4637 = vmul.f32 %v4633, 0.25
      %v4638 = vmul.f32 %v4634, 0.25
      %v4643 = vperm.slane %v4611, 0
      %v4644 = vperm.slane %v4612, 0
      %v4645 = vperm.slane %v4613, 0
      %v4646 = vperm.slane %v4614, 0
      %vm4647 = vcmask 1041409
      %v4648 = vsel %vm4647, %v4644, %v4643
      %vm4649 = vcmask 1042434
      %v4650 = vsel %vm4649, %v4645, %v4648
      %vm4651 = vcmask 1043459
      %v4652 = vsel %vm4651, %v4646, %v4650
      %v4654 = vperm.slane %v4611, 2
      %v4655 = vperm.slane %v4612, 2
      %v4656 = vperm.slane %v4613, 2
      %v4657 = vperm.slane %v4614, 2
      %v4658 = vsel %vm4647, %v4655, %v4654
      %v4659 = vsel %vm4649, %v4656, %v4658
      %v4660 = vsel %vm4651, %v4657, %v4659
      %v4666 = vperm.slane %v4635, 0
      %v4667 = vperm.slane %v4636, 0
      %v4668 = vperm.slane %v4637, 0
      %v4669 = vperm.slane %v4638, 0
      %v4670 = vsel %vm4647, %v4667, %v4666
      %v4671 = vsel %vm4649, %v4668, %v4670
      %v4672 = vsel %vm4651, %v4669, %v4671
      %v4674 = vperm.slane %v4635, 2
      %v4675 = vperm.slane %v4636, 2
      %v4676 = vperm.slane %v4637, 2
      %v4677 = vperm.slane %v4638, 2
      %v4678 = vsel %vm4647, %v4675, %v4674
      %v4679 = vsel %vm4649, %v4676, %v4678
      %v4680 = vsel %vm4651, %v4677, %v4679
      %v4682 = vpack.c.bf16 %v4660, %v4652
      %v4683 = vpack.c.bf16 %v4680, %v4672
      %v4686 = vrot.slane %v4682, 2
      %v4687 = vrot.slane %v4683, 4
      %v4688 = vrot.slane %v4683, 6
      %v4691 = vsel %vm852, %v4682, %v4686
      %v4694 = vsel %vm2264, %v4687, %v4688
      %v4695 = vsel %vm1539, %v4691, %v4694
      %4697 = vst [vmem:[%s229] sm:$0xff] %v4695
      %p4698 = scmp.lt.s32.totalorder %s16, 1
      %s4699 = scalar_select %p4698, %s16, 1
      %s4700 = smul.addr %s4699, 4
      %s4701 = smul.addr %s4700, 2
      %s4702 = scalar_lea.vmem %s5, %s4701
      // Predicated region
      $region41: #{tvqa_plus_forward.3} parent=39 // pred_check
        %p4703 = pneg %p144
      $region42: #{tvqa_plus_forward.3} parent=39 // pred_check_branch
        %4705 = sbr.rel (%p4703) target = $region44
      $region43: #{tvqa_plus_forward.3} parent=39 // pred_region
        _
      $region44: #{tvqa_plus_forward.3} parent=39 // pred_fallthru
        _
    $region40: #{tvqa_plus_forward.3} parent=5 // pred_fallthru
      _
    %p4706 = scmp.le.s32.totalorder 2, %s11
    // Predicated region
    $region45: #{tvqa_plus_forward.3} parent=5 // pred_check
      %p4707 = pneg %p4706
    $region46: #{tvqa_plus_forward.3} parent=5 // pred_check_branch
      %4709 = sbr.rel (%p4707) target = $region48
    $region47: #{tvqa_plus_forward.3} parent=5 // pred_region
      %s4710 = ssub.s32 %s11, 2
      // Predicated region
      $region49: #{tvqa_plus_forward.3} parent=47 // pred_check
        %p4711 = pneg %p150
      $region50: #{tvqa_plus_forward.3} parent=47 // pred_check_branch
        %4713 = sbr.rel (%p4711) target = $region52
      $region51: #{tvqa_plus_forward.3} parent=47 // pred_region
        %p4714 = scmp.lt.s32.totalorder %s17, 1
        %s4715 = scalar_select %p4714, %s17, 1
        %s4716 = smul.addr %s4715, 4
        %s4717 = smul.addr %s4716, 2
        %s4718 = scalar_lea.vmem %s5, %s4717
      $region52: #{tvqa_plus_forward.3} parent=47 // pred_fallthru
        _
    $region48: #{tvqa_plus_forward.3} parent=5 // pred_fallthru
      _
  $region6: #{tvqa_plus_forward.3} parent=0 // loop_footer
    %s15 = sadd.s32 1, %s11
  $region7: #{tvqa_plus_forward.3} parent=0 // loop_footer_branch
    %10 = sbr.rel target = $region3
  $region8: #{tvqa_plus_forward.3} parent=0 // loop_exit
    _

</llo_original>
